<compile_context>
chip_gen: v6e
topology: v6e:2x2x1
jax: 0.10.0
libtpu: 0.0.40
codegen_flags: <defaults>
</compile_context>

<pallas_src>
import math
import functools

import numpy as np
import jax
import jax.numpy as jnp
from jax.experimental import pallas as pl
from jax.experimental.pallas import tpu as pltpu

# ------------------------------- configuration --------------------------------
B = 2                 # batch
T = 8                 # motion frames (== music frames)
NUM_FRAMES = 16       # learned sequence-embedding table length
INPUT_FEATS = 24
LATENT_DIM = 32       # D
NUM_HEADS = 4
FF_SIZE = 64
NUM_LAYERS = 2
TIME_EMBED_DIM = 4 * LATENT_DIM        # 128
MUSIC_RAW_DIM = 64
MUSIC_LATENT_DIM = TIME_EMBED_DIM      # stand-in for 512 (must equal time_embed_dim)
LANES = 128

F32 = jnp.float32


# --------------------------- math helpers (trace-time) ------------------------
def _silu(x):
    return x * jax.nn.sigmoid(x)


def _gelu_tanh(x):
    # TODO(synk): PyTorch nn.GELU() is exact erf; tanh approx differs by < ~1.5e-3 and keeps
    # the transcendental on the EUP slot.
    c = math.sqrt(2.0 / math.pi)
    return 0.5 * x * (1.0 + jnp.tanh(c * (x + 0.044715 * x * x * x)))


def _layernorm(x, g, b, eps=1e-5):
    mu = jnp.mean(x, axis=-1, keepdims=True)
    xc = x - mu
    var = jnp.mean(xc * xc, axis=-1, keepdims=True)
    return xc * jax.lax.rsqrt(var + eps) * g + b


# --------------------------------- fused kernel --------------------------------
def fused_forward_kernel(din_ref, w_ref, o_ref, *, doff, woff, batch, seqlen):
    D = LATENT_DIM
    Lt = MUSIC_LATENT_DIM
    BT = batch * seqlen

    def DIN(name):                       # static slice of the per-call input slab
        off, (r, c) = doff[name]
        return din_ref[off:off + r, :c]

    def W(name):                         # static slice of the constant weight slab
        off, (r, c) = woff[name]
        return w_ref[off:off + r, :c]

    x = DIN('x')            # (BT, INPUT_FEATS)
    xf = DIN('xf')          # (2*BT, 64)  rows = [xf_proj ; xf_out], batch-stacked
    temb = DIN('temb')      # (BT, Dt)
    mask = DIN('mask')      # (BT, 1)
    kadd = (1.0 - mask) * -1000000.0

    hm = W('hmask')         # (D, D) block-diagonal head mask

    # --- self.linear on both music tensors with one matmul ---
    xf_lin = jnp.dot(xf, W('music_w'), preferred_element_type=F32) + W('music_b')
    xf_proj_l = xf_lin[:BT]             # (BT, Dt)
    xf_out_l = xf_lin[BT:]              # (BT, Dt)

    # --- emb and all six stylization emb projections (3 lane-aligned chunks) ---
    emb = temb + xf_proj_l
    silu_emb = _silu(emb)
    eo = [jnp.dot(silu_emb, W('swe%d' % c), preferred_element_type=F32) + W('sbe%d' % c)
          for c in range(3)]            # each (BT, 128) = 2 stylization blocks

    sln = W('sln')          # (12, D)   rows 2*blk = gamma, 2*blk+1 = beta
    swo = W('swo')          # (6*D, D)
    sbo = W('sbo')          # (6, D)

    def stylization(y, blk):
        chunk = eo[blk // 2]
        o = (blk % 2) * 2 * D
        scale = chunk[:, o:o + D]
        shift = chunk[:, o + D:o + 2 * D]
        yn = _layernorm(y, sln[2 * blk:2 * blk + 1], sln[2 * blk + 1:2 * blk + 2])
        h2 = yn * (1.0 + scale) + shift
        return (jnp.dot(_silu(h2), swo[blk * D:(blk + 1) * D],
                        preferred_element_type=F32) + sbo[blk:blk + 1])

    def lin_attn(q, k, v):
        # softmax over each head's feature chunk (row-wise; segment sum via head mask)
        eq = jnp.exp(q - jnp.max(q, axis=-1, keepdims=True))
        q_sm = eq * pl.reciprocal(
            jnp.dot(eq, hm, preferred_element_type=F32), approx=True)
        # softmax over the sequence axis per batch element + per-batch k^T v attention
        ek = jnp.exp(k - jnp.max(k, axis=0, keepdims=True))   # shared shift: still exact
        ys = []
        for bi in range(batch):                                # static tiny loop over B
            sl = slice(bi * seqlen, (bi + 1) * seqlen)
            ek_b = ek[sl]
            k_sm = ek_b * pl.reciprocal(
                jnp.sum(ek_b, axis=0, keepdims=True), approx=True)
            att = jnp.dot(k_sm.T, v[sl], preferred_element_type=F32) * hm   # (D, D)
            ys.append(jnp.dot(q_sm[sl], att, preferred_element_type=F32))   # (T, D)
        return jnp.concatenate(ys, axis=0)                                   # (BT, D)

    # --- joint embedding + learned sequence embedding ---
    seq = W('seq_emb')[:seqlen]                                  # (T, D)
    seq_bt = jnp.concatenate([seq] * batch, axis=0)              # (BT, D)
    h = jnp.dot(x, W('wje'), preferred_element_type=F32) + W('bje') + seq_bt

    for l in range(NUM_LAYERS):          # static unroll
        # ---------------- LinearTemporalSelfAttention ----------------
        sa_ln = W('sa_ln%d' % l)
        w_sa = W('sa_w%d' % l)           # (3D, D) rows = [wq; wk; wv] (sublane-aligned)
        b_sa = W('sa_b%d' % l)           # (3, D)  rows = [bq; bk; bv]
        xn = _layernorm(h, sa_ln[0:1], sa_ln[1:2])
        q = jnp.dot(xn, w_sa[0:D], preferred_element_type=F32) + b_sa[0:1]
        k = jnp.dot(xn, w_sa[D:2 * D], preferred_element_type=F32) + b_sa[1:2] + kadd
        v = (jnp.dot(xn, w_sa[2 * D:3 * D], preferred_element_type=F32) + b_sa[2:3]) * mask
        h = h + stylization(lin_attn(q, k, v), 3 * l + 0)

        # ---------------- LinearTemporalCrossAttention ----------------
        ca_ln = W('ca_ln%d' % l)
        ca_tln = W('ca_tln%d' % l)
        w_kv = W('ca_wkv%d' % l)         # (2*Lt, D) rows = [wk; wv]
        b_ca = W('ca_b%d' % l)           # (3, D)   rows = [bq; bk; bv]
        xn = _layernorm(h, ca_ln[0:1], ca_ln[1:2])
        tn = _layernorm(xf_out_l, ca_tln[0:1], ca_tln[1:2])
        q = jnp.dot(xn, W('ca_wq%d' % l), preferred_element_type=F32) + b_ca[0:1]
        k = jnp.dot(tn, w_kv[0:Lt], preferred_element_type=F32) + b_ca[1:2]
        v = jnp.dot(tn, w_kv[Lt:2 * Lt], preferred_element_type=F32) + b_ca[2:3]
        h = h + stylization(lin_attn(q, k, v), 3 * l + 1)

        # ------------------------------ FFN ----------------------------
        h1 = _gelu_tanh(jnp.dot(h, W('ffn_w1%d' % l), preferred_element_type=F32)
                        + W('ffn_b1%d' % l))
        y = jnp.dot(h1, W('ffn_w2%d' % l), preferred_element_type=F32) + W('ffn_b2%d' % l)
        h = h + stylization(y, 3 * l + 2)

    # --- final output projection: lane-dense (wout zero-padded to 128 columns) ---
    o_ref[...] = jnp.dot(h, W('wout'), preferred_element_type=F32) + W('bout')


# ------------------------------ slab packing -----------------------------------
class _SlabPacker:
    """Packs many small (r, c<=128) f32 matrices into one (R, 128) lane-padded slab."""

    def __init__(self):
        self._chunks, self._off, self._cur = [], {}, 0

    def add(self, name, arr):
        arr = jnp.asarray(arr, F32)
        r, c = arr.shape
        rp = (-r) % 8
        self._chunks.append(jnp.pad(arr, ((0, rp), (0, LANES - c))))
        self._off[name] = (self._cur, (r, c))
        self._cur += r + rp

    def finalize(self):
        return jnp.concatenate(self._chunks, axis=0), self._off


# ------------------------------ parameters -------------------------------------
def init_params(key):
    keys = iter(jax.random.split(key, 256))

    def nrm(shape, scale=0.05):
        return (scale * jax.random.normal(next(keys), shape)).astype(F32)

    def ones(shape):
        return jnp.ones(shape, F32)

    def zeros(shape):
        return jnp.zeros(shape, F32)

    D, Dt, L, Fd = LATENT_DIM, TIME_EMBED_DIM, MUSIC_LATENT_DIM, FF_SIZE

    def style():
        return dict(we=nrm((Dt, 2 * D)), be=nrm((1, 2 * D)),
                    gs=ones((1, D)), bs=zeros((1, D)),
                    wo=nrm((D, D)), bo=nrm((1, D)))

    def layer():
        sa = dict(g=ones((1, D)), b=zeros((1, D)),
                  wq=nrm((D, D)), bq=nrm((1, D)),
                  wk=nrm((D, D)), bk=nrm((1, D)),
                  wv=nrm((D, D)), bv=nrm((1, D)), **style())
        ca = dict(g=ones((1, D)), b=zeros((1, D)),
                  tg=ones((1, L)), tb=zeros((1, L)),
                  wq=nrm((D, D)), bq=nrm((1, D)),
                  wk=nrm((L, D)), bk=nrm((1, D)),
                  wv=nrm((L, D)), bv=nrm((1, D)), **style())
        ffn = dict(w1=nrm((D, Fd)), b1=nrm((1, Fd)),
                   w2=nrm((Fd, D)), b2=nrm((1, D)), **style())
        return dict(sa=sa, ca=ca, ffn=ffn)

    return dict(
        linear_w=nrm((MUSIC_RAW_DIM, L)), linear_b=nrm((1, L)),
        wt1=nrm((D, Dt)), bt1=nrm((1, Dt)),
        wt2=nrm((Dt, Dt)), bt2=nrm((1, Dt)),
        seq_emb=nrm((NUM_FRAMES, D), scale=1.0),
        wje=nrm((INPUT_FEATS, D)), bje=nrm((1, D)),
        wout=nrm((D, INPUT_FEATS)), bout=nrm((1, INPUT_FEATS)),
        layers=[layer() for _ in range(NUM_LAYERS)],
    )


def pack_params(params):
    """One-time packing of EVERY constant tensor into a single (R,128) weight slab."""
    D = LATENT_DIM
    pk = _SlabPacker()

    dh = D // NUM_HEADS
    hid = np.arange(D) // dh
    head_mask = jnp.asarray((hid[:, None] == hid[None, :]).astype(np.float32))

    pk.add('music_w', params['linear_w'])
    pk.add('music_b', params['linear_b'])
    pk.add('wje', params['wje'])
    pk.add('bje', params['bje'])
    pk.add('seq_emb', params['seq_emb'])
    pk.add('hmask', head_mask)

    # stylization blocks in order l0.sa, l0.ca, l0.ffn, l1.sa, ...
    blocks = []
    for lp in params['layers']:
        blocks += [lp['sa'], lp['ca'], lp['ffn']]
    swe_full = jnp.concatenate([bk['we'] for bk in blocks], axis=1)   # (Dt, 6*2D)
    sbe_full = jnp.concatenate([bk['be'] for bk in blocks], axis=1)   # (1, 6*2D)
    for c in range(3):   # three lane-aligned 128-column chunks (2 blocks per chunk)
        pk.add('swe%d' % c, swe_full[:, c * 128:(c + 1) * 128])
        pk.add('sbe%d' % c, sbe_full[:, c * 128:(c + 1) * 128])
    pk.add('sln', jnp.concatenate(
        [jnp.concatenate([bk['gs'], bk['bs']], axis=0) for bk in blocks], axis=0))
    pk.add('swo', jnp.concatenate([bk['wo'] for bk in blocks], axis=0))
    pk.add('sbo', jnp.concatenate([bk['bo'] for bk in blocks], axis=0))

    for l, lp in enumerate(params['layers']):
        sa, ca, ffn = lp['sa'], lp['ca'], lp['ffn']
        pk.add('sa_ln%d' % l, jnp.concatenate([sa['g'], sa['b']], axis=0))
        pk.add('sa_w%d' % l, jnp.concatenate([sa['wq'], sa['wk'], sa['wv']], axis=0))
        pk.add('sa_b%d' % l, jnp.concatenate([sa['bq'], sa['bk'], sa['bv']], axis=0))
        pk.add('ca_ln%d' % l, jnp.concatenate([ca['g'], ca['b']], axis=0))
        pk.add('ca_tln%d' % l, jnp.concatenate([ca['tg'], ca['tb']], axis=0))
        pk.add('ca_wq%d' % l, ca['wq'])
        pk.add('ca_wkv%d' % l, jnp.concatenate([ca['wk'], ca['wv']], axis=0))
        pk.add('ca_b%d' % l, jnp.concatenate([ca['bq'], ca['bk'], ca['bv']], axis=0))
        pk.add('ffn_w1%d' % l, ffn['w1'])
        pk.add('ffn_b1%d' % l, ffn['b1'])
        pk.add('ffn_w2%d' % l, ffn['w2'])
        pk.add('ffn_b2%d' % l, ffn['b2'])

    # lane-dense final projection: zero-pad 24 output columns to 128
    wout_p = jnp.zeros((D, LANES), F32).at[:, :INPUT_FEATS].set(params['wout'])
    bout_p = jnp.zeros((1, LANES), F32).at[:, :INPUT_FEATS].set(params['bout'])
    pk.add('wout', wout_p)
    pk.add('bout', bout_p)

    wslab, woff = pk.finalize()
    tiny = dict(wt1=params['wt1'], bt1=params['bt1'],
                wt2=params['wt2'], bt2=params['bt2'])
    return wslab, woff, tiny


# --------------------------- plain-JAX glue pieces ------------------------------
def timestep_embedding(timesteps, dim, max_period=10000):
    half = dim // 2
    freqs = jnp.exp(-math.log(max_period) * jnp.arange(half, dtype=F32) / half)
    args = timesteps[:, None].astype(F32) * freqs[None]
    emb = jnp.concatenate([jnp.cos(args), jnp.sin(args)], axis=-1)
    if dim % 2:
        emb = jnp.concatenate([emb, jnp.zeros_like(emb[:, :1])], axis=-1)
    return emb


def generate_src_mask(Tn, length):
    return (jnp.arange(Tn)[None, :] < length[:, None]).astype(F32)[:, :, None]


# -------------------------------- forward ---------------------------------------
def pallas_forward(woff, wslab, tiny, x, timesteps, length, xf_proj, xf_out):
    Bn, Tn, _ = x.shape
    BT = Bn * Tn
    D = LATENT_DIM

    # time-embedding MLP on tiny (B, .) vectors — plain JAX glue inside the same jit
    temb = timestep_embedding(timesteps, D)
    temb = _silu(temb @ tiny['wt1'] + tiny['bt1']) @ tiny['wt2'] + tiny['bt2']   # (B, Dt)
    temb_bt = jnp.broadcast_to(
        temb[:, None, :], (Bn, Tn, TIME_EMBED_DIM)).reshape(BT, TIME_EMBED_DIM)

    mask = (jnp.arange(Tn)[None, :] < length[:, None]).astype(F32).reshape(BT, 1)
    x2 = x.reshape(BT, INPUT_FEATS)
    xf_cat = jnp.concatenate([xf_proj.reshape(BT, MUSIC_RAW_DIM),
                              xf_out.reshape(BT, MUSIC_RAW_DIM)], axis=0)

    # pack the per-call tensors into one lane-padded input slab (layout plumbing only)
    pieces = [('x', x2), ('xf', xf_cat), ('temb', temb_bt), ('mask', mask)]
    doff, rows, cur = {}, [], 0
    for name, a in pieces:
        r, c = a.shape
        rp = (-r) % 8
        doff[name] = (cur, (r, c))
        rows.append(jnp.pad(a, ((0, rp), (0, LANES - c))))
        cur += r + rp
    din = jnp.concatenate(rows, axis=0)

    kernel = functools.partial(fused_forward_kernel, doff=doff, woff=woff,
                               batch=Bn, seqlen=Tn)
    out = pl.pallas_call(
        kernel,
        out_shape=jax.ShapeDtypeStruct((BT, LANES), F32),
        in_specs=[pl.BlockSpec(memory_space=pltpu.MemorySpace.VMEM),
                  pl.BlockSpec(memory_space=pltpu.MemorySpace.VMEM)],
        out_specs=pl.BlockSpec(memory_space=pltpu.MemorySpace.VMEM),
    )(din, wslab)
    return out[:, :INPUT_FEATS].reshape(Bn, Tn, INPUT_FEATS)


# --------------------------- pure-JAX reference ---------------------------------
def ref_forward(params, x, timesteps, length, xf_proj, xf_out):
    Bn, Tn, _ = x.shape
    D = LATENT_DIM
    xf_p = xf_proj @ params['linear_w'] + params['linear_b']
    xf_o = xf_out @ params['linear_w'] + params['linear_b']
    temb = timestep_embedding(timesteps, D)
    temb = _silu(temb @ params['wt1'] + params['bt1']) @ params['wt2'] + params['bt2']
    emb = temb[:, None, :] + xf_p
    h = x @ params['wje'] + params['bje'] + params['seq_emb'][None, :Tn]
    mask = generate_src_mask(Tn, length)

    def ln(v, g, b):
        mu = jnp.mean(v, -1, keepdims=True)
        xc = v - mu
        var = jnp.mean(xc * xc, -1, keepdims=True)
        return xc * jax.lax.rsqrt(var + 1e-5) * g + b

    def styl(hh, p):
        eo = _silu(emb) @ p['we'] + p['be']
        scale, shift = eo[..., :D], eo[..., D:]
        hn = ln(hh, p['gs'], p['bs'])
        return _silu(hn * (1.0 + scale) + shift) @ p['wo'] + p['bo']

    def lin_attn(q, k, v):
        Bq, Tq, Dq = q.shape
        H = NUM_HEADS
        d = Dq // H
        q = jax.nn.softmax(q.reshape(Bq, Tq, H, d), axis=-1)
        k = jax.nn.softmax(k.reshape(Bq, -1, H, d), axis=1)
        v = v.reshape(Bq, -1, H, d)
        att = jnp.einsum('bnhd,bnhl->bhdl', k, v)
        return jnp.einsum('bnhd,bhdl->bnhl', q, att).reshape(Bq, Tq, Dq)

    for lp in params['layers']:
        sa = lp['sa']
        xn = ln(h, sa['g'], sa['b'])
        q = xn @ sa['wq'] + sa['bq']
        k = xn @ sa['wk'] + sa['bk'] + (1.0 - mask) * -1000000.0
        v = (xn @ sa['wv'] + sa['bv']) * mask
        h = h + styl(lin_attn(q, k, v), sa)
        ca = lp['ca']
        xn = ln(h, ca['g'], ca['b'])
        tn = ln(xf_o, ca['tg'], ca['tb'])
        q = xn @ ca['wq'] + ca['bq']
        k = tn @ ca['wk'] + ca['bk']
        v = tn @ ca['wv'] + ca['bv']
        h = h + styl(lin_attn(q, k, v), ca)
        fp = lp['ffn']
        y = jax.nn.gelu(h @ fp['w1'] + fp['b1'], approximate=False) @ fp['w2'] + fp['b2']
        h = h + styl(y, fp)
    return h @ params['wout'] + params['bout']


# ----------------------------------- main ---------------------------------------
if __name__ == "__main__":
    key = jax.random.PRNGKey(0)
    kp, kx, kf1, kf2 = jax.random.split(key, 4)
    params = init_params(kp)
    wslab, woff, tiny = pack_params(params)

    x = jax.random.normal(kx, (B, T, INPUT_FEATS), dtype=F32)
    timesteps = jnp.array([3, 17], dtype=jnp.int32)
    length = jnp.array([T, 5], dtype=jnp.int32)
    xf_proj = jax.random.normal(kf1, (B, T, MUSIC_RAW_DIM), dtype=F32)
    xf_out = jax.random.normal(kf2, (B, T, MUSIC_RAW_DIM), dtype=F32)

    fwd = jax.jit(functools.partial(pallas_forward, woff))
    out = jax.block_until_ready(fwd(wslab, tiny, x, timesteps, length, xf_proj, xf_out))

    ref = jax.block_until_ready(
        jax.jit(ref_forward)(params, x, timesteps, length, xf_proj, xf_out))
    np.testing.assert_allclose(np.asarray(out), np.asarray(ref), rtol=2e-2, atol=2e-2)

    assert out.shape == (B, T, INPUT_FEATS)
    print("KERNEL_OK")
</pallas_src>

<mosaic_0001>
module attributes {stable_mosaic.version = 11 : i64} {
  func.func @fused_forward_kernel(%arg0: memref<80x128xf32, #tpu.memory_space<vmem>>, %arg1: memref<1888x128xf32, #tpu.memory_space<vmem>>, %arg2: memref<16x128xf32, #tpu.memory_space<vmem>>) attributes {dimension_semantics = [], scalar_prefetch = 0 : i64, scratch_operands = 0 : i64, tpu.core_type = #tpu.core_type<tc>} {
    %c0 = arith.constant 0 : index
    %c0_0 = arith.constant 0 : index
    %0 = vector.load %arg0[%c0, %c0_0] : memref<80x128xf32, #tpu.memory_space<vmem>>, vector<16x24xf32>
    %c16 = arith.constant 16 : index
    %c0_1 = arith.constant 0 : index
    %1 = vector.load %arg0[%c16, %c0_1] : memref<80x128xf32, #tpu.memory_space<vmem>>, vector<32x64xf32>
    %c48 = arith.constant 48 : index
    %c0_2 = arith.constant 0 : index
    %2 = vector.load %arg0[%c48, %c0_2] : memref<80x128xf32, #tpu.memory_space<vmem>>, vector<16x128xf32>
    %c64 = arith.constant 64 : index
    %c0_3 = arith.constant 0 : index
    %3 = vector.load %arg0[%c64, %c0_3] : memref<80x128xf32, #tpu.memory_space<vmem>>, vector<16x1xf32>
    %cst = arith.constant 1.000000e+00 : f32
    %4 = vector.broadcast %cst : f32 to vector<16x1xf32>
    %5 = arith.subf %4, %3 : vector<16x1xf32>
    %cst_4 = arith.constant -1.000000e+06 : f32
    %6 = vector.broadcast %cst_4 : f32 to vector<16x1xf32>
    %7 = arith.mulf %5, %6 : vector<16x1xf32>
    %c120 = arith.constant 120 : index
    %c0_5 = arith.constant 0 : index
    %8 = vector.load %arg1[%c120, %c0_5] : memref<1888x128xf32, #tpu.memory_space<vmem>>, vector<32x32xf32>
    %c0_6 = arith.constant 0 : index
    %c0_7 = arith.constant 0 : index
    %9 = vector.load %arg1[%c0_6, %c0_7] : memref<1888x128xf32, #tpu.memory_space<vmem>>, vector<64x128xf32>
    %cst_8 = arith.constant dense<0.000000e+00> : vector<32x128xf32>
    %10 = tpu.matmul %1, %9, %cst_8 {dimension_numbers = #tpu.dot_dimension_numbers<[1], [0], [0], [1], [0, 0, 1, 1], [], []>} : vector<32x64xf32>, vector<64x128xf32>, vector<32x128xf32> -> vector<32x128xf32>
    %c64_9 = arith.constant 64 : index
    %c0_10 = arith.constant 0 : index
    %11 = vector.load %arg1[%c64_9, %c0_10] : memref<1888x128xf32, #tpu.memory_space<vmem>>, vector<1x128xf32>
    %12 = vector.broadcast %11 : vector<1x128xf32> to vector<32x128xf32>
    %13 = arith.addf %10, %12 : vector<32x128xf32>
    %14 = vector.extract_strided_slice %13 {offsets = [0, 0], sizes = [16, 128], strides = [1, 1]} : vector<32x128xf32> to vector<16x128xf32>
    %15 = vector.extract_strided_slice %13 {offsets = [16, 0], sizes = [16, 128], strides = [1, 1]} : vector<32x128xf32> to vector<16x128xf32>
    %16 = arith.addf %2, %14 : vector<16x128xf32>
    %17 = arith.negf %16 : vector<16x128xf32>
    %18 = math.exp %17 : vector<16x128xf32>
    %cst_11 = arith.constant 1.000000e+00 : f32
    %19 = vector.broadcast %cst_11 : f32 to vector<16x128xf32>
    %20 = arith.addf %19, %18 : vector<16x128xf32>
    %21 = arith.divf %19, %20 : vector<16x128xf32>
    %22 = arith.mulf %16, %21 : vector<16x128xf32>
    %c152 = arith.constant 152 : index
    %c0_12 = arith.constant 0 : index
    %23 = vector.load %arg1[%c152, %c0_12] : memref<1888x128xf32, #tpu.memory_space<vmem>>, vector<128x128xf32>
    %cst_13 = arith.constant dense<0.000000e+00> : vector<16x128xf32>
    %24 = tpu.matmul %22, %23, %cst_13 {dimension_numbers = #tpu.dot_dimension_numbers<[1], [0], [0], [1], [0, 0, 1, 1], [], []>} : vector<16x128xf32>, vector<128x128xf32>, vector<16x128xf32> -> vector<16x128xf32>
    %c280 = arith.constant 280 : index
    %c0_14 = arith.constant 0 : index
    %25 = vector.load %arg1[%c280, %c0_14] : memref<1888x128xf32, #tpu.memory_space<vmem>>, vector<1x128xf32>
    %26 = vector.broadcast %25 : vector<1x128xf32> to vector<16x128xf32>
    %27 = arith.addf %24, %26 : vector<16x128xf32>
    %c288 = arith.constant 288 : index
    %c0_15 = arith.constant 0 : index
    %28 = vector.load %arg1[%c288, %c0_15] : memref<1888x128xf32, #tpu.memory_space<vmem>>, vector<128x128xf32>
    %cst_16 = arith.constant dense<0.000000e+00> : vector<16x128xf32>
    %29 = tpu.matmul %22, %28, %cst_16 {dimension_numbers = #tpu.dot_dimension_numbers<[1], [0], [0], [1], [0, 0, 1, 1], [], []>} : vector<16x128xf32>, vector<128x128xf32>, vector<16x128xf32> -> vector<16x128xf32>
    %c416 = arith.constant 416 : index
    %c0_17 = arith.constant 0 : index
    %30 = vector.load %arg1[%c416, %c0_17] : memref<1888x128xf32, #tpu.memory_space<vmem>>, vector<1x128xf32>
    %31 = vector.broadcast %30 : vector<1x128xf32> to vector<16x128xf32>
    %32 = arith.addf %29, %31 : vector<16x128xf32>
    %c424 = arith.constant 424 : index
    %c0_18 = arith.constant 0 : index
    %33 = vector.load %arg1[%c424, %c0_18] : memref<1888x128xf32, #tpu.memory_space<vmem>>, vector<128x128xf32>
    %cst_19 = arith.constant dense<0.000000e+00> : vector<16x128xf32>
    %34 = tpu.matmul %22, %33, %cst_19 {dimension_numbers = #tpu.dot_dimension_numbers<[1], [0], [0], [1], [0, 0, 1, 1], [], []>} : vector<16x128xf32>, vector<128x128xf32>, vector<16x128xf32> -> vector<16x128xf32>
    %c552 = arith.constant 552 : index
    %c0_20 = arith.constant 0 : index
    %35 = vector.load %arg1[%c552, %c0_20] : memref<1888x128xf32, #tpu.memory_space<vmem>>, vector<1x128xf32>
    %36 = vector.broadcast %35 : vector<1x128xf32> to vector<16x128xf32>
    %37 = arith.addf %34, %36 : vector<16x128xf32>
    %c560 = arith.constant 560 : index
    %c0_21 = arith.constant 0 : index
    %38 = vector.load %arg1[%c560, %c0_21] : memref<1888x128xf32, #tpu.memory_space<vmem>>, vector<12x32xf32>
    %c576 = arith.constant 576 : index
    %c0_22 = arith.constant 0 : index
    %39 = vector.load %arg1[%c576, %c0_22] : memref<1888x128xf32, #tpu.memory_space<vmem>>, vector<192x32xf32>
    %c768 = arith.constant 768 : index
    %c0_23 = arith.constant 0 : index
    %40 = vector.load %arg1[%c768, %c0_23] : memref<1888x128xf32, #tpu.memory_space<vmem>>, vector<6x32xf32>
    %c104 = arith.constant 104 : index
    %c0_24 = arith.constant 0 : index
    %41 = vector.load %arg1[%c104, %c0_24] : memref<1888x128xf32, #tpu.memory_space<vmem>>, vector<16x32xf32>
    %42 = vector.extract_strided_slice %41 {offsets = [0, 0], sizes = [8, 32], strides = [1, 1]} : vector<16x32xf32> to vector<8x32xf32>
    %43 = tpu.concatenate %42, %42 in 0 : vector<8x32xf32>, vector<8x32xf32> -> vector<16x32xf32>
    %c72 = arith.constant 72 : index
    %c0_25 = arith.constant 0 : index
    %44 = vector.load %arg1[%c72, %c0_25] : memref<1888x128xf32, #tpu.memory_space<vmem>>, vector<24x32xf32>
    %cst_26 = arith.constant dense<0.000000e+00> : vector<16x32xf32>
    %45 = tpu.matmul %0, %44, %cst_26 {dimension_numbers = #tpu.dot_dimension_numbers<[1], [0], [0], [1], [0, 0, 1, 1], [], []>} : vector<16x24xf32>, vector<24x32xf32>, vector<16x32xf32> -> vector<16x32xf32>
    %c96 = arith.constant 96 : index
    %c0_27 = arith.constant 0 : index
    %46 = vector.load %arg1[%c96, %c0_27] : memref<1888x128xf32, #tpu.memory_space<vmem>>, vector<1x32xf32>
    %47 = vector.broadcast %46 : vector<1x32xf32> to vector<16x32xf32>
    %48 = arith.addf %45, %47 : vector<16x32xf32>
    %49 = arith.addf %48, %43 : vector<16x32xf32>
    %c776 = arith.constant 776 : index
    %c0_28 = arith.constant 0 : index
    %50 = vector.load %arg1[%c776, %c0_28] : memref<1888x128xf32, #tpu.memory_space<vmem>>, vector<2x32xf32>
    %c784 = arith.constant 784 : index
    %c0_29 = arith.constant 0 : index
    %51 = vector.load %arg1[%c784, %c0_29] : memref<1888x128xf32, #tpu.memory_space<vmem>>, vector<96x32xf32>
    %c880 = arith.constant 880 : index
    %c0_30 = arith.constant 0 : index
    %52 = vector.load %arg1[%c880, %c0_30] : memref<1888x128xf32, #tpu.memory_space<vmem>>, vector<3x32xf32>
    %53 = vector.extract_strided_slice %50 {offsets = [0, 0], sizes = [1, 32], strides = [1, 1]} : vector<2x32xf32> to vector<1x32xf32>
    %54 = vector.extract_strided_slice %50 {offsets = [1, 0], sizes = [1, 32], strides = [1, 1]} : vector<2x32xf32> to vector<1x32xf32>
    %cst_31 = arith.constant dense<0.000000e+00> : vector<16xf32>
    %55 = vector.multi_reduction <add>, %49, %cst_31 [1] : vector<16x32xf32> to vector<16xf32>
    %56 = vector.shape_cast %55 : vector<16xf32> to vector<16x1xf32>
    %cst_32 = arith.constant 3.200000e+01 : f32
    %57 = vector.broadcast %cst_32 : f32 to vector<16x1xf32>
    %58 = arith.divf %56, %57 : vector<16x1xf32>
    %59 = vector.broadcast %58 : vector<16x1xf32> to vector<16x32xf32>
    %60 = arith.subf %49, %59 : vector<16x32xf32>
    %61 = arith.mulf %60, %60 : vector<16x32xf32>
    %cst_33 = arith.constant dense<0.000000e+00> : vector<16xf32>
    %62 = vector.multi_reduction <add>, %61, %cst_33 [1] : vector<16x32xf32> to vector<16xf32>
    %63 = vector.shape_cast %62 : vector<16xf32> to vector<16x1xf32>
    %cst_34 = arith.constant 3.200000e+01 : f32
    %64 = vector.broadcast %cst_34 : f32 to vector<16x1xf32>
    %65 = arith.divf %63, %64 : vector<16x1xf32>
    %cst_35 = arith.constant 9.99999974E-6 : f32
    %66 = vector.broadcast %cst_35 : f32 to vector<16x1xf32>
    %67 = arith.addf %65, %66 : vector<16x1xf32>
    %68 = math.rsqrt %67 : vector<16x1xf32>
    %69 = vector.broadcast %68 : vector<16x1xf32> to vector<16x32xf32>
    %70 = arith.mulf %60, %69 : vector<16x32xf32>
    %71 = vector.broadcast %53 : vector<1x32xf32> to vector<16x32xf32>
    %72 = arith.mulf %70, %71 : vector<16x32xf32>
    %73 = vector.broadcast %54 : vector<1x32xf32> to vector<16x32xf32>
    %74 = arith.addf %72, %73 : vector<16x32xf32>
    %75 = vector.extract_strided_slice %51 {offsets = [0, 0], sizes = [32, 32], strides = [1, 1]} : vector<96x32xf32> to vector<32x32xf32>
    %cst_36 = arith.constant dense<0.000000e+00> : vector<16x32xf32>
    %76 = tpu.matmul %74, %75, %cst_36 {dimension_numbers = #tpu.dot_dimension_numbers<[1], [0], [0], [1], [0, 0, 1, 1], [], []>} : vector<16x32xf32>, vector<32x32xf32>, vector<16x32xf32> -> vector<16x32xf32>
    %77 = vector.extract_strided_slice %52 {offsets = [0, 0], sizes = [1, 32], strides = [1, 1]} : vector<3x32xf32> to vector<1x32xf32>
    %78 = vector.broadcast %77 : vector<1x32xf32> to vector<16x32xf32>
    %79 = arith.addf %76, %78 : vector<16x32xf32>
    %80 = vector.extract_strided_slice %51 {offsets = [32, 0], sizes = [32, 32], strides = [1, 1]} : vector<96x32xf32> to vector<32x32xf32>
    %cst_37 = arith.constant dense<0.000000e+00> : vector<16x32xf32>
    %81 = tpu.matmul %74, %80, %cst_37 {dimension_numbers = #tpu.dot_dimension_numbers<[1], [0], [0], [1], [0, 0, 1, 1], [], []>} : vector<16x32xf32>, vector<32x32xf32>, vector<16x32xf32> -> vector<16x32xf32>
    %82 = vector.extract_strided_slice %52 {offsets = [1, 0], sizes = [1, 32], strides = [1, 1]} : vector<3x32xf32> to vector<1x32xf32>
    %83 = vector.broadcast %82 : vector<1x32xf32> to vector<16x32xf32>
    %84 = arith.addf %81, %83 : vector<16x32xf32>
    %85 = vector.broadcast %7 : vector<16x1xf32> to vector<16x32xf32>
    %86 = arith.addf %84, %85 : vector<16x32xf32>
    %87 = vector.extract_strided_slice %51 {offsets = [64, 0], sizes = [32, 32], strides = [1, 1]} : vector<96x32xf32> to vector<32x32xf32>
    %cst_38 = arith.constant dense<0.000000e+00> : vector<16x32xf32>
    %88 = tpu.matmul %74, %87, %cst_38 {dimension_numbers = #tpu.dot_dimension_numbers<[1], [0], [0], [1], [0, 0, 1, 1], [], []>} : vector<16x32xf32>, vector<32x32xf32>, vector<16x32xf32> -> vector<16x32xf32>
    %89 = vector.extract_strided_slice %52 {offsets = [2, 0], sizes = [1, 32], strides = [1, 1]} : vector<3x32xf32> to vector<1x32xf32>
    %90 = vector.broadcast %89 : vector<1x32xf32> to vector<16x32xf32>
    %91 = arith.addf %88, %90 : vector<16x32xf32>
    %92 = vector.broadcast %3 : vector<16x1xf32> to vector<16x32xf32>
    %93 = arith.mulf %91, %92 : vector<16x32xf32>
    %cst_39 = arith.constant dense<0xFF800000> : vector<16xf32>
    %94 = vector.multi_reduction <maximumf>, %79, %cst_39 [1] : vector<16x32xf32> to vector<16xf32>
    %95 = vector.shape_cast %94 : vector<16xf32> to vector<16x1xf32>
    %96 = vector.broadcast %95 : vector<16x1xf32> to vector<16x32xf32>
    %97 = arith.subf %79, %96 : vector<16x32xf32>
    %98 = math.exp %97 : vector<16x32xf32>
    %cst_40 = arith.constant dense<0.000000e+00> : vector<16x32xf32>
    %99 = tpu.matmul %98, %8, %cst_40 {dimension_numbers = #tpu.dot_dimension_numbers<[1], [0], [0], [1], [0, 0, 1, 1], [], []>} : vector<16x32xf32>, vector<32x32xf32>, vector<16x32xf32> -> vector<16x32xf32>
    %100 = tpu.reciprocal %99 {approx = true} : vector<16x32xf32> -> vector<16x32xf32>
    %101 = arith.mulf %98, %100 : vector<16x32xf32>
    %cst_41 = arith.constant dense<0xFF800000> : vector<32xf32>
    %102 = vector.multi_reduction <maximumf>, %86, %cst_41 [0] : vector<16x32xf32> to vector<32xf32>
    %103 = vector.shape_cast %102 : vector<32xf32> to vector<1x32xf32>
    %104 = vector.broadcast %103 : vector<1x32xf32> to vector<16x32xf32>
    %105 = arith.subf %86, %104 : vector<16x32xf32>
    %106 = math.exp %105 : vector<16x32xf32>
    %107 = vector.extract_strided_slice %106 {offsets = [0, 0], sizes = [8, 32], strides = [1, 1]} : vector<16x32xf32> to vector<8x32xf32>
    %cst_42 = arith.constant dense<0.000000e+00> : vector<32xf32>
    %108 = vector.multi_reduction <add>, %107, %cst_42 [0] : vector<8x32xf32> to vector<32xf32>
    %109 = vector.shape_cast %108 : vector<32xf32> to vector<1x32xf32>
    %110 = tpu.reciprocal %109 {approx = true} : vector<1x32xf32> -> vector<1x32xf32>
    %111 = vector.broadcast %110 : vector<1x32xf32> to vector<8x32xf32>
    %112 = arith.mulf %107, %111 : vector<8x32xf32>
    %113 = tpu.transpose %112, [1, 0] : vector<8x32xf32> -> vector<32x8xf32>
    %114 = vector.extract_strided_slice %93 {offsets = [0, 0], sizes = [8, 32], strides = [1, 1]} : vector<16x32xf32> to vector<8x32xf32>
    %cst_43 = arith.constant dense<0.000000e+00> : vector<32x32xf32>
    %115 = tpu.matmul %113, %114, %cst_43 {dimension_numbers = #tpu.dot_dimension_numbers<[1], [0], [0], [1], [0, 0, 1, 1], [], []>} : vector<32x8xf32>, vector<8x32xf32>, vector<32x32xf32> -> vector<32x32xf32>
    %116 = arith.mulf %115, %8 : vector<32x32xf32>
    %117 = vector.extract_strided_slice %101 {offsets = [0, 0], sizes = [8, 32], strides = [1, 1]} : vector<16x32xf32> to vector<8x32xf32>
    %cst_44 = arith.constant dense<0.000000e+00> : vector<8x32xf32>
    %118 = tpu.matmul %117, %116, %cst_44 {dimension_numbers = #tpu.dot_dimension_numbers<[1], [0], [0], [1], [0, 0, 1, 1], [], []>} : vector<8x32xf32>, vector<32x32xf32>, vector<8x32xf32> -> vector<8x32xf32>
    %119 = vector.extract_strided_slice %106 {offsets = [8, 0], sizes = [8, 32], strides = [1, 1]} : vector<16x32xf32> to vector<8x32xf32>
    %cst_45 = arith.constant dense<0.000000e+00> : vector<32xf32>
    %120 = vector.multi_reduction <add>, %119, %cst_45 [0] : vector<8x32xf32> to vector<32xf32>
    %121 = vector.shape_cast %120 : vector<32xf32> to vector<1x32xf32>
    %122 = tpu.reciprocal %121 {approx = true} : vector<1x32xf32> -> vector<1x32xf32>
    %123 = vector.broadcast %122 : vector<1x32xf32> to vector<8x32xf32>
    %124 = arith.mulf %119, %123 : vector<8x32xf32>
    %125 = tpu.transpose %124, [1, 0] : vector<8x32xf32> -> vector<32x8xf32>
    %126 = vector.extract_strided_slice %93 {offsets = [8, 0], sizes = [8, 32], strides = [1, 1]} : vector<16x32xf32> to vector<8x32xf32>
    %cst_46 = arith.constant dense<0.000000e+00> : vector<32x32xf32>
    %127 = tpu.matmul %125, %126, %cst_46 {dimension_numbers = #tpu.dot_dimension_numbers<[1], [0], [0], [1], [0, 0, 1, 1], [], []>} : vector<32x8xf32>, vector<8x32xf32>, vector<32x32xf32> -> vector<32x32xf32>
    %128 = arith.mulf %127, %8 : vector<32x32xf32>
    %129 = vector.extract_strided_slice %101 {offsets = [8, 0], sizes = [8, 32], strides = [1, 1]} : vector<16x32xf32> to vector<8x32xf32>
    %cst_47 = arith.constant dense<0.000000e+00> : vector<8x32xf32>
    %130 = tpu.matmul %129, %128, %cst_47 {dimension_numbers = #tpu.dot_dimension_numbers<[1], [0], [0], [1], [0, 0, 1, 1], [], []>} : vector<8x32xf32>, vector<32x32xf32>, vector<8x32xf32> -> vector<8x32xf32>
    %131 = tpu.concatenate %118, %130 in 0 : vector<8x32xf32>, vector<8x32xf32> -> vector<16x32xf32>
    %132 = vector.extract_strided_slice %27 {offsets = [0, 0], sizes = [16, 32], strides = [1, 1]} : vector<16x128xf32> to vector<16x32xf32>
    %133 = vector.extract_strided_slice %27 {offsets = [0, 32], sizes = [16, 32], strides = [1, 1]} : vector<16x128xf32> to vector<16x32xf32>
    %134 = vector.extract_strided_slice %38 {offsets = [0, 0], sizes = [1, 32], strides = [1, 1]} : vector<12x32xf32> to vector<1x32xf32>
    %135 = vector.extract_strided_slice %38 {offsets = [1, 0], sizes = [1, 32], strides = [1, 1]} : vector<12x32xf32> to vector<1x32xf32>
    %cst_48 = arith.constant dense<0.000000e+00> : vector<16xf32>
    %136 = vector.multi_reduction <add>, %131, %cst_48 [1] : vector<16x32xf32> to vector<16xf32>
    %137 = vector.shape_cast %136 : vector<16xf32> to vector<16x1xf32>
    %cst_49 = arith.constant 3.200000e+01 : f32
    %138 = vector.broadcast %cst_49 : f32 to vector<16x1xf32>
    %139 = arith.divf %137, %138 : vector<16x1xf32>
    %140 = vector.broadcast %139 : vector<16x1xf32> to vector<16x32xf32>
    %141 = arith.subf %131, %140 : vector<16x32xf32>
    %142 = arith.mulf %141, %141 : vector<16x32xf32>
    %cst_50 = arith.constant dense<0.000000e+00> : vector<16xf32>
    %143 = vector.multi_reduction <add>, %142, %cst_50 [1] : vector<16x32xf32> to vector<16xf32>
    %144 = vector.shape_cast %143 : vector<16xf32> to vector<16x1xf32>
    %cst_51 = arith.constant 3.200000e+01 : f32
    %145 = vector.broadcast %cst_51 : f32 to vector<16x1xf32>
    %146 = arith.divf %144, %145 : vector<16x1xf32>
    %cst_52 = arith.constant 9.99999974E-6 : f32
    %147 = vector.broadcast %cst_52 : f32 to vector<16x1xf32>
    %148 = arith.addf %146, %147 : vector<16x1xf32>
    %149 = math.rsqrt %148 : vector<16x1xf32>
    %150 = vector.broadcast %149 : vector<16x1xf32> to vector<16x32xf32>
    %151 = arith.mulf %141, %150 : vector<16x32xf32>
    %152 = vector.broadcast %134 : vector<1x32xf32> to vector<16x32xf32>
    %153 = arith.mulf %151, %152 : vector<16x32xf32>
    %154 = vector.broadcast %135 : vector<1x32xf32> to vector<16x32xf32>
    %155 = arith.addf %153, %154 : vector<16x32xf32>
    %cst_53 = arith.constant 1.000000e+00 : f32
    %156 = vector.broadcast %cst_53 : f32 to vector<16x32xf32>
    %157 = arith.addf %156, %132 : vector<16x32xf32>
    %158 = arith.mulf %155, %157 : vector<16x32xf32>
    %159 = arith.addf %158, %133 : vector<16x32xf32>
    %160 = arith.negf %159 : vector<16x32xf32>
    %161 = math.exp %160 : vector<16x32xf32>
    %cst_54 = arith.constant 1.000000e+00 : f32
    %162 = vector.broadcast %cst_54 : f32 to vector<16x32xf32>
    %163 = arith.addf %162, %161 : vector<16x32xf32>
    %164 = arith.divf %162, %163 : vector<16x32xf32>
    %165 = arith.mulf %159, %164 : vector<16x32xf32>
    %166 = vector.extract_strided_slice %39 {offsets = [0, 0], sizes = [32, 32], strides = [1, 1]} : vector<192x32xf32> to vector<32x32xf32>
    %cst_55 = arith.constant dense<0.000000e+00> : vector<16x32xf32>
    %167 = tpu.matmul %165, %166, %cst_55 {dimension_numbers = #tpu.dot_dimension_numbers<[1], [0], [0], [1], [0, 0, 1, 1], [], []>} : vector<16x32xf32>, vector<32x32xf32>, vector<16x32xf32> -> vector<16x32xf32>
    %168 = vector.extract_strided_slice %40 {offsets = [0, 0], sizes = [1, 32], strides = [1, 1]} : vector<6x32xf32> to vector<1x32xf32>
    %169 = vector.broadcast %168 : vector<1x32xf32> to vector<16x32xf32>
    %170 = arith.addf %167, %169 : vector<16x32xf32>
    %171 = arith.addf %49, %170 : vector<16x32xf32>
    %c888 = arith.constant 888 : index
    %c0_56 = arith.constant 0 : index
    %172 = vector.load %arg1[%c888, %c0_56] : memref<1888x128xf32, #tpu.memory_space<vmem>>, vector<2x32xf32>
    %c896 = arith.constant 896 : index
    %c0_57 = arith.constant 0 : index
    %173 = vector.load %arg1[%c896, %c0_57] : memref<1888x128xf32, #tpu.memory_space<vmem>>, vector<2x128xf32>
    %c936 = arith.constant 936 : index
    %c0_58 = arith.constant 0 : index
    %174 = vector.load %arg1[%c936, %c0_58] : memref<1888x128xf32, #tpu.memory_space<vmem>>, vector<256x32xf32>
    %c1192 = arith.constant 1192 : index
    %c0_59 = arith.constant 0 : index
    %175 = vector.load %arg1[%c1192, %c0_59] : memref<1888x128xf32, #tpu.memory_space<vmem>>, vector<3x32xf32>
    %176 = vector.extract_strided_slice %172 {offsets = [0, 0], sizes = [1, 32], strides = [1, 1]} : vector<2x32xf32> to vector<1x32xf32>
    %177 = vector.extract_strided_slice %172 {offsets = [1, 0], sizes = [1, 32], strides = [1, 1]} : vector<2x32xf32> to vector<1x32xf32>
    %cst_60 = arith.constant dense<0.000000e+00> : vector<16xf32>
    %178 = vector.multi_reduction <add>, %171, %cst_60 [1] : vector<16x32xf32> to vector<16xf32>
    %179 = vector.shape_cast %178 : vector<16xf32> to vector<16x1xf32>
    %cst_61 = arith.constant 3.200000e+01 : f32
    %180 = vector.broadcast %cst_61 : f32 to vector<16x1xf32>
    %181 = arith.divf %179, %180 : vector<16x1xf32>
    %182 = vector.broadcast %181 : vector<16x1xf32> to vector<16x32xf32>
    %183 = arith.subf %171, %182 : vector<16x32xf32>
    %184 = arith.mulf %183, %183 : vector<16x32xf32>
    %cst_62 = arith.constant dense<0.000000e+00> : vector<16xf32>
    %185 = vector.multi_reduction <add>, %184, %cst_62 [1] : vector<16x32xf32> to vector<16xf32>
    %186 = vector.shape_cast %185 : vector<16xf32> to vector<16x1xf32>
    %cst_63 = arith.constant 3.200000e+01 : f32
    %187 = vector.broadcast %cst_63 : f32 to vector<16x1xf32>
    %188 = arith.divf %186, %187 : vector<16x1xf32>
    %cst_64 = arith.constant 9.99999974E-6 : f32
    %189 = vector.broadcast %cst_64 : f32 to vector<16x1xf32>
    %190 = arith.addf %188, %189 : vector<16x1xf32>
    %191 = math.rsqrt %190 : vector<16x1xf32>
    %192 = vector.broadcast %191 : vector<16x1xf32> to vector<16x32xf32>
    %193 = arith.mulf %183, %192 : vector<16x32xf32>
    %194 = vector.broadcast %176 : vector<1x32xf32> to vector<16x32xf32>
    %195 = arith.mulf %193, %194 : vector<16x32xf32>
    %196 = vector.broadcast %177 : vector<1x32xf32> to vector<16x32xf32>
    %197 = arith.addf %195, %196 : vector<16x32xf32>
    %198 = vector.extract_strided_slice %173 {offsets = [0, 0], sizes = [1, 128], strides = [1, 1]} : vector<2x128xf32> to vector<1x128xf32>
    %199 = vector.extract_strided_slice %173 {offsets = [1, 0], sizes = [1, 128], strides = [1, 1]} : vector<2x128xf32> to vector<1x128xf32>
    %cst_65 = arith.constant dense<0.000000e+00> : vector<16xf32>
    %200 = vector.multi_reduction <add>, %15, %cst_65 [1] : vector<16x128xf32> to vector<16xf32>
    %201 = vector.shape_cast %200 : vector<16xf32> to vector<16x1xf32>
    %cst_66 = arith.constant 1.280000e+02 : f32
    %202 = vector.broadcast %cst_66 : f32 to vector<16x1xf32>
    %203 = arith.divf %201, %202 : vector<16x1xf32>
    %204 = vector.broadcast %203 : vector<16x1xf32> to vector<16x128xf32>
    %205 = arith.subf %15, %204 : vector<16x128xf32>
    %206 = arith.mulf %205, %205 : vector<16x128xf32>
    %cst_67 = arith.constant dense<0.000000e+00> : vector<16xf32>
    %207 = vector.multi_reduction <add>, %206, %cst_67 [1] : vector<16x128xf32> to vector<16xf32>
    %208 = vector.shape_cast %207 : vector<16xf32> to vector<16x1xf32>
    %cst_68 = arith.constant 1.280000e+02 : f32
    %209 = vector.broadcast %cst_68 : f32 to vector<16x1xf32>
    %210 = arith.divf %208, %209 : vector<16x1xf32>
    %cst_69 = arith.constant 9.99999974E-6 : f32
    %211 = vector.broadcast %cst_69 : f32 to vector<16x1xf32>
    %212 = arith.addf %210, %211 : vector<16x1xf32>
    %213 = math.rsqrt %212 : vector<16x1xf32>
    %214 = vector.broadcast %213 : vector<16x1xf32> to vector<16x128xf32>
    %215 = arith.mulf %205, %214 : vector<16x128xf32>
    %216 = vector.broadcast %198 : vector<1x128xf32> to vector<16x128xf32>
    %217 = arith.mulf %215, %216 : vector<16x128xf32>
    %218 = vector.broadcast %199 : vector<1x128xf32> to vector<16x128xf32>
    %219 = arith.addf %217, %218 : vector<16x128xf32>
    %c904 = arith.constant 904 : index
    %c0_70 = arith.constant 0 : index
    %220 = vector.load %arg1[%c904, %c0_70] : memref<1888x128xf32, #tpu.memory_space<vmem>>, vector<32x32xf32>
    %cst_71 = arith.constant dense<0.000000e+00> : vector<16x32xf32>
    %221 = tpu.matmul %197, %220, %cst_71 {dimension_numbers = #tpu.dot_dimension_numbers<[1], [0], [0], [1], [0, 0, 1, 1], [], []>} : vector<16x32xf32>, vector<32x32xf32>, vector<16x32xf32> -> vector<16x32xf32>
    %222 = vector.extract_strided_slice %175 {offsets = [0, 0], sizes = [1, 32], strides = [1, 1]} : vector<3x32xf32> to vector<1x32xf32>
    %223 = vector.broadcast %222 : vector<1x32xf32> to vector<16x32xf32>
    %224 = arith.addf %221, %223 : vector<16x32xf32>
    %225 = vector.extract_strided_slice %174 {offsets = [0, 0], sizes = [128, 32], strides = [1, 1]} : vector<256x32xf32> to vector<128x32xf32>
    %cst_72 = arith.constant dense<0.000000e+00> : vector<16x32xf32>
    %226 = tpu.matmul %219, %225, %cst_72 {dimension_numbers = #tpu.dot_dimension_numbers<[1], [0], [0], [1], [0, 0, 1, 1], [], []>} : vector<16x128xf32>, vector<128x32xf32>, vector<16x32xf32> -> vector<16x32xf32>
    %227 = vector.extract_strided_slice %175 {offsets = [1, 0], sizes = [1, 32], strides = [1, 1]} : vector<3x32xf32> to vector<1x32xf32>
    %228 = vector.broadcast %227 : vector<1x32xf32> to vector<16x32xf32>
    %229 = arith.addf %226, %228 : vector<16x32xf32>
    %230 = vector.extract_strided_slice %174 {offsets = [128, 0], sizes = [128, 32], strides = [1, 1]} : vector<256x32xf32> to vector<128x32xf32>
    %cst_73 = arith.constant dense<0.000000e+00> : vector<16x32xf32>
    %231 = tpu.matmul %219, %230, %cst_73 {dimension_numbers = #tpu.dot_dimension_numbers<[1], [0], [0], [1], [0, 0, 1, 1], [], []>} : vector<16x128xf32>, vector<128x32xf32>, vector<16x32xf32> -> vector<16x32xf32>
    %232 = vector.extract_strided_slice %175 {offsets = [2, 0], sizes = [1, 32], strides = [1, 1]} : vector<3x32xf32> to vector<1x32xf32>
    %233 = vector.broadcast %232 : vector<1x32xf32> to vector<16x32xf32>
    %234 = arith.addf %231, %233 : vector<16x32xf32>
    %cst_74 = arith.constant dense<0xFF800000> : vector<16xf32>
    %235 = vector.multi_reduction <maximumf>, %224, %cst_74 [1] : vector<16x32xf32> to vector<16xf32>
    %236 = vector.shape_cast %235 : vector<16xf32> to vector<16x1xf32>
    %237 = vector.broadcast %236 : vector<16x1xf32> to vector<16x32xf32>
    %238 = arith.subf %224, %237 : vector<16x32xf32>
    %239 = math.exp %238 : vector<16x32xf32>
    %cst_75 = arith.constant dense<0.000000e+00> : vector<16x32xf32>
    %240 = tpu.matmul %239, %8, %cst_75 {dimension_numbers = #tpu.dot_dimension_numbers<[1], [0], [0], [1], [0, 0, 1, 1], [], []>} : vector<16x32xf32>, vector<32x32xf32>, vector<16x32xf32> -> vector<16x32xf32>
    %241 = tpu.reciprocal %240 {approx = true} : vector<16x32xf32> -> vector<16x32xf32>
    %242 = arith.mulf %239, %241 : vector<16x32xf32>
    %cst_76 = arith.constant dense<0xFF800000> : vector<32xf32>
    %243 = vector.multi_reduction <maximumf>, %229, %cst_76 [0] : vector<16x32xf32> to vector<32xf32>
    %244 = vector.shape_cast %243 : vector<32xf32> to vector<1x32xf32>
    %245 = vector.broadcast %244 : vector<1x32xf32> to vector<16x32xf32>
    %246 = arith.subf %229, %245 : vector<16x32xf32>
    %247 = math.exp %246 : vector<16x32xf32>
    %248 = vector.extract_strided_slice %247 {offsets = [0, 0], sizes = [8, 32], strides = [1, 1]} : vector<16x32xf32> to vector<8x32xf32>
    %cst_77 = arith.constant dense<0.000000e+00> : vector<32xf32>
    %249 = vector.multi_reduction <add>, %248, %cst_77 [0] : vector<8x32xf32> to vector<32xf32>
    %250 = vector.shape_cast %249 : vector<32xf32> to vector<1x32xf32>
    %251 = tpu.reciprocal %250 {approx = true} : vector<1x32xf32> -> vector<1x32xf32>
    %252 = vector.broadcast %251 : vector<1x32xf32> to vector<8x32xf32>
    %253 = arith.mulf %248, %252 : vector<8x32xf32>
    %254 = tpu.transpose %253, [1, 0] : vector<8x32xf32> -> vector<32x8xf32>
    %255 = vector.extract_strided_slice %234 {offsets = [0, 0], sizes = [8, 32], strides = [1, 1]} : vector<16x32xf32> to vector<8x32xf32>
    %cst_78 = arith.constant dense<0.000000e+00> : vector<32x32xf32>
    %256 = tpu.matmul %254, %255, %cst_78 {dimension_numbers = #tpu.dot_dimension_numbers<[1], [0], [0], [1], [0, 0, 1, 1], [], []>} : vector<32x8xf32>, vector<8x32xf32>, vector<32x32xf32> -> vector<32x32xf32>
    %257 = arith.mulf %256, %8 : vector<32x32xf32>
    %258 = vector.extract_strided_slice %242 {offsets = [0, 0], sizes = [8, 32], strides = [1, 1]} : vector<16x32xf32> to vector<8x32xf32>
    %cst_79 = arith.constant dense<0.000000e+00> : vector<8x32xf32>
    %259 = tpu.matmul %258, %257, %cst_79 {dimension_numbers = #tpu.dot_dimension_numbers<[1], [0], [0], [1], [0, 0, 1, 1], [], []>} : vector<8x32xf32>, vector<32x32xf32>, vector<8x32xf32> -> vector<8x32xf32>
    %260 = vector.extract_strided_slice %247 {offsets = [8, 0], sizes = [8, 32], strides = [1, 1]} : vector<16x32xf32> to vector<8x32xf32>
    %cst_80 = arith.constant dense<0.000000e+00> : vector<32xf32>
    %261 = vector.multi_reduction <add>, %260, %cst_80 [0] : vector<8x32xf32> to vector<32xf32>
    %262 = vector.shape_cast %261 : vector<32xf32> to vector<1x32xf32>
    %263 = tpu.reciprocal %262 {approx = true} : vector<1x32xf32> -> vector<1x32xf32>
    %264 = vector.broadcast %263 : vector<1x32xf32> to vector<8x32xf32>
    %265 = arith.mulf %260, %264 : vector<8x32xf32>
    %266 = tpu.transpose %265, [1, 0] : vector<8x32xf32> -> vector<32x8xf32>
    %267 = vector.extract_strided_slice %234 {offsets = [8, 0], sizes = [8, 32], strides = [1, 1]} : vector<16x32xf32> to vector<8x32xf32>
    %cst_81 = arith.constant dense<0.000000e+00> : vector<32x32xf32>
    %268 = tpu.matmul %266, %267, %cst_81 {dimension_numbers = #tpu.dot_dimension_numbers<[1], [0], [0], [1], [0, 0, 1, 1], [], []>} : vector<32x8xf32>, vector<8x32xf32>, vector<32x32xf32> -> vector<32x32xf32>
    %269 = arith.mulf %268, %8 : vector<32x32xf32>
    %270 = vector.extract_strided_slice %242 {offsets = [8, 0], sizes = [8, 32], strides = [1, 1]} : vector<16x32xf32> to vector<8x32xf32>
    %cst_82 = arith.constant dense<0.000000e+00> : vector<8x32xf32>
    %271 = tpu.matmul %270, %269, %cst_82 {dimension_numbers = #tpu.dot_dimension_numbers<[1], [0], [0], [1], [0, 0, 1, 1], [], []>} : vector<8x32xf32>, vector<32x32xf32>, vector<8x32xf32> -> vector<8x32xf32>
    %272 = tpu.concatenate %259, %271 in 0 : vector<8x32xf32>, vector<8x32xf32> -> vector<16x32xf32>
    %273 = vector.extract_strided_slice %27 {offsets = [0, 64], sizes = [16, 32], strides = [1, 1]} : vector<16x128xf32> to vector<16x32xf32>
    %274 = vector.extract_strided_slice %27 {offsets = [0, 96], sizes = [16, 32], strides = [1, 1]} : vector<16x128xf32> to vector<16x32xf32>
    %275 = vector.extract_strided_slice %38 {offsets = [2, 0], sizes = [1, 32], strides = [1, 1]} : vector<12x32xf32> to vector<1x32xf32>
    %276 = vector.extract_strided_slice %38 {offsets = [3, 0], sizes = [1, 32], strides = [1, 1]} : vector<12x32xf32> to vector<1x32xf32>
    %cst_83 = arith.constant dense<0.000000e+00> : vector<16xf32>
    %277 = vector.multi_reduction <add>, %272, %cst_83 [1] : vector<16x32xf32> to vector<16xf32>
    %278 = vector.shape_cast %277 : vector<16xf32> to vector<16x1xf32>
    %cst_84 = arith.constant 3.200000e+01 : f32
    %279 = vector.broadcast %cst_84 : f32 to vector<16x1xf32>
    %280 = arith.divf %278, %279 : vector<16x1xf32>
    %281 = vector.broadcast %280 : vector<16x1xf32> to vector<16x32xf32>
    %282 = arith.subf %272, %281 : vector<16x32xf32>
    %283 = arith.mulf %282, %282 : vector<16x32xf32>
    %cst_85 = arith.constant dense<0.000000e+00> : vector<16xf32>
    %284 = vector.multi_reduction <add>, %283, %cst_85 [1] : vector<16x32xf32> to vector<16xf32>
    %285 = vector.shape_cast %284 : vector<16xf32> to vector<16x1xf32>
    %cst_86 = arith.constant 3.200000e+01 : f32
    %286 = vector.broadcast %cst_86 : f32 to vector<16x1xf32>
    %287 = arith.divf %285, %286 : vector<16x1xf32>
    %cst_87 = arith.constant 9.99999974E-6 : f32
    %288 = vector.broadcast %cst_87 : f32 to vector<16x1xf32>
    %289 = arith.addf %287, %288 : vector<16x1xf32>
    %290 = math.rsqrt %289 : vector<16x1xf32>
    %291 = vector.broadcast %290 : vector<16x1xf32> to vector<16x32xf32>
    %292 = arith.mulf %282, %291 : vector<16x32xf32>
    %293 = vector.broadcast %275 : vector<1x32xf32> to vector<16x32xf32>
    %294 = arith.mulf %292, %293 : vector<16x32xf32>
    %295 = vector.broadcast %276 : vector<1x32xf32> to vector<16x32xf32>
    %296 = arith.addf %294, %295 : vector<16x32xf32>
    %cst_88 = arith.constant 1.000000e+00 : f32
    %297 = vector.broadcast %cst_88 : f32 to vector<16x32xf32>
    %298 = arith.addf %297, %273 : vector<16x32xf32>
    %299 = arith.mulf %296, %298 : vector<16x32xf32>
    %300 = arith.addf %299, %274 : vector<16x32xf32>
    %301 = arith.negf %300 : vector<16x32xf32>
    %302 = math.exp %301 : vector<16x32xf32>
    %cst_89 = arith.constant 1.000000e+00 : f32
    %303 = vector.broadcast %cst_89 : f32 to vector<16x32xf32>
    %304 = arith.addf %303, %302 : vector<16x32xf32>
    %305 = arith.divf %303, %304 : vector<16x32xf32>
    %306 = arith.mulf %300, %305 : vector<16x32xf32>
    %307 = vector.extract_strided_slice %39 {offsets = [32, 0], sizes = [32, 32], strides = [1, 1]} : vector<192x32xf32> to vector<32x32xf32>
    %cst_90 = arith.constant dense<0.000000e+00> : vector<16x32xf32>
    %308 = tpu.matmul %306, %307, %cst_90 {dimension_numbers = #tpu.dot_dimension_numbers<[1], [0], [0], [1], [0, 0, 1, 1], [], []>} : vector<16x32xf32>, vector<32x32xf32>, vector<16x32xf32> -> vector<16x32xf32>
    %309 = vector.extract_strided_slice %40 {offsets = [1, 0], sizes = [1, 32], strides = [1, 1]} : vector<6x32xf32> to vector<1x32xf32>
    %310 = vector.broadcast %309 : vector<1x32xf32> to vector<16x32xf32>
    %311 = arith.addf %308, %310 : vector<16x32xf32>
    %312 = arith.addf %171, %311 : vector<16x32xf32>
    %c1200 = arith.constant 1200 : index
    %c0_91 = arith.constant 0 : index
    %313 = vector.load %arg1[%c1200, %c0_91] : memref<1888x128xf32, #tpu.memory_space<vmem>>, vector<32x64xf32>
    %cst_92 = arith.constant dense<0.000000e+00> : vector<16x64xf32>
    %314 = tpu.matmul %312, %313, %cst_92 {dimension_numbers = #tpu.dot_dimension_numbers<[1], [0], [0], [1], [0, 0, 1, 1], [], []>} : vector<16x32xf32>, vector<32x64xf32>, vector<16x64xf32> -> vector<16x64xf32>
    %c1232 = arith.constant 1232 : index
    %c0_93 = arith.constant 0 : index
    %315 = vector.load %arg1[%c1232, %c0_93] : memref<1888x128xf32, #tpu.memory_space<vmem>>, vector<1x64xf32>
    %316 = vector.broadcast %315 : vector<1x64xf32> to vector<16x64xf32>
    %317 = arith.addf %314, %316 : vector<16x64xf32>
    %cst_94 = arith.constant 5.000000e-01 : f32
    %318 = vector.broadcast %cst_94 : f32 to vector<16x64xf32>
    %319 = arith.mulf %318, %317 : vector<16x64xf32>
    %cst_95 = arith.constant 4.471500e-02 : f32
    %320 = vector.broadcast %cst_95 : f32 to vector<16x64xf32>
    %321 = arith.mulf %320, %317 : vector<16x64xf32>
    %322 = arith.mulf %321, %317 : vector<16x64xf32>
    %323 = arith.mulf %322, %317 : vector<16x64xf32>
    %324 = arith.addf %317, %323 : vector<16x64xf32>
    %cst_96 = arith.constant 0.797884583 : f32
    %325 = vector.broadcast %cst_96 : f32 to vector<16x64xf32>
    %326 = arith.mulf %325, %324 : vector<16x64xf32>
    %327 = math.tanh %326 : vector<16x64xf32>
    %cst_97 = arith.constant 1.000000e+00 : f32
    %328 = vector.broadcast %cst_97 : f32 to vector<16x64xf32>
    %329 = arith.addf %328, %327 : vector<16x64xf32>
    %330 = arith.mulf %319, %329 : vector<16x64xf32>
    %c1240 = arith.constant 1240 : index
    %c0_98 = arith.constant 0 : index
    %331 = vector.load %arg1[%c1240, %c0_98] : memref<1888x128xf32, #tpu.memory_space<vmem>>, vector<64x32xf32>
    %cst_99 = arith.constant dense<0.000000e+00> : vector<16x32xf32>
    %332 = tpu.matmul %330, %331, %cst_99 {dimension_numbers = #tpu.dot_dimension_numbers<[1], [0], [0], [1], [0, 0, 1, 1], [], []>} : vector<16x64xf32>, vector<64x32xf32>, vector<16x32xf32> -> vector<16x32xf32>
    %c1304 = arith.constant 1304 : index
    %c0_100 = arith.constant 0 : index
    %333 = vector.load %arg1[%c1304, %c0_100] : memref<1888x128xf32, #tpu.memory_space<vmem>>, vector<1x32xf32>
    %334 = vector.broadcast %333 : vector<1x32xf32> to vector<16x32xf32>
    %335 = arith.addf %332, %334 : vector<16x32xf32>
    %336 = vector.extract_strided_slice %32 {offsets = [0, 0], sizes = [16, 32], strides = [1, 1]} : vector<16x128xf32> to vector<16x32xf32>
    %337 = vector.extract_strided_slice %32 {offsets = [0, 32], sizes = [16, 32], strides = [1, 1]} : vector<16x128xf32> to vector<16x32xf32>
    %338 = vector.extract_strided_slice %38 {offsets = [4, 0], sizes = [1, 32], strides = [1, 1]} : vector<12x32xf32> to vector<1x32xf32>
    %339 = vector.extract_strided_slice %38 {offsets = [5, 0], sizes = [1, 32], strides = [1, 1]} : vector<12x32xf32> to vector<1x32xf32>
    %cst_101 = arith.constant dense<0.000000e+00> : vector<16xf32>
    %340 = vector.multi_reduction <add>, %335, %cst_101 [1] : vector<16x32xf32> to vector<16xf32>
    %341 = vector.shape_cast %340 : vector<16xf32> to vector<16x1xf32>
    %cst_102 = arith.constant 3.200000e+01 : f32
    %342 = vector.broadcast %cst_102 : f32 to vector<16x1xf32>
    %343 = arith.divf %341, %342 : vector<16x1xf32>
    %344 = vector.broadcast %343 : vector<16x1xf32> to vector<16x32xf32>
    %345 = arith.subf %335, %344 : vector<16x32xf32>
    %346 = arith.mulf %345, %345 : vector<16x32xf32>
    %cst_103 = arith.constant dense<0.000000e+00> : vector<16xf32>
    %347 = vector.multi_reduction <add>, %346, %cst_103 [1] : vector<16x32xf32> to vector<16xf32>
    %348 = vector.shape_cast %347 : vector<16xf32> to vector<16x1xf32>
    %cst_104 = arith.constant 3.200000e+01 : f32
    %349 = vector.broadcast %cst_104 : f32 to vector<16x1xf32>
    %350 = arith.divf %348, %349 : vector<16x1xf32>
    %cst_105 = arith.constant 9.99999974E-6 : f32
    %351 = vector.broadcast %cst_105 : f32 to vector<16x1xf32>
    %352 = arith.addf %350, %351 : vector<16x1xf32>
    %353 = math.rsqrt %352 : vector<16x1xf32>
    %354 = vector.broadcast %353 : vector<16x1xf32> to vector<16x32xf32>
    %355 = arith.mulf %345, %354 : vector<16x32xf32>
    %356 = vector.broadcast %338 : vector<1x32xf32> to vector<16x32xf32>
    %357 = arith.mulf %355, %356 : vector<16x32xf32>
    %358 = vector.broadcast %339 : vector<1x32xf32> to vector<16x32xf32>
    %359 = arith.addf %357, %358 : vector<16x32xf32>
    %cst_106 = arith.constant 1.000000e+00 : f32
    %360 = vector.broadcast %cst_106 : f32 to vector<16x32xf32>
    %361 = arith.addf %360, %336 : vector<16x32xf32>
    %362 = arith.mulf %359, %361 : vector<16x32xf32>
    %363 = arith.addf %362, %337 : vector<16x32xf32>
    %364 = arith.negf %363 : vector<16x32xf32>
    %365 = math.exp %364 : vector<16x32xf32>
    %cst_107 = arith.constant 1.000000e+00 : f32
    %366 = vector.broadcast %cst_107 : f32 to vector<16x32xf32>
    %367 = arith.addf %366, %365 : vector<16x32xf32>
    %368 = arith.divf %366, %367 : vector<16x32xf32>
    %369 = arith.mulf %363, %368 : vector<16x32xf32>
    %370 = vector.extract_strided_slice %39 {offsets = [64, 0], sizes = [32, 32], strides = [1, 1]} : vector<192x32xf32> to vector<32x32xf32>
    %cst_108 = arith.constant dense<0.000000e+00> : vector<16x32xf32>
    %371 = tpu.matmul %369, %370, %cst_108 {dimension_numbers = #tpu.dot_dimension_numbers<[1], [0], [0], [1], [0, 0, 1, 1], [], []>} : vector<16x32xf32>, vector<32x32xf32>, vector<16x32xf32> -> vector<16x32xf32>
    %372 = vector.extract_strided_slice %40 {offsets = [2, 0], sizes = [1, 32], strides = [1, 1]} : vector<6x32xf32> to vector<1x32xf32>
    %373 = vector.broadcast %372 : vector<1x32xf32> to vector<16x32xf32>
    %374 = arith.addf %371, %373 : vector<16x32xf32>
    %375 = arith.addf %312, %374 : vector<16x32xf32>
    %c1312 = arith.constant 1312 : index
    %c0_109 = arith.constant 0 : index
    %376 = vector.load %arg1[%c1312, %c0_109] : memref<1888x128xf32, #tpu.memory_space<vmem>>, vector<2x32xf32>
    %c1320 = arith.constant 1320 : index
    %c0_110 = arith.constant 0 : index
    %377 = vector.load %arg1[%c1320, %c0_110] : memref<1888x128xf32, #tpu.memory_space<vmem>>, vector<96x32xf32>
    %c1416 = arith.constant 1416 : index
    %c0_111 = arith.constant 0 : index
    %378 = vector.load %arg1[%c1416, %c0_111] : memref<1888x128xf32, #tpu.memory_space<vmem>>, vector<3x32xf32>
    %379 = vector.extract_strided_slice %376 {offsets = [0, 0], sizes = [1, 32], strides = [1, 1]} : vector<2x32xf32> to vector<1x32xf32>
    %380 = vector.extract_strided_slice %376 {offsets = [1, 0], sizes = [1, 32], strides = [1, 1]} : vector<2x32xf32> to vector<1x32xf32>
    %cst_112 = arith.constant dense<0.000000e+00> : vector<16xf32>
    %381 = vector.multi_reduction <add>, %375, %cst_112 [1] : vector<16x32xf32> to vector<16xf32>
    %382 = vector.shape_cast %381 : vector<16xf32> to vector<16x1xf32>
    %cst_113 = arith.constant 3.200000e+01 : f32
    %383 = vector.broadcast %cst_113 : f32 to vector<16x1xf32>
    %384 = arith.divf %382, %383 : vector<16x1xf32>
    %385 = vector.broadcast %384 : vector<16x1xf32> to vector<16x32xf32>
    %386 = arith.subf %375, %385 : vector<16x32xf32>
    %387 = arith.mulf %386, %386 : vector<16x32xf32>
    %cst_114 = arith.constant dense<0.000000e+00> : vector<16xf32>
    %388 = vector.multi_reduction <add>, %387, %cst_114 [1] : vector<16x32xf32> to vector<16xf32>
    %389 = vector.shape_cast %388 : vector<16xf32> to vector<16x1xf32>
    %cst_115 = arith.constant 3.200000e+01 : f32
    %390 = vector.broadcast %cst_115 : f32 to vector<16x1xf32>
    %391 = arith.divf %389, %390 : vector<16x1xf32>
    %cst_116 = arith.constant 9.99999974E-6 : f32
    %392 = vector.broadcast %cst_116 : f32 to vector<16x1xf32>
    %393 = arith.addf %391, %392 : vector<16x1xf32>
    %394 = math.rsqrt %393 : vector<16x1xf32>
    %395 = vector.broadcast %394 : vector<16x1xf32> to vector<16x32xf32>
    %396 = arith.mulf %386, %395 : vector<16x32xf32>
    %397 = vector.broadcast %379 : vector<1x32xf32> to vector<16x32xf32>
    %398 = arith.mulf %396, %397 : vector<16x32xf32>
    %399 = vector.broadcast %380 : vector<1x32xf32> to vector<16x32xf32>
    %400 = arith.addf %398, %399 : vector<16x32xf32>
    %401 = vector.extract_strided_slice %377 {offsets = [0, 0], sizes = [32, 32], strides = [1, 1]} : vector<96x32xf32> to vector<32x32xf32>
    %cst_117 = arith.constant dense<0.000000e+00> : vector<16x32xf32>
    %402 = tpu.matmul %400, %401, %cst_117 {dimension_numbers = #tpu.dot_dimension_numbers<[1], [0], [0], [1], [0, 0, 1, 1], [], []>} : vector<16x32xf32>, vector<32x32xf32>, vector<16x32xf32> -> vector<16x32xf32>
    %403 = vector.extract_strided_slice %378 {offsets = [0, 0], sizes = [1, 32], strides = [1, 1]} : vector<3x32xf32> to vector<1x32xf32>
    %404 = vector.broadcast %403 : vector<1x32xf32> to vector<16x32xf32>
    %405 = arith.addf %402, %404 : vector<16x32xf32>
    %406 = vector.extract_strided_slice %377 {offsets = [32, 0], sizes = [32, 32], strides = [1, 1]} : vector<96x32xf32> to vector<32x32xf32>
    %cst_118 = arith.constant dense<0.000000e+00> : vector<16x32xf32>
    %407 = tpu.matmul %400, %406, %cst_118 {dimension_numbers = #tpu.dot_dimension_numbers<[1], [0], [0], [1], [0, 0, 1, 1], [], []>} : vector<16x32xf32>, vector<32x32xf32>, vector<16x32xf32> -> vector<16x32xf32>
    %408 = vector.extract_strided_slice %378 {offsets = [1, 0], sizes = [1, 32], strides = [1, 1]} : vector<3x32xf32> to vector<1x32xf32>
    %409 = vector.broadcast %408 : vector<1x32xf32> to vector<16x32xf32>
    %410 = arith.addf %407, %409 : vector<16x32xf32>
    %411 = vector.broadcast %7 : vector<16x1xf32> to vector<16x32xf32>
    %412 = arith.addf %410, %411 : vector<16x32xf32>
    %413 = vector.extract_strided_slice %377 {offsets = [64, 0], sizes = [32, 32], strides = [1, 1]} : vector<96x32xf32> to vector<32x32xf32>
    %cst_119 = arith.constant dense<0.000000e+00> : vector<16x32xf32>
    %414 = tpu.matmul %400, %413, %cst_119 {dimension_numbers = #tpu.dot_dimension_numbers<[1], [0], [0], [1], [0, 0, 1, 1], [], []>} : vector<16x32xf32>, vector<32x32xf32>, vector<16x32xf32> -> vector<16x32xf32>
    %415 = vector.extract_strided_slice %378 {offsets = [2, 0], sizes = [1, 32], strides = [1, 1]} : vector<3x32xf32> to vector<1x32xf32>
    %416 = vector.broadcast %415 : vector<1x32xf32> to vector<16x32xf32>
    %417 = arith.addf %414, %416 : vector<16x32xf32>
    %418 = vector.broadcast %3 : vector<16x1xf32> to vector<16x32xf32>
    %419 = arith.mulf %417, %418 : vector<16x32xf32>
    %cst_120 = arith.constant dense<0xFF800000> : vector<16xf32>
    %420 = vector.multi_reduction <maximumf>, %405, %cst_120 [1] : vector<16x32xf32> to vector<16xf32>
    %421 = vector.shape_cast %420 : vector<16xf32> to vector<16x1xf32>
    %422 = vector.broadcast %421 : vector<16x1xf32> to vector<16x32xf32>
    %423 = arith.subf %405, %422 : vector<16x32xf32>
    %424 = math.exp %423 : vector<16x32xf32>
    %cst_121 = arith.constant dense<0.000000e+00> : vector<16x32xf32>
    %425 = tpu.matmul %424, %8, %cst_121 {dimension_numbers = #tpu.dot_dimension_numbers<[1], [0], [0], [1], [0, 0, 1, 1], [], []>} : vector<16x32xf32>, vector<32x32xf32>, vector<16x32xf32> -> vector<16x32xf32>
    %426 = tpu.reciprocal %425 {approx = true} : vector<16x32xf32> -> vector<16x32xf32>
    %427 = arith.mulf %424, %426 : vector<16x32xf32>
    %cst_122 = arith.constant dense<0xFF800000> : vector<32xf32>
    %428 = vector.multi_reduction <maximumf>, %412, %cst_122 [0] : vector<16x32xf32> to vector<32xf32>
    %429 = vector.shape_cast %428 : vector<32xf32> to vector<1x32xf32>
    %430 = vector.broadcast %429 : vector<1x32xf32> to vector<16x32xf32>
    %431 = arith.subf %412, %430 : vector<16x32xf32>
    %432 = math.exp %431 : vector<16x32xf32>
    %433 = vector.extract_strided_slice %432 {offsets = [0, 0], sizes = [8, 32], strides = [1, 1]} : vector<16x32xf32> to vector<8x32xf32>
    %cst_123 = arith.constant dense<0.000000e+00> : vector<32xf32>
    %434 = vector.multi_reduction <add>, %433, %cst_123 [0] : vector<8x32xf32> to vector<32xf32>
    %435 = vector.shape_cast %434 : vector<32xf32> to vector<1x32xf32>
    %436 = tpu.reciprocal %435 {approx = true} : vector<1x32xf32> -> vector<1x32xf32>
    %437 = vector.broadcast %436 : vector<1x32xf32> to vector<8x32xf32>
    %438 = arith.mulf %433, %437 : vector<8x32xf32>
    %439 = tpu.transpose %438, [1, 0] : vector<8x32xf32> -> vector<32x8xf32>
    %440 = vector.extract_strided_slice %419 {offsets = [0, 0], sizes = [8, 32], strides = [1, 1]} : vector<16x32xf32> to vector<8x32xf32>
    %cst_124 = arith.constant dense<0.000000e+00> : vector<32x32xf32>
    %441 = tpu.matmul %439, %440, %cst_124 {dimension_numbers = #tpu.dot_dimension_numbers<[1], [0], [0], [1], [0, 0, 1, 1], [], []>} : vector<32x8xf32>, vector<8x32xf32>, vector<32x32xf32> -> vector<32x32xf32>
    %442 = arith.mulf %441, %8 : vector<32x32xf32>
    %443 = vector.extract_strided_slice %427 {offsets = [0, 0], sizes = [8, 32], strides = [1, 1]} : vector<16x32xf32> to vector<8x32xf32>
    %cst_125 = arith.constant dense<0.000000e+00> : vector<8x32xf32>
    %444 = tpu.matmul %443, %442, %cst_125 {dimension_numbers = #tpu.dot_dimension_numbers<[1], [0], [0], [1], [0, 0, 1, 1], [], []>} : vector<8x32xf32>, vector<32x32xf32>, vector<8x32xf32> -> vector<8x32xf32>
    %445 = vector.extract_strided_slice %432 {offsets = [8, 0], sizes = [8, 32], strides = [1, 1]} : vector<16x32xf32> to vector<8x32xf32>
    %cst_126 = arith.constant dense<0.000000e+00> : vector<32xf32>
    %446 = vector.multi_reduction <add>, %445, %cst_126 [0] : vector<8x32xf32> to vector<32xf32>
    %447 = vector.shape_cast %446 : vector<32xf32> to vector<1x32xf32>
    %448 = tpu.reciprocal %447 {approx = true} : vector<1x32xf32> -> vector<1x32xf32>
    %449 = vector.broadcast %448 : vector<1x32xf32> to vector<8x32xf32>
    %450 = arith.mulf %445, %449 : vector<8x32xf32>
    %451 = tpu.transpose %450, [1, 0] : vector<8x32xf32> -> vector<32x8xf32>
    %452 = vector.extract_strided_slice %419 {offsets = [8, 0], sizes = [8, 32], strides = [1, 1]} : vector<16x32xf32> to vector<8x32xf32>
    %cst_127 = arith.constant dense<0.000000e+00> : vector<32x32xf32>
    %453 = tpu.matmul %451, %452, %cst_127 {dimension_numbers = #tpu.dot_dimension_numbers<[1], [0], [0], [1], [0, 0, 1, 1], [], []>} : vector<32x8xf32>, vector<8x32xf32>, vector<32x32xf32> -> vector<32x32xf32>
    %454 = arith.mulf %453, %8 : vector<32x32xf32>
    %455 = vector.extract_strided_slice %427 {offsets = [8, 0], sizes = [8, 32], strides = [1, 1]} : vector<16x32xf32> to vector<8x32xf32>
    %cst_128 = arith.constant dense<0.000000e+00> : vector<8x32xf32>
    %456 = tpu.matmul %455, %454, %cst_128 {dimension_numbers = #tpu.dot_dimension_numbers<[1], [0], [0], [1], [0, 0, 1, 1], [], []>} : vector<8x32xf32>, vector<32x32xf32>, vector<8x32xf32> -> vector<8x32xf32>
    %457 = tpu.concatenate %444, %456 in 0 : vector<8x32xf32>, vector<8x32xf32> -> vector<16x32xf32>
    %458 = vector.extract_strided_slice %32 {offsets = [0, 64], sizes = [16, 32], strides = [1, 1]} : vector<16x128xf32> to vector<16x32xf32>
    %459 = vector.extract_strided_slice %32 {offsets = [0, 96], sizes = [16, 32], strides = [1, 1]} : vector<16x128xf32> to vector<16x32xf32>
    %460 = vector.extract_strided_slice %38 {offsets = [6, 0], sizes = [1, 32], strides = [1, 1]} : vector<12x32xf32> to vector<1x32xf32>
    %461 = vector.extract_strided_slice %38 {offsets = [7, 0], sizes = [1, 32], strides = [1, 1]} : vector<12x32xf32> to vector<1x32xf32>
    %cst_129 = arith.constant dense<0.000000e+00> : vector<16xf32>
    %462 = vector.multi_reduction <add>, %457, %cst_129 [1] : vector<16x32xf32> to vector<16xf32>
    %463 = vector.shape_cast %462 : vector<16xf32> to vector<16x1xf32>
    %cst_130 = arith.constant 3.200000e+01 : f32
    %464 = vector.broadcast %cst_130 : f32 to vector<16x1xf32>
    %465 = arith.divf %463, %464 : vector<16x1xf32>
    %466 = vector.broadcast %465 : vector<16x1xf32> to vector<16x32xf32>
    %467 = arith.subf %457, %466 : vector<16x32xf32>
    %468 = arith.mulf %467, %467 : vector<16x32xf32>
    %cst_131 = arith.constant dense<0.000000e+00> : vector<16xf32>
    %469 = vector.multi_reduction <add>, %468, %cst_131 [1] : vector<16x32xf32> to vector<16xf32>
    %470 = vector.shape_cast %469 : vector<16xf32> to vector<16x1xf32>
    %cst_132 = arith.constant 3.200000e+01 : f32
    %471 = vector.broadcast %cst_132 : f32 to vector<16x1xf32>
    %472 = arith.divf %470, %471 : vector<16x1xf32>
    %cst_133 = arith.constant 9.99999974E-6 : f32
    %473 = vector.broadcast %cst_133 : f32 to vector<16x1xf32>
    %474 = arith.addf %472, %473 : vector<16x1xf32>
    %475 = math.rsqrt %474 : vector<16x1xf32>
    %476 = vector.broadcast %475 : vector<16x1xf32> to vector<16x32xf32>
    %477 = arith.mulf %467, %476 : vector<16x32xf32>
    %478 = vector.broadcast %460 : vector<1x32xf32> to vector<16x32xf32>
    %479 = arith.mulf %477, %478 : vector<16x32xf32>
    %480 = vector.broadcast %461 : vector<1x32xf32> to vector<16x32xf32>
    %481 = arith.addf %479, %480 : vector<16x32xf32>
    %cst_134 = arith.constant 1.000000e+00 : f32
    %482 = vector.broadcast %cst_134 : f32 to vector<16x32xf32>
    %483 = arith.addf %482, %458 : vector<16x32xf32>
    %484 = arith.mulf %481, %483 : vector<16x32xf32>
    %485 = arith.addf %484, %459 : vector<16x32xf32>
    %486 = arith.negf %485 : vector<16x32xf32>
    %487 = math.exp %486 : vector<16x32xf32>
    %cst_135 = arith.constant 1.000000e+00 : f32
    %488 = vector.broadcast %cst_135 : f32 to vector<16x32xf32>
    %489 = arith.addf %488, %487 : vector<16x32xf32>
    %490 = arith.divf %488, %489 : vector<16x32xf32>
    %491 = arith.mulf %485, %490 : vector<16x32xf32>
    %492 = vector.extract_strided_slice %39 {offsets = [96, 0], sizes = [32, 32], strides = [1, 1]} : vector<192x32xf32> to vector<32x32xf32>
    %cst_136 = arith.constant dense<0.000000e+00> : vector<16x32xf32>
    %493 = tpu.matmul %491, %492, %cst_136 {dimension_numbers = #tpu.dot_dimension_numbers<[1], [0], [0], [1], [0, 0, 1, 1], [], []>} : vector<16x32xf32>, vector<32x32xf32>, vector<16x32xf32> -> vector<16x32xf32>
    %494 = vector.extract_strided_slice %40 {offsets = [3, 0], sizes = [1, 32], strides = [1, 1]} : vector<6x32xf32> to vector<1x32xf32>
    %495 = vector.broadcast %494 : vector<1x32xf32> to vector<16x32xf32>
    %496 = arith.addf %493, %495 : vector<16x32xf32>
    %497 = arith.addf %375, %496 : vector<16x32xf32>
    %c1424 = arith.constant 1424 : index
    %c0_137 = arith.constant 0 : index
    %498 = vector.load %arg1[%c1424, %c0_137] : memref<1888x128xf32, #tpu.memory_space<vmem>>, vector<2x32xf32>
    %c1432 = arith.constant 1432 : index
    %c0_138 = arith.constant 0 : index
    %499 = vector.load %arg1[%c1432, %c0_138] : memref<1888x128xf32, #tpu.memory_space<vmem>>, vector<2x128xf32>
    %c1472 = arith.constant 1472 : index
    %c0_139 = arith.constant 0 : index
    %500 = vector.load %arg1[%c1472, %c0_139] : memref<1888x128xf32, #tpu.memory_space<vmem>>, vector<256x32xf32>
    %c1728 = arith.constant 1728 : index
    %c0_140 = arith.constant 0 : index
    %501 = vector.load %arg1[%c1728, %c0_140] : memref<1888x128xf32, #tpu.memory_space<vmem>>, vector<3x32xf32>
    %502 = vector.extract_strided_slice %498 {offsets = [0, 0], sizes = [1, 32], strides = [1, 1]} : vector<2x32xf32> to vector<1x32xf32>
    %503 = vector.extract_strided_slice %498 {offsets = [1, 0], sizes = [1, 32], strides = [1, 1]} : vector<2x32xf32> to vector<1x32xf32>
    %cst_141 = arith.constant dense<0.000000e+00> : vector<16xf32>
    %504 = vector.multi_reduction <add>, %497, %cst_141 [1] : vector<16x32xf32> to vector<16xf32>
    %505 = vector.shape_cast %504 : vector<16xf32> to vector<16x1xf32>
    %cst_142 = arith.constant 3.200000e+01 : f32
    %506 = vector.broadcast %cst_142 : f32 to vector<16x1xf32>
    %507 = arith.divf %505, %506 : vector<16x1xf32>
    %508 = vector.broadcast %507 : vector<16x1xf32> to vector<16x32xf32>
    %509 = arith.subf %497, %508 : vector<16x32xf32>
    %510 = arith.mulf %509, %509 : vector<16x32xf32>
    %cst_143 = arith.constant dense<0.000000e+00> : vector<16xf32>
    %511 = vector.multi_reduction <add>, %510, %cst_143 [1] : vector<16x32xf32> to vector<16xf32>
    %512 = vector.shape_cast %511 : vector<16xf32> to vector<16x1xf32>
    %cst_144 = arith.constant 3.200000e+01 : f32
    %513 = vector.broadcast %cst_144 : f32 to vector<16x1xf32>
    %514 = arith.divf %512, %513 : vector<16x1xf32>
    %cst_145 = arith.constant 9.99999974E-6 : f32
    %515 = vector.broadcast %cst_145 : f32 to vector<16x1xf32>
    %516 = arith.addf %514, %515 : vector<16x1xf32>
    %517 = math.rsqrt %516 : vector<16x1xf32>
    %518 = vector.broadcast %517 : vector<16x1xf32> to vector<16x32xf32>
    %519 = arith.mulf %509, %518 : vector<16x32xf32>
    %520 = vector.broadcast %502 : vector<1x32xf32> to vector<16x32xf32>
    %521 = arith.mulf %519, %520 : vector<16x32xf32>
    %522 = vector.broadcast %503 : vector<1x32xf32> to vector<16x32xf32>
    %523 = arith.addf %521, %522 : vector<16x32xf32>
    %524 = vector.extract_strided_slice %499 {offsets = [0, 0], sizes = [1, 128], strides = [1, 1]} : vector<2x128xf32> to vector<1x128xf32>
    %525 = vector.extract_strided_slice %499 {offsets = [1, 0], sizes = [1, 128], strides = [1, 1]} : vector<2x128xf32> to vector<1x128xf32>
    %cst_146 = arith.constant dense<0.000000e+00> : vector<16xf32>
    %526 = vector.multi_reduction <add>, %15, %cst_146 [1] : vector<16x128xf32> to vector<16xf32>
    %527 = vector.shape_cast %526 : vector<16xf32> to vector<16x1xf32>
    %cst_147 = arith.constant 1.280000e+02 : f32
    %528 = vector.broadcast %cst_147 : f32 to vector<16x1xf32>
    %529 = arith.divf %527, %528 : vector<16x1xf32>
    %530 = vector.broadcast %529 : vector<16x1xf32> to vector<16x128xf32>
    %531 = arith.subf %15, %530 : vector<16x128xf32>
    %532 = arith.mulf %531, %531 : vector<16x128xf32>
    %cst_148 = arith.constant dense<0.000000e+00> : vector<16xf32>
    %533 = vector.multi_reduction <add>, %532, %cst_148 [1] : vector<16x128xf32> to vector<16xf32>
    %534 = vector.shape_cast %533 : vector<16xf32> to vector<16x1xf32>
    %cst_149 = arith.constant 1.280000e+02 : f32
    %535 = vector.broadcast %cst_149 : f32 to vector<16x1xf32>
    %536 = arith.divf %534, %535 : vector<16x1xf32>
    %cst_150 = arith.constant 9.99999974E-6 : f32
    %537 = vector.broadcast %cst_150 : f32 to vector<16x1xf32>
    %538 = arith.addf %536, %537 : vector<16x1xf32>
    %539 = math.rsqrt %538 : vector<16x1xf32>
    %540 = vector.broadcast %539 : vector<16x1xf32> to vector<16x128xf32>
    %541 = arith.mulf %531, %540 : vector<16x128xf32>
    %542 = vector.broadcast %524 : vector<1x128xf32> to vector<16x128xf32>
    %543 = arith.mulf %541, %542 : vector<16x128xf32>
    %544 = vector.broadcast %525 : vector<1x128xf32> to vector<16x128xf32>
    %545 = arith.addf %543, %544 : vector<16x128xf32>
    %c1440 = arith.constant 1440 : index
    %c0_151 = arith.constant 0 : index
    %546 = vector.load %arg1[%c1440, %c0_151] : memref<1888x128xf32, #tpu.memory_space<vmem>>, vector<32x32xf32>
    %cst_152 = arith.constant dense<0.000000e+00> : vector<16x32xf32>
    %547 = tpu.matmul %523, %546, %cst_152 {dimension_numbers = #tpu.dot_dimension_numbers<[1], [0], [0], [1], [0, 0, 1, 1], [], []>} : vector<16x32xf32>, vector<32x32xf32>, vector<16x32xf32> -> vector<16x32xf32>
    %548 = vector.extract_strided_slice %501 {offsets = [0, 0], sizes = [1, 32], strides = [1, 1]} : vector<3x32xf32> to vector<1x32xf32>
    %549 = vector.broadcast %548 : vector<1x32xf32> to vector<16x32xf32>
    %550 = arith.addf %547, %549 : vector<16x32xf32>
    %551 = vector.extract_strided_slice %500 {offsets = [0, 0], sizes = [128, 32], strides = [1, 1]} : vector<256x32xf32> to vector<128x32xf32>
    %cst_153 = arith.constant dense<0.000000e+00> : vector<16x32xf32>
    %552 = tpu.matmul %545, %551, %cst_153 {dimension_numbers = #tpu.dot_dimension_numbers<[1], [0], [0], [1], [0, 0, 1, 1], [], []>} : vector<16x128xf32>, vector<128x32xf32>, vector<16x32xf32> -> vector<16x32xf32>
    %553 = vector.extract_strided_slice %501 {offsets = [1, 0], sizes = [1, 32], strides = [1, 1]} : vector<3x32xf32> to vector<1x32xf32>
    %554 = vector.broadcast %553 : vector<1x32xf32> to vector<16x32xf32>
    %555 = arith.addf %552, %554 : vector<16x32xf32>
    %556 = vector.extract_strided_slice %500 {offsets = [128, 0], sizes = [128, 32], strides = [1, 1]} : vector<256x32xf32> to vector<128x32xf32>
    %cst_154 = arith.constant dense<0.000000e+00> : vector<16x32xf32>
    %557 = tpu.matmul %545, %556, %cst_154 {dimension_numbers = #tpu.dot_dimension_numbers<[1], [0], [0], [1], [0, 0, 1, 1], [], []>} : vector<16x128xf32>, vector<128x32xf32>, vector<16x32xf32> -> vector<16x32xf32>
    %558 = vector.extract_strided_slice %501 {offsets = [2, 0], sizes = [1, 32], strides = [1, 1]} : vector<3x32xf32> to vector<1x32xf32>
    %559 = vector.broadcast %558 : vector<1x32xf32> to vector<16x32xf32>
    %560 = arith.addf %557, %559 : vector<16x32xf32>
    %cst_155 = arith.constant dense<0xFF800000> : vector<16xf32>
    %561 = vector.multi_reduction <maximumf>, %550, %cst_155 [1] : vector<16x32xf32> to vector<16xf32>
    %562 = vector.shape_cast %561 : vector<16xf32> to vector<16x1xf32>
    %563 = vector.broadcast %562 : vector<16x1xf32> to vector<16x32xf32>
    %564 = arith.subf %550, %563 : vector<16x32xf32>
    %565 = math.exp %564 : vector<16x32xf32>
    %cst_156 = arith.constant dense<0.000000e+00> : vector<16x32xf32>
    %566 = tpu.matmul %565, %8, %cst_156 {dimension_numbers = #tpu.dot_dimension_numbers<[1], [0], [0], [1], [0, 0, 1, 1], [], []>} : vector<16x32xf32>, vector<32x32xf32>, vector<16x32xf32> -> vector<16x32xf32>
    %567 = tpu.reciprocal %566 {approx = true} : vector<16x32xf32> -> vector<16x32xf32>
    %568 = arith.mulf %565, %567 : vector<16x32xf32>
    %cst_157 = arith.constant dense<0xFF800000> : vector<32xf32>
    %569 = vector.multi_reduction <maximumf>, %555, %cst_157 [0] : vector<16x32xf32> to vector<32xf32>
    %570 = vector.shape_cast %569 : vector<32xf32> to vector<1x32xf32>
    %571 = vector.broadcast %570 : vector<1x32xf32> to vector<16x32xf32>
    %572 = arith.subf %555, %571 : vector<16x32xf32>
    %573 = math.exp %572 : vector<16x32xf32>
    %574 = vector.extract_strided_slice %573 {offsets = [0, 0], sizes = [8, 32], strides = [1, 1]} : vector<16x32xf32> to vector<8x32xf32>
    %cst_158 = arith.constant dense<0.000000e+00> : vector<32xf32>
    %575 = vector.multi_reduction <add>, %574, %cst_158 [0] : vector<8x32xf32> to vector<32xf32>
    %576 = vector.shape_cast %575 : vector<32xf32> to vector<1x32xf32>
    %577 = tpu.reciprocal %576 {approx = true} : vector<1x32xf32> -> vector<1x32xf32>
    %578 = vector.broadcast %577 : vector<1x32xf32> to vector<8x32xf32>
    %579 = arith.mulf %574, %578 : vector<8x32xf32>
    %580 = tpu.transpose %579, [1, 0] : vector<8x32xf32> -> vector<32x8xf32>
    %581 = vector.extract_strided_slice %560 {offsets = [0, 0], sizes = [8, 32], strides = [1, 1]} : vector<16x32xf32> to vector<8x32xf32>
    %cst_159 = arith.constant dense<0.000000e+00> : vector<32x32xf32>
    %582 = tpu.matmul %580, %581, %cst_159 {dimension_numbers = #tpu.dot_dimension_numbers<[1], [0], [0], [1], [0, 0, 1, 1], [], []>} : vector<32x8xf32>, vector<8x32xf32>, vector<32x32xf32> -> vector<32x32xf32>
    %583 = arith.mulf %582, %8 : vector<32x32xf32>
    %584 = vector.extract_strided_slice %568 {offsets = [0, 0], sizes = [8, 32], strides = [1, 1]} : vector<16x32xf32> to vector<8x32xf32>
    %cst_160 = arith.constant dense<0.000000e+00> : vector<8x32xf32>
    %585 = tpu.matmul %584, %583, %cst_160 {dimension_numbers = #tpu.dot_dimension_numbers<[1], [0], [0], [1], [0, 0, 1, 1], [], []>} : vector<8x32xf32>, vector<32x32xf32>, vector<8x32xf32> -> vector<8x32xf32>
    %586 = vector.extract_strided_slice %573 {offsets = [8, 0], sizes = [8, 32], strides = [1, 1]} : vector<16x32xf32> to vector<8x32xf32>
    %cst_161 = arith.constant dense<0.000000e+00> : vector<32xf32>
    %587 = vector.multi_reduction <add>, %586, %cst_161 [0] : vector<8x32xf32> to vector<32xf32>
    %588 = vector.shape_cast %587 : vector<32xf32> to vector<1x32xf32>
    %589 = tpu.reciprocal %588 {approx = true} : vector<1x32xf32> -> vector<1x32xf32>
    %590 = vector.broadcast %589 : vector<1x32xf32> to vector<8x32xf32>
    %591 = arith.mulf %586, %590 : vector<8x32xf32>
    %592 = tpu.transpose %591, [1, 0] : vector<8x32xf32> -> vector<32x8xf32>
    %593 = vector.extract_strided_slice %560 {offsets = [8, 0], sizes = [8, 32], strides = [1, 1]} : vector<16x32xf32> to vector<8x32xf32>
    %cst_162 = arith.constant dense<0.000000e+00> : vector<32x32xf32>
    %594 = tpu.matmul %592, %593, %cst_162 {dimension_numbers = #tpu.dot_dimension_numbers<[1], [0], [0], [1], [0, 0, 1, 1], [], []>} : vector<32x8xf32>, vector<8x32xf32>, vector<32x32xf32> -> vector<32x32xf32>
    %595 = arith.mulf %594, %8 : vector<32x32xf32>
    %596 = vector.extract_strided_slice %568 {offsets = [8, 0], sizes = [8, 32], strides = [1, 1]} : vector<16x32xf32> to vector<8x32xf32>
    %cst_163 = arith.constant dense<0.000000e+00> : vector<8x32xf32>
    %597 = tpu.matmul %596, %595, %cst_163 {dimension_numbers = #tpu.dot_dimension_numbers<[1], [0], [0], [1], [0, 0, 1, 1], [], []>} : vector<8x32xf32>, vector<32x32xf32>, vector<8x32xf32> -> vector<8x32xf32>
    %598 = tpu.concatenate %585, %597 in 0 : vector<8x32xf32>, vector<8x32xf32> -> vector<16x32xf32>
    %599 = vector.extract_strided_slice %37 {offsets = [0, 0], sizes = [16, 32], strides = [1, 1]} : vector<16x128xf32> to vector<16x32xf32>
    %600 = vector.extract_strided_slice %37 {offsets = [0, 32], sizes = [16, 32], strides = [1, 1]} : vector<16x128xf32> to vector<16x32xf32>
    %601 = vector.extract_strided_slice %38 {offsets = [8, 0], sizes = [1, 32], strides = [1, 1]} : vector<12x32xf32> to vector<1x32xf32>
    %602 = vector.extract_strided_slice %38 {offsets = [9, 0], sizes = [1, 32], strides = [1, 1]} : vector<12x32xf32> to vector<1x32xf32>
    %cst_164 = arith.constant dense<0.000000e+00> : vector<16xf32>
    %603 = vector.multi_reduction <add>, %598, %cst_164 [1] : vector<16x32xf32> to vector<16xf32>
    %604 = vector.shape_cast %603 : vector<16xf32> to vector<16x1xf32>
    %cst_165 = arith.constant 3.200000e+01 : f32
    %605 = vector.broadcast %cst_165 : f32 to vector<16x1xf32>
    %606 = arith.divf %604, %605 : vector<16x1xf32>
    %607 = vector.broadcast %606 : vector<16x1xf32> to vector<16x32xf32>
    %608 = arith.subf %598, %607 : vector<16x32xf32>
    %609 = arith.mulf %608, %608 : vector<16x32xf32>
    %cst_166 = arith.constant dense<0.000000e+00> : vector<16xf32>
    %610 = vector.multi_reduction <add>, %609, %cst_166 [1] : vector<16x32xf32> to vector<16xf32>
    %611 = vector.shape_cast %610 : vector<16xf32> to vector<16x1xf32>
    %cst_167 = arith.constant 3.200000e+01 : f32
    %612 = vector.broadcast %cst_167 : f32 to vector<16x1xf32>
    %613 = arith.divf %611, %612 : vector<16x1xf32>
    %cst_168 = arith.constant 9.99999974E-6 : f32
    %614 = vector.broadcast %cst_168 : f32 to vector<16x1xf32>
    %615 = arith.addf %613, %614 : vector<16x1xf32>
    %616 = math.rsqrt %615 : vector<16x1xf32>
    %617 = vector.broadcast %616 : vector<16x1xf32> to vector<16x32xf32>
    %618 = arith.mulf %608, %617 : vector<16x32xf32>
    %619 = vector.broadcast %601 : vector<1x32xf32> to vector<16x32xf32>
    %620 = arith.mulf %618, %619 : vector<16x32xf32>
    %621 = vector.broadcast %602 : vector<1x32xf32> to vector<16x32xf32>
    %622 = arith.addf %620, %621 : vector<16x32xf32>
    %cst_169 = arith.constant 1.000000e+00 : f32
    %623 = vector.broadcast %cst_169 : f32 to vector<16x32xf32>
    %624 = arith.addf %623, %599 : vector<16x32xf32>
    %625 = arith.mulf %622, %624 : vector<16x32xf32>
    %626 = arith.addf %625, %600 : vector<16x32xf32>
    %627 = arith.negf %626 : vector<16x32xf32>
    %628 = math.exp %627 : vector<16x32xf32>
    %cst_170 = arith.constant 1.000000e+00 : f32
    %629 = vector.broadcast %cst_170 : f32 to vector<16x32xf32>
    %630 = arith.addf %629, %628 : vector<16x32xf32>
    %631 = arith.divf %629, %630 : vector<16x32xf32>
    %632 = arith.mulf %626, %631 : vector<16x32xf32>
    %633 = vector.extract_strided_slice %39 {offsets = [128, 0], sizes = [32, 32], strides = [1, 1]} : vector<192x32xf32> to vector<32x32xf32>
    %cst_171 = arith.constant dense<0.000000e+00> : vector<16x32xf32>
    %634 = tpu.matmul %632, %633, %cst_171 {dimension_numbers = #tpu.dot_dimension_numbers<[1], [0], [0], [1], [0, 0, 1, 1], [], []>} : vector<16x32xf32>, vector<32x32xf32>, vector<16x32xf32> -> vector<16x32xf32>
    %635 = vector.extract_strided_slice %40 {offsets = [4, 0], sizes = [1, 32], strides = [1, 1]} : vector<6x32xf32> to vector<1x32xf32>
    %636 = vector.broadcast %635 : vector<1x32xf32> to vector<16x32xf32>
    %637 = arith.addf %634, %636 : vector<16x32xf32>
    %638 = arith.addf %497, %637 : vector<16x32xf32>
    %c1736 = arith.constant 1736 : index
    %c0_172 = arith.constant 0 : index
    %639 = vector.load %arg1[%c1736, %c0_172] : memref<1888x128xf32, #tpu.memory_space<vmem>>, vector<32x64xf32>
    %cst_173 = arith.constant dense<0.000000e+00> : vector<16x64xf32>
    %640 = tpu.matmul %638, %639, %cst_173 {dimension_numbers = #tpu.dot_dimension_numbers<[1], [0], [0], [1], [0, 0, 1, 1], [], []>} : vector<16x32xf32>, vector<32x64xf32>, vector<16x64xf32> -> vector<16x64xf32>
    %c1768 = arith.constant 1768 : index
    %c0_174 = arith.constant 0 : index
    %641 = vector.load %arg1[%c1768, %c0_174] : memref<1888x128xf32, #tpu.memory_space<vmem>>, vector<1x64xf32>
    %642 = vector.broadcast %641 : vector<1x64xf32> to vector<16x64xf32>
    %643 = arith.addf %640, %642 : vector<16x64xf32>
    %cst_175 = arith.constant 5.000000e-01 : f32
    %644 = vector.broadcast %cst_175 : f32 to vector<16x64xf32>
    %645 = arith.mulf %644, %643 : vector<16x64xf32>
    %cst_176 = arith.constant 4.471500e-02 : f32
    %646 = vector.broadcast %cst_176 : f32 to vector<16x64xf32>
    %647 = arith.mulf %646, %643 : vector<16x64xf32>
    %648 = arith.mulf %647, %643 : vector<16x64xf32>
    %649 = arith.mulf %648, %643 : vector<16x64xf32>
    %650 = arith.addf %643, %649 : vector<16x64xf32>
    %cst_177 = arith.constant 0.797884583 : f32
    %651 = vector.broadcast %cst_177 : f32 to vector<16x64xf32>
    %652 = arith.mulf %651, %650 : vector<16x64xf32>
    %653 = math.tanh %652 : vector<16x64xf32>
    %cst_178 = arith.constant 1.000000e+00 : f32
    %654 = vector.broadcast %cst_178 : f32 to vector<16x64xf32>
    %655 = arith.addf %654, %653 : vector<16x64xf32>
    %656 = arith.mulf %645, %655 : vector<16x64xf32>
    %c1776 = arith.constant 1776 : index
    %c0_179 = arith.constant 0 : index
    %657 = vector.load %arg1[%c1776, %c0_179] : memref<1888x128xf32, #tpu.memory_space<vmem>>, vector<64x32xf32>
    %cst_180 = arith.constant dense<0.000000e+00> : vector<16x32xf32>
    %658 = tpu.matmul %656, %657, %cst_180 {dimension_numbers = #tpu.dot_dimension_numbers<[1], [0], [0], [1], [0, 0, 1, 1], [], []>} : vector<16x64xf32>, vector<64x32xf32>, vector<16x32xf32> -> vector<16x32xf32>
    %c1840 = arith.constant 1840 : index
    %c0_181 = arith.constant 0 : index
    %659 = vector.load %arg1[%c1840, %c0_181] : memref<1888x128xf32, #tpu.memory_space<vmem>>, vector<1x32xf32>
    %660 = vector.broadcast %659 : vector<1x32xf32> to vector<16x32xf32>
    %661 = arith.addf %658, %660 : vector<16x32xf32>
    %662 = vector.extract_strided_slice %37 {offsets = [0, 64], sizes = [16, 32], strides = [1, 1]} : vector<16x128xf32> to vector<16x32xf32>
    %663 = vector.extract_strided_slice %37 {offsets = [0, 96], sizes = [16, 32], strides = [1, 1]} : vector<16x128xf32> to vector<16x32xf32>
    %664 = vector.extract_strided_slice %38 {offsets = [10, 0], sizes = [1, 32], strides = [1, 1]} : vector<12x32xf32> to vector<1x32xf32>
    %665 = vector.extract_strided_slice %38 {offsets = [11, 0], sizes = [1, 32], strides = [1, 1]} : vector<12x32xf32> to vector<1x32xf32>
    %cst_182 = arith.constant dense<0.000000e+00> : vector<16xf32>
    %666 = vector.multi_reduction <add>, %661, %cst_182 [1] : vector<16x32xf32> to vector<16xf32>
    %667 = vector.shape_cast %666 : vector<16xf32> to vector<16x1xf32>
    %cst_183 = arith.constant 3.200000e+01 : f32
    %668 = vector.broadcast %cst_183 : f32 to vector<16x1xf32>
    %669 = arith.divf %667, %668 : vector<16x1xf32>
    %670 = vector.broadcast %669 : vector<16x1xf32> to vector<16x32xf32>
    %671 = arith.subf %661, %670 : vector<16x32xf32>
    %672 = arith.mulf %671, %671 : vector<16x32xf32>
    %cst_184 = arith.constant dense<0.000000e+00> : vector<16xf32>
    %673 = vector.multi_reduction <add>, %672, %cst_184 [1] : vector<16x32xf32> to vector<16xf32>
    %674 = vector.shape_cast %673 : vector<16xf32> to vector<16x1xf32>
    %cst_185 = arith.constant 3.200000e+01 : f32
    %675 = vector.broadcast %cst_185 : f32 to vector<16x1xf32>
    %676 = arith.divf %674, %675 : vector<16x1xf32>
    %cst_186 = arith.constant 9.99999974E-6 : f32
    %677 = vector.broadcast %cst_186 : f32 to vector<16x1xf32>
    %678 = arith.addf %676, %677 : vector<16x1xf32>
    %679 = math.rsqrt %678 : vector<16x1xf32>
    %680 = vector.broadcast %679 : vector<16x1xf32> to vector<16x32xf32>
    %681 = arith.mulf %671, %680 : vector<16x32xf32>
    %682 = vector.broadcast %664 : vector<1x32xf32> to vector<16x32xf32>
    %683 = arith.mulf %681, %682 : vector<16x32xf32>
    %684 = vector.broadcast %665 : vector<1x32xf32> to vector<16x32xf32>
    %685 = arith.addf %683, %684 : vector<16x32xf32>
    %cst_187 = arith.constant 1.000000e+00 : f32
    %686 = vector.broadcast %cst_187 : f32 to vector<16x32xf32>
    %687 = arith.addf %686, %662 : vector<16x32xf32>
    %688 = arith.mulf %685, %687 : vector<16x32xf32>
    %689 = arith.addf %688, %663 : vector<16x32xf32>
    %690 = arith.negf %689 : vector<16x32xf32>
    %691 = math.exp %690 : vector<16x32xf32>
    %cst_188 = arith.constant 1.000000e+00 : f32
    %692 = vector.broadcast %cst_188 : f32 to vector<16x32xf32>
    %693 = arith.addf %692, %691 : vector<16x32xf32>
    %694 = arith.divf %692, %693 : vector<16x32xf32>
    %695 = arith.mulf %689, %694 : vector<16x32xf32>
    %696 = vector.extract_strided_slice %39 {offsets = [160, 0], sizes = [32, 32], strides = [1, 1]} : vector<192x32xf32> to vector<32x32xf32>
    %cst_189 = arith.constant dense<0.000000e+00> : vector<16x32xf32>
    %697 = tpu.matmul %695, %696, %cst_189 {dimension_numbers = #tpu.dot_dimension_numbers<[1], [0], [0], [1], [0, 0, 1, 1], [], []>} : vector<16x32xf32>, vector<32x32xf32>, vector<16x32xf32> -> vector<16x32xf32>
    %698 = vector.extract_strided_slice %40 {offsets = [5, 0], sizes = [1, 32], strides = [1, 1]} : vector<6x32xf32> to vector<1x32xf32>
    %699 = vector.broadcast %698 : vector<1x32xf32> to vector<16x32xf32>
    %700 = arith.addf %697, %699 : vector<16x32xf32>
    %701 = arith.addf %638, %700 : vector<16x32xf32>
    %c1848 = arith.constant 1848 : index
    %c0_190 = arith.constant 0 : index
    %702 = vector.load %arg1[%c1848, %c0_190] : memref<1888x128xf32, #tpu.memory_space<vmem>>, vector<32x128xf32>
    %cst_191 = arith.constant dense<0.000000e+00> : vector<16x128xf32>
    %703 = tpu.matmul %701, %702, %cst_191 {dimension_numbers = #tpu.dot_dimension_numbers<[1], [0], [0], [1], [0, 0, 1, 1], [], []>} : vector<16x32xf32>, vector<32x128xf32>, vector<16x128xf32> -> vector<16x128xf32>
    %c1880 = arith.constant 1880 : index
    %c0_192 = arith.constant 0 : index
    %704 = vector.load %arg1[%c1880, %c0_192] : memref<1888x128xf32, #tpu.memory_space<vmem>>, vector<1x128xf32>
    %705 = vector.broadcast %704 : vector<1x128xf32> to vector<16x128xf32>
    %706 = arith.addf %703, %705 : vector<16x128xf32>
    %c0_193 = arith.constant 0 : index
    %c0_194 = arith.constant 0 : index
    %707 = vector.load %arg2[%c0_193, %c0_194] : memref<16x128xf32, #tpu.memory_space<vmem>>, vector<16x128xf32>
    tpu.vector_store %arg2[%c0_193, %c0_194], %706 {strides = array<i32>} : memref<16x128xf32, #tpu.memory_space<vmem>>, vector<16x128xf32>,
    return
  }
}

</mosaic_0001>

<llo_original>
// kernel: pallas_forward.1
$region0: #{pallas_forward.1}
  #allocation0 [shape = 'u32[]', space=smem, size = 0x4, offset = 0x4, fixed_abs, tag = 'smem constant byte address 0x4 - core index']
  #allocation1 [shape = 'u32[144,128]{1,0:T(1,128)}', space=vmem, size = 0x12000, scoped, tag = 'internal scratch']
  %s0 = inlined_call_operand.vmem [shape: f32[80,128], index: 0, kind: input, shape index: {}]
  %s1 = inlined_call_operand.hbm [shape: f32[1888,128], index: 1, kind: input, shape index: {}]
  %s2 = inlined_call_operand.vmem [shape: f32[16,128], index: 2, kind: output, shape index: {}]
  %s3 = sld [smem:[#allocation0]]
  $region22: #{pallas_forward.1} parent=0
    _
  %s5 = ssub.s32 1, %s3
  %s6 = scalar_select 0, %s5, %s3
  $region1: #{pallas_forward.1} parent=0
    #allocation2 [shape = 'u8[966656]{0}', space=vmem, size = 0xec000, scoped, tag = 'input window, operand 1, single buffered']
    #allocation3 [shape = 's32[1]{0}', space=sflag, size = 0x4, scoped, tag = 'scoped memory for pallas_forward.1']
    %7 = vsyncpa [#allocation3], 0
    // Predicated region
    $region2: #{pallas_forward.1} parent=1 // pred_check
      _
    $region3: #{pallas_forward.1} parent=1 // pred_check_branch
      %9 = sbr.rel (0) target = $region5
    $region4: #{pallas_forward.1} parent=1 // pred_region
      _
    $region5: #{pallas_forward.1} parent=1 // pred_fallthru
      _
    // Predicated region
    $region6: #{pallas_forward.1} parent=1 // pred_check
      _
    $region7: #{pallas_forward.1} parent=1 // pred_check_branch
      %11 = sbr.rel (0) target = $region9
    $region8: #{pallas_forward.1} parent=1 // pred_region
      %s13 = ssub.s32 30208, 30208
      %14 = vsyncadd [#allocation3], %s13
      %s15 = sshll.u32 [#allocation2], 4
      %s16 = int_to_ptr.vmem [resolvable:$true] %s15
      %21 = dma.hbm_to_vmem [thread:$0]  %s1, 30208, %s16, [#allocation3], 128, 128, 8
    $region9: #{pallas_forward.1} parent=1 // pred_fallthru
      _
    // Predicated region
    $region10: #{pallas_forward.1} parent=1 // pred_check
      _
    $region11: #{pallas_forward.1} parent=1 // pred_check_branch
      %23 = sbr.rel (0) target = $region13
    $region12: #{pallas_forward.1} parent=1 // pred_region
      %24 = dma.done [#allocation3], 30208
    $region13: #{pallas_forward.1} parent=1 // pred_fallthru
      _
    %v25 = vld [vmem:[%s0] sm:$0xff]
    %v26 = vld [vmem:[%s0 + $0x8] sm:$0xff]
    %v27 = vld [vmem:[%s0 + $0x10] sm:$0xff]
    %v28 = vld [vmem:[%s0 + $0x18] sm:$0xff]
    %v29 = vld [vmem:[%s0 + $0x20] sm:$0xff]
    %v30 = vld [vmem:[%s0 + $0x28] sm:$0xff]
    %v31 = vld [vmem:[%s0 + $0x30] sm:$0xff]
    %v32 = vld [vmem:[%s0 + $0x38] sm:$0xff]
    %v33 = vld [vmem:[%s0 + $0x40] sm:$0xff]
    %v34 = vld [vmem:[%s0 + $0x48] sm:$0xff]
    %v35 = vsub.f32 1.0, %v33
    %v36 = vsub.f32 1.0, %v34
    %v37 = vmul.f32 %v35, -1000000.0
    %v38 = vmul.f32 %v36, -1000000.0
    %v39 = vld [vmem:[#allocation2 + $0x78] sm:$0xff]
    %v40 = vld [vmem:[#allocation2 + $0x80] sm:$0xff]
    %v41 = vld [vmem:[#allocation2 + $0x88] sm:$0xff]
    %v42 = vld [vmem:[#allocation2 + $0x90] sm:$0xff]
    %v43 = vld [vmem:[#allocation2] sm:$0xff]
    %v44 = vld [vmem:[#allocation2 + $0x8] sm:$0xff]
    %v45 = vld [vmem:[#allocation2 + $0x10] sm:$0xff]
    %v46 = vld [vmem:[#allocation2 + $0x18] sm:$0xff]
    %v47 = vld [vmem:[#allocation2 + $0x20] sm:$0xff]
    %v48 = vld [vmem:[#allocation2 + $0x28] sm:$0xff]
    %v49 = vld [vmem:[#allocation2 + $0x30] sm:$0xff]
    %v50 = vld [vmem:[#allocation2 + $0x38] sm:$0xff]
    %v51 = vld [vmem:[#allocation2 + $0x40] sm:$0x1]
    %v52 = vlaneseq
    %v53 = vshrl.u32 %v52, 7
    %v54 = vsub.s32 0, %v53
    %v55 = vrot.slane %v51, %v54
    %vm56 = vcmask 523264
    %v58 = vsel %vm56, %v27, 0
    %v61 = vsel %vm56, %v28, 0
    %v64 = vsel %vm56, %v29, 0
    %v67 = vsel %vm56, %v30, 0
    %69 = vmatprep.subr.mxu0 0.0
    %70 = vmatpush1.msra.mxu0 0.0
    %71 = vmatprep.subr.mxu0 0.0
    %72 = vmatpush1.msra.mxu0 0.0
    %73 = vmatprep.subr.mxu0 0.0
    %74 = vmatpush1.msra.mxu0 0.0
    %75 = vmatprep.subr.mxu0 0.0
    %76 = vmatpush1.msra.mxu0 0.0
    %77 = vmatprep.subr.mxu0 0.0
    %78 = vmatpush1.msra.mxu0 0.0
    %79 = vmatprep.subr.mxu0 0.0
    %80 = vmatpush1.msra.mxu0 0.0
    %81 = vmatprep.subr.mxu0 0.0
    %82 = vmatpush1.msra.mxu0 0.0
    %83 = vmatprep.subr.mxu0 0.0
    %84 = vmatpush1.msra.mxu0 0.0
    %85 = vmatprep.subr.mxu0 0.0
    %86 = vmatpush1.msra.mxu0 %v50
    %87 = vmatprep.subr.mxu0 0.0
    %88 = vmatpush1.msra.mxu0 %v49
    %89 = vmatprep.subr.mxu0 0.0
    %90 = vmatpush1.msra.mxu0 %v48
    %91 = vmatprep.subr.mxu0 0.0
    %92 = vmatpush1.msra.mxu0 %v47
    %93 = vmatprep.subr.mxu0 0.0
    %94 = vmatpush1.msra.mxu0 %v46
    %95 = vmatprep.subr.mxu0 0.0
    %96 = vmatpush1.msra.mxu0 %v45
    %97 = vmatprep.subr.mxu0 0.0
    %98 = vmatpush1.msra.mxu0 %v44
    %99 = vmatprep.subr.mxu0 0.0
    %100 = vmatpush1.msra.mxu0 %v43
    %101 = vmatprep.subr.mxu0 0.0
    %102 = vmatpush2.msra.mxu0 0.0
    %103 = vmatprep.subr.mxu0 0.0
    %104 = vmatpush2.msra.mxu0 0.0
    %105 = vmatprep.subr.mxu0 0.0
    %106 = vmatpush2.msra.mxu0 0.0
    %107 = vmatprep.subr.mxu0 0.0
    %108 = vmatpush2.msra.mxu0 0.0
    %109 = vmatprep.subr.mxu0 0.0
    %110 = vmatpush2.msra.mxu0 0.0
    %111 = vmatprep.subr.mxu0 0.0
    %112 = vmatpush2.msra.mxu0 0.0
    %113 = vmatprep.subr.mxu0 0.0
    %114 = vmatpush2.msra.mxu0 0.0
    %115 = vmatprep.subr.mxu0 0.0
    %116 = vmatpush2.msra.mxu0 0.0
    %117 = vmatprep.subr.mxu0 0.0
    %118 = vmatpush2.msra.mxu0 0.0
    %119 = vmatprep.subr.mxu0 0.0
    %120 = vmatpush2.msra.mxu0 0.0
    %121 = vmatprep.subr.mxu0 0.0
    %122 = vmatpush2.msra.mxu0 0.0
    %123 = vmatprep.subr.mxu0 0.0
    %124 = vmatpush2.msra.mxu0 0.0
    %125 = vmatprep.subr.mxu0 0.0
    %126 = vmatpush2.msra.mxu0 0.0
    %127 = vmatprep.subr.mxu0 0.0
    %128 = vmatpush2.msra.mxu0 0.0
    %129 = vmatprep.subr.mxu0 0.0
    %130 = vmatpush2.msra.mxu0 0.0
    %131 = vmatprep.subr.mxu0 0.0
    %132 = vmatpush2.msra.mxu0 0.0
    %133 = vmatprep.mubr.f32.mxu0 0.0
    %134 = vmatmul.mubr.f32.gmra.mxu0 %v58
    %v135 = vpop.f32.mrf.mxu0
    %v136 = vadd.f32 %v55, %v135
    %v137 = vpop.f32.mrf.mxu0
    %138 = vmatprep.mubr.f32.mxu0 0.0
    %139 = vmatmul.mubr.f32.gmra.mxu0 %v61
    %v140 = vpop.f32.mrf.mxu0
    %v141 = vadd.f32 %v55, %v140
    %v142 = vpop.f32.mrf.mxu0
    %143 = vmatprep.mubr.f32.mxu0 0.0
    %144 = vmatmul.mubr.f32.gmra.mxu0 %v64
    %v145 = vpop.f32.mrf.mxu0
    %v146 = vadd.f32 %v55, %v145
    %v147 = vpop.f32.mrf.mxu0
    %148 = vmatprep.mubr.f32.mxu0 0.0
    %149 = vmatmul.mubr.f32.gmra.mxu0 %v67
    %v150 = vpop.f32.mrf.mxu0
    %v151 = vadd.f32 %v55, %v150
    %v152 = vpop.f32.mrf.mxu0
    %153 = vdwg.mxu0
    %v154 = vadd.f32 %v31, %v136
    %v155 = vadd.f32 %v32, %v141
    %v156 = vxor.u32 %v154, 2147483648
    %v157 = vxor.u32 %v155, 2147483648
    %v158 = vmul.f32 %v156, 1.442695
    %v159 = vpow.pop %v158
    %v160 = vmul.f32 %v157, 1.442695
    %v161 = vpow.pop %v160
    %v162 = vadd.f32 %v159, 1.0
    %v163 = vadd.f32 %v161, 1.0
    %v164 = vrcp.pop %v162
    %v165 = vmul.f32 1.0, %v164
    %v166 = vrcp.pop %v163
    %v167 = vmul.f32 1.0, %v166
    %v168 = vmul.f32 %v154, %v165
    %v169 = vmul.f32 %v155, %v167
    %v170 = vld [vmem:[#allocation2 + $0x98] sm:$0xff]
    %v171 = vld [vmem:[#allocation2 + $0xa0] sm:$0xff]
    %v172 = vld [vmem:[#allocation2 + $0xa8] sm:$0xff]
    %v173 = vld [vmem:[#allocation2 + $0xb0] sm:$0xff]
    %v174 = vld [vmem:[#allocation2 + $0xb8] sm:$0xff]
    %v175 = vld [vmem:[#allocation2 + $0xc0] sm:$0xff]
    %v176 = vld [vmem:[#allocation2 + $0xc8] sm:$0xff]
    %v177 = vld [vmem:[#allocation2 + $0xd0] sm:$0xff]
    %v178 = vld [vmem:[#allocation2 + $0xd8] sm:$0xff]
    %v179 = vld [vmem:[#allocation2 + $0xe0] sm:$0xff]
    %v180 = vld [vmem:[#allocation2 + $0xe8] sm:$0xff]
    %v181 = vld [vmem:[#allocation2 + $0xf0] sm:$0xff]
    %v182 = vld [vmem:[#allocation2 + $0xf8] sm:$0xff]
    %v183 = vld [vmem:[#allocation2 + $0x100] sm:$0xff]
    %v184 = vld [vmem:[#allocation2 + $0x108] sm:$0xff]
    %v185 = vld [vmem:[#allocation2 + $0x110] sm:$0xff]
    %v186 = vld [vmem:[#allocation2 + $0x118] sm:$0x1]
    %v187 = vlaneseq
    %v188 = vshrl.u32 %v187, 7
    %v189 = vsub.s32 0, %v188
    %v190 = vrot.slane %v186, %v189
    %191 = vmatprep.subr.mxu0 0.0
    %192 = vmatpush1.msra.mxu0 %v185
    %193 = vmatprep.subr.mxu0 0.0
    %194 = vmatpush1.msra.mxu0 %v184
    %195 = vmatprep.subr.mxu0 0.0
    %196 = vmatpush1.msra.mxu0 %v183
    %197 = vmatprep.subr.mxu0 0.0
    %198 = vmatpush1.msra.mxu0 %v182
    %199 = vmatprep.subr.mxu0 0.0
    %200 = vmatpush1.msra.mxu0 %v181
    %201 = vmatprep.subr.mxu0 0.0
    %202 = vmatpush1.msra.mxu0 %v180
    %203 = vmatprep.subr.mxu0 0.0
    %204 = vmatpush1.msra.mxu0 %v179
    %205 = vmatprep.subr.mxu0 0.0
    %206 = vmatpush1.msra.mxu0 %v178
    %207 = vmatprep.subr.mxu0 0.0
    %208 = vmatpush1.msra.mxu0 %v177
    %209 = vmatprep.subr.mxu0 0.0
    %210 = vmatpush1.msra.mxu0 %v176
    %211 = vmatprep.subr.mxu0 0.0
    %212 = vmatpush1.msra.mxu0 %v175
    %213 = vmatprep.subr.mxu0 0.0
    %214 = vmatpush1.msra.mxu0 %v174
    %215 = vmatprep.subr.mxu0 0.0
    %216 = vmatpush1.msra.mxu0 %v173
    %217 = vmatprep.subr.mxu0 0.0
    %218 = vmatpush1.msra.mxu0 %v172
    %219 = vmatprep.subr.mxu0 0.0
    %220 = vmatpush1.msra.mxu0 %v171
    %221 = vmatprep.subr.mxu0 0.0
    %222 = vmatpush1.msra.mxu0 %v170
    %223 = vmatprep.subr.mxu0 0.0
    %224 = vmatpush2.msra.mxu0 0.0
    %225 = vmatprep.subr.mxu0 0.0
    %226 = vmatpush2.msra.mxu0 0.0
    %227 = vmatprep.subr.mxu0 0.0
    %228 = vmatpush2.msra.mxu0 0.0
    %229 = vmatprep.subr.mxu0 0.0
    %230 = vmatpush2.msra.mxu0 0.0
    %231 = vmatprep.subr.mxu0 0.0
    %232 = vmatpush2.msra.mxu0 0.0
    %233 = vmatprep.subr.mxu0 0.0
    %234 = vmatpush2.msra.mxu0 0.0
    %235 = vmatprep.subr.mxu0 0.0
    %236 = vmatpush2.msra.mxu0 0.0
    %237 = vmatprep.subr.mxu0 0.0
    %238 = vmatpush2.msra.mxu0 0.0
    %239 = vmatprep.subr.mxu0 0.0
    %240 = vmatpush2.msra.mxu0 0.0
    %241 = vmatprep.subr.mxu0 0.0
    %242 = vmatpush2.msra.mxu0 0.0
    %243 = vmatprep.subr.mxu0 0.0
    %244 = vmatpush2.msra.mxu0 0.0
    %245 = vmatprep.subr.mxu0 0.0
    %246 = vmatpush2.msra.mxu0 0.0
    %247 = vmatprep.subr.mxu0 0.0
    %248 = vmatpush2.msra.mxu0 0.0
    %249 = vmatprep.subr.mxu0 0.0
    %250 = vmatpush2.msra.mxu0 0.0
    %251 = vmatprep.subr.mxu0 0.0
    %252 = vmatpush2.msra.mxu0 0.0
    %253 = vmatprep.subr.mxu0 0.0
    %254 = vmatpush2.msra.mxu0 0.0
    %255 = vmatprep.mubr.f32.mxu0 0.0
    %256 = vmatmul.mubr.f32.gmra.mxu0 %v168
    %v257 = vpop.f32.mrf.mxu0
    %v258 = vadd.f32 %v190, %v257
    %v259 = vpop.f32.mrf.mxu0
    %260 = vmatprep.mubr.f32.mxu0 0.0
    %261 = vmatmul.mubr.f32.gmra.mxu0 %v169
    %v262 = vpop.f32.mrf.mxu0
    %v263 = vadd.f32 %v190, %v262
    %v264 = vpop.f32.mrf.mxu0
    %265 = vdwg.mxu0
    %v266 = vld [vmem:[#allocation2 + $0x120] sm:$0xff]
    %v267 = vld [vmem:[#allocation2 + $0x128] sm:$0xff]
    %v268 = vld [vmem:[#allocation2 + $0x130] sm:$0xff]
    %v269 = vld [vmem:[#allocation2 + $0x138] sm:$0xff]
    %v270 = vld [vmem:[#allocation2 + $0x140] sm:$0xff]
    %v271 = vld [vmem:[#allocation2 + $0x148] sm:$0xff]
    %v272 = vld [vmem:[#allocation2 + $0x150] sm:$0xff]
    %v273 = vld [vmem:[#allocation2 + $0x158] sm:$0xff]
    %v274 = vld [vmem:[#allocation2 + $0x160] sm:$0xff]
    %v275 = vld [vmem:[#allocation2 + $0x168] sm:$0xff]
    %v276 = vld [vmem:[#allocation2 + $0x170] sm:$0xff]
    %v277 = vld [vmem:[#allocation2 + $0x178] sm:$0xff]
    %v278 = vld [vmem:[#allocation2 + $0x180] sm:$0xff]
    %v279 = vld [vmem:[#allocation2 + $0x188] sm:$0xff]
    %v280 = vld [vmem:[#allocation2 + $0x190] sm:$0xff]
    %v281 = vld [vmem:[#allocation2 + $0x198] sm:$0xff]
    %v282 = vld [vmem:[#allocation2 + $0x1a0] sm:$0x1]
    %v283 = vlaneseq
    %v284 = vshrl.u32 %v283, 7
    %v285 = vsub.s32 0, %v284
    %v286 = vrot.slane %v282, %v285
    %287 = vmatprep.subr.mxu0 0.0
    %288 = vmatpush1.msra.mxu0 %v281
    %289 = vmatprep.subr.mxu0 0.0
    %290 = vmatpush1.msra.mxu0 %v280
    %291 = vmatprep.subr.mxu0 0.0
    %292 = vmatpush1.msra.mxu0 %v279
    %293 = vmatprep.subr.mxu0 0.0
    %294 = vmatpush1.msra.mxu0 %v278
    %295 = vmatprep.subr.mxu0 0.0
    %296 = vmatpush1.msra.mxu0 %v277
    %297 = vmatprep.subr.mxu0 0.0
    %298 = vmatpush1.msra.mxu0 %v276
    %299 = vmatprep.subr.mxu0 0.0
    %300 = vmatpush1.msra.mxu0 %v275
    %301 = vmatprep.subr.mxu0 0.0
    %302 = vmatpush1.msra.mxu0 %v274
    %303 = vmatprep.subr.mxu0 0.0
    %304 = vmatpush1.msra.mxu0 %v273
    %305 = vmatprep.subr.mxu0 0.0
    %306 = vmatpush1.msra.mxu0 %v272
    %307 = vmatprep.subr.mxu0 0.0
    %308 = vmatpush1.msra.mxu0 %v271
    %309 = vmatprep.subr.mxu0 0.0
    %310 = vmatpush1.msra.mxu0 %v270
    %311 = vmatprep.subr.mxu0 0.0
    %312 = vmatpush1.msra.mxu0 %v269
    %313 = vmatprep.subr.mxu0 0.0
    %314 = vmatpush1.msra.mxu0 %v268
    %315 = vmatprep.subr.mxu0 0.0
    %316 = vmatpush1.msra.mxu0 %v267
    %317 = vmatprep.subr.mxu0 0.0
    %318 = vmatpush1.msra.mxu0 %v266
    %319 = vmatprep.subr.mxu0 0.0
    %320 = vmatpush2.msra.mxu0 0.0
    %321 = vmatprep.subr.mxu0 0.0
    %322 = vmatpush2.msra.mxu0 0.0
    %323 = vmatprep.subr.mxu0 0.0
    %324 = vmatpush2.msra.mxu0 0.0
    %325 = vmatprep.subr.mxu0 0.0
    %326 = vmatpush2.msra.mxu0 0.0
    %327 = vmatprep.subr.mxu0 0.0
    %328 = vmatpush2.msra.mxu0 0.0
    %329 = vmatprep.subr.mxu0 0.0
    %330 = vmatpush2.msra.mxu0 0.0
    %331 = vmatprep.subr.mxu0 0.0
    %332 = vmatpush2.msra.mxu0 0.0
    %333 = vmatprep.subr.mxu0 0.0
    %334 = vmatpush2.msra.mxu0 0.0
    %335 = vmatprep.subr.mxu0 0.0
    %336 = vmatpush2.msra.mxu0 0.0
    %337 = vmatprep.subr.mxu0 0.0
    %338 = vmatpush2.msra.mxu0 0.0
    %339 = vmatprep.subr.mxu0 0.0
    %340 = vmatpush2.msra.mxu0 0.0
    %341 = vmatprep.subr.mxu0 0.0
    %342 = vmatpush2.msra.mxu0 0.0
    %343 = vmatprep.subr.mxu0 0.0
    %344 = vmatpush2.msra.mxu0 0.0
    %345 = vmatprep.subr.mxu0 0.0
    %346 = vmatpush2.msra.mxu0 0.0
    %347 = vmatprep.subr.mxu0 0.0
    %348 = vmatpush2.msra.mxu0 0.0
    %349 = vmatprep.subr.mxu0 0.0
    %350 = vmatpush2.msra.mxu0 0.0
    %351 = vmatprep.mubr.f32.mxu0 0.0
    %352 = vmatmul.mubr.f32.gmra.mxu0 %v168
    %v353 = vpop.f32.mrf.mxu0
    %v354 = vadd.f32 %v286, %v353
    %v355 = vpop.f32.mrf.mxu0
    %356 = vmatprep.mubr.f32.mxu0 0.0
    %357 = vmatmul.mubr.f32.gmra.mxu0 %v169
    %v358 = vpop.f32.mrf.mxu0
    %v359 = vadd.f32 %v286, %v358
    %v360 = vpop.f32.mrf.mxu0
    %361 = vdwg.mxu0
    %v362 = vld [vmem:[#allocation2 + $0x1a8] sm:$0xff]
    %v363 = vld [vmem:[#allocation2 + $0x1b0] sm:$0xff]
    %v364 = vld [vmem:[#allocation2 + $0x1b8] sm:$0xff]
    %v365 = vld [vmem:[#allocation2 + $0x1c0] sm:$0xff]
    %v366 = vld [vmem:[#allocation2 + $0x1c8] sm:$0xff]
    %v367 = vld [vmem:[#allocation2 + $0x1d0] sm:$0xff]
    %v368 = vld [vmem:[#allocation2 + $0x1d8] sm:$0xff]
    %v369 = vld [vmem:[#allocation2 + $0x1e0] sm:$0xff]
    %v370 = vld [vmem:[#allocation2 + $0x1e8] sm:$0xff]
    %v371 = vld [vmem:[#allocation2 + $0x1f0] sm:$0xff]
    %v372 = vld [vmem:[#allocation2 + $0x1f8] sm:$0xff]
    %v373 = vld [vmem:[#allocation2 + $0x200] sm:$0xff]
    %v374 = vld [vmem:[#allocation2 + $0x208] sm:$0xff]
    %v375 = vld [vmem:[#allocation2 + $0x210] sm:$0xff]
    %v376 = vld [vmem:[#allocation2 + $0x218] sm:$0xff]
    %v377 = vld [vmem:[#allocation2 + $0x220] sm:$0xff]
    %v378 = vld [vmem:[#allocation2 + $0x228] sm:$0x1]
    %v379 = vlaneseq
    %v380 = vshrl.u32 %v379, 7
    %v381 = vsub.s32 0, %v380
    %v382 = vrot.slane %v378, %v381
    %383 = vmatprep.subr.mxu0 0.0
    %384 = vmatpush1.msra.mxu0 %v377
    %385 = vmatprep.subr.mxu0 0.0
    %386 = vmatpush1.msra.mxu0 %v376
    %387 = vmatprep.subr.mxu0 0.0
    %388 = vmatpush1.msra.mxu0 %v375
    %389 = vmatprep.subr.mxu0 0.0
    %390 = vmatpush1.msra.mxu0 %v374
    %391 = vmatprep.subr.mxu0 0.0
    %392 = vmatpush1.msra.mxu0 %v373
    %393 = vmatprep.subr.mxu0 0.0
    %394 = vmatpush1.msra.mxu0 %v372
    %395 = vmatprep.subr.mxu0 0.0
    %396 = vmatpush1.msra.mxu0 %v371
    %397 = vmatprep.subr.mxu0 0.0
    %398 = vmatpush1.msra.mxu0 %v370
    %399 = vmatprep.subr.mxu0 0.0
    %400 = vmatpush1.msra.mxu0 %v369
    %401 = vmatprep.subr.mxu0 0.0
    %402 = vmatpush1.msra.mxu0 %v368
    %403 = vmatprep.subr.mxu0 0.0
    %404 = vmatpush1.msra.mxu0 %v367
    %405 = vmatprep.subr.mxu0 0.0
    %406 = vmatpush1.msra.mxu0 %v366
    %407 = vmatprep.subr.mxu0 0.0
    %408 = vmatpush1.msra.mxu0 %v365
    %409 = vmatprep.subr.mxu0 0.0
    %410 = vmatpush1.msra.mxu0 %v364
    %411 = vmatprep.subr.mxu0 0.0
    %412 = vmatpush1.msra.mxu0 %v363
    %413 = vmatprep.subr.mxu0 0.0
    %414 = vmatpush1.msra.mxu0 %v362
    %415 = vmatprep.subr.mxu0 0.0
    %416 = vmatpush2.msra.mxu0 0.0
    %417 = vmatprep.subr.mxu0 0.0
    %418 = vmatpush2.msra.mxu0 0.0
    %419 = vmatprep.subr.mxu0 0.0
    %420 = vmatpush2.msra.mxu0 0.0
    %421 = vmatprep.subr.mxu0 0.0
    %422 = vmatpush2.msra.mxu0 0.0
    %423 = vmatprep.subr.mxu0 0.0
    %424 = vmatpush2.msra.mxu0 0.0
    %425 = vmatprep.subr.mxu0 0.0
    %426 = vmatpush2.msra.mxu0 0.0
    %427 = vmatprep.subr.mxu0 0.0
    %428 = vmatpush2.msra.mxu0 0.0
    %429 = vmatprep.subr.mxu0 0.0
    %430 = vmatpush2.msra.mxu0 0.0
    %431 = vmatprep.subr.mxu0 0.0
    %432 = vmatpush2.msra.mxu0 0.0
    %433 = vmatprep.subr.mxu0 0.0
    %434 = vmatpush2.msra.mxu0 0.0
    %435 = vmatprep.subr.mxu0 0.0
    %436 = vmatpush2.msra.mxu0 0.0
    %437 = vmatprep.subr.mxu0 0.0
    %438 = vmatpush2.msra.mxu0 0.0
    %439 = vmatprep.subr.mxu0 0.0
    %440 = vmatpush2.msra.mxu0 0.0
    %441 = vmatprep.subr.mxu0 0.0
    %442 = vmatpush2.msra.mxu0 0.0
    %443 = vmatprep.subr.mxu0 0.0
    %444 = vmatpush2.msra.mxu0 0.0
    %445 = vmatprep.subr.mxu0 0.0
    %446 = vmatpush2.msra.mxu0 0.0
    %447 = vmatprep.mubr.f32.mxu0 0.0
    %448 = vmatmul.mubr.f32.gmra.mxu0 %v168
    %v449 = vpop.f32.mrf.mxu0
    %v450 = vadd.f32 %v382, %v449
    %v451 = vpop.f32.mrf.mxu0
    %452 = vmatprep.mubr.f32.mxu0 0.0
    %453 = vmatmul.mubr.f32.gmra.mxu0 %v169
    %v454 = vpop.f32.mrf.mxu0
    %v455 = vadd.f32 %v382, %v454
    %v456 = vpop.f32.mrf.mxu0
    %457 = vdwg.mxu0
    %v458 = vld [vmem:[#allocation2 + $0x230] sm:$0xff]
    %v459 = vld [vmem:[#allocation2 + $0x238] sm:$0xf]
    %v460 = vld [vmem:[#allocation2 + $0x240] sm:$0xff]
    %v461 = vld [vmem:[#allocation2 + $0x248] sm:$0xff]
    %v462 = vld [vmem:[#allocation2 + $0x250] sm:$0xff]
    %v463 = vld [vmem:[#allocation2 + $0x258] sm:$0xff]
    %v464 = vld [vmem:[#allocation2 + $0x260] sm:$0xff]
    %v465 = vld [vmem:[#allocation2 + $0x268] sm:$0xff]
    %v466 = vld [vmem:[#allocation2 + $0x270] sm:$0xff]
    %v467 = vld [vmem:[#allocation2 + $0x278] sm:$0xff]
    %v468 = vld [vmem:[#allocation2 + $0x280] sm:$0xff]
    %v469 = vld [vmem:[#allocation2 + $0x288] sm:$0xff]
    %v470 = vld [vmem:[#allocation2 + $0x290] sm:$0xff]
    %v471 = vld [vmem:[#allocation2 + $0x298] sm:$0xff]
    %v472 = vld [vmem:[#allocation2 + $0x2a0] sm:$0xff]
    %v473 = vld [vmem:[#allocation2 + $0x2a8] sm:$0xff]
    %v474 = vld [vmem:[#allocation2 + $0x2b0] sm:$0xff]
    %v475 = vld [vmem:[#allocation2 + $0x2b8] sm:$0xff]
    %v476 = vld [vmem:[#allocation2 + $0x2c0] sm:$0xff]
    %v477 = vld [vmem:[#allocation2 + $0x2c8] sm:$0xff]
    %v478 = vld [vmem:[#allocation2 + $0x2d0] sm:$0xff]
    %v479 = vld [vmem:[#allocation2 + $0x2d8] sm:$0xff]
    %v480 = vld [vmem:[#allocation2 + $0x2e0] sm:$0xff]
    %v481 = vld [vmem:[#allocation2 + $0x2e8] sm:$0xff]
    %v482 = vld [vmem:[#allocation2 + $0x2f0] sm:$0xff]
    %v483 = vld [vmem:[#allocation2 + $0x2f8] sm:$0xff]
    %v484 = vld [vmem:[#allocation2 + $0x300] sm:$0x3f]
    %v485 = vld [vmem:[#allocation2 + $0x68] sm:$0xff]
    %v486 = vld [vmem:[#allocation2 + $0x48] sm:$0xff]
    %v487 = vld [vmem:[#allocation2 + $0x50] sm:$0xff]
    %v488 = vld [vmem:[#allocation2 + $0x58] sm:$0xff]
    %v489 = vld [vmem:[#allocation2 + $0x60] sm:$0x1]
    %v490 = vlaneseq
    %v491 = vshrl.u32 %v490, 7
    %v492 = vsub.s32 0, %v491
    %v493 = vrot.slane %v489, %v492
    %vm494 = vcmask 195584
    %v496 = vsel %vm494, %v25, 0
    %v499 = vsel %vm494, %v26, 0
    %501 = vmatprep.subr.mxu0 0.0
    %502 = vmatpush1.msra.mxu0 0.0
    %503 = vmatprep.subr.mxu0 0.0
    %504 = vmatpush1.msra.mxu0 0.0
    %505 = vmatprep.subr.mxu0 0.0
    %506 = vmatpush1.msra.mxu0 0.0
    %507 = vmatprep.subr.mxu0 0.0
    %508 = vmatpush1.msra.mxu0 0.0
    %509 = vmatprep.subr.mxu0 0.0
    %510 = vmatpush1.msra.mxu0 0.0
    %511 = vmatprep.subr.mxu0 0.0
    %512 = vmatpush1.msra.mxu0 0.0
    %513 = vmatprep.subr.mxu0 0.0
    %514 = vmatpush1.msra.mxu0 0.0
    %515 = vmatprep.subr.mxu0 0.0
    %516 = vmatpush1.msra.mxu0 0.0
    %517 = vmatprep.subr.mxu0 0.0
    %518 = vmatpush1.msra.mxu0 0.0
    %519 = vmatprep.subr.mxu0 0.0
    %520 = vmatpush1.msra.mxu0 0.0
    %521 = vmatprep.subr.mxu0 0.0
    %522 = vmatpush1.msra.mxu0 0.0
    %523 = vmatprep.subr.mxu0 0.0
    %524 = vmatpush1.msra.mxu0 0.0
    %525 = vmatprep.subr.mxu0 0.0
    %526 = vmatpush1.msra.mxu0 0.0
    %527 = vmatprep.subr.mxu0 0.0
    %528 = vmatpush1.msra.mxu0 %v488
    %529 = vmatprep.subr.mxu0 0.0
    %530 = vmatpush1.msra.mxu0 %v487
    %531 = vmatprep.subr.mxu0 0.0
    %532 = vmatpush1.msra.mxu0 %v486
    %533 = vmatprep.subr.mxu0 0.0
    %534 = vmatpush2.msra.mxu0 0.0
    %535 = vmatprep.subr.mxu0 0.0
    %536 = vmatpush2.msra.mxu0 0.0
    %537 = vmatprep.subr.mxu0 0.0
    %538 = vmatpush2.msra.mxu0 0.0
    %539 = vmatprep.subr.mxu0 0.0
    %540 = vmatpush2.msra.mxu0 0.0
    %541 = vmatprep.subr.mxu0 0.0
    %542 = vmatpush2.msra.mxu0 0.0
    %543 = vmatprep.subr.mxu0 0.0
    %544 = vmatpush2.msra.mxu0 0.0
    %545 = vmatprep.subr.mxu0 0.0
    %546 = vmatpush2.msra.mxu0 0.0
    %547 = vmatprep.subr.mxu0 0.0
    %548 = vmatpush2.msra.mxu0 0.0
    %549 = vmatprep.subr.mxu0 0.0
    %550 = vmatpush2.msra.mxu0 0.0
    %551 = vmatprep.subr.mxu0 0.0
    %552 = vmatpush2.msra.mxu0 0.0
    %553 = vmatprep.subr.mxu0 0.0
    %554 = vmatpush2.msra.mxu0 0.0
    %555 = vmatprep.subr.mxu0 0.0
    %556 = vmatpush2.msra.mxu0 0.0
    %557 = vmatprep.subr.mxu0 0.0
    %558 = vmatpush2.msra.mxu0 0.0
    %559 = vmatprep.subr.mxu0 0.0
    %560 = vmatpush2.msra.mxu0 0.0
    %561 = vmatprep.subr.mxu0 0.0
    %562 = vmatpush2.msra.mxu0 0.0
    %563 = vmatprep.subr.mxu0 0.0
    %564 = vmatpush2.msra.mxu0 0.0
    %565 = vmatprep.mubr.f32.mxu0 0.0
    %566 = vmatmul.mubr.f32.gmra.mxu0 %v496
    %v567 = vpop.f32.mrf.mxu0
    %v568 = vadd.f32 %v493, %v567
    %v569 = vpop.f32.mrf.mxu0
    %570 = vmatprep.mubr.f32.mxu0 0.0
    %571 = vmatmul.mubr.f32.gmra.mxu0 %v499
    %v572 = vpop.f32.mrf.mxu0
    %v573 = vadd.f32 %v493, %v572
    %v574 = vpop.f32.mrf.mxu0
    %575 = vdwg.mxu0
    %v576 = vadd.f32 %v568, %v485
    %v577 = vadd.f32 %v573, %v485
    %v578 = vld [vmem:[#allocation2 + $0x308] sm:$0x3]
    %v579 = vld [vmem:[#allocation2 + $0x310] sm:$0xff]
    %v580 = vld [vmem:[#allocation2 + $0x318] sm:$0xff]
    %v581 = vld [vmem:[#allocation2 + $0x320] sm:$0xff]
    %v582 = vld [vmem:[#allocation2 + $0x328] sm:$0xff]
    %v583 = vld [vmem:[#allocation2 + $0x330] sm:$0xff]
    %v584 = vld [vmem:[#allocation2 + $0x338] sm:$0xff]
    %v585 = vld [vmem:[#allocation2 + $0x340] sm:$0xff]
    %v586 = vld [vmem:[#allocation2 + $0x348] sm:$0xff]
    %v587 = vld [vmem:[#allocation2 + $0x350] sm:$0xff]
    %v588 = vld [vmem:[#allocation2 + $0x358] sm:$0xff]
    %v589 = vld [vmem:[#allocation2 + $0x360] sm:$0xff]
    %v590 = vld [vmem:[#allocation2 + $0x368] sm:$0xff]
    %v591 = vld [vmem:[#allocation2 + $0x370] sm:$0x7]
    %vm592 = vcmask 261120
    %v593 = vsel %vm592, %v576, 0.0
    %594 = vadd.xlane.f32.xlu0 %v593
    %v595 = vpop.xlane.xlu0 %594
    %v596 = vsel %vm592, %v577, 0.0
    %597 = vadd.xlane.f32.xlu0 %v596
    %v598 = vpop.xlane.xlu0 %597
    %v599 = vrcp.pop 32.0
    %v600 = vmul.f32 %v595, %v599
    %v601 = vmul.f32 %v598, %v599
    %v602 = vsub.f32 %v576, %v600
    %v603 = vsub.f32 %v577, %v601
    %v604 = vmul.f32 %v602, %v602
    %v605 = vmul.f32 %v603, %v603
    %v606 = vsel %vm592, %v604, 0.0
    %607 = vadd.xlane.f32.xlu0 %v606
    %v608 = vpop.xlane.xlu0 %607
    %v609 = vsel %vm592, %v605, 0.0
    %610 = vadd.xlane.f32.xlu0 %v609
    %v611 = vpop.xlane.xlu0 %610
    %v612 = vmul.f32 %v608, %v599
    %v613 = vmul.f32 %v611, %v599
    %v614 = vadd.f32 %v612, 1e-05
    %v615 = vadd.f32 %v613, 1e-05
    %v616 = vrsqrt.pop %v614
    %v617 = vrsqrt.pop %v615
    %v618 = vmul.f32 %v602, %v616
    %v619 = vmul.f32 %v603, %v617
    %v620 = vlaneseq
    %v621 = vshrl.u32 %v620, 7
    %v622 = vsub.s32 0, %v621
    %v623 = vrot.slane %v578, %v622
    %v624 = vmul.f32 %v618, %v623
    %v625 = vmul.f32 %v619, %v623
    %v626 = vlaneseq
    %v627 = vshrl.u32 %v626, 7
    %v628 = vsub.s32 1, %v627
    %v629 = vrot.slane %v578, %v628
    %v630 = vadd.f32 %v624, %v629
    %v631 = vadd.f32 %v625, %v629
    %v632 = vlaneseq
    %v633 = vshrl.u32 %v632, 7
    %v634 = vsub.s32 0, %v633
    %v635 = vrot.slane %v591, %v634
    %v637 = vsel %vm592, %v630, 0
    %v640 = vsel %vm592, %v631, 0
    %642 = vmatprep.subr.mxu0 0.0
    %643 = vmatpush1.msra.mxu0 0.0
    %644 = vmatprep.subr.mxu0 0.0
    %645 = vmatpush1.msra.mxu0 0.0
    %646 = vmatprep.subr.mxu0 0.0
    %647 = vmatpush1.msra.mxu0 0.0
    %648 = vmatprep.subr.mxu0 0.0
    %649 = vmatpush1.msra.mxu0 0.0
    %650 = vmatprep.subr.mxu0 0.0
    %651 = vmatpush1.msra.mxu0 0.0
    %652 = vmatprep.subr.mxu0 0.0
    %653 = vmatpush1.msra.mxu0 0.0
    %654 = vmatprep.subr.mxu0 0.0
    %655 = vmatpush1.msra.mxu0 0.0
    %656 = vmatprep.subr.mxu0 0.0
    %657 = vmatpush1.msra.mxu0 0.0
    %658 = vmatprep.subr.mxu0 0.0
    %659 = vmatpush1.msra.mxu0 0.0
    %660 = vmatprep.subr.mxu0 0.0
    %661 = vmatpush1.msra.mxu0 0.0
    %662 = vmatprep.subr.mxu0 0.0
    %663 = vmatpush1.msra.mxu0 0.0
    %664 = vmatprep.subr.mxu0 0.0
    %665 = vmatpush1.msra.mxu0 0.0
    %666 = vmatprep.subr.mxu0 0.0
    %667 = vmatpush1.msra.mxu0 %v582
    %668 = vmatprep.subr.mxu0 0.0
    %669 = vmatpush1.msra.mxu0 %v581
    %670 = vmatprep.subr.mxu0 0.0
    %671 = vmatpush1.msra.mxu0 %v580
    %672 = vmatprep.subr.mxu0 0.0
    %673 = vmatpush1.msra.mxu0 %v579
    %674 = vmatprep.subr.mxu0 0.0
    %675 = vmatpush2.msra.mxu0 0.0
    %676 = vmatprep.subr.mxu0 0.0
    %677 = vmatpush2.msra.mxu0 0.0
    %678 = vmatprep.subr.mxu0 0.0
    %679 = vmatpush2.msra.mxu0 0.0
    %680 = vmatprep.subr.mxu0 0.0
    %681 = vmatpush2.msra.mxu0 0.0
    %682 = vmatprep.subr.mxu0 0.0
    %683 = vmatpush2.msra.mxu0 0.0
    %684 = vmatprep.subr.mxu0 0.0
    %685 = vmatpush2.msra.mxu0 0.0
    %686 = vmatprep.subr.mxu0 0.0
    %687 = vmatpush2.msra.mxu0 0.0
    %688 = vmatprep.subr.mxu0 0.0
    %689 = vmatpush2.msra.mxu0 0.0
    %690 = vmatprep.subr.mxu0 0.0
    %691 = vmatpush2.msra.mxu0 0.0
    %692 = vmatprep.subr.mxu0 0.0
    %693 = vmatpush2.msra.mxu0 0.0
    %694 = vmatprep.subr.mxu0 0.0
    %695 = vmatpush2.msra.mxu0 0.0
    %696 = vmatprep.subr.mxu0 0.0
    %697 = vmatpush2.msra.mxu0 0.0
    %698 = vmatprep.subr.mxu0 0.0
    %699 = vmatpush2.msra.mxu0 0.0
    %700 = vmatprep.subr.mxu0 0.0
    %701 = vmatpush2.msra.mxu0 0.0
    %702 = vmatprep.subr.mxu0 0.0
    %703 = vmatpush2.msra.mxu0 0.0
    %704 = vmatprep.subr.mxu0 0.0
    %705 = vmatpush2.msra.mxu0 0.0
    %706 = vmatprep.mubr.f32.mxu0 0.0
    %707 = vmatmul.mubr.f32.gmra.mxu0 %v637
    %v708 = vpop.f32.mrf.mxu0
    %v709 = vadd.f32 %v635, %v708
    %v710 = vpop.f32.mrf.mxu0
    %711 = vmatprep.mubr.f32.mxu0 0.0
    %712 = vmatmul.mubr.f32.gmra.mxu0 %v640
    %v713 = vpop.f32.mrf.mxu0
    %v714 = vadd.f32 %v635, %v713
    %v715 = vpop.f32.mrf.mxu0
    %716 = vdwg.mxu0
    %v717 = vlaneseq
    %v718 = vshrl.u32 %v717, 7
    %v719 = vsub.s32 1, %v718
    %v720 = vrot.slane %v591, %v719
    %721 = vmatprep.subr.mxu0 0.0
    %722 = vmatpush1.msra.mxu0 0.0
    %723 = vmatprep.subr.mxu0 0.0
    %724 = vmatpush1.msra.mxu0 0.0
    %725 = vmatprep.subr.mxu0 0.0
    %726 = vmatpush1.msra.mxu0 0.0
    %727 = vmatprep.subr.mxu0 0.0
    %728 = vmatpush1.msra.mxu0 0.0
    %729 = vmatprep.subr.mxu0 0.0
    %730 = vmatpush1.msra.mxu0 0.0
    %731 = vmatprep.subr.mxu0 0.0
    %732 = vmatpush1.msra.mxu0 0.0
    %733 = vmatprep.subr.mxu0 0.0
    %734 = vmatpush1.msra.mxu0 0.0
    %735 = vmatprep.subr.mxu0 0.0
    %736 = vmatpush1.msra.mxu0 0.0
    %737 = vmatprep.subr.mxu0 0.0
    %738 = vmatpush1.msra.mxu0 0.0
    %739 = vmatprep.subr.mxu0 0.0
    %740 = vmatpush1.msra.mxu0 0.0
    %741 = vmatprep.subr.mxu0 0.0
    %742 = vmatpush1.msra.mxu0 0.0
    %743 = vmatprep.subr.mxu0 0.0
    %744 = vmatpush1.msra.mxu0 0.0
    %745 = vmatprep.subr.mxu0 0.0
    %746 = vmatpush1.msra.mxu0 %v586
    %747 = vmatprep.subr.mxu0 0.0
    %748 = vmatpush1.msra.mxu0 %v585
    %749 = vmatprep.subr.mxu0 0.0
    %750 = vmatpush1.msra.mxu0 %v584
    %751 = vmatprep.subr.mxu0 0.0
    %752 = vmatpush1.msra.mxu0 %v583
    %753 = vmatprep.subr.mxu0 0.0
    %754 = vmatpush2.msra.mxu0 0.0
    %755 = vmatprep.subr.mxu0 0.0
    %756 = vmatpush2.msra.mxu0 0.0
    %757 = vmatprep.subr.mxu0 0.0
    %758 = vmatpush2.msra.mxu0 0.0
    %759 = vmatprep.subr.mxu0 0.0
    %760 = vmatpush2.msra.mxu0 0.0
    %761 = vmatprep.subr.mxu0 0.0
    %762 = vmatpush2.msra.mxu0 0.0
    %763 = vmatprep.subr.mxu0 0.0
    %764 = vmatpush2.msra.mxu0 0.0
    %765 = vmatprep.subr.mxu0 0.0
    %766 = vmatpush2.msra.mxu0 0.0
    %767 = vmatprep.subr.mxu0 0.0
    %768 = vmatpush2.msra.mxu0 0.0
    %769 = vmatprep.subr.mxu0 0.0
    %770 = vmatpush2.msra.mxu0 0.0
    %771 = vmatprep.subr.mxu0 0.0
    %772 = vmatpush2.msra.mxu0 0.0
    %773 = vmatprep.subr.mxu0 0.0
    %774 = vmatpush2.msra.mxu0 0.0
    %775 = vmatprep.subr.mxu0 0.0
    %776 = vmatpush2.msra.mxu0 0.0
    %777 = vmatprep.subr.mxu0 0.0
    %778 = vmatpush2.msra.mxu0 0.0
    %779 = vmatprep.subr.mxu0 0.0
    %780 = vmatpush2.msra.mxu0 0.0
    %781 = vmatprep.subr.mxu0 0.0
    %782 = vmatpush2.msra.mxu0 0.0
    %783 = vmatprep.subr.mxu0 0.0
    %784 = vmatpush2.msra.mxu0 0.0
    %785 = vmatprep.mubr.f32.mxu0 0.0
    %786 = vmatmul.mubr.f32.gmra.mxu0 %v637
    %v787 = vpop.f32.mrf.mxu0
    %v788 = vadd.f32 %v720, %v787
    %v789 = vpop.f32.mrf.mxu0
    %790 = vmatprep.mubr.f32.mxu0 0.0
    %791 = vmatmul.mubr.f32.gmra.mxu0 %v640
    %v792 = vpop.f32.mrf.mxu0
    %v793 = vadd.f32 %v720, %v792
    %v794 = vpop.f32.mrf.mxu0
    %795 = vdwg.mxu0
    %797 = vset.pattern.permute.xlu0 0
    %798 = vperm.xlu0 %797, %v37
    %v799 = vpop.permute.xlu0 %798
    %802 = vset.pattern.permute.xlu0 0
    %803 = vperm.xlu0 %802, %v38
    %v804 = vpop.permute.xlu0 %803
    %v806 = vadd.f32 %v788, %v799
    %v807 = vadd.f32 %v793, %v804
    %v808 = vlaneseq
    %v809 = vshrl.u32 %v808, 7
    %v810 = vsub.s32 2, %v809
    %v811 = vrot.slane %v591, %v810
    %812 = vmatprep.subr.mxu0 0.0
    %813 = vmatpush1.msra.mxu0 0.0
    %814 = vmatprep.subr.mxu0 0.0
    %815 = vmatpush1.msra.mxu0 0.0
    %816 = vmatprep.subr.mxu0 0.0
    %817 = vmatpush1.msra.mxu0 0.0
    %818 = vmatprep.subr.mxu0 0.0
    %819 = vmatpush1.msra.mxu0 0.0
    %820 = vmatprep.subr.mxu0 0.0
    %821 = vmatpush1.msra.mxu0 0.0
    %822 = vmatprep.subr.mxu0 0.0
    %823 = vmatpush1.msra.mxu0 0.0
    %824 = vmatprep.subr.mxu0 0.0
    %825 = vmatpush1.msra.mxu0 0.0
    %826 = vmatprep.subr.mxu0 0.0
    %827 = vmatpush1.msra.mxu0 0.0
    %828 = vmatprep.subr.mxu0 0.0
    %829 = vmatpush1.msra.mxu0 0.0
    %830 = vmatprep.subr.mxu0 0.0
    %831 = vmatpush1.msra.mxu0 0.0
    %832 = vmatprep.subr.mxu0 0.0
    %833 = vmatpush1.msra.mxu0 0.0
    %834 = vmatprep.subr.mxu0 0.0
    %835 = vmatpush1.msra.mxu0 0.0
    %836 = vmatprep.subr.mxu0 0.0
    %837 = vmatpush1.msra.mxu0 %v590
    %838 = vmatprep.subr.mxu0 0.0
    %839 = vmatpush1.msra.mxu0 %v589
    %840 = vmatprep.subr.mxu0 0.0
    %841 = vmatpush1.msra.mxu0 %v588
    %842 = vmatprep.subr.mxu0 0.0
    %843 = vmatpush1.msra.mxu0 %v587
    %844 = vmatprep.subr.mxu0 0.0
    %845 = vmatpush2.msra.mxu0 0.0
    %846 = vmatprep.subr.mxu0 0.0
    %847 = vmatpush2.msra.mxu0 0.0
    %848 = vmatprep.subr.mxu0 0.0
    %849 = vmatpush2.msra.mxu0 0.0
    %850 = vmatprep.subr.mxu0 0.0
    %851 = vmatpush2.msra.mxu0 0.0
    %852 = vmatprep.subr.mxu0 0.0
    %853 = vmatpush2.msra.mxu0 0.0
    %854 = vmatprep.subr.mxu0 0.0
    %855 = vmatpush2.msra.mxu0 0.0
    %856 = vmatprep.subr.mxu0 0.0
    %857 = vmatpush2.msra.mxu0 0.0
    %858 = vmatprep.subr.mxu0 0.0
    %859 = vmatpush2.msra.mxu0 0.0
    %860 = vmatprep.subr.mxu0 0.0
    %861 = vmatpush2.msra.mxu0 0.0
    %862 = vmatprep.subr.mxu0 0.0
    %863 = vmatpush2.msra.mxu0 0.0
    %864 = vmatprep.subr.mxu0 0.0
    %865 = vmatpush2.msra.mxu0 0.0
    %866 = vmatprep.subr.mxu0 0.0
    %867 = vmatpush2.msra.mxu0 0.0
    %868 = vmatprep.subr.mxu0 0.0
    %869 = vmatpush2.msra.mxu0 0.0
    %870 = vmatprep.subr.mxu0 0.0
    %871 = vmatpush2.msra.mxu0 0.0
    %872 = vmatprep.subr.mxu0 0.0
    %873 = vmatpush2.msra.mxu0 0.0
    %874 = vmatprep.subr.mxu0 0.0
    %875 = vmatpush2.msra.mxu0 0.0
    %876 = vmatprep.mubr.f32.mxu0 0.0
    %877 = vmatmul.mubr.f32.gmra.mxu0 %v637
    %v878 = vpop.f32.mrf.mxu0
    %v879 = vadd.f32 %v811, %v878
    %v880 = vpop.f32.mrf.mxu0
    %881 = vmatprep.mubr.f32.mxu0 0.0
    %882 = vmatmul.mubr.f32.gmra.mxu0 %v640
    %v883 = vpop.f32.mrf.mxu0
    %v884 = vadd.f32 %v811, %v883
    %v885 = vpop.f32.mrf.mxu0
    %886 = vdwg.mxu0
    %888 = vset.pattern.permute.xlu0 0
    %889 = vperm.xlu0 %888, %v33
    %v890 = vpop.permute.xlu0 %889
    %893 = vset.pattern.permute.xlu0 0
    %894 = vperm.xlu0 %893, %v34
    %v895 = vpop.permute.xlu0 %894
    %v897 = vmul.f32 %v879, %v890
    %v898 = vmul.f32 %v884, %v895
    %v899 = vsel %vm592, %v709, -inf
    %900 = vmax.xlane.f32.xlu0 %v899
    %v901 = vpop.xlane.xlu0 %900
    %v902 = vsel %vm592, %v714, -inf
    %903 = vmax.xlane.f32.xlu0 %v902
    %v904 = vpop.xlane.xlu0 %903
    %v905 = vsub.f32 %v709, %v901
    %v906 = vsub.f32 %v714, %v904
    %v907 = vmul.f32 %v905, 1.442695
    %v908 = vpow.pop %v907
    %v909 = vmul.f32 %v906, 1.442695
    %v910 = vpow.pop %v909
    %v912 = vsel %vm592, %v908, 0
    %v915 = vsel %vm592, %v910, 0
    %917 = vmatprep.subr.mxu0 0.0
    %918 = vmatpush1.msra.mxu0 0.0
    %919 = vmatprep.subr.mxu0 0.0
    %920 = vmatpush1.msra.mxu0 0.0
    %921 = vmatprep.subr.mxu0 0.0
    %922 = vmatpush1.msra.mxu0 0.0
    %923 = vmatprep.subr.mxu0 0.0
    %924 = vmatpush1.msra.mxu0 0.0
    %925 = vmatprep.subr.mxu0 0.0
    %926 = vmatpush1.msra.mxu0 0.0
    %927 = vmatprep.subr.mxu0 0.0
    %928 = vmatpush1.msra.mxu0 0.0
    %929 = vmatprep.subr.mxu0 0.0
    %930 = vmatpush1.msra.mxu0 0.0
    %931 = vmatprep.subr.mxu0 0.0
    %932 = vmatpush1.msra.mxu0 0.0
    %933 = vmatprep.subr.mxu0 0.0
    %934 = vmatpush1.msra.mxu0 0.0
    %935 = vmatprep.subr.mxu0 0.0
    %936 = vmatpush1.msra.mxu0 0.0
    %937 = vmatprep.subr.mxu0 0.0
    %938 = vmatpush1.msra.mxu0 0.0
    %939 = vmatprep.subr.mxu0 0.0
    %940 = vmatpush1.msra.mxu0 0.0
    %941 = vmatprep.subr.mxu0 0.0
    %942 = vmatpush1.msra.mxu0 %v42
    %943 = vmatprep.subr.mxu0 0.0
    %944 = vmatpush1.msra.mxu0 %v41
    %945 = vmatprep.subr.mxu0 0.0
    %946 = vmatpush1.msra.mxu0 %v40
    %947 = vmatprep.subr.mxu0 0.0
    %948 = vmatpush1.msra.mxu0 %v39
    %949 = vmatprep.subr.mxu0 0.0
    %950 = vmatpush2.msra.mxu0 0.0
    %951 = vmatprep.subr.mxu0 0.0
    %952 = vmatpush2.msra.mxu0 0.0
    %953 = vmatprep.subr.mxu0 0.0
    %954 = vmatpush2.msra.mxu0 0.0
    %955 = vmatprep.subr.mxu0 0.0
    %956 = vmatpush2.msra.mxu0 0.0
    %957 = vmatprep.subr.mxu0 0.0
    %958 = vmatpush2.msra.mxu0 0.0
    %959 = vmatprep.subr.mxu0 0.0
    %960 = vmatpush2.msra.mxu0 0.0
    %961 = vmatprep.subr.mxu0 0.0
    %962 = vmatpush2.msra.mxu0 0.0
    %963 = vmatprep.subr.mxu0 0.0
    %964 = vmatpush2.msra.mxu0 0.0
    %965 = vmatprep.subr.mxu0 0.0
    %966 = vmatpush2.msra.mxu0 0.0
    %967 = vmatprep.subr.mxu0 0.0
    %968 = vmatpush2.msra.mxu0 0.0
    %969 = vmatprep.subr.mxu0 0.0
    %970 = vmatpush2.msra.mxu0 0.0
    %971 = vmatprep.subr.mxu0 0.0
    %972 = vmatpush2.msra.mxu0 0.0
    %973 = vmatprep.subr.mxu0 0.0
    %974 = vmatpush2.msra.mxu0 0.0
    %975 = vmatprep.subr.mxu0 0.0
    %976 = vmatpush2.msra.mxu0 0.0
    %977 = vmatprep.subr.mxu0 0.0
    %978 = vmatpush2.msra.mxu0 0.0
    %979 = vmatprep.subr.mxu0 0.0
    %980 = vmatpush2.msra.mxu0 0.0
    %981 = vmatprep.mubr.f32.mxu0 0.0
    %982 = vmatmul.mubr.f32.gmra.mxu0 %v912
    %v983 = vpop.f32.mrf.mxu0
    %v984 = vadd.f32 0.0, %v983
    %v985 = vpop.f32.mrf.mxu0
    %986 = vmatprep.mubr.f32.mxu0 0.0
    %987 = vmatmul.mubr.f32.gmra.mxu0 %v915
    %v988 = vpop.f32.mrf.mxu0
    %v989 = vadd.f32 0.0, %v988
    %v990 = vpop.f32.mrf.mxu0
    %991 = vdwg.mxu0
    %v992 = vrcp.pop %v984
    %v993 = vrcp.pop %v989
    %v994 = vmul.f32 %v908, %v992
    %v995 = vmul.f32 %v910, %v993
    %v996 = vsel %vm592, %v806, -inf
    %v997 = vsel %vm592, %v807, -inf
    %v998 = vmax.f32 %v996, %v997
    %v999 = vrot.slane %v998, 4
    %v1000 = vmax.f32 %v998, %v999
    %v1001 = vrot.slane %v1000, 2
    %v1002 = vmax.f32 %v1000, %v1001
    %v1003 = vrot.slane %v1002, 1
    %v1004 = vmax.f32 %v1002, %v1003
    %v1005 = vsub.f32 %v806, %v1004
    %v1006 = vsub.f32 %v807, %v1004
    %v1007 = vmul.f32 %v1005, 1.442695
    %v1008 = vpow.pop %v1007
    %v1009 = vmul.f32 %v1006, 1.442695
    %v1010 = vpow.pop %v1009
    %v1011 = vsel %vm592, %v1008, 0.0
    %v1012 = vrot.slane %v1011, 4
    %v1013 = vadd.f32 %v1011, %v1012
    %v1014 = vrot.slane %v1013, 2
    %v1015 = vadd.f32 %v1013, %v1014
    %v1016 = vrot.slane %v1015, 1
    %v1017 = vadd.f32 %v1015, %v1016
    %v1018 = vrcp.pop %v1017
    %v1019 = vmul.f32 %v1008, %v1018
    %1020 = vxpose.xlu0.b32.start [1/16] %v1019, 128
    %1021 = vxpose.xlu0.b32.cont [2/16] 0.0, 128
    %1022 = vxpose.xlu0.b32.cont [3/16] 0.0, 128
    %1023 = vxpose.xlu0.b32.cont [4/16] 0.0, 128
    %1024 = vxpose.xlu0.b32.cont [5/16] 0.0, 128
    %1025 = vxpose.xlu0.b32.cont [6/16] 0.0, 128
    %1026 = vxpose.xlu0.b32.cont [7/16] 0.0, 128
    %1027 = vxpose.xlu0.b32.cont [8/16] 0.0, 128
    %1028 = vxpose.xlu0.b32.cont [9/16] 0.0, 128
    %1029 = vxpose.xlu0.b32.cont [10/16] 0.0, 128
    %1030 = vxpose.xlu0.b32.cont [11/16] 0.0, 128
    %1031 = vxpose.xlu0.b32.cont [12/16] 0.0, 128
    %1032 = vxpose.xlu0.b32.cont [13/16] 0.0, 128
    %1033 = vxpose.xlu0.b32.cont [14/16] 0.0, 128
    %1034 = vxpose.xlu0.b32.cont [15/16] 0.0, 128
    %1035 = vxpose.xlu0.b32.end [16/16] 0.0, 128
    %v1036 = vpop.trf.xlu0
    %v1037 = vpop.trf.xlu0
    %v1038 = vpop.trf.xlu0
    %v1039 = vpop.trf.xlu0
    %v1040 = vpop.trf.xlu0
    %v1041 = vpop.trf.xlu0
    %v1042 = vpop.trf.xlu0
    %v1043 = vpop.trf.xlu0
    %v1044 = vpop.trf.xlu0
    %v1045 = vpop.trf.xlu0
    %v1046 = vpop.trf.xlu0
    %v1047 = vpop.trf.xlu0
    %v1048 = vpop.trf.xlu0
    %v1049 = vpop.trf.xlu0
    %v1050 = vpop.trf.xlu0
    %v1051 = vpop.trf.xlu0
    %vm1052 = vcmask 64512
    %v1054 = vsel %vm1052, %v1036, 0
    %v1057 = vsel %vm1052, %v1037, 0
    %v1060 = vsel %vm1052, %v1038, 0
    %v1063 = vsel %vm1052, %v1039, 0
    %1065 = vmatprep.subr.mxu0 0.0
    %1066 = vmatpush1.msra.mxu0 0.0
    %1067 = vmatprep.subr.mxu0 0.0
    %1068 = vmatpush1.msra.mxu0 0.0
    %1069 = vmatprep.subr.mxu0 0.0
    %1070 = vmatpush1.msra.mxu0 0.0
    %1071 = vmatprep.subr.mxu0 0.0
    %1072 = vmatpush1.msra.mxu0 0.0
    %1073 = vmatprep.subr.mxu0 0.0
    %1074 = vmatpush1.msra.mxu0 0.0
    %1075 = vmatprep.subr.mxu0 0.0
    %1076 = vmatpush1.msra.mxu0 0.0
    %1077 = vmatprep.subr.mxu0 0.0
    %1078 = vmatpush1.msra.mxu0 0.0
    %1079 = vmatprep.subr.mxu0 0.0
    %1080 = vmatpush1.msra.mxu0 0.0
    %1081 = vmatprep.subr.mxu0 0.0
    %1082 = vmatpush1.msra.mxu0 0.0
    %1083 = vmatprep.subr.mxu0 0.0
    %1084 = vmatpush1.msra.mxu0 0.0
    %1085 = vmatprep.subr.mxu0 0.0
    %1086 = vmatpush1.msra.mxu0 0.0
    %1087 = vmatprep.subr.mxu0 0.0
    %1088 = vmatpush1.msra.mxu0 0.0
    %1089 = vmatprep.subr.mxu0 0.0
    %1090 = vmatpush1.msra.mxu0 0.0
    %1091 = vmatprep.subr.mxu0 0.0
    %1092 = vmatpush1.msra.mxu0 0.0
    %1093 = vmatprep.subr.mxu0 0.0
    %1094 = vmatpush1.msra.mxu0 0.0
    %1095 = vmatprep.subr.mxu0 0.0
    %1096 = vmatpush1.msra.mxu0 %v897
    %1097 = vmatprep.subr.mxu0 0.0
    %1098 = vmatpush2.msra.mxu0 0.0
    %1099 = vmatprep.subr.mxu0 0.0
    %1100 = vmatpush2.msra.mxu0 0.0
    %1101 = vmatprep.subr.mxu0 0.0
    %1102 = vmatpush2.msra.mxu0 0.0
    %1103 = vmatprep.subr.mxu0 0.0
    %1104 = vmatpush2.msra.mxu0 0.0
    %1105 = vmatprep.subr.mxu0 0.0
    %1106 = vmatpush2.msra.mxu0 0.0
    %1107 = vmatprep.subr.mxu0 0.0
    %1108 = vmatpush2.msra.mxu0 0.0
    %1109 = vmatprep.subr.mxu0 0.0
    %1110 = vmatpush2.msra.mxu0 0.0
    %1111 = vmatprep.subr.mxu0 0.0
    %1112 = vmatpush2.msra.mxu0 0.0
    %1113 = vmatprep.subr.mxu0 0.0
    %1114 = vmatpush2.msra.mxu0 0.0
    %1115 = vmatprep.subr.mxu0 0.0
    %1116 = vmatpush2.msra.mxu0 0.0
    %1117 = vmatprep.subr.mxu0 0.0
    %1118 = vmatpush2.msra.mxu0 0.0
    %1119 = vmatprep.subr.mxu0 0.0
    %1120 = vmatpush2.msra.mxu0 0.0
    %1121 = vmatprep.subr.mxu0 0.0
    %1122 = vmatpush2.msra.mxu0 0.0
    %1123 = vmatprep.subr.mxu0 0.0
    %1124 = vmatpush2.msra.mxu0 0.0
    %1125 = vmatprep.subr.mxu0 0.0
    %1126 = vmatpush2.msra.mxu0 0.0
    %1127 = vmatprep.subr.mxu0 0.0
    %1128 = vmatpush2.msra.mxu0 0.0
    %1129 = vmatprep.mubr.f32.mxu0 0.0
    %1130 = vmatmul.mubr.f32.gmra.mxu0 %v1054
    %v1131 = vpop.f32.mrf.mxu0
    %v1132 = vadd.f32 0.0, %v1131
    %v1133 = vpop.f32.mrf.mxu0
    %1134 = vmatprep.mubr.f32.mxu0 0.0
    %1135 = vmatmul.mubr.f32.gmra.mxu0 %v1057
    %v1136 = vpop.f32.mrf.mxu0
    %v1137 = vadd.f32 0.0, %v1136
    %v1138 = vpop.f32.mrf.mxu0
    %1139 = vmatprep.mubr.f32.mxu0 0.0
    %1140 = vmatmul.mubr.f32.gmra.mxu0 %v1060
    %v1141 = vpop.f32.mrf.mxu0
    %v1142 = vadd.f32 0.0, %v1141
    %v1143 = vpop.f32.mrf.mxu0
    %1144 = vmatprep.mubr.f32.mxu0 0.0
    %1145 = vmatmul.mubr.f32.gmra.mxu0 %v1063
    %v1146 = vpop.f32.mrf.mxu0
    %v1147 = vadd.f32 0.0, %v1146
    %v1148 = vpop.f32.mrf.mxu0
    %1149 = vdwg.mxu0
    %v1150 = vmul.f32 %v1132, %v39
    %v1151 = vmul.f32 %v1137, %v40
    %v1152 = vmul.f32 %v1142, %v41
    %v1153 = vmul.f32 %v1147, %v42
    %v1155 = vsel %vm592, %v994, 0
    %1157 = vmatprep.subr.mxu0 0.0
    %1158 = vmatpush1.msra.mxu0 0.0
    %1159 = vmatprep.subr.mxu0 0.0
    %1160 = vmatpush1.msra.mxu0 0.0
    %1161 = vmatprep.subr.mxu0 0.0
    %1162 = vmatpush1.msra.mxu0 0.0
    %1163 = vmatprep.subr.mxu0 0.0
    %1164 = vmatpush1.msra.mxu0 0.0
    %1165 = vmatprep.subr.mxu0 0.0
    %1166 = vmatpush1.msra.mxu0 0.0
    %1167 = vmatprep.subr.mxu0 0.0
    %1168 = vmatpush1.msra.mxu0 0.0
    %1169 = vmatprep.subr.mxu0 0.0
    %1170 = vmatpush1.msra.mxu0 0.0
    %1171 = vmatprep.subr.mxu0 0.0
    %1172 = vmatpush1.msra.mxu0 0.0
    %1173 = vmatprep.subr.mxu0 0.0
    %1174 = vmatpush1.msra.mxu0 0.0
    %1175 = vmatprep.subr.mxu0 0.0
    %1176 = vmatpush1.msra.mxu0 0.0
    %1177 = vmatprep.subr.mxu0 0.0
    %1178 = vmatpush1.msra.mxu0 0.0
    %1179 = vmatprep.subr.mxu0 0.0
    %1180 = vmatpush1.msra.mxu0 0.0
    %1181 = vmatprep.subr.mxu0 0.0
    %1182 = vmatpush1.msra.mxu0 %v1153
    %1183 = vmatprep.subr.mxu0 0.0
    %1184 = vmatpush1.msra.mxu0 %v1152
    %1185 = vmatprep.subr.mxu0 0.0
    %1186 = vmatpush1.msra.mxu0 %v1151
    %1187 = vmatprep.subr.mxu0 0.0
    %1188 = vmatpush1.msra.mxu0 %v1150
    %1189 = vmatprep.subr.mxu0 0.0
    %1190 = vmatpush2.msra.mxu0 0.0
    %1191 = vmatprep.subr.mxu0 0.0
    %1192 = vmatpush2.msra.mxu0 0.0
    %1193 = vmatprep.subr.mxu0 0.0
    %1194 = vmatpush2.msra.mxu0 0.0
    %1195 = vmatprep.subr.mxu0 0.0
    %1196 = vmatpush2.msra.mxu0 0.0
    %1197 = vmatprep.subr.mxu0 0.0
    %1198 = vmatpush2.msra.mxu0 0.0
    %1199 = vmatprep.subr.mxu0 0.0
    %1200 = vmatpush2.msra.mxu0 0.0
    %1201 = vmatprep.subr.mxu0 0.0
    %1202 = vmatpush2.msra.mxu0 0.0
    %1203 = vmatprep.subr.mxu0 0.0
    %1204 = vmatpush2.msra.mxu0 0.0
    %1205 = vmatprep.subr.mxu0 0.0
    %1206 = vmatpush2.msra.mxu0 0.0
    %1207 = vmatprep.subr.mxu0 0.0
    %1208 = vmatpush2.msra.mxu0 0.0
    %1209 = vmatprep.subr.mxu0 0.0
    %1210 = vmatpush2.msra.mxu0 0.0
    %1211 = vmatprep.subr.mxu0 0.0
    %1212 = vmatpush2.msra.mxu0 0.0
    %1213 = vmatprep.subr.mxu0 0.0
    %1214 = vmatpush2.msra.mxu0 0.0
    %1215 = vmatprep.subr.mxu0 0.0
    %1216 = vmatpush2.msra.mxu0 0.0
    %1217 = vmatprep.subr.mxu0 0.0
    %1218 = vmatpush2.msra.mxu0 0.0
    %1219 = vmatprep.subr.mxu0 0.0
    %1220 = vmatpush2.msra.mxu0 0.0
    %1221 = vmatprep.mubr.f32.mxu0 0.0
    %1222 = vmatmul.mubr.f32.gmra.mxu0 %v1155
    %v1223 = vpop.f32.mrf.mxu0
    %v1224 = vadd.f32 0.0, %v1223
    %v1225 = vpop.f32.mrf.mxu0
    %1226 = vdwg.mxu0
    %v1227 = vsel %vm592, %v1010, 0.0
    %v1228 = vrot.slane %v1227, 4
    %v1229 = vadd.f32 %v1227, %v1228
    %v1230 = vrot.slane %v1229, 2
    %v1231 = vadd.f32 %v1229, %v1230
    %v1232 = vrot.slane %v1231, 1
    %v1233 = vadd.f32 %v1231, %v1232
    %v1234 = vrcp.pop %v1233
    %v1235 = vmul.f32 %v1010, %v1234
    %1236 = vxpose.xlu0.b32.start [1/16] %v1235, 128
    %1237 = vxpose.xlu0.b32.cont [2/16] 0.0, 128
    %1238 = vxpose.xlu0.b32.cont [3/16] 0.0, 128
    %1239 = vxpose.xlu0.b32.cont [4/16] 0.0, 128
    %1240 = vxpose.xlu0.b32.cont [5/16] 0.0, 128
    %1241 = vxpose.xlu0.b32.cont [6/16] 0.0, 128
    %1242 = vxpose.xlu0.b32.cont [7/16] 0.0, 128
    %1243 = vxpose.xlu0.b32.cont [8/16] 0.0, 128
    %1244 = vxpose.xlu0.b32.cont [9/16] 0.0, 128
    %1245 = vxpose.xlu0.b32.cont [10/16] 0.0, 128
    %1246 = vxpose.xlu0.b32.cont [11/16] 0.0, 128
    %1247 = vxpose.xlu0.b32.cont [12/16] 0.0, 128
    %1248 = vxpose.xlu0.b32.cont [13/16] 0.0, 128
    %1249 = vxpose.xlu0.b32.cont [14/16] 0.0, 128
    %1250 = vxpose.xlu0.b32.cont [15/16] 0.0, 128
    %1251 = vxpose.xlu0.b32.end [16/16] 0.0, 128
    %v1252 = vpop.trf.xlu0
    %v1253 = vpop.trf.xlu0
    %v1254 = vpop.trf.xlu0
    %v1255 = vpop.trf.xlu0
    %v1256 = vpop.trf.xlu0
    %v1257 = vpop.trf.xlu0
    %v1258 = vpop.trf.xlu0
    %v1259 = vpop.trf.xlu0
    %v1260 = vpop.trf.xlu0
    %v1261 = vpop.trf.xlu0
    %v1262 = vpop.trf.xlu0
    %v1263 = vpop.trf.xlu0
    %v1264 = vpop.trf.xlu0
    %v1265 = vpop.trf.xlu0
    %v1266 = vpop.trf.xlu0
    %v1267 = vpop.trf.xlu0
    %v1269 = vsel %vm1052, %v1252, 0
    %v1272 = vsel %vm1052, %v1253, 0
    %v1275 = vsel %vm1052, %v1254, 0
    %v1278 = vsel %vm1052, %v1255, 0
    %1280 = vmatprep.subr.mxu0 0.0
    %1281 = vmatpush1.msra.mxu0 0.0
    %1282 = vmatprep.subr.mxu0 0.0
    %1283 = vmatpush1.msra.mxu0 0.0
    %1284 = vmatprep.subr.mxu0 0.0
    %1285 = vmatpush1.msra.mxu0 0.0
    %1286 = vmatprep.subr.mxu0 0.0
    %1287 = vmatpush1.msra.mxu0 0.0
    %1288 = vmatprep.subr.mxu0 0.0
    %1289 = vmatpush1.msra.mxu0 0.0
    %1290 = vmatprep.subr.mxu0 0.0
    %1291 = vmatpush1.msra.mxu0 0.0
    %1292 = vmatprep.subr.mxu0 0.0
    %1293 = vmatpush1.msra.mxu0 0.0
    %1294 = vmatprep.subr.mxu0 0.0
    %1295 = vmatpush1.msra.mxu0 0.0
    %1296 = vmatprep.subr.mxu0 0.0
    %1297 = vmatpush1.msra.mxu0 0.0
    %1298 = vmatprep.subr.mxu0 0.0
    %1299 = vmatpush1.msra.mxu0 0.0
    %1300 = vmatprep.subr.mxu0 0.0
    %1301 = vmatpush1.msra.mxu0 0.0
    %1302 = vmatprep.subr.mxu0 0.0
    %1303 = vmatpush1.msra.mxu0 0.0
    %1304 = vmatprep.subr.mxu0 0.0
    %1305 = vmatpush1.msra.mxu0 0.0
    %1306 = vmatprep.subr.mxu0 0.0
    %1307 = vmatpush1.msra.mxu0 0.0
    %1308 = vmatprep.subr.mxu0 0.0
    %1309 = vmatpush1.msra.mxu0 0.0
    %1310 = vmatprep.subr.mxu0 0.0
    %1311 = vmatpush1.msra.mxu0 %v898
    %1312 = vmatprep.subr.mxu0 0.0
    %1313 = vmatpush2.msra.mxu0 0.0
    %1314 = vmatprep.subr.mxu0 0.0
    %1315 = vmatpush2.msra.mxu0 0.0
    %1316 = vmatprep.subr.mxu0 0.0
    %1317 = vmatpush2.msra.mxu0 0.0
    %1318 = vmatprep.subr.mxu0 0.0
    %1319 = vmatpush2.msra.mxu0 0.0
    %1320 = vmatprep.subr.mxu0 0.0
    %1321 = vmatpush2.msra.mxu0 0.0
    %1322 = vmatprep.subr.mxu0 0.0
    %1323 = vmatpush2.msra.mxu0 0.0
    %1324 = vmatprep.subr.mxu0 0.0
    %1325 = vmatpush2.msra.mxu0 0.0
    %1326 = vmatprep.subr.mxu0 0.0
    %1327 = vmatpush2.msra.mxu0 0.0
    %1328 = vmatprep.subr.mxu0 0.0
    %1329 = vmatpush2.msra.mxu0 0.0
    %1330 = vmatprep.subr.mxu0 0.0
    %1331 = vmatpush2.msra.mxu0 0.0
    %1332 = vmatprep.subr.mxu0 0.0
    %1333 = vmatpush2.msra.mxu0 0.0
    %1334 = vmatprep.subr.mxu0 0.0
    %1335 = vmatpush2.msra.mxu0 0.0
    %1336 = vmatprep.subr.mxu0 0.0
    %1337 = vmatpush2.msra.mxu0 0.0
    %1338 = vmatprep.subr.mxu0 0.0
    %1339 = vmatpush2.msra.mxu0 0.0
    %1340 = vmatprep.subr.mxu0 0.0
    %1341 = vmatpush2.msra.mxu0 0.0
    %1342 = vmatprep.subr.mxu0 0.0
    %1343 = vmatpush2.msra.mxu0 0.0
    %1344 = vmatprep.mubr.f32.mxu0 0.0
    %1345 = vmatmul.mubr.f32.gmra.mxu0 %v1269
    %v1346 = vpop.f32.mrf.mxu0
    %v1347 = vadd.f32 0.0, %v1346
    %v1348 = vpop.f32.mrf.mxu0
    %1349 = vmatprep.mubr.f32.mxu0 0.0
    %1350 = vmatmul.mubr.f32.gmra.mxu0 %v1272
    %v1351 = vpop.f32.mrf.mxu0
    %v1352 = vadd.f32 0.0, %v1351
    %v1353 = vpop.f32.mrf.mxu0
    %1354 = vmatprep.mubr.f32.mxu0 0.0
    %1355 = vmatmul.mubr.f32.gmra.mxu0 %v1275
    %v1356 = vpop.f32.mrf.mxu0
    %v1357 = vadd.f32 0.0, %v1356
    %v1358 = vpop.f32.mrf.mxu0
    %1359 = vmatprep.mubr.f32.mxu0 0.0
    %1360 = vmatmul.mubr.f32.gmra.mxu0 %v1278
    %v1361 = vpop.f32.mrf.mxu0
    %v1362 = vadd.f32 0.0, %v1361
    %v1363 = vpop.f32.mrf.mxu0
    %1364 = vdwg.mxu0
    %v1365 = vmul.f32 %v1347, %v39
    %v1366 = vmul.f32 %v1352, %v40
    %v1367 = vmul.f32 %v1357, %v41
    %v1368 = vmul.f32 %v1362, %v42
    %v1370 = vsel %vm592, %v995, 0
    %1372 = vmatprep.subr.mxu0 0.0
    %1373 = vmatpush1.msra.mxu0 0.0
    %1374 = vmatprep.subr.mxu0 0.0
    %1375 = vmatpush1.msra.mxu0 0.0
    %1376 = vmatprep.subr.mxu0 0.0
    %1377 = vmatpush1.msra.mxu0 0.0
    %1378 = vmatprep.subr.mxu0 0.0
    %1379 = vmatpush1.msra.mxu0 0.0
    %1380 = vmatprep.subr.mxu0 0.0
    %1381 = vmatpush1.msra.mxu0 0.0
    %1382 = vmatprep.subr.mxu0 0.0
    %1383 = vmatpush1.msra.mxu0 0.0
    %1384 = vmatprep.subr.mxu0 0.0
    %1385 = vmatpush1.msra.mxu0 0.0
    %1386 = vmatprep.subr.mxu0 0.0
    %1387 = vmatpush1.msra.mxu0 0.0
    %1388 = vmatprep.subr.mxu0 0.0
    %1389 = vmatpush1.msra.mxu0 0.0
    %1390 = vmatprep.subr.mxu0 0.0
    %1391 = vmatpush1.msra.mxu0 0.0
    %1392 = vmatprep.subr.mxu0 0.0
    %1393 = vmatpush1.msra.mxu0 0.0
    %1394 = vmatprep.subr.mxu0 0.0
    %1395 = vmatpush1.msra.mxu0 0.0
    %1396 = vmatprep.subr.mxu0 0.0
    %1397 = vmatpush1.msra.mxu0 %v1368
    %1398 = vmatprep.subr.mxu0 0.0
    %1399 = vmatpush1.msra.mxu0 %v1367
    %1400 = vmatprep.subr.mxu0 0.0
    %1401 = vmatpush1.msra.mxu0 %v1366
    %1402 = vmatprep.subr.mxu0 0.0
    %1403 = vmatpush1.msra.mxu0 %v1365
    %1404 = vmatprep.subr.mxu0 0.0
    %1405 = vmatpush2.msra.mxu0 0.0
    %1406 = vmatprep.subr.mxu0 0.0
    %1407 = vmatpush2.msra.mxu0 0.0
    %1408 = vmatprep.subr.mxu0 0.0
    %1409 = vmatpush2.msra.mxu0 0.0
    %1410 = vmatprep.subr.mxu0 0.0
    %1411 = vmatpush2.msra.mxu0 0.0
    %1412 = vmatprep.subr.mxu0 0.0
    %1413 = vmatpush2.msra.mxu0 0.0
    %1414 = vmatprep.subr.mxu0 0.0
    %1415 = vmatpush2.msra.mxu0 0.0
    %1416 = vmatprep.subr.mxu0 0.0
    %1417 = vmatpush2.msra.mxu0 0.0
    %1418 = vmatprep.subr.mxu0 0.0
    %1419 = vmatpush2.msra.mxu0 0.0
    %1420 = vmatprep.subr.mxu0 0.0
    %1421 = vmatpush2.msra.mxu0 0.0
    %1422 = vmatprep.subr.mxu0 0.0
    %1423 = vmatpush2.msra.mxu0 0.0
    %1424 = vmatprep.subr.mxu0 0.0
    %1425 = vmatpush2.msra.mxu0 0.0
    %1426 = vmatprep.subr.mxu0 0.0
    %1427 = vmatpush2.msra.mxu0 0.0
    %1428 = vmatprep.subr.mxu0 0.0
    %1429 = vmatpush2.msra.mxu0 0.0
    %1430 = vmatprep.subr.mxu0 0.0
    %1431 = vmatpush2.msra.mxu0 0.0
    %1432 = vmatprep.subr.mxu0 0.0
    %1433 = vmatpush2.msra.mxu0 0.0
    %1434 = vmatprep.subr.mxu0 0.0
    %1435 = vmatpush2.msra.mxu0 0.0
    %1436 = vmatprep.mubr.f32.mxu0 0.0
    %1437 = vmatmul.mubr.f32.gmra.mxu0 %v1370
    %v1438 = vpop.f32.mrf.mxu0
    %v1439 = vadd.f32 0.0, %v1438
    %v1440 = vpop.f32.mrf.mxu0
    %1441 = vdwg.mxu0
    %v1442 = vsel %vm592, %v1224, 0.0
    %1443 = vadd.xlane.f32.xlu0 %v1442
    %v1444 = vpop.xlane.xlu0 %1443
    %v1445 = vsel %vm592, %v1439, 0.0
    %1446 = vadd.xlane.f32.xlu0 %v1445
    %v1447 = vpop.xlane.xlu0 %1446
    %v1448 = vmul.f32 %v1444, %v599
    %v1449 = vmul.f32 %v1447, %v599
    %v1450 = vsub.f32 %v1224, %v1448
    %v1451 = vsub.f32 %v1439, %v1449
    %v1452 = vmul.f32 %v1450, %v1450
    %v1453 = vmul.f32 %v1451, %v1451
    %v1454 = vsel %vm592, %v1452, 0.0
    %1455 = vadd.xlane.f32.xlu0 %v1454
    %v1456 = vpop.xlane.xlu0 %1455
    %v1457 = vsel %vm592, %v1453, 0.0
    %1458 = vadd.xlane.f32.xlu0 %v1457
    %v1459 = vpop.xlane.xlu0 %1458
    %v1460 = vmul.f32 %v1456, %v599
    %v1461 = vmul.f32 %v1459, %v599
    %v1462 = vadd.f32 %v1460, 1e-05
    %v1463 = vadd.f32 %v1461, 1e-05
    %v1464 = vrsqrt.pop %v1462
    %v1465 = vrsqrt.pop %v1463
    %v1466 = vmul.f32 %v1450, %v1464
    %v1467 = vmul.f32 %v1451, %v1465
    %v1468 = vlaneseq
    %v1469 = vshrl.u32 %v1468, 7
    %v1470 = vsub.s32 0, %v1469
    %v1471 = vrot.slane %v458, %v1470
    %v1472 = vmul.f32 %v1466, %v1471
    %v1473 = vmul.f32 %v1467, %v1471
    %v1474 = vlaneseq
    %v1475 = vshrl.u32 %v1474, 7
    %v1476 = vsub.s32 1, %v1475
    %v1477 = vrot.slane %v458, %v1476
    %v1478 = vadd.f32 %v1472, %v1477
    %v1479 = vadd.f32 %v1473, %v1477
    %v1480 = vadd.f32 %v258, 1.0
    %v1481 = vadd.f32 %v263, 1.0
    %v1482 = vmul.f32 %v1478, %v1480
    %v1483 = vmul.f32 %v1479, %v1481
    %1486 = vrot.lane.b32.xlu0 %v258, 96
    %v1487 = vpop.permute.xlu0 %1486
    %1488 = vrot.lane.b32.xlu0 %v263, 96
    %v1489 = vpop.permute.xlu0 %1488
    %v1492 = vadd.f32 %v1482, %v1487
    %v1493 = vadd.f32 %v1483, %v1489
    %v1494 = vxor.u32 %v1492, 2147483648
    %v1495 = vxor.u32 %v1493, 2147483648
    %v1496 = vmul.f32 %v1494, 1.442695
    %v1497 = vpow.pop %v1496
    %v1498 = vmul.f32 %v1495, 1.442695
    %v1499 = vpow.pop %v1498
    %v1500 = vadd.f32 %v1497, 1.0
    %v1501 = vadd.f32 %v1499, 1.0
    %v1502 = vrcp.pop %v1500
    %v1503 = vmul.f32 1.0, %v1502
    %v1504 = vrcp.pop %v1501
    %v1505 = vmul.f32 1.0, %v1504
    %v1506 = vmul.f32 %v1492, %v1503
    %v1507 = vmul.f32 %v1493, %v1505
    %v1508 = vlaneseq
    %v1509 = vshrl.u32 %v1508, 7
    %v1510 = vsub.s32 0, %v1509
    %v1511 = vrot.slane %v484, %v1510
    %v1513 = vsel %vm592, %v1506, 0
    %v1516 = vsel %vm592, %v1507, 0
    %1518 = vmatprep.subr.mxu0 0.0
    %1519 = vmatpush1.msra.mxu0 0.0
    %1520 = vmatprep.subr.mxu0 0.0
    %1521 = vmatpush1.msra.mxu0 0.0
    %1522 = vmatprep.subr.mxu0 0.0
    %1523 = vmatpush1.msra.mxu0 0.0
    %1524 = vmatprep.subr.mxu0 0.0
    %1525 = vmatpush1.msra.mxu0 0.0
    %1526 = vmatprep.subr.mxu0 0.0
    %1527 = vmatpush1.msra.mxu0 0.0
    %1528 = vmatprep.subr.mxu0 0.0
    %1529 = vmatpush1.msra.mxu0 0.0
    %1530 = vmatprep.subr.mxu0 0.0
    %1531 = vmatpush1.msra.mxu0 0.0
    %1532 = vmatprep.subr.mxu0 0.0
    %1533 = vmatpush1.msra.mxu0 0.0
    %1534 = vmatprep.subr.mxu0 0.0
    %1535 = vmatpush1.msra.mxu0 0.0
    %1536 = vmatprep.subr.mxu0 0.0
    %1537 = vmatpush1.msra.mxu0 0.0
    %1538 = vmatprep.subr.mxu0 0.0
    %1539 = vmatpush1.msra.mxu0 0.0
    %1540 = vmatprep.subr.mxu0 0.0
    %1541 = vmatpush1.msra.mxu0 0.0
    %1542 = vmatprep.subr.mxu0 0.0
    %1543 = vmatpush1.msra.mxu0 %v463
    %1544 = vmatprep.subr.mxu0 0.0
    %1545 = vmatpush1.msra.mxu0 %v462
    %1546 = vmatprep.subr.mxu0 0.0
    %1547 = vmatpush1.msra.mxu0 %v461
    %1548 = vmatprep.subr.mxu0 0.0
    %1549 = vmatpush1.msra.mxu0 %v460
    %1550 = vmatprep.subr.mxu0 0.0
    %1551 = vmatpush2.msra.mxu0 0.0
    %1552 = vmatprep.subr.mxu0 0.0
    %1553 = vmatpush2.msra.mxu0 0.0
    %1554 = vmatprep.subr.mxu0 0.0
    %1555 = vmatpush2.msra.mxu0 0.0
    %1556 = vmatprep.subr.mxu0 0.0
    %1557 = vmatpush2.msra.mxu0 0.0
    %1558 = vmatprep.subr.mxu0 0.0
    %1559 = vmatpush2.msra.mxu0 0.0
    %1560 = vmatprep.subr.mxu0 0.0
    %1561 = vmatpush2.msra.mxu0 0.0
    %1562 = vmatprep.subr.mxu0 0.0
    %1563 = vmatpush2.msra.mxu0 0.0
    %1564 = vmatprep.subr.mxu0 0.0
    %1565 = vmatpush2.msra.mxu0 0.0
    %1566 = vmatprep.subr.mxu0 0.0
    %1567 = vmatpush2.msra.mxu0 0.0
    %1568 = vmatprep.subr.mxu0 0.0
    %1569 = vmatpush2.msra.mxu0 0.0
    %1570 = vmatprep.subr.mxu0 0.0
    %1571 = vmatpush2.msra.mxu0 0.0
    %1572 = vmatprep.subr.mxu0 0.0
    %1573 = vmatpush2.msra.mxu0 0.0
    %1574 = vmatprep.subr.mxu0 0.0
    %1575 = vmatpush2.msra.mxu0 0.0
    %1576 = vmatprep.subr.mxu0 0.0
    %1577 = vmatpush2.msra.mxu0 0.0
    %1578 = vmatprep.subr.mxu0 0.0
    %1579 = vmatpush2.msra.mxu0 0.0
    %1580 = vmatprep.subr.mxu0 0.0
    %1581 = vmatpush2.msra.mxu0 0.0
    %1582 = vmatprep.mubr.f32.mxu0 0.0
    %1583 = vmatmul.mubr.f32.gmra.mxu0 %v1513
    %v1584 = vpop.f32.mrf.mxu0
    %v1585 = vadd.f32 %v1511, %v1584
    %v1586 = vpop.f32.mrf.mxu0
    %1587 = vmatprep.mubr.f32.mxu0 0.0
    %1588 = vmatmul.mubr.f32.gmra.mxu0 %v1516
    %v1589 = vpop.f32.mrf.mxu0
    %v1590 = vadd.f32 %v1511, %v1589
    %v1591 = vpop.f32.mrf.mxu0
    %1592 = vdwg.mxu0
    %v1593 = vadd.f32 %v576, %v1585
    %v1594 = vadd.f32 %v577, %v1590
    %v1595 = vld [vmem:[#allocation2 + $0x378] sm:$0x3]
    %v1596 = vld [vmem:[#allocation2 + $0x380] sm:$0x3]
    %v1597 = vld [vmem:[#allocation2 + $0x3a8] sm:$0xff]
    %v1598 = vld [vmem:[#allocation2 + $0x3b0] sm:$0xff]
    %v1599 = vld [vmem:[#allocation2 + $0x3b8] sm:$0xff]
    %v1600 = vld [vmem:[#allocation2 + $0x3c0] sm:$0xff]
    %v1601 = vld [vmem:[#allocation2 + $0x3c8] sm:$0xff]
    %v1602 = vld [vmem:[#allocation2 + $0x3d0] sm:$0xff]
    %v1603 = vld [vmem:[#allocation2 + $0x3d8] sm:$0xff]
    %v1604 = vld [vmem:[#allocation2 + $0x3e0] sm:$0xff]
    %v1605 = vld [vmem:[#allocation2 + $0x3e8] sm:$0xff]
    %v1606 = vld [vmem:[#allocation2 + $0x3f0] sm:$0xff]
    %v1607 = vld [vmem:[#allocation2 + $0x3f8] sm:$0xff]
    %v1608 = vld [vmem:[#allocation2 + $0x400] sm:$0xff]
    %v1609 = vld [vmem:[#allocation2 + $0x408] sm:$0xff]
    %v1610 = vld [vmem:[#allocation2 + $0x410] sm:$0xff]
    %v1611 = vld [vmem:[#allocation2 + $0x418] sm:$0xff]
    %v1612 = vld [vmem:[#allocation2 + $0x420] sm:$0xff]
    %v1613 = vld [vmem:[#allocation2 + $0x428] sm:$0xff]
    %v1614 = vld [vmem:[#allocation2 + $0x430] sm:$0xff]
    %v1615 = vld [vmem:[#allocation2 + $0x438] sm:$0xff]
    %v1616 = vld [vmem:[#allocation2 + $0x440] sm:$0xff]
    %v1617 = vld [vmem:[#allocation2 + $0x448] sm:$0xff]
    %v1618 = vld [vmem:[#allocation2 + $0x450] sm:$0xff]
    %v1619 = vld [vmem:[#allocation2 + $0x458] sm:$0xff]
    %v1620 = vld [vmem:[#allocation2 + $0x460] sm:$0xff]
    %v1621 = vld [vmem:[#allocation2 + $0x468] sm:$0xff]
    %v1622 = vld [vmem:[#allocation2 + $0x470] sm:$0xff]
    %v1623 = vld [vmem:[#allocation2 + $0x478] sm:$0xff]
    %v1624 = vld [vmem:[#allocation2 + $0x480] sm:$0xff]
    %v1625 = vld [vmem:[#allocation2 + $0x488] sm:$0xff]
    %v1626 = vld [vmem:[#allocation2 + $0x490] sm:$0xff]
    %v1627 = vld [vmem:[#allocation2 + $0x498] sm:$0xff]
    %v1628 = vld [vmem:[#allocation2 + $0x4a0] sm:$0xff]
    %v1629 = vld [vmem:[#allocation2 + $0x4a8] sm:$0x7]
    %v1630 = vsel %vm592, %v1593, 0.0
    %1631 = vadd.xlane.f32.xlu0 %v1630
    %v1632 = vpop.xlane.xlu0 %1631
    %v1633 = vsel %vm592, %v1594, 0.0
    %1634 = vadd.xlane.f32.xlu0 %v1633
    %v1635 = vpop.xlane.xlu0 %1634
    %v1636 = vmul.f32 %v1632, %v599
    %v1637 = vmul.f32 %v1635, %v599
    %v1638 = vsub.f32 %v1593, %v1636
    %v1639 = vsub.f32 %v1594, %v1637
    %v1640 = vmul.f32 %v1638, %v1638
    %v1641 = vmul.f32 %v1639, %v1639
    %v1642 = vsel %vm592, %v1640, 0.0
    %1643 = vadd.xlane.f32.xlu0 %v1642
    %v1644 = vpop.xlane.xlu0 %1643
    %v1645 = vsel %vm592, %v1641, 0.0
    %1646 = vadd.xlane.f32.xlu0 %v1645
    %v1647 = vpop.xlane.xlu0 %1646
    %v1648 = vmul.f32 %v1644, %v599
    %v1649 = vmul.f32 %v1647, %v599
    %v1650 = vadd.f32 %v1648, 1e-05
    %v1651 = vadd.f32 %v1649, 1e-05
    %v1652 = vrsqrt.pop %v1650
    %v1653 = vrsqrt.pop %v1651
    %v1654 = vmul.f32 %v1638, %v1652
    %v1655 = vmul.f32 %v1639, %v1653
    %v1656 = vlaneseq
    %v1657 = vshrl.u32 %v1656, 7
    %v1658 = vsub.s32 0, %v1657
    %v1659 = vrot.slane %v1595, %v1658
    %v1660 = vmul.f32 %v1654, %v1659
    %v1661 = vmul.f32 %v1655, %v1659
    %v1662 = vlaneseq
    %v1663 = vshrl.u32 %v1662, 7
    %v1664 = vsub.s32 1, %v1663
    %v1665 = vrot.slane %v1595, %v1664
    %v1666 = vadd.f32 %v1660, %v1665
    %v1667 = vadd.f32 %v1661, %v1665
    %1668 = vadd.xlane.f32.xlu0 %v146
    %v1669 = vpop.xlane.xlu0 %1668
    %1670 = vadd.xlane.f32.xlu0 %v151
    %v1671 = vpop.xlane.xlu0 %1670
    %v1672 = vrcp.pop 128.0
    %v1673 = vmul.f32 %v1669, %v1672
    %v1674 = vmul.f32 %v1671, %v1672
    %v1675 = vsub.f32 %v146, %v1673
    %v1676 = vsub.f32 %v151, %v1674
    %v1677 = vmul.f32 %v1675, %v1675
    %v1678 = vmul.f32 %v1676, %v1676
    %1679 = vadd.xlane.f32.xlu0 %v1677
    %v1680 = vpop.xlane.xlu0 %1679
    %1681 = vadd.xlane.f32.xlu0 %v1678
    %v1682 = vpop.xlane.xlu0 %1681
    %v1683 = vmul.f32 %v1680, %v1672
    %v1684 = vmul.f32 %v1682, %v1672
    %v1685 = vadd.f32 %v1683, 1e-05
    %v1686 = vadd.f32 %v1684, 1e-05
    %v1687 = vrsqrt.pop %v1685
    %v1688 = vrsqrt.pop %v1686
    %v1689 = vmul.f32 %v1675, %v1687
    %v1690 = vmul.f32 %v1676, %v1688
    %v1691 = vlaneseq
    %v1692 = vshrl.u32 %v1691, 7
    %v1693 = vsub.s32 0, %v1692
    %v1694 = vrot.slane %v1596, %v1693
    %v1695 = vmul.f32 %v1689, %v1694
    %v1696 = vmul.f32 %v1690, %v1694
    %v1697 = vlaneseq
    %v1698 = vshrl.u32 %v1697, 7
    %v1699 = vsub.s32 1, %v1698
    %v1700 = vrot.slane %v1596, %v1699
    %v1701 = vadd.f32 %v1695, %v1700
    %v1702 = vadd.f32 %v1696, %v1700
    %v1703 = vld [vmem:[#allocation2 + $0x388] sm:$0xff]
    %v1704 = vld [vmem:[#allocation2 + $0x390] sm:$0xff]
    %v1705 = vld [vmem:[#allocation2 + $0x398] sm:$0xff]
    %v1706 = vld [vmem:[#allocation2 + $0x3a0] sm:$0xff]
    %v1707 = vlaneseq
    %v1708 = vshrl.u32 %v1707, 7
    %v1709 = vsub.s32 0, %v1708
    %v1710 = vrot.slane %v1629, %v1709
    %v1712 = vsel %vm592, %v1666, 0
    %v1715 = vsel %vm592, %v1667, 0
    %1717 = vmatprep.subr.mxu0 0.0
    %1718 = vmatpush1.msra.mxu0 0.0
    %1719 = vmatprep.subr.mxu0 0.0
    %1720 = vmatpush1.msra.mxu0 0.0
    %1721 = vmatprep.subr.mxu0 0.0
    %1722 = vmatpush1.msra.mxu0 0.0
    %1723 = vmatprep.subr.mxu0 0.0
    %1724 = vmatpush1.msra.mxu0 0.0
    %1725 = vmatprep.subr.mxu0 0.0
    %1726 = vmatpush1.msra.mxu0 0.0
    %1727 = vmatprep.subr.mxu0 0.0
    %1728 = vmatpush1.msra.mxu0 0.0
    %1729 = vmatprep.subr.mxu0 0.0
    %1730 = vmatpush1.msra.mxu0 0.0
    %1731 = vmatprep.subr.mxu0 0.0
    %1732 = vmatpush1.msra.mxu0 0.0
    %1733 = vmatprep.subr.mxu0 0.0
    %1734 = vmatpush1.msra.mxu0 0.0
    %1735 = vmatprep.subr.mxu0 0.0
    %1736 = vmatpush1.msra.mxu0 0.0
    %1737 = vmatprep.subr.mxu0 0.0
    %1738 = vmatpush1.msra.mxu0 0.0
    %1739 = vmatprep.subr.mxu0 0.0
    %1740 = vmatpush1.msra.mxu0 0.0
    %1741 = vmatprep.subr.mxu0 0.0
    %1742 = vmatpush1.msra.mxu0 %v1706
    %1743 = vmatprep.subr.mxu0 0.0
    %1744 = vmatpush1.msra.mxu0 %v1705
    %1745 = vmatprep.subr.mxu0 0.0
    %1746 = vmatpush1.msra.mxu0 %v1704
    %1747 = vmatprep.subr.mxu0 0.0
    %1748 = vmatpush1.msra.mxu0 %v1703
    %1749 = vmatprep.subr.mxu0 0.0
    %1750 = vmatpush2.msra.mxu0 0.0
    %1751 = vmatprep.subr.mxu0 0.0
    %1752 = vmatpush2.msra.mxu0 0.0
    %1753 = vmatprep.subr.mxu0 0.0
    %1754 = vmatpush2.msra.mxu0 0.0
    %1755 = vmatprep.subr.mxu0 0.0
    %1756 = vmatpush2.msra.mxu0 0.0
    %1757 = vmatprep.subr.mxu0 0.0
    %1758 = vmatpush2.msra.mxu0 0.0
    %1759 = vmatprep.subr.mxu0 0.0
    %1760 = vmatpush2.msra.mxu0 0.0
    %1761 = vmatprep.subr.mxu0 0.0
    %1762 = vmatpush2.msra.mxu0 0.0
    %1763 = vmatprep.subr.mxu0 0.0
    %1764 = vmatpush2.msra.mxu0 0.0
    %1765 = vmatprep.subr.mxu0 0.0
    %1766 = vmatpush2.msra.mxu0 0.0
    %1767 = vmatprep.subr.mxu0 0.0
    %1768 = vmatpush2.msra.mxu0 0.0
    %1769 = vmatprep.subr.mxu0 0.0
    %1770 = vmatpush2.msra.mxu0 0.0
    %1771 = vmatprep.subr.mxu0 0.0
    %1772 = vmatpush2.msra.mxu0 0.0
    %1773 = vmatprep.subr.mxu0 0.0
    %1774 = vmatpush2.msra.mxu0 0.0
    %1775 = vmatprep.subr.mxu0 0.0
    %1776 = vmatpush2.msra.mxu0 0.0
    %1777 = vmatprep.subr.mxu0 0.0
    %1778 = vmatpush2.msra.mxu0 0.0
    %1779 = vmatprep.subr.mxu0 0.0
    %1780 = vmatpush2.msra.mxu0 0.0
    %1781 = vmatprep.mubr.f32.mxu0 0.0
    %1782 = vmatmul.mubr.f32.gmra.mxu0 %v1712
    %v1783 = vpop.f32.mrf.mxu0
    %v1784 = vadd.f32 %v1710, %v1783
    %v1785 = vpop.f32.mrf.mxu0
    %1786 = vmatprep.mubr.f32.mxu0 0.0
    %1787 = vmatmul.mubr.f32.gmra.mxu0 %v1715
    %v1788 = vpop.f32.mrf.mxu0
    %v1789 = vadd.f32 %v1710, %v1788
    %v1790 = vpop.f32.mrf.mxu0
    %1791 = vdwg.mxu0
    %v1792 = vlaneseq
    %v1793 = vshrl.u32 %v1792, 7
    %v1794 = vsub.s32 1, %v1793
    %v1795 = vrot.slane %v1629, %v1794
    %1796 = vmatprep.subr.mxu0 0.0
    %1797 = vmatpush1.msra.mxu0 %v1612
    %1798 = vmatprep.subr.mxu0 0.0
    %1799 = vmatpush1.msra.mxu0 %v1611
    %1800 = vmatprep.subr.mxu0 0.0
    %1801 = vmatpush1.msra.mxu0 %v1610
    %1802 = vmatprep.subr.mxu0 0.0
    %1803 = vmatpush1.msra.mxu0 %v1609
    %1804 = vmatprep.subr.mxu0 0.0
    %1805 = vmatpush1.msra.mxu0 %v1608
    %1806 = vmatprep.subr.mxu0 0.0
    %1807 = vmatpush1.msra.mxu0 %v1607
    %1808 = vmatprep.subr.mxu0 0.0
    %1809 = vmatpush1.msra.mxu0 %v1606
    %1810 = vmatprep.subr.mxu0 0.0
    %1811 = vmatpush1.msra.mxu0 %v1605
    %1812 = vmatprep.subr.mxu0 0.0
    %1813 = vmatpush1.msra.mxu0 %v1604
    %1814 = vmatprep.subr.mxu0 0.0
    %1815 = vmatpush1.msra.mxu0 %v1603
    %1816 = vmatprep.subr.mxu0 0.0
    %1817 = vmatpush1.msra.mxu0 %v1602
    %1818 = vmatprep.subr.mxu0 0.0
    %1819 = vmatpush1.msra.mxu0 %v1601
    %1820 = vmatprep.subr.mxu0 0.0
    %1821 = vmatpush1.msra.mxu0 %v1600
    %1822 = vmatprep.subr.mxu0 0.0
    %1823 = vmatpush1.msra.mxu0 %v1599
    %1824 = vmatprep.subr.mxu0 0.0
    %1825 = vmatpush1.msra.mxu0 %v1598
    %1826 = vmatprep.subr.mxu0 0.0
    %1827 = vmatpush1.msra.mxu0 %v1597
    %1828 = vmatprep.subr.mxu0 0.0
    %1829 = vmatpush2.msra.mxu0 0.0
    %1830 = vmatprep.subr.mxu0 0.0
    %1831 = vmatpush2.msra.mxu0 0.0
    %1832 = vmatprep.subr.mxu0 0.0
    %1833 = vmatpush2.msra.mxu0 0.0
    %1834 = vmatprep.subr.mxu0 0.0
    %1835 = vmatpush2.msra.mxu0 0.0
    %1836 = vmatprep.subr.mxu0 0.0
    %1837 = vmatpush2.msra.mxu0 0.0
    %1838 = vmatprep.subr.mxu0 0.0
    %1839 = vmatpush2.msra.mxu0 0.0
    %1840 = vmatprep.subr.mxu0 0.0
    %1841 = vmatpush2.msra.mxu0 0.0
    %1842 = vmatprep.subr.mxu0 0.0
    %1843 = vmatpush2.msra.mxu0 0.0
    %1844 = vmatprep.subr.mxu0 0.0
    %1845 = vmatpush2.msra.mxu0 0.0
    %1846 = vmatprep.subr.mxu0 0.0
    %1847 = vmatpush2.msra.mxu0 0.0
    %1848 = vmatprep.subr.mxu0 0.0
    %1849 = vmatpush2.msra.mxu0 0.0
    %1850 = vmatprep.subr.mxu0 0.0
    %1851 = vmatpush2.msra.mxu0 0.0
    %1852 = vmatprep.subr.mxu0 0.0
    %1853 = vmatpush2.msra.mxu0 0.0
    %1854 = vmatprep.subr.mxu0 0.0
    %1855 = vmatpush2.msra.mxu0 0.0
    %1856 = vmatprep.subr.mxu0 0.0
    %1857 = vmatpush2.msra.mxu0 0.0
    %1858 = vmatprep.subr.mxu0 0.0
    %1859 = vmatpush2.msra.mxu0 0.0
    %1860 = vmatprep.mubr.f32.mxu0 0.0
    %1861 = vmatmul.mubr.f32.gmra.mxu0 %v1701
    %v1862 = vpop.f32.mrf.mxu0
    %v1863 = vadd.f32 %v1795, %v1862
    %v1864 = vpop.f32.mrf.mxu0
    %1865 = vmatprep.mubr.f32.mxu0 0.0
    %1866 = vmatmul.mubr.f32.gmra.mxu0 %v1702
    %v1867 = vpop.f32.mrf.mxu0
    %v1868 = vadd.f32 %v1795, %v1867
    %v1869 = vpop.f32.mrf.mxu0
    %1870 = vdwg.mxu0
    %v1871 = vlaneseq
    %v1872 = vshrl.u32 %v1871, 7
    %v1873 = vsub.s32 2, %v1872
    %v1874 = vrot.slane %v1629, %v1873
    %1875 = vmatprep.subr.mxu0 0.0
    %1876 = vmatpush1.msra.mxu0 %v1628
    %1877 = vmatprep.subr.mxu0 0.0
    %1878 = vmatpush1.msra.mxu0 %v1627
    %1879 = vmatprep.subr.mxu0 0.0
    %1880 = vmatpush1.msra.mxu0 %v1626
    %1881 = vmatprep.subr.mxu0 0.0
    %1882 = vmatpush1.msra.mxu0 %v1625
    %1883 = vmatprep.subr.mxu0 0.0
    %1884 = vmatpush1.msra.mxu0 %v1624
    %1885 = vmatprep.subr.mxu0 0.0
    %1886 = vmatpush1.msra.mxu0 %v1623
    %1887 = vmatprep.subr.mxu0 0.0
    %1888 = vmatpush1.msra.mxu0 %v1622
    %1889 = vmatprep.subr.mxu0 0.0
    %1890 = vmatpush1.msra.mxu0 %v1621
    %1891 = vmatprep.subr.mxu0 0.0
    %1892 = vmatpush1.msra.mxu0 %v1620
    %1893 = vmatprep.subr.mxu0 0.0
    %1894 = vmatpush1.msra.mxu0 %v1619
    %1895 = vmatprep.subr.mxu0 0.0
    %1896 = vmatpush1.msra.mxu0 %v1618
    %1897 = vmatprep.subr.mxu0 0.0
    %1898 = vmatpush1.msra.mxu0 %v1617
    %1899 = vmatprep.subr.mxu0 0.0
    %1900 = vmatpush1.msra.mxu0 %v1616
    %1901 = vmatprep.subr.mxu0 0.0
    %1902 = vmatpush1.msra.mxu0 %v1615
    %1903 = vmatprep.subr.mxu0 0.0
    %1904 = vmatpush1.msra.mxu0 %v1614
    %1905 = vmatprep.subr.mxu0 0.0
    %1906 = vmatpush1.msra.mxu0 %v1613
    %1907 = vmatprep.subr.mxu0 0.0
    %1908 = vmatpush2.msra.mxu0 0.0
    %1909 = vmatprep.subr.mxu0 0.0
    %1910 = vmatpush2.msra.mxu0 0.0
    %1911 = vmatprep.subr.mxu0 0.0
    %1912 = vmatpush2.msra.mxu0 0.0
    %1913 = vmatprep.subr.mxu0 0.0
    %1914 = vmatpush2.msra.mxu0 0.0
    %1915 = vmatprep.subr.mxu0 0.0
    %1916 = vmatpush2.msra.mxu0 0.0
    %1917 = vmatprep.subr.mxu0 0.0
    %1918 = vmatpush2.msra.mxu0 0.0
    %1919 = vmatprep.subr.mxu0 0.0
    %1920 = vmatpush2.msra.mxu0 0.0
    %1921 = vmatprep.subr.mxu0 0.0
    %1922 = vmatpush2.msra.mxu0 0.0
    %1923 = vmatprep.subr.mxu0 0.0
    %1924 = vmatpush2.msra.mxu0 0.0
    %1925 = vmatprep.subr.mxu0 0.0
    %1926 = vmatpush2.msra.mxu0 0.0
    %1927 = vmatprep.subr.mxu0 0.0
    %1928 = vmatpush2.msra.mxu0 0.0
    %1929 = vmatprep.subr.mxu0 0.0
    %1930 = vmatpush2.msra.mxu0 0.0
    %1931 = vmatprep.subr.mxu0 0.0
    %1932 = vmatpush2.msra.mxu0 0.0
    %1933 = vmatprep.subr.mxu0 0.0
    %1934 = vmatpush2.msra.mxu0 0.0
    %1935 = vmatprep.subr.mxu0 0.0
    %1936 = vmatpush2.msra.mxu0 0.0
    %1937 = vmatprep.subr.mxu0 0.0
    %1938 = vmatpush2.msra.mxu0 0.0
    %1939 = vmatprep.mubr.f32.mxu0 0.0
    %1940 = vmatmul.mubr.f32.gmra.mxu0 %v1701
    %v1941 = vpop.f32.mrf.mxu0
    %v1942 = vadd.f32 %v1874, %v1941
    %v1943 = vpop.f32.mrf.mxu0
    %1944 = vmatprep.mubr.f32.mxu0 0.0
    %1945 = vmatmul.mubr.f32.gmra.mxu0 %v1702
    %v1946 = vpop.f32.mrf.mxu0
    %v1947 = vadd.f32 %v1874, %v1946
    %v1948 = vpop.f32.mrf.mxu0
    %1949 = vdwg.mxu0
    %v1950 = vsel %vm592, %v1784, -inf
    %1951 = vmax.xlane.f32.xlu0 %v1950
    %v1952 = vpop.xlane.xlu0 %1951
    %v1953 = vsel %vm592, %v1789, -inf
    %1954 = vmax.xlane.f32.xlu0 %v1953
    %v1955 = vpop.xlane.xlu0 %1954
    %v1956 = vsub.f32 %v1784, %v1952
    %v1957 = vsub.f32 %v1789, %v1955
    %v1958 = vmul.f32 %v1956, 1.442695
    %v1959 = vpow.pop %v1958
    %v1960 = vmul.f32 %v1957, 1.442695
    %v1961 = vpow.pop %v1960
    %v1963 = vsel %vm592, %v1959, 0
    %v1966 = vsel %vm592, %v1961, 0
    %1968 = vmatprep.subr.mxu0 0.0
    %1969 = vmatpush1.msra.mxu0 0.0
    %1970 = vmatprep.subr.mxu0 0.0
    %1971 = vmatpush1.msra.mxu0 0.0
    %1972 = vmatprep.subr.mxu0 0.0
    %1973 = vmatpush1.msra.mxu0 0.0
    %1974 = vmatprep.subr.mxu0 0.0
    %1975 = vmatpush1.msra.mxu0 0.0
    %1976 = vmatprep.subr.mxu0 0.0
    %1977 = vmatpush1.msra.mxu0 0.0
    %1978 = vmatprep.subr.mxu0 0.0
    %1979 = vmatpush1.msra.mxu0 0.0
    %1980 = vmatprep.subr.mxu0 0.0
    %1981 = vmatpush1.msra.mxu0 0.0
    %1982 = vmatprep.subr.mxu0 0.0
    %1983 = vmatpush1.msra.mxu0 0.0
    %1984 = vmatprep.subr.mxu0 0.0
    %1985 = vmatpush1.msra.mxu0 0.0
    %1986 = vmatprep.subr.mxu0 0.0
    %1987 = vmatpush1.msra.mxu0 0.0
    %1988 = vmatprep.subr.mxu0 0.0
    %1989 = vmatpush1.msra.mxu0 0.0
    %1990 = vmatprep.subr.mxu0 0.0
    %1991 = vmatpush1.msra.mxu0 0.0
    %1992 = vmatprep.subr.mxu0 0.0
    %1993 = vmatpush1.msra.mxu0 %v42
    %1994 = vmatprep.subr.mxu0 0.0
    %1995 = vmatpush1.msra.mxu0 %v41
    %1996 = vmatprep.subr.mxu0 0.0
    %1997 = vmatpush1.msra.mxu0 %v40
    %1998 = vmatprep.subr.mxu0 0.0
    %1999 = vmatpush1.msra.mxu0 %v39
    %2000 = vmatprep.subr.mxu0 0.0
    %2001 = vmatpush2.msra.mxu0 0.0
    %2002 = vmatprep.subr.mxu0 0.0
    %2003 = vmatpush2.msra.mxu0 0.0
    %2004 = vmatprep.subr.mxu0 0.0
    %2005 = vmatpush2.msra.mxu0 0.0
    %2006 = vmatprep.subr.mxu0 0.0
    %2007 = vmatpush2.msra.mxu0 0.0
    %2008 = vmatprep.subr.mxu0 0.0
    %2009 = vmatpush2.msra.mxu0 0.0
    %2010 = vmatprep.subr.mxu0 0.0
    %2011 = vmatpush2.msra.mxu0 0.0
    %2012 = vmatprep.subr.mxu0 0.0
    %2013 = vmatpush2.msra.mxu0 0.0
    %2014 = vmatprep.subr.mxu0 0.0
    %2015 = vmatpush2.msra.mxu0 0.0
    %2016 = vmatprep.subr.mxu0 0.0
    %2017 = vmatpush2.msra.mxu0 0.0
    %2018 = vmatprep.subr.mxu0 0.0
    %2019 = vmatpush2.msra.mxu0 0.0
    %2020 = vmatprep.subr.mxu0 0.0
    %2021 = vmatpush2.msra.mxu0 0.0
    %2022 = vmatprep.subr.mxu0 0.0
    %2023 = vmatpush2.msra.mxu0 0.0
    %2024 = vmatprep.subr.mxu0 0.0
    %2025 = vmatpush2.msra.mxu0 0.0
    %2026 = vmatprep.subr.mxu0 0.0
    %2027 = vmatpush2.msra.mxu0 0.0
    %2028 = vmatprep.subr.mxu0 0.0
    %2029 = vmatpush2.msra.mxu0 0.0
    %2030 = vmatprep.subr.mxu0 0.0
    %2031 = vmatpush2.msra.mxu0 0.0
    %2032 = vmatprep.mubr.f32.mxu0 0.0
    %2033 = vmatmul.mubr.f32.gmra.mxu0 %v1963
    %v2034 = vpop.f32.mrf.mxu0
    %v2035 = vadd.f32 0.0, %v2034
    %v2036 = vpop.f32.mrf.mxu0
    %2037 = vmatprep.mubr.f32.mxu0 0.0
    %2038 = vmatmul.mubr.f32.gmra.mxu0 %v1966
    %v2039 = vpop.f32.mrf.mxu0
    %v2040 = vadd.f32 0.0, %v2039
    %v2041 = vpop.f32.mrf.mxu0
    %2042 = vdwg.mxu0
    %v2043 = vrcp.pop %v2035
    %v2044 = vrcp.pop %v2040
    %v2045 = vmul.f32 %v1959, %v2043
    %v2046 = vmul.f32 %v1961, %v2044
    %v2047 = vsel %vm592, %v1863, -inf
    %v2048 = vsel %vm592, %v1868, -inf
    %v2049 = vmax.f32 %v2047, %v2048
    %v2050 = vrot.slane %v2049, 4
    %v2051 = vmax.f32 %v2049, %v2050
    %v2052 = vrot.slane %v2051, 2
    %v2053 = vmax.f32 %v2051, %v2052
    %v2054 = vrot.slane %v2053, 1
    %v2055 = vmax.f32 %v2053, %v2054
    %v2056 = vsub.f32 %v1863, %v2055
    %v2057 = vsub.f32 %v1868, %v2055
    %v2058 = vmul.f32 %v2056, 1.442695
    %v2059 = vpow.pop %v2058
    %v2060 = vmul.f32 %v2057, 1.442695
    %v2061 = vpow.pop %v2060
    %v2062 = vsel %vm592, %v2059, 0.0
    %v2063 = vrot.slane %v2062, 4
    %v2064 = vadd.f32 %v2062, %v2063
    %v2065 = vrot.slane %v2064, 2
    %v2066 = vadd.f32 %v2064, %v2065
    %v2067 = vrot.slane %v2066, 1
    %v2068 = vadd.f32 %v2066, %v2067
    %v2069 = vrcp.pop %v2068
    %v2070 = vmul.f32 %v2059, %v2069
    %2071 = vxpose.xlu0.b32.start [1/16] %v2070, 128
    %2072 = vxpose.xlu0.b32.cont [2/16] 0.0, 128
    %2073 = vxpose.xlu0.b32.cont [3/16] 0.0, 128
    %2074 = vxpose.xlu0.b32.cont [4/16] 0.0, 128
    %2075 = vxpose.xlu0.b32.cont [5/16] 0.0, 128
    %2076 = vxpose.xlu0.b32.cont [6/16] 0.0, 128
    %2077 = vxpose.xlu0.b32.cont [7/16] 0.0, 128
    %2078 = vxpose.xlu0.b32.cont [8/16] 0.0, 128
    %2079 = vxpose.xlu0.b32.cont [9/16] 0.0, 128
    %2080 = vxpose.xlu0.b32.cont [10/16] 0.0, 128
    %2081 = vxpose.xlu0.b32.cont [11/16] 0.0, 128
    %2082 = vxpose.xlu0.b32.cont [12/16] 0.0, 128
    %2083 = vxpose.xlu0.b32.cont [13/16] 0.0, 128
    %2084 = vxpose.xlu0.b32.cont [14/16] 0.0, 128
    %2085 = vxpose.xlu0.b32.cont [15/16] 0.0, 128
    %2086 = vxpose.xlu0.b32.end [16/16] 0.0, 128
    %v2087 = vpop.trf.xlu0
    %v2088 = vpop.trf.xlu0
    %v2089 = vpop.trf.xlu0
    %v2090 = vpop.trf.xlu0
    %v2091 = vpop.trf.xlu0
    %v2092 = vpop.trf.xlu0
    %v2093 = vpop.trf.xlu0
    %v2094 = vpop.trf.xlu0
    %v2095 = vpop.trf.xlu0
    %v2096 = vpop.trf.xlu0
    %v2097 = vpop.trf.xlu0
    %v2098 = vpop.trf.xlu0
    %v2099 = vpop.trf.xlu0
    %v2100 = vpop.trf.xlu0
    %v2101 = vpop.trf.xlu0
    %v2102 = vpop.trf.xlu0
    %v2104 = vsel %vm1052, %v2087, 0
    %v2107 = vsel %vm1052, %v2088, 0
    %v2110 = vsel %vm1052, %v2089, 0
    %v2113 = vsel %vm1052, %v2090, 0
    %2115 = vmatprep.subr.mxu0 0.0
    %2116 = vmatpush1.msra.mxu0 0.0
    %2117 = vmatprep.subr.mxu0 0.0
    %2118 = vmatpush1.msra.mxu0 0.0
    %2119 = vmatprep.subr.mxu0 0.0
    %2120 = vmatpush1.msra.mxu0 0.0
    %2121 = vmatprep.subr.mxu0 0.0
    %2122 = vmatpush1.msra.mxu0 0.0
    %2123 = vmatprep.subr.mxu0 0.0
    %2124 = vmatpush1.msra.mxu0 0.0
    %2125 = vmatprep.subr.mxu0 0.0
    %2126 = vmatpush1.msra.mxu0 0.0
    %2127 = vmatprep.subr.mxu0 0.0
    %2128 = vmatpush1.msra.mxu0 0.0
    %2129 = vmatprep.subr.mxu0 0.0
    %2130 = vmatpush1.msra.mxu0 0.0
    %2131 = vmatprep.subr.mxu0 0.0
    %2132 = vmatpush1.msra.mxu0 0.0
    %2133 = vmatprep.subr.mxu0 0.0
    %2134 = vmatpush1.msra.mxu0 0.0
    %2135 = vmatprep.subr.mxu0 0.0
    %2136 = vmatpush1.msra.mxu0 0.0
    %2137 = vmatprep.subr.mxu0 0.0
    %2138 = vmatpush1.msra.mxu0 0.0
    %2139 = vmatprep.subr.mxu0 0.0
    %2140 = vmatpush1.msra.mxu0 0.0
    %2141 = vmatprep.subr.mxu0 0.0
    %2142 = vmatpush1.msra.mxu0 0.0
    %2143 = vmatprep.subr.mxu0 0.0
    %2144 = vmatpush1.msra.mxu0 0.0
    %2145 = vmatprep.subr.mxu0 0.0
    %2146 = vmatpush1.msra.mxu0 %v1942
    %2147 = vmatprep.subr.mxu0 0.0
    %2148 = vmatpush2.msra.mxu0 0.0
    %2149 = vmatprep.subr.mxu0 0.0
    %2150 = vmatpush2.msra.mxu0 0.0
    %2151 = vmatprep.subr.mxu0 0.0
    %2152 = vmatpush2.msra.mxu0 0.0
    %2153 = vmatprep.subr.mxu0 0.0
    %2154 = vmatpush2.msra.mxu0 0.0
    %2155 = vmatprep.subr.mxu0 0.0
    %2156 = vmatpush2.msra.mxu0 0.0
    %2157 = vmatprep.subr.mxu0 0.0
    %2158 = vmatpush2.msra.mxu0 0.0
    %2159 = vmatprep.subr.mxu0 0.0
    %2160 = vmatpush2.msra.mxu0 0.0
    %2161 = vmatprep.subr.mxu0 0.0
    %2162 = vmatpush2.msra.mxu0 0.0
    %2163 = vmatprep.subr.mxu0 0.0
    %2164 = vmatpush2.msra.mxu0 0.0
    %2165 = vmatprep.subr.mxu0 0.0
    %2166 = vmatpush2.msra.mxu0 0.0
    %2167 = vmatprep.subr.mxu0 0.0
    %2168 = vmatpush2.msra.mxu0 0.0
    %2169 = vmatprep.subr.mxu0 0.0
    %2170 = vmatpush2.msra.mxu0 0.0
    %2171 = vmatprep.subr.mxu0 0.0
    %2172 = vmatpush2.msra.mxu0 0.0
    %2173 = vmatprep.subr.mxu0 0.0
    %2174 = vmatpush2.msra.mxu0 0.0
    %2175 = vmatprep.subr.mxu0 0.0
    %2176 = vmatpush2.msra.mxu0 0.0
    %2177 = vmatprep.subr.mxu0 0.0
    %2178 = vmatpush2.msra.mxu0 0.0
    %2179 = vmatprep.mubr.f32.mxu0 0.0
    %2180 = vmatmul.mubr.f32.gmra.mxu0 %v2104
    %v2181 = vpop.f32.mrf.mxu0
    %v2182 = vadd.f32 0.0, %v2181
    %v2183 = vpop.f32.mrf.mxu0
    %2184 = vmatprep.mubr.f32.mxu0 0.0
    %2185 = vmatmul.mubr.f32.gmra.mxu0 %v2107
    %v2186 = vpop.f32.mrf.mxu0
    %v2187 = vadd.f32 0.0, %v2186
    %v2188 = vpop.f32.mrf.mxu0
    %2189 = vmatprep.mubr.f32.mxu0 0.0
    %2190 = vmatmul.mubr.f32.gmra.mxu0 %v2110
    %v2191 = vpop.f32.mrf.mxu0
    %v2192 = vadd.f32 0.0, %v2191
    %v2193 = vpop.f32.mrf.mxu0
    %2194 = vmatprep.mubr.f32.mxu0 0.0
    %2195 = vmatmul.mubr.f32.gmra.mxu0 %v2113
    %v2196 = vpop.f32.mrf.mxu0
    %v2197 = vadd.f32 0.0, %v2196
    %v2198 = vpop.f32.mrf.mxu0
    %2199 = vdwg.mxu0
    %v2200 = vmul.f32 %v2182, %v39
    %v2201 = vmul.f32 %v2187, %v40
    %v2202 = vmul.f32 %v2192, %v41
    %v2203 = vmul.f32 %v2197, %v42
    %v2205 = vsel %vm592, %v2045, 0
    %2207 = vmatprep.subr.mxu0 0.0
    %2208 = vmatpush1.msra.mxu0 0.0
    %2209 = vmatprep.subr.mxu0 0.0
    %2210 = vmatpush1.msra.mxu0 0.0
    %2211 = vmatprep.subr.mxu0 0.0
    %2212 = vmatpush1.msra.mxu0 0.0
    %2213 = vmatprep.subr.mxu0 0.0
    %2214 = vmatpush1.msra.mxu0 0.0
    %2215 = vmatprep.subr.mxu0 0.0
    %2216 = vmatpush1.msra.mxu0 0.0
    %2217 = vmatprep.subr.mxu0 0.0
    %2218 = vmatpush1.msra.mxu0 0.0
    %2219 = vmatprep.subr.mxu0 0.0
    %2220 = vmatpush1.msra.mxu0 0.0
    %2221 = vmatprep.subr.mxu0 0.0
    %2222 = vmatpush1.msra.mxu0 0.0
    %2223 = vmatprep.subr.mxu0 0.0
    %2224 = vmatpush1.msra.mxu0 0.0
    %2225 = vmatprep.subr.mxu0 0.0
    %2226 = vmatpush1.msra.mxu0 0.0
    %2227 = vmatprep.subr.mxu0 0.0
    %2228 = vmatpush1.msra.mxu0 0.0
    %2229 = vmatprep.subr.mxu0 0.0
    %2230 = vmatpush1.msra.mxu0 0.0
    %2231 = vmatprep.subr.mxu0 0.0
    %2232 = vmatpush1.msra.mxu0 %v2203
    %2233 = vmatprep.subr.mxu0 0.0
    %2234 = vmatpush1.msra.mxu0 %v2202
    %2235 = vmatprep.subr.mxu0 0.0
    %2236 = vmatpush1.msra.mxu0 %v2201
    %2237 = vmatprep.subr.mxu0 0.0
    %2238 = vmatpush1.msra.mxu0 %v2200
    %2239 = vmatprep.subr.mxu0 0.0
    %2240 = vmatpush2.msra.mxu0 0.0
    %2241 = vmatprep.subr.mxu0 0.0
    %2242 = vmatpush2.msra.mxu0 0.0
    %2243 = vmatprep.subr.mxu0 0.0
    %2244 = vmatpush2.msra.mxu0 0.0
    %2245 = vmatprep.subr.mxu0 0.0
    %2246 = vmatpush2.msra.mxu0 0.0
    %2247 = vmatprep.subr.mxu0 0.0
    %2248 = vmatpush2.msra.mxu0 0.0
    %2249 = vmatprep.subr.mxu0 0.0
    %2250 = vmatpush2.msra.mxu0 0.0
    %2251 = vmatprep.subr.mxu0 0.0
    %2252 = vmatpush2.msra.mxu0 0.0
    %2253 = vmatprep.subr.mxu0 0.0
    %2254 = vmatpush2.msra.mxu0 0.0
    %2255 = vmatprep.subr.mxu0 0.0
    %2256 = vmatpush2.msra.mxu0 0.0
    %2257 = vmatprep.subr.mxu0 0.0
    %2258 = vmatpush2.msra.mxu0 0.0
    %2259 = vmatprep.subr.mxu0 0.0
    %2260 = vmatpush2.msra.mxu0 0.0
    %2261 = vmatprep.subr.mxu0 0.0
    %2262 = vmatpush2.msra.mxu0 0.0
    %2263 = vmatprep.subr.mxu0 0.0
    %2264 = vmatpush2.msra.mxu0 0.0
    %2265 = vmatprep.subr.mxu0 0.0
    %2266 = vmatpush2.msra.mxu0 0.0
    %2267 = vmatprep.subr.mxu0 0.0
    %2268 = vmatpush2.msra.mxu0 0.0
    %2269 = vmatprep.subr.mxu0 0.0
    %2270 = vmatpush2.msra.mxu0 0.0
    %2271 = vmatprep.mubr.f32.mxu0 0.0
    %2272 = vmatmul.mubr.f32.gmra.mxu0 %v2205
    %v2273 = vpop.f32.mrf.mxu0
    %v2274 = vadd.f32 0.0, %v2273
    %v2275 = vpop.f32.mrf.mxu0
    %2276 = vdwg.mxu0
    %v2277 = vsel %vm592, %v2061, 0.0
    %v2278 = vrot.slane %v2277, 4
    %v2279 = vadd.f32 %v2277, %v2278
    %v2280 = vrot.slane %v2279, 2
    %v2281 = vadd.f32 %v2279, %v2280
    %v2282 = vrot.slane %v2281, 1
    %v2283 = vadd.f32 %v2281, %v2282
    %v2284 = vrcp.pop %v2283
    %v2285 = vmul.f32 %v2061, %v2284
    %2286 = vxpose.xlu0.b32.start [1/16] %v2285, 128
    %2287 = vxpose.xlu0.b32.cont [2/16] 0.0, 128
    %2288 = vxpose.xlu0.b32.cont [3/16] 0.0, 128
    %2289 = vxpose.xlu0.b32.cont [4/16] 0.0, 128
    %2290 = vxpose.xlu0.b32.cont [5/16] 0.0, 128
    %2291 = vxpose.xlu0.b32.cont [6/16] 0.0, 128
    %2292 = vxpose.xlu0.b32.cont [7/16] 0.0, 128
    %2293 = vxpose.xlu0.b32.cont [8/16] 0.0, 128
    %2294 = vxpose.xlu0.b32.cont [9/16] 0.0, 128
    %2295 = vxpose.xlu0.b32.cont [10/16] 0.0, 128
    %2296 = vxpose.xlu0.b32.cont [11/16] 0.0, 128
    %2297 = vxpose.xlu0.b32.cont [12/16] 0.0, 128
    %2298 = vxpose.xlu0.b32.cont [13/16] 0.0, 128
    %2299 = vxpose.xlu0.b32.cont [14/16] 0.0, 128
    %2300 = vxpose.xlu0.b32.cont [15/16] 0.0, 128
    %2301 = vxpose.xlu0.b32.end [16/16] 0.0, 128
    %v2302 = vpop.trf.xlu0
    %v2303 = vpop.trf.xlu0
    %v2304 = vpop.trf.xlu0
    %v2305 = vpop.trf.xlu0
    %v2306 = vpop.trf.xlu0
    %v2307 = vpop.trf.xlu0
    %v2308 = vpop.trf.xlu0
    %v2309 = vpop.trf.xlu0
    %v2310 = vpop.trf.xlu0
    %v2311 = vpop.trf.xlu0
    %v2312 = vpop.trf.xlu0
    %v2313 = vpop.trf.xlu0
    %v2314 = vpop.trf.xlu0
    %v2315 = vpop.trf.xlu0
    %v2316 = vpop.trf.xlu0
    %v2317 = vpop.trf.xlu0
    %v2319 = vsel %vm1052, %v2302, 0
    %v2322 = vsel %vm1052, %v2303, 0
    %v2325 = vsel %vm1052, %v2304, 0
    %v2328 = vsel %vm1052, %v2305, 0
    %2330 = vmatprep.subr.mxu0 0.0
    %2331 = vmatpush1.msra.mxu0 0.0
    %2332 = vmatprep.subr.mxu0 0.0
    %2333 = vmatpush1.msra.mxu0 0.0
    %2334 = vmatprep.subr.mxu0 0.0
    %2335 = vmatpush1.msra.mxu0 0.0
    %2336 = vmatprep.subr.mxu0 0.0
    %2337 = vmatpush1.msra.mxu0 0.0
    %2338 = vmatprep.subr.mxu0 0.0
    %2339 = vmatpush1.msra.mxu0 0.0
    %2340 = vmatprep.subr.mxu0 0.0
    %2341 = vmatpush1.msra.mxu0 0.0
    %2342 = vmatprep.subr.mxu0 0.0
    %2343 = vmatpush1.msra.mxu0 0.0
    %2344 = vmatprep.subr.mxu0 0.0
    %2345 = vmatpush1.msra.mxu0 0.0
    %2346 = vmatprep.subr.mxu0 0.0
    %2347 = vmatpush1.msra.mxu0 0.0
    %2348 = vmatprep.subr.mxu0 0.0
    %2349 = vmatpush1.msra.mxu0 0.0
    %2350 = vmatprep.subr.mxu0 0.0
    %2351 = vmatpush1.msra.mxu0 0.0
    %2352 = vmatprep.subr.mxu0 0.0
    %2353 = vmatpush1.msra.mxu0 0.0
    %2354 = vmatprep.subr.mxu0 0.0
    %2355 = vmatpush1.msra.mxu0 0.0
    %2356 = vmatprep.subr.mxu0 0.0
    %2357 = vmatpush1.msra.mxu0 0.0
    %2358 = vmatprep.subr.mxu0 0.0
    %2359 = vmatpush1.msra.mxu0 0.0
    %2360 = vmatprep.subr.mxu0 0.0
    %2361 = vmatpush1.msra.mxu0 %v1947
    %2362 = vmatprep.subr.mxu0 0.0
    %2363 = vmatpush2.msra.mxu0 0.0
    %2364 = vmatprep.subr.mxu0 0.0
    %2365 = vmatpush2.msra.mxu0 0.0
    %2366 = vmatprep.subr.mxu0 0.0
    %2367 = vmatpush2.msra.mxu0 0.0
    %2368 = vmatprep.subr.mxu0 0.0
    %2369 = vmatpush2.msra.mxu0 0.0
    %2370 = vmatprep.subr.mxu0 0.0
    %2371 = vmatpush2.msra.mxu0 0.0
    %2372 = vmatprep.subr.mxu0 0.0
    %2373 = vmatpush2.msra.mxu0 0.0
    %2374 = vmatprep.subr.mxu0 0.0
    %2375 = vmatpush2.msra.mxu0 0.0
    %2376 = vmatprep.subr.mxu0 0.0
    %2377 = vmatpush2.msra.mxu0 0.0
    %2378 = vmatprep.subr.mxu0 0.0
    %2379 = vmatpush2.msra.mxu0 0.0
    %2380 = vmatprep.subr.mxu0 0.0
    %2381 = vmatpush2.msra.mxu0 0.0
    %2382 = vmatprep.subr.mxu0 0.0
    %2383 = vmatpush2.msra.mxu0 0.0
    %2384 = vmatprep.subr.mxu0 0.0
    %2385 = vmatpush2.msra.mxu0 0.0
    %2386 = vmatprep.subr.mxu0 0.0
    %2387 = vmatpush2.msra.mxu0 0.0
    %2388 = vmatprep.subr.mxu0 0.0
    %2389 = vmatpush2.msra.mxu0 0.0
    %2390 = vmatprep.subr.mxu0 0.0
    %2391 = vmatpush2.msra.mxu0 0.0
    %2392 = vmatprep.subr.mxu0 0.0
    %2393 = vmatpush2.msra.mxu0 0.0
    %2394 = vmatprep.mubr.f32.mxu0 0.0
    %2395 = vmatmul.mubr.f32.gmra.mxu0 %v2319
    %v2396 = vpop.f32.mrf.mxu0
    %v2397 = vadd.f32 0.0, %v2396
    %v2398 = vpop.f32.mrf.mxu0
    %2399 = vmatprep.mubr.f32.mxu0 0.0
    %2400 = vmatmul.mubr.f32.gmra.mxu0 %v2322
    %v2401 = vpop.f32.mrf.mxu0
    %v2402 = vadd.f32 0.0, %v2401
    %v2403 = vpop.f32.mrf.mxu0
    %2404 = vmatprep.mubr.f32.mxu0 0.0
    %2405 = vmatmul.mubr.f32.gmra.mxu0 %v2325
    %v2406 = vpop.f32.mrf.mxu0
    %v2407 = vadd.f32 0.0, %v2406
    %v2408 = vpop.f32.mrf.mxu0
    %2409 = vmatprep.mubr.f32.mxu0 0.0
    %2410 = vmatmul.mubr.f32.gmra.mxu0 %v2328
    %v2411 = vpop.f32.mrf.mxu0
    %v2412 = vadd.f32 0.0, %v2411
    %v2413 = vpop.f32.mrf.mxu0
    %2414 = vdwg.mxu0
    %v2415 = vmul.f32 %v2397, %v39
    %v2416 = vmul.f32 %v2402, %v40
    %v2417 = vmul.f32 %v2407, %v41
    %v2418 = vmul.f32 %v2412, %v42
    %v2420 = vsel %vm592, %v2046, 0
    %2422 = vmatprep.subr.mxu0 0.0
    %2423 = vmatpush1.msra.mxu0 0.0
    %2424 = vmatprep.subr.mxu0 0.0
    %2425 = vmatpush1.msra.mxu0 0.0
    %2426 = vmatprep.subr.mxu0 0.0
    %2427 = vmatpush1.msra.mxu0 0.0
    %2428 = vmatprep.subr.mxu0 0.0
    %2429 = vmatpush1.msra.mxu0 0.0
    %2430 = vmatprep.subr.mxu0 0.0
    %2431 = vmatpush1.msra.mxu0 0.0
    %2432 = vmatprep.subr.mxu0 0.0
    %2433 = vmatpush1.msra.mxu0 0.0
    %2434 = vmatprep.subr.mxu0 0.0
    %2435 = vmatpush1.msra.mxu0 0.0
    %2436 = vmatprep.subr.mxu0 0.0
    %2437 = vmatpush1.msra.mxu0 0.0
    %2438 = vmatprep.subr.mxu0 0.0
    %2439 = vmatpush1.msra.mxu0 0.0
    %2440 = vmatprep.subr.mxu0 0.0
    %2441 = vmatpush1.msra.mxu0 0.0
    %2442 = vmatprep.subr.mxu0 0.0
    %2443 = vmatpush1.msra.mxu0 0.0
    %2444 = vmatprep.subr.mxu0 0.0
    %2445 = vmatpush1.msra.mxu0 0.0
    %2446 = vmatprep.subr.mxu0 0.0
    %2447 = vmatpush1.msra.mxu0 %v2418
    %2448 = vmatprep.subr.mxu0 0.0
    %2449 = vmatpush1.msra.mxu0 %v2417
    %2450 = vmatprep.subr.mxu0 0.0
    %2451 = vmatpush1.msra.mxu0 %v2416
    %2452 = vmatprep.subr.mxu0 0.0
    %2453 = vmatpush1.msra.mxu0 %v2415
    %2454 = vmatprep.subr.mxu0 0.0
    %2455 = vmatpush2.msra.mxu0 0.0
    %2456 = vmatprep.subr.mxu0 0.0
    %2457 = vmatpush2.msra.mxu0 0.0
    %2458 = vmatprep.subr.mxu0 0.0
    %2459 = vmatpush2.msra.mxu0 0.0
    %2460 = vmatprep.subr.mxu0 0.0
    %2461 = vmatpush2.msra.mxu0 0.0
    %2462 = vmatprep.subr.mxu0 0.0
    %2463 = vmatpush2.msra.mxu0 0.0
    %2464 = vmatprep.subr.mxu0 0.0
    %2465 = vmatpush2.msra.mxu0 0.0
    %2466 = vmatprep.subr.mxu0 0.0
    %2467 = vmatpush2.msra.mxu0 0.0
    %2468 = vmatprep.subr.mxu0 0.0
    %2469 = vmatpush2.msra.mxu0 0.0
    %2470 = vmatprep.subr.mxu0 0.0
    %2471 = vmatpush2.msra.mxu0 0.0
    %2472 = vmatprep.subr.mxu0 0.0
    %2473 = vmatpush2.msra.mxu0 0.0
    %2474 = vmatprep.subr.mxu0 0.0
    %2475 = vmatpush2.msra.mxu0 0.0
    %2476 = vmatprep.subr.mxu0 0.0
    %2477 = vmatpush2.msra.mxu0 0.0
    %2478 = vmatprep.subr.mxu0 0.0
    %2479 = vmatpush2.msra.mxu0 0.0
    %2480 = vmatprep.subr.mxu0 0.0
    %2481 = vmatpush2.msra.mxu0 0.0
    %2482 = vmatprep.subr.mxu0 0.0
    %2483 = vmatpush2.msra.mxu0 0.0
    %2484 = vmatprep.subr.mxu0 0.0
    %2485 = vmatpush2.msra.mxu0 0.0
    %2486 = vmatprep.mubr.f32.mxu0 0.0
    %2487 = vmatmul.mubr.f32.gmra.mxu0 %v2420
    %v2488 = vpop.f32.mrf.mxu0
    %v2489 = vadd.f32 0.0, %v2488
    %v2490 = vpop.f32.mrf.mxu0
    %2491 = vdwg.mxu0
    %v2492 = vsel %vm592, %v2274, 0.0
    %2493 = vadd.xlane.f32.xlu0 %v2492
    %v2494 = vpop.xlane.xlu0 %2493
    %v2495 = vsel %vm592, %v2489, 0.0
    %2496 = vadd.xlane.f32.xlu0 %v2495
    %v2497 = vpop.xlane.xlu0 %2496
    %v2498 = vmul.f32 %v2494, %v599
    %v2499 = vmul.f32 %v2497, %v599
    %v2500 = vsub.f32 %v2274, %v2498
    %v2501 = vsub.f32 %v2489, %v2499
    %v2502 = vmul.f32 %v2500, %v2500
    %v2503 = vmul.f32 %v2501, %v2501
    %v2504 = vsel %vm592, %v2502, 0.0
    %2505 = vadd.xlane.f32.xlu0 %v2504
    %v2506 = vpop.xlane.xlu0 %2505
    %v2507 = vsel %vm592, %v2503, 0.0
    %2508 = vadd.xlane.f32.xlu0 %v2507
    %v2509 = vpop.xlane.xlu0 %2508
    %v2510 = vmul.f32 %v2506, %v599
    %v2511 = vmul.f32 %v2509, %v599
    %v2512 = vadd.f32 %v2510, 1e-05
    %v2513 = vadd.f32 %v2511, 1e-05
    %v2514 = vrsqrt.pop %v2512
    %v2515 = vrsqrt.pop %v2513
    %v2516 = vmul.f32 %v2500, %v2514
    %v2517 = vmul.f32 %v2501, %v2515
    %v2518 = vlaneseq
    %v2519 = vshrl.u32 %v2518, 7
    %v2520 = vsub.s32 2, %v2519
    %v2521 = vrot.slane %v458, %v2520
    %v2522 = vmul.f32 %v2516, %v2521
    %v2523 = vmul.f32 %v2517, %v2521
    %v2524 = vlaneseq
    %v2525 = vshrl.u32 %v2524, 7
    %v2526 = vsub.s32 3, %v2525
    %v2527 = vrot.slane %v458, %v2526
    %v2528 = vadd.f32 %v2522, %v2527
    %v2529 = vadd.f32 %v2523, %v2527
    %2532 = vrot.lane.b32.xlu0 %v1480, 64
    %v2533 = vpop.permute.xlu0 %2532
    %2534 = vrot.lane.b32.xlu0 %v1481, 64
    %v2535 = vpop.permute.xlu0 %2534
    %v2538 = vmul.f32 %v2528, %v2533
    %v2539 = vmul.f32 %v2529, %v2535
    %2540 = vrot.lane.b32.xlu0 %v258, 32
    %v2541 = vpop.permute.xlu0 %2540
    %2542 = vrot.lane.b32.xlu0 %v263, 32
    %v2543 = vpop.permute.xlu0 %2542
    %v2546 = vadd.f32 %v2538, %v2541
    %v2547 = vadd.f32 %v2539, %v2543
    %v2548 = vxor.u32 %v2546, 2147483648
    %v2549 = vxor.u32 %v2547, 2147483648
    %v2550 = vmul.f32 %v2548, 1.442695
    %v2551 = vpow.pop %v2550
    %v2552 = vmul.f32 %v2549, 1.442695
    %v2553 = vpow.pop %v2552
    %v2554 = vadd.f32 %v2551, 1.0
    %v2555 = vadd.f32 %v2553, 1.0
    %v2556 = vrcp.pop %v2554
    %v2557 = vmul.f32 1.0, %v2556
    %v2558 = vrcp.pop %v2555
    %v2559 = vmul.f32 1.0, %v2558
    %v2560 = vmul.f32 %v2546, %v2557
    %v2561 = vmul.f32 %v2547, %v2559
    %v2562 = vlaneseq
    %v2563 = vshrl.u32 %v2562, 7
    %v2564 = vsub.s32 1, %v2563
    %v2565 = vrot.slane %v484, %v2564
    %v2567 = vsel %vm592, %v2560, 0
    %v2570 = vsel %vm592, %v2561, 0
    %2572 = vmatprep.subr.mxu0 0.0
    %2573 = vmatpush1.msra.mxu0 0.0
    %2574 = vmatprep.subr.mxu0 0.0
    %2575 = vmatpush1.msra.mxu0 0.0
    %2576 = vmatprep.subr.mxu0 0.0
    %2577 = vmatpush1.msra.mxu0 0.0
    %2578 = vmatprep.subr.mxu0 0.0
    %2579 = vmatpush1.msra.mxu0 0.0
    %2580 = vmatprep.subr.mxu0 0.0
    %2581 = vmatpush1.msra.mxu0 0.0
    %2582 = vmatprep.subr.mxu0 0.0
    %2583 = vmatpush1.msra.mxu0 0.0
    %2584 = vmatprep.subr.mxu0 0.0
    %2585 = vmatpush1.msra.mxu0 0.0
    %2586 = vmatprep.subr.mxu0 0.0
    %2587 = vmatpush1.msra.mxu0 0.0
    %2588 = vmatprep.subr.mxu0 0.0
    %2589 = vmatpush1.msra.mxu0 0.0
    %2590 = vmatprep.subr.mxu0 0.0
    %2591 = vmatpush1.msra.mxu0 0.0
    %2592 = vmatprep.subr.mxu0 0.0
    %2593 = vmatpush1.msra.mxu0 0.0
    %2594 = vmatprep.subr.mxu0 0.0
    %2595 = vmatpush1.msra.mxu0 0.0
    %2596 = vmatprep.subr.mxu0 0.0
    %2597 = vmatpush1.msra.mxu0 %v467
    %2598 = vmatprep.subr.mxu0 0.0
    %2599 = vmatpush1.msra.mxu0 %v466
    %2600 = vmatprep.subr.mxu0 0.0
    %2601 = vmatpush1.msra.mxu0 %v465
    %2602 = vmatprep.subr.mxu0 0.0
    %2603 = vmatpush1.msra.mxu0 %v464
    %2604 = vmatprep.subr.mxu0 0.0
    %2605 = vmatpush2.msra.mxu0 0.0
    %2606 = vmatprep.subr.mxu0 0.0
    %2607 = vmatpush2.msra.mxu0 0.0
    %2608 = vmatprep.subr.mxu0 0.0
    %2609 = vmatpush2.msra.mxu0 0.0
    %2610 = vmatprep.subr.mxu0 0.0
    %2611 = vmatpush2.msra.mxu0 0.0
    %2612 = vmatprep.subr.mxu0 0.0
    %2613 = vmatpush2.msra.mxu0 0.0
    %2614 = vmatprep.subr.mxu0 0.0
    %2615 = vmatpush2.msra.mxu0 0.0
    %2616 = vmatprep.subr.mxu0 0.0
    %2617 = vmatpush2.msra.mxu0 0.0
    %2618 = vmatprep.subr.mxu0 0.0
    %2619 = vmatpush2.msra.mxu0 0.0
    %2620 = vmatprep.subr.mxu0 0.0
    %2621 = vmatpush2.msra.mxu0 0.0
    %2622 = vmatprep.subr.mxu0 0.0
    %2623 = vmatpush2.msra.mxu0 0.0
    %2624 = vmatprep.subr.mxu0 0.0
    %2625 = vmatpush2.msra.mxu0 0.0
    %2626 = vmatprep.subr.mxu0 0.0
    %2627 = vmatpush2.msra.mxu0 0.0
    %2628 = vmatprep.subr.mxu0 0.0
    %2629 = vmatpush2.msra.mxu0 0.0
    %2630 = vmatprep.subr.mxu0 0.0
    %2631 = vmatpush2.msra.mxu0 0.0
    %2632 = vmatprep.subr.mxu0 0.0
    %2633 = vmatpush2.msra.mxu0 0.0
    %2634 = vmatprep.subr.mxu0 0.0
    %2635 = vmatpush2.msra.mxu0 0.0
    %2636 = vmatprep.mubr.f32.mxu0 0.0
    %2637 = vmatmul.mubr.f32.gmra.mxu0 %v2567
    %v2638 = vpop.f32.mrf.mxu0
    %v2639 = vadd.f32 %v2565, %v2638
    %v2640 = vpop.f32.mrf.mxu0
    %2641 = vmatprep.mubr.f32.mxu0 0.0
    %2642 = vmatmul.mubr.f32.gmra.mxu0 %v2570
    %v2643 = vpop.f32.mrf.mxu0
    %v2644 = vadd.f32 %v2565, %v2643
    %v2645 = vpop.f32.mrf.mxu0
    %2646 = vdwg.mxu0
    %v2647 = vadd.f32 %v1593, %v2639
    %v2648 = vadd.f32 %v1594, %v2644
    %v2649 = vld [vmem:[#allocation2 + $0x4b0] sm:$0xff]
    %v2650 = vld [vmem:[#allocation2 + $0x4b8] sm:$0xff]
    %v2651 = vld [vmem:[#allocation2 + $0x4c0] sm:$0xff]
    %v2652 = vld [vmem:[#allocation2 + $0x4c8] sm:$0xff]
    %v2653 = vld [vmem:[#allocation2 + $0x4d0] sm:$0x1]
    %v2654 = vlaneseq
    %v2655 = vshrl.u32 %v2654, 7
    %v2656 = vsub.s32 0, %v2655
    %v2657 = vrot.slane %v2653, %v2656
    %v2659 = vsel %vm592, %v2647, 0
    %v2662 = vsel %vm592, %v2648, 0
    %2664 = vmatprep.subr.mxu0 0.0
    %2665 = vmatpush1.msra.mxu0 0.0
    %2666 = vmatprep.subr.mxu0 0.0
    %2667 = vmatpush1.msra.mxu0 0.0
    %2668 = vmatprep.subr.mxu0 0.0
    %2669 = vmatpush1.msra.mxu0 0.0
    %2670 = vmatprep.subr.mxu0 0.0
    %2671 = vmatpush1.msra.mxu0 0.0
    %2672 = vmatprep.subr.mxu0 0.0
    %2673 = vmatpush1.msra.mxu0 0.0
    %2674 = vmatprep.subr.mxu0 0.0
    %2675 = vmatpush1.msra.mxu0 0.0
    %2676 = vmatprep.subr.mxu0 0.0
    %2677 = vmatpush1.msra.mxu0 0.0
    %2678 = vmatprep.subr.mxu0 0.0
    %2679 = vmatpush1.msra.mxu0 0.0
    %2680 = vmatprep.subr.mxu0 0.0
    %2681 = vmatpush1.msra.mxu0 0.0
    %2682 = vmatprep.subr.mxu0 0.0
    %2683 = vmatpush1.msra.mxu0 0.0
    %2684 = vmatprep.subr.mxu0 0.0
    %2685 = vmatpush1.msra.mxu0 0.0
    %2686 = vmatprep.subr.mxu0 0.0
    %2687 = vmatpush1.msra.mxu0 0.0
    %2688 = vmatprep.subr.mxu0 0.0
    %2689 = vmatpush1.msra.mxu0 %v2652
    %2690 = vmatprep.subr.mxu0 0.0
    %2691 = vmatpush1.msra.mxu0 %v2651
    %2692 = vmatprep.subr.mxu0 0.0
    %2693 = vmatpush1.msra.mxu0 %v2650
    %2694 = vmatprep.subr.mxu0 0.0
    %2695 = vmatpush1.msra.mxu0 %v2649
    %2696 = vmatprep.subr.mxu0 0.0
    %2697 = vmatpush2.msra.mxu0 0.0
    %2698 = vmatprep.subr.mxu0 0.0
    %2699 = vmatpush2.msra.mxu0 0.0
    %2700 = vmatprep.subr.mxu0 0.0
    %2701 = vmatpush2.msra.mxu0 0.0
    %2702 = vmatprep.subr.mxu0 0.0
    %2703 = vmatpush2.msra.mxu0 0.0
    %2704 = vmatprep.subr.mxu0 0.0
    %2705 = vmatpush2.msra.mxu0 0.0
    %2706 = vmatprep.subr.mxu0 0.0
    %2707 = vmatpush2.msra.mxu0 0.0
    %2708 = vmatprep.subr.mxu0 0.0
    %2709 = vmatpush2.msra.mxu0 0.0
    %2710 = vmatprep.subr.mxu0 0.0
    %2711 = vmatpush2.msra.mxu0 0.0
    %2712 = vmatprep.subr.mxu0 0.0
    %2713 = vmatpush2.msra.mxu0 0.0
    %2714 = vmatprep.subr.mxu0 0.0
    %2715 = vmatpush2.msra.mxu0 0.0
    %2716 = vmatprep.subr.mxu0 0.0
    %2717 = vmatpush2.msra.mxu0 0.0
    %2718 = vmatprep.subr.mxu0 0.0
    %2719 = vmatpush2.msra.mxu0 0.0
    %2720 = vmatprep.subr.mxu0 0.0
    %2721 = vmatpush2.msra.mxu0 0.0
    %2722 = vmatprep.subr.mxu0 0.0
    %2723 = vmatpush2.msra.mxu0 0.0
    %2724 = vmatprep.subr.mxu0 0.0
    %2725 = vmatpush2.msra.mxu0 0.0
    %2726 = vmatprep.subr.mxu0 0.0
    %2727 = vmatpush2.msra.mxu0 0.0
    %2728 = vmatprep.mubr.f32.mxu0 0.0
    %2729 = vmatmul.mubr.f32.gmra.mxu0 %v2659
    %v2730 = vpop.f32.mrf.mxu0
    %v2731 = vadd.f32 %v2657, %v2730
    %v2732 = vpop.f32.mrf.mxu0
    %2733 = vmatprep.mubr.f32.mxu0 0.0
    %2734 = vmatmul.mubr.f32.gmra.mxu0 %v2662
    %v2735 = vpop.f32.mrf.mxu0
    %v2736 = vadd.f32 %v2657, %v2735
    %v2737 = vpop.f32.mrf.mxu0
    %2738 = vdwg.mxu0
    %v2739 = vmul.f32 %v2731, 0.5
    %v2740 = vmul.f32 %v2736, 0.5
    %v2741 = vmul.f32 %v2731, 0.044715
    %v2742 = vmul.f32 %v2736, 0.044715
    %v2743 = vmul.f32 %v2741, %v2731
    %v2744 = vmul.f32 %v2742, %v2736
    %v2745 = vmul.f32 %v2743, %v2731
    %v2746 = vmul.f32 %v2744, %v2736
    %v2747 = vadd.f32 %v2731, %v2745
    %v2748 = vadd.f32 %v2736, %v2746
    %v2749 = vmul.f32 %v2747, 0.7978846
    %v2750 = vmul.f32 %v2748, 0.7978846
    %v2751 = vtanh.pop %v2749
    %v2752 = vtanh.pop %v2750
    %v2753 = vadd.f32 %v2751, 1.0
    %v2754 = vadd.f32 %v2752, 1.0
    %v2755 = vmul.f32 %v2739, %v2753
    %v2756 = vmul.f32 %v2740, %v2754
    %v2757 = vld [vmem:[#allocation2 + $0x4d8] sm:$0xff]
    %v2758 = vld [vmem:[#allocation2 + $0x4e0] sm:$0xff]
    %v2759 = vld [vmem:[#allocation2 + $0x4e8] sm:$0xff]
    %v2760 = vld [vmem:[#allocation2 + $0x4f0] sm:$0xff]
    %v2761 = vld [vmem:[#allocation2 + $0x4f8] sm:$0xff]
    %v2762 = vld [vmem:[#allocation2 + $0x500] sm:$0xff]
    %v2763 = vld [vmem:[#allocation2 + $0x508] sm:$0xff]
    %v2764 = vld [vmem:[#allocation2 + $0x510] sm:$0xff]
    %v2765 = vld [vmem:[#allocation2 + $0x518] sm:$0x1]
    %v2766 = vlaneseq
    %v2767 = vshrl.u32 %v2766, 7
    %v2768 = vsub.s32 0, %v2767
    %v2769 = vrot.slane %v2765, %v2768
    %v2771 = vsel %vm56, %v2755, 0
    %v2774 = vsel %vm56, %v2756, 0
    %2776 = vmatprep.subr.mxu0 0.0
    %2777 = vmatpush1.msra.mxu0 0.0
    %2778 = vmatprep.subr.mxu0 0.0
    %2779 = vmatpush1.msra.mxu0 0.0
    %2780 = vmatprep.subr.mxu0 0.0
    %2781 = vmatpush1.msra.mxu0 0.0
    %2782 = vmatprep.subr.mxu0 0.0
    %2783 = vmatpush1.msra.mxu0 0.0
    %2784 = vmatprep.subr.mxu0 0.0
    %2785 = vmatpush1.msra.mxu0 0.0
    %2786 = vmatprep.subr.mxu0 0.0
    %2787 = vmatpush1.msra.mxu0 0.0
    %2788 = vmatprep.subr.mxu0 0.0
    %2789 = vmatpush1.msra.mxu0 0.0
    %2790 = vmatprep.subr.mxu0 0.0
    %2791 = vmatpush1.msra.mxu0 0.0
    %2792 = vmatprep.subr.mxu0 0.0
    %2793 = vmatpush1.msra.mxu0 %v2764
    %2794 = vmatprep.subr.mxu0 0.0
    %2795 = vmatpush1.msra.mxu0 %v2763
    %2796 = vmatprep.subr.mxu0 0.0
    %2797 = vmatpush1.msra.mxu0 %v2762
    %2798 = vmatprep.subr.mxu0 0.0
    %2799 = vmatpush1.msra.mxu0 %v2761
    %2800 = vmatprep.subr.mxu0 0.0
    %2801 = vmatpush1.msra.mxu0 %v2760
    %2802 = vmatprep.subr.mxu0 0.0
    %2803 = vmatpush1.msra.mxu0 %v2759
    %2804 = vmatprep.subr.mxu0 0.0
    %2805 = vmatpush1.msra.mxu0 %v2758
    %2806 = vmatprep.subr.mxu0 0.0
    %2807 = vmatpush1.msra.mxu0 %v2757
    %2808 = vmatprep.subr.mxu0 0.0
    %2809 = vmatpush2.msra.mxu0 0.0
    %2810 = vmatprep.subr.mxu0 0.0
    %2811 = vmatpush2.msra.mxu0 0.0
    %2812 = vmatprep.subr.mxu0 0.0
    %2813 = vmatpush2.msra.mxu0 0.0
    %2814 = vmatprep.subr.mxu0 0.0
    %2815 = vmatpush2.msra.mxu0 0.0
    %2816 = vmatprep.subr.mxu0 0.0
    %2817 = vmatpush2.msra.mxu0 0.0
    %2818 = vmatprep.subr.mxu0 0.0
    %2819 = vmatpush2.msra.mxu0 0.0
    %2820 = vmatprep.subr.mxu0 0.0
    %2821 = vmatpush2.msra.mxu0 0.0
    %2822 = vmatprep.subr.mxu0 0.0
    %2823 = vmatpush2.msra.mxu0 0.0
    %2824 = vmatprep.subr.mxu0 0.0
    %2825 = vmatpush2.msra.mxu0 0.0
    %2826 = vmatprep.subr.mxu0 0.0
    %2827 = vmatpush2.msra.mxu0 0.0
    %2828 = vmatprep.subr.mxu0 0.0
    %2829 = vmatpush2.msra.mxu0 0.0
    %2830 = vmatprep.subr.mxu0 0.0
    %2831 = vmatpush2.msra.mxu0 0.0
    %2832 = vmatprep.subr.mxu0 0.0
    %2833 = vmatpush2.msra.mxu0 0.0
    %2834 = vmatprep.subr.mxu0 0.0
    %2835 = vmatpush2.msra.mxu0 0.0
    %2836 = vmatprep.subr.mxu0 0.0
    %2837 = vmatpush2.msra.mxu0 0.0
    %2838 = vmatprep.subr.mxu0 0.0
    %2839 = vmatpush2.msra.mxu0 0.0
    %2840 = vmatprep.mubr.f32.mxu0 0.0
    %2841 = vmatmul.mubr.f32.gmra.mxu0 %v2771
    %v2842 = vpop.f32.mrf.mxu0
    %v2843 = vadd.f32 %v2769, %v2842
    %v2844 = vpop.f32.mrf.mxu0
    %2845 = vmatprep.mubr.f32.mxu0 0.0
    %2846 = vmatmul.mubr.f32.gmra.mxu0 %v2774
    %v2847 = vpop.f32.mrf.mxu0
    %v2848 = vadd.f32 %v2769, %v2847
    %v2849 = vpop.f32.mrf.mxu0
    %2850 = vdwg.mxu0
    %v2851 = vsel %vm592, %v2843, 0.0
    %2852 = vadd.xlane.f32.xlu0 %v2851
    %v2853 = vpop.xlane.xlu0 %2852
    %v2854 = vsel %vm592, %v2848, 0.0
    %2855 = vadd.xlane.f32.xlu0 %v2854
    %v2856 = vpop.xlane.xlu0 %2855
    %v2857 = vmul.f32 %v2853, %v599
    %v2858 = vmul.f32 %v2856, %v599
    %v2859 = vsub.f32 %v2843, %v2857
    %v2860 = vsub.f32 %v2848, %v2858
    %v2861 = vmul.f32 %v2859, %v2859
    %v2862 = vmul.f32 %v2860, %v2860
    %v2863 = vsel %vm592, %v2861, 0.0
    %2864 = vadd.xlane.f32.xlu0 %v2863
    %v2865 = vpop.xlane.xlu0 %2864
    %v2866 = vsel %vm592, %v2862, 0.0
    %2867 = vadd.xlane.f32.xlu0 %v2866
    %v2868 = vpop.xlane.xlu0 %2867
    %v2869 = vmul.f32 %v2865, %v599
    %v2870 = vmul.f32 %v2868, %v599
    %v2871 = vadd.f32 %v2869, 1e-05
    %v2872 = vadd.f32 %v2870, 1e-05
    %v2873 = vrsqrt.pop %v2871
    %v2874 = vrsqrt.pop %v2872
    %v2875 = vmul.f32 %v2859, %v2873
    %v2876 = vmul.f32 %v2860, %v2874
    %v2877 = vlaneseq
    %v2878 = vshrl.u32 %v2877, 7
    %v2879 = vsub.s32 4, %v2878
    %v2880 = vrot.slane %v458, %v2879
    %v2881 = vmul.f32 %v2875, %v2880
    %v2882 = vmul.f32 %v2876, %v2880
    %v2883 = vlaneseq
    %v2884 = vshrl.u32 %v2883, 7
    %v2885 = vsub.s32 5, %v2884
    %v2886 = vrot.slane %v458, %v2885
    %v2887 = vadd.f32 %v2881, %v2886
    %v2888 = vadd.f32 %v2882, %v2886
    %v2889 = vadd.f32 %v354, 1.0
    %v2890 = vadd.f32 %v359, 1.0
    %v2891 = vmul.f32 %v2887, %v2889
    %v2892 = vmul.f32 %v2888, %v2890
    %2895 = vrot.lane.b32.xlu0 %v354, 96
    %v2896 = vpop.permute.xlu0 %2895
    %2897 = vrot.lane.b32.xlu0 %v359, 96
    %v2898 = vpop.permute.xlu0 %2897
    %v2901 = vadd.f32 %v2891, %v2896
    %v2902 = vadd.f32 %v2892, %v2898
    %v2903 = vxor.u32 %v2901, 2147483648
    %v2904 = vxor.u32 %v2902, 2147483648
    %v2905 = vmul.f32 %v2903, 1.442695
    %v2906 = vpow.pop %v2905
    %v2907 = vmul.f32 %v2904, 1.442695
    %v2908 = vpow.pop %v2907
    %v2909 = vadd.f32 %v2906, 1.0
    %v2910 = vadd.f32 %v2908, 1.0
    %v2911 = vrcp.pop %v2909
    %v2912 = vmul.f32 1.0, %v2911
    %v2913 = vrcp.pop %v2910
    %v2914 = vmul.f32 1.0, %v2913
    %v2915 = vmul.f32 %v2901, %v2912
    %v2916 = vmul.f32 %v2902, %v2914
    %v2917 = vlaneseq
    %v2918 = vshrl.u32 %v2917, 7
    %v2919 = vsub.s32 2, %v2918
    %v2920 = vrot.slane %v484, %v2919
    %v2922 = vsel %vm592, %v2915, 0
    %v2925 = vsel %vm592, %v2916, 0
    %2927 = vmatprep.subr.mxu0 0.0
    %2928 = vmatpush1.msra.mxu0 0.0
    %2929 = vmatprep.subr.mxu0 0.0
    %2930 = vmatpush1.msra.mxu0 0.0
    %2931 = vmatprep.subr.mxu0 0.0
    %2932 = vmatpush1.msra.mxu0 0.0
    %2933 = vmatprep.subr.mxu0 0.0
    %2934 = vmatpush1.msra.mxu0 0.0
    %2935 = vmatprep.subr.mxu0 0.0
    %2936 = vmatpush1.msra.mxu0 0.0
    %2937 = vmatprep.subr.mxu0 0.0
    %2938 = vmatpush1.msra.mxu0 0.0
    %2939 = vmatprep.subr.mxu0 0.0
    %2940 = vmatpush1.msra.mxu0 0.0
    %2941 = vmatprep.subr.mxu0 0.0
    %2942 = vmatpush1.msra.mxu0 0.0
    %2943 = vmatprep.subr.mxu0 0.0
    %2944 = vmatpush1.msra.mxu0 0.0
    %2945 = vmatprep.subr.mxu0 0.0
    %2946 = vmatpush1.msra.mxu0 0.0
    %2947 = vmatprep.subr.mxu0 0.0
    %2948 = vmatpush1.msra.mxu0 0.0
    %2949 = vmatprep.subr.mxu0 0.0
    %2950 = vmatpush1.msra.mxu0 0.0
    %2951 = vmatprep.subr.mxu0 0.0
    %2952 = vmatpush1.msra.mxu0 %v471
    %2953 = vmatprep.subr.mxu0 0.0
    %2954 = vmatpush1.msra.mxu0 %v470
    %2955 = vmatprep.subr.mxu0 0.0
    %2956 = vmatpush1.msra.mxu0 %v469
    %2957 = vmatprep.subr.mxu0 0.0
    %2958 = vmatpush1.msra.mxu0 %v468
    %2959 = vmatprep.subr.mxu0 0.0
    %2960 = vmatpush2.msra.mxu0 0.0
    %2961 = vmatprep.subr.mxu0 0.0
    %2962 = vmatpush2.msra.mxu0 0.0
    %2963 = vmatprep.subr.mxu0 0.0
    %2964 = vmatpush2.msra.mxu0 0.0
    %2965 = vmatprep.subr.mxu0 0.0
    %2966 = vmatpush2.msra.mxu0 0.0
    %2967 = vmatprep.subr.mxu0 0.0
    %2968 = vmatpush2.msra.mxu0 0.0
    %2969 = vmatprep.subr.mxu0 0.0
    %2970 = vmatpush2.msra.mxu0 0.0
    %2971 = vmatprep.subr.mxu0 0.0
    %2972 = vmatpush2.msra.mxu0 0.0
    %2973 = vmatprep.subr.mxu0 0.0
    %2974 = vmatpush2.msra.mxu0 0.0
    %2975 = vmatprep.subr.mxu0 0.0
    %2976 = vmatpush2.msra.mxu0 0.0
    %2977 = vmatprep.subr.mxu0 0.0
    %2978 = vmatpush2.msra.mxu0 0.0
    %2979 = vmatprep.subr.mxu0 0.0
    %2980 = vmatpush2.msra.mxu0 0.0
    %2981 = vmatprep.subr.mxu0 0.0
    %2982 = vmatpush2.msra.mxu0 0.0
    %2983 = vmatprep.subr.mxu0 0.0
    %2984 = vmatpush2.msra.mxu0 0.0
    %2985 = vmatprep.subr.mxu0 0.0
    %2986 = vmatpush2.msra.mxu0 0.0
    %2987 = vmatprep.subr.mxu0 0.0
    %2988 = vmatpush2.msra.mxu0 0.0
    %2989 = vmatprep.subr.mxu0 0.0
    %2990 = vmatpush2.msra.mxu0 0.0
    %2991 = vmatprep.mubr.f32.mxu0 0.0
    %2992 = vmatmul.mubr.f32.gmra.mxu0 %v2922
    %v2993 = vpop.f32.mrf.mxu0
    %v2994 = vadd.f32 %v2920, %v2993
    %v2995 = vpop.f32.mrf.mxu0
    %2996 = vmatprep.mubr.f32.mxu0 0.0
    %2997 = vmatmul.mubr.f32.gmra.mxu0 %v2925
    %v2998 = vpop.f32.mrf.mxu0
    %v2999 = vadd.f32 %v2920, %v2998
    %v3000 = vpop.f32.mrf.mxu0
    %3001 = vdwg.mxu0
    %v3002 = vadd.f32 %v2647, %v2994
    %v3003 = vadd.f32 %v2648, %v2999
    %v3004 = vld [vmem:[#allocation2 + $0x520] sm:$0x3]
    %v3005 = vld [vmem:[#allocation2 + $0x528] sm:$0xff]
    %v3006 = vld [vmem:[#allocation2 + $0x530] sm:$0xff]
    %v3007 = vld [vmem:[#allocation2 + $0x538] sm:$0xff]
    %v3008 = vld [vmem:[#allocation2 + $0x540] sm:$0xff]
    %v3009 = vld [vmem:[#allocation2 + $0x548] sm:$0xff]
    %v3010 = vld [vmem:[#allocation2 + $0x550] sm:$0xff]
    %v3011 = vld [vmem:[#allocation2 + $0x558] sm:$0xff]
    %v3012 = vld [vmem:[#allocation2 + $0x560] sm:$0xff]
    %v3013 = vld [vmem:[#allocation2 + $0x568] sm:$0xff]
    %v3014 = vld [vmem:[#allocation2 + $0x570] sm:$0xff]
    %v3015 = vld [vmem:[#allocation2 + $0x578] sm:$0xff]
    %v3016 = vld [vmem:[#allocation2 + $0x580] sm:$0xff]
    %v3017 = vld [vmem:[#allocation2 + $0x588] sm:$0x7]
    %v3018 = vsel %vm592, %v3002, 0.0
    %3019 = vadd.xlane.f32.xlu0 %v3018
    %v3020 = vpop.xlane.xlu0 %3019
    %v3021 = vsel %vm592, %v3003, 0.0
    %3022 = vadd.xlane.f32.xlu0 %v3021
    %v3023 = vpop.xlane.xlu0 %3022
    %v3024 = vmul.f32 %v3020, %v599
    %v3025 = vmul.f32 %v3023, %v599
    %v3026 = vsub.f32 %v3002, %v3024
    %v3027 = vsub.f32 %v3003, %v3025
    %v3028 = vmul.f32 %v3026, %v3026
    %v3029 = vmul.f32 %v3027, %v3027
    %v3030 = vsel %vm592, %v3028, 0.0
    %3031 = vadd.xlane.f32.xlu0 %v3030
    %v3032 = vpop.xlane.xlu0 %3031
    %v3033 = vsel %vm592, %v3029, 0.0
    %3034 = vadd.xlane.f32.xlu0 %v3033
    %v3035 = vpop.xlane.xlu0 %3034
    %v3036 = vmul.f32 %v3032, %v599
    %v3037 = vmul.f32 %v3035, %v599
    %v3038 = vadd.f32 %v3036, 1e-05
    %v3039 = vadd.f32 %v3037, 1e-05
    %v3040 = vrsqrt.pop %v3038
    %v3041 = vrsqrt.pop %v3039
    %v3042 = vmul.f32 %v3026, %v3040
    %v3043 = vmul.f32 %v3027, %v3041
    %v3044 = vlaneseq
    %v3045 = vshrl.u32 %v3044, 7
    %v3046 = vsub.s32 0, %v3045
    %v3047 = vrot.slane %v3004, %v3046
    %v3048 = vmul.f32 %v3042, %v3047
    %v3049 = vmul.f32 %v3043, %v3047
    %v3050 = vlaneseq
    %v3051 = vshrl.u32 %v3050, 7
    %v3052 = vsub.s32 1, %v3051
    %v3053 = vrot.slane %v3004, %v3052
    %v3054 = vadd.f32 %v3048, %v3053
    %v3055 = vadd.f32 %v3049, %v3053
    %v3056 = vlaneseq
    %v3057 = vshrl.u32 %v3056, 7
    %v3058 = vsub.s32 0, %v3057
    %v3059 = vrot.slane %v3017, %v3058
    %v3061 = vsel %vm592, %v3054, 0
    %v3064 = vsel %vm592, %v3055, 0
    %3066 = vmatprep.subr.mxu0 0.0
    %3067 = vmatpush1.msra.mxu0 0.0
    %3068 = vmatprep.subr.mxu0 0.0
    %3069 = vmatpush1.msra.mxu0 0.0
    %3070 = vmatprep.subr.mxu0 0.0
    %3071 = vmatpush1.msra.mxu0 0.0
    %3072 = vmatprep.subr.mxu0 0.0
    %3073 = vmatpush1.msra.mxu0 0.0
    %3074 = vmatprep.subr.mxu0 0.0
    %3075 = vmatpush1.msra.mxu0 0.0
    %3076 = vmatprep.subr.mxu0 0.0
    %3077 = vmatpush1.msra.mxu0 0.0
    %3078 = vmatprep.subr.mxu0 0.0
    %3079 = vmatpush1.msra.mxu0 0.0
    %3080 = vmatprep.subr.mxu0 0.0
    %3081 = vmatpush1.msra.mxu0 0.0
    %3082 = vmatprep.subr.mxu0 0.0
    %3083 = vmatpush1.msra.mxu0 0.0
    %3084 = vmatprep.subr.mxu0 0.0
    %3085 = vmatpush1.msra.mxu0 0.0
    %3086 = vmatprep.subr.mxu0 0.0
    %3087 = vmatpush1.msra.mxu0 0.0
    %3088 = vmatprep.subr.mxu0 0.0
    %3089 = vmatpush1.msra.mxu0 0.0
    %3090 = vmatprep.subr.mxu0 0.0
    %3091 = vmatpush1.msra.mxu0 %v3008
    %3092 = vmatprep.subr.mxu0 0.0
    %3093 = vmatpush1.msra.mxu0 %v3007
    %3094 = vmatprep.subr.mxu0 0.0
    %3095 = vmatpush1.msra.mxu0 %v3006
    %3096 = vmatprep.subr.mxu0 0.0
    %3097 = vmatpush1.msra.mxu0 %v3005
    %3098 = vmatprep.subr.mxu0 0.0
    %3099 = vmatpush2.msra.mxu0 0.0
    %3100 = vmatprep.subr.mxu0 0.0
    %3101 = vmatpush2.msra.mxu0 0.0
    %3102 = vmatprep.subr.mxu0 0.0
    %3103 = vmatpush2.msra.mxu0 0.0
    %3104 = vmatprep.subr.mxu0 0.0
    %3105 = vmatpush2.msra.mxu0 0.0
    %3106 = vmatprep.subr.mxu0 0.0
    %3107 = vmatpush2.msra.mxu0 0.0
    %3108 = vmatprep.subr.mxu0 0.0
    %3109 = vmatpush2.msra.mxu0 0.0
    %3110 = vmatprep.subr.mxu0 0.0
    %3111 = vmatpush2.msra.mxu0 0.0
    %3112 = vmatprep.subr.mxu0 0.0
    %3113 = vmatpush2.msra.mxu0 0.0
    %3114 = vmatprep.subr.mxu0 0.0
    %3115 = vmatpush2.msra.mxu0 0.0
    %3116 = vmatprep.subr.mxu0 0.0
    %3117 = vmatpush2.msra.mxu0 0.0
    %3118 = vmatprep.subr.mxu0 0.0
    %3119 = vmatpush2.msra.mxu0 0.0
    %3120 = vmatprep.subr.mxu0 0.0
    %3121 = vmatpush2.msra.mxu0 0.0
    %3122 = vmatprep.subr.mxu0 0.0
    %3123 = vmatpush2.msra.mxu0 0.0
    %3124 = vmatprep.subr.mxu0 0.0
    %3125 = vmatpush2.msra.mxu0 0.0
    %3126 = vmatprep.subr.mxu0 0.0
    %3127 = vmatpush2.msra.mxu0 0.0
    %3128 = vmatprep.subr.mxu0 0.0
    %3129 = vmatpush2.msra.mxu0 0.0
    %3130 = vmatprep.mubr.f32.mxu0 0.0
    %3131 = vmatmul.mubr.f32.gmra.mxu0 %v3061
    %v3132 = vpop.f32.mrf.mxu0
    %v3133 = vadd.f32 %v3059, %v3132
    %v3134 = vpop.f32.mrf.mxu0
    %3135 = vmatprep.mubr.f32.mxu0 0.0
    %3136 = vmatmul.mubr.f32.gmra.mxu0 %v3064
    %v3137 = vpop.f32.mrf.mxu0
    %v3138 = vadd.f32 %v3059, %v3137
    %v3139 = vpop.f32.mrf.mxu0
    %3140 = vdwg.mxu0
    %v3141 = vlaneseq
    %v3142 = vshrl.u32 %v3141, 7
    %v3143 = vsub.s32 1, %v3142
    %v3144 = vrot.slane %v3017, %v3143
    %3145 = vmatprep.subr.mxu0 0.0
    %3146 = vmatpush1.msra.mxu0 0.0
    %3147 = vmatprep.subr.mxu0 0.0
    %3148 = vmatpush1.msra.mxu0 0.0
    %3149 = vmatprep.subr.mxu0 0.0
    %3150 = vmatpush1.msra.mxu0 0.0
    %3151 = vmatprep.subr.mxu0 0.0
    %3152 = vmatpush1.msra.mxu0 0.0
    %3153 = vmatprep.subr.mxu0 0.0
    %3154 = vmatpush1.msra.mxu0 0.0
    %3155 = vmatprep.subr.mxu0 0.0
    %3156 = vmatpush1.msra.mxu0 0.0
    %3157 = vmatprep.subr.mxu0 0.0
    %3158 = vmatpush1.msra.mxu0 0.0
    %3159 = vmatprep.subr.mxu0 0.0
    %3160 = vmatpush1.msra.mxu0 0.0
    %3161 = vmatprep.subr.mxu0 0.0
    %3162 = vmatpush1.msra.mxu0 0.0
    %3163 = vmatprep.subr.mxu0 0.0
    %3164 = vmatpush1.msra.mxu0 0.0
    %3165 = vmatprep.subr.mxu0 0.0
    %3166 = vmatpush1.msra.mxu0 0.0
    %3167 = vmatprep.subr.mxu0 0.0
    %3168 = vmatpush1.msra.mxu0 0.0
    %3169 = vmatprep.subr.mxu0 0.0
    %3170 = vmatpush1.msra.mxu0 %v3012
    %3171 = vmatprep.subr.mxu0 0.0
    %3172 = vmatpush1.msra.mxu0 %v3011
    %3173 = vmatprep.subr.mxu0 0.0
    %3174 = vmatpush1.msra.mxu0 %v3010
    %3175 = vmatprep.subr.mxu0 0.0
    %3176 = vmatpush1.msra.mxu0 %v3009
    %3177 = vmatprep.subr.mxu0 0.0
    %3178 = vmatpush2.msra.mxu0 0.0
    %3179 = vmatprep.subr.mxu0 0.0
    %3180 = vmatpush2.msra.mxu0 0.0
    %3181 = vmatprep.subr.mxu0 0.0
    %3182 = vmatpush2.msra.mxu0 0.0
    %3183 = vmatprep.subr.mxu0 0.0
    %3184 = vmatpush2.msra.mxu0 0.0
    %3185 = vmatprep.subr.mxu0 0.0
    %3186 = vmatpush2.msra.mxu0 0.0
    %3187 = vmatprep.subr.mxu0 0.0
    %3188 = vmatpush2.msra.mxu0 0.0
    %3189 = vmatprep.subr.mxu0 0.0
    %3190 = vmatpush2.msra.mxu0 0.0
    %3191 = vmatprep.subr.mxu0 0.0
    %3192 = vmatpush2.msra.mxu0 0.0
    %3193 = vmatprep.subr.mxu0 0.0
    %3194 = vmatpush2.msra.mxu0 0.0
    %3195 = vmatprep.subr.mxu0 0.0
    %3196 = vmatpush2.msra.mxu0 0.0
    %3197 = vmatprep.subr.mxu0 0.0
    %3198 = vmatpush2.msra.mxu0 0.0
    %3199 = vmatprep.subr.mxu0 0.0
    %3200 = vmatpush2.msra.mxu0 0.0
    %3201 = vmatprep.subr.mxu0 0.0
    %3202 = vmatpush2.msra.mxu0 0.0
    %3203 = vmatprep.subr.mxu0 0.0
    %3204 = vmatpush2.msra.mxu0 0.0
    %3205 = vmatprep.subr.mxu0 0.0
    %3206 = vmatpush2.msra.mxu0 0.0
    %3207 = vmatprep.subr.mxu0 0.0
    %3208 = vmatpush2.msra.mxu0 0.0
    %3209 = vmatprep.mubr.f32.mxu0 0.0
    %3210 = vmatmul.mubr.f32.gmra.mxu0 %v3061
    %v3211 = vpop.f32.mrf.mxu0
    %v3212 = vadd.f32 %v3144, %v3211
    %v3213 = vpop.f32.mrf.mxu0
    %3214 = vmatprep.mubr.f32.mxu0 0.0
    %3215 = vmatmul.mubr.f32.gmra.mxu0 %v3064
    %v3216 = vpop.f32.mrf.mxu0
    %v3217 = vadd.f32 %v3144, %v3216
    %v3218 = vpop.f32.mrf.mxu0
    %3219 = vdwg.mxu0
    %v3220 = vadd.f32 %v3212, %v799
    %v3221 = vadd.f32 %v3217, %v804
    %v3222 = vlaneseq
    %v3223 = vshrl.u32 %v3222, 7
    %v3224 = vsub.s32 2, %v3223
    %v3225 = vrot.slane %v3017, %v3224
    %3226 = vmatprep.subr.mxu0 0.0
    %3227 = vmatpush1.msra.mxu0 0.0
    %3228 = vmatprep.subr.mxu0 0.0
    %3229 = vmatpush1.msra.mxu0 0.0
    %3230 = vmatprep.subr.mxu0 0.0
    %3231 = vmatpush1.msra.mxu0 0.0
    %3232 = vmatprep.subr.mxu0 0.0
    %3233 = vmatpush1.msra.mxu0 0.0
    %3234 = vmatprep.subr.mxu0 0.0
    %3235 = vmatpush1.msra.mxu0 0.0
    %3236 = vmatprep.subr.mxu0 0.0
    %3237 = vmatpush1.msra.mxu0 0.0
    %3238 = vmatprep.subr.mxu0 0.0
    %3239 = vmatpush1.msra.mxu0 0.0
    %3240 = vmatprep.subr.mxu0 0.0
    %3241 = vmatpush1.msra.mxu0 0.0
    %3242 = vmatprep.subr.mxu0 0.0
    %3243 = vmatpush1.msra.mxu0 0.0
    %3244 = vmatprep.subr.mxu0 0.0
    %3245 = vmatpush1.msra.mxu0 0.0
    %3246 = vmatprep.subr.mxu0 0.0
    %3247 = vmatpush1.msra.mxu0 0.0
    %3248 = vmatprep.subr.mxu0 0.0
    %3249 = vmatpush1.msra.mxu0 0.0
    %3250 = vmatprep.subr.mxu0 0.0
    %3251 = vmatpush1.msra.mxu0 %v3016
    %3252 = vmatprep.subr.mxu0 0.0
    %3253 = vmatpush1.msra.mxu0 %v3015
    %3254 = vmatprep.subr.mxu0 0.0
    %3255 = vmatpush1.msra.mxu0 %v3014
    %3256 = vmatprep.subr.mxu0 0.0
    %3257 = vmatpush1.msra.mxu0 %v3013
    %3258 = vmatprep.subr.mxu0 0.0
    %3259 = vmatpush2.msra.mxu0 0.0
    %3260 = vmatprep.subr.mxu0 0.0
    %3261 = vmatpush2.msra.mxu0 0.0
    %3262 = vmatprep.subr.mxu0 0.0
    %3263 = vmatpush2.msra.mxu0 0.0
    %3264 = vmatprep.subr.mxu0 0.0
    %3265 = vmatpush2.msra.mxu0 0.0
    %3266 = vmatprep.subr.mxu0 0.0
    %3267 = vmatpush2.msra.mxu0 0.0
    %3268 = vmatprep.subr.mxu0 0.0
    %3269 = vmatpush2.msra.mxu0 0.0
    %3270 = vmatprep.subr.mxu0 0.0
    %3271 = vmatpush2.msra.mxu0 0.0
    %3272 = vmatprep.subr.mxu0 0.0
    %3273 = vmatpush2.msra.mxu0 0.0
    %3274 = vmatprep.subr.mxu0 0.0
    %3275 = vmatpush2.msra.mxu0 0.0
    %3276 = vmatprep.subr.mxu0 0.0
    %3277 = vmatpush2.msra.mxu0 0.0
    %3278 = vmatprep.subr.mxu0 0.0
    %3279 = vmatpush2.msra.mxu0 0.0
    %3280 = vmatprep.subr.mxu0 0.0
    %3281 = vmatpush2.msra.mxu0 0.0
    %3282 = vmatprep.subr.mxu0 0.0
    %3283 = vmatpush2.msra.mxu0 0.0
    %3284 = vmatprep.subr.mxu0 0.0
    %3285 = vmatpush2.msra.mxu0 0.0
    %3286 = vmatprep.subr.mxu0 0.0
    %3287 = vmatpush2.msra.mxu0 0.0
    %3288 = vmatprep.subr.mxu0 0.0
    %3289 = vmatpush2.msra.mxu0 0.0
    %3290 = vmatprep.mubr.f32.mxu0 0.0
    %3291 = vmatmul.mubr.f32.gmra.mxu0 %v3061
    %v3292 = vpop.f32.mrf.mxu0
    %v3293 = vadd.f32 %v3225, %v3292
    %v3294 = vpop.f32.mrf.mxu0
    %3295 = vmatprep.mubr.f32.mxu0 0.0
    %3296 = vmatmul.mubr.f32.gmra.mxu0 %v3064
    %v3297 = vpop.f32.mrf.mxu0
    %v3298 = vadd.f32 %v3225, %v3297
    %v3299 = vpop.f32.mrf.mxu0
    %3300 = vdwg.mxu0
    %v3301 = vmul.f32 %v3293, %v890
    %v3302 = vmul.f32 %v3298, %v895
    %v3303 = vsel %vm592, %v3133, -inf
    %3304 = vmax.xlane.f32.xlu0 %v3303
    %v3305 = vpop.xlane.xlu0 %3304
    %v3306 = vsel %vm592, %v3138, -inf
    %3307 = vmax.xlane.f32.xlu0 %v3306
    %v3308 = vpop.xlane.xlu0 %3307
    %v3309 = vsub.f32 %v3133, %v3305
    %v3310 = vsub.f32 %v3138, %v3308
    %v3311 = vmul.f32 %v3309, 1.442695
    %v3312 = vpow.pop %v3311
    %v3313 = vmul.f32 %v3310, 1.442695
    %v3314 = vpow.pop %v3313
    %v3316 = vsel %vm592, %v3312, 0
    %v3319 = vsel %vm592, %v3314, 0
    %3321 = vmatprep.subr.mxu0 0.0
    %3322 = vmatpush1.msra.mxu0 0.0
    %3323 = vmatprep.subr.mxu0 0.0
    %3324 = vmatpush1.msra.mxu0 0.0
    %3325 = vmatprep.subr.mxu0 0.0
    %3326 = vmatpush1.msra.mxu0 0.0
    %3327 = vmatprep.subr.mxu0 0.0
    %3328 = vmatpush1.msra.mxu0 0.0
    %3329 = vmatprep.subr.mxu0 0.0
    %3330 = vmatpush1.msra.mxu0 0.0
    %3331 = vmatprep.subr.mxu0 0.0
    %3332 = vmatpush1.msra.mxu0 0.0
    %3333 = vmatprep.subr.mxu0 0.0
    %3334 = vmatpush1.msra.mxu0 0.0
    %3335 = vmatprep.subr.mxu0 0.0
    %3336 = vmatpush1.msra.mxu0 0.0
    %3337 = vmatprep.subr.mxu0 0.0
    %3338 = vmatpush1.msra.mxu0 0.0
    %3339 = vmatprep.subr.mxu0 0.0
    %3340 = vmatpush1.msra.mxu0 0.0
    %3341 = vmatprep.subr.mxu0 0.0
    %3342 = vmatpush1.msra.mxu0 0.0
    %3343 = vmatprep.subr.mxu0 0.0
    %3344 = vmatpush1.msra.mxu0 0.0
    %3345 = vmatprep.subr.mxu0 0.0
    %3346 = vmatpush1.msra.mxu0 %v42
    %3347 = vmatprep.subr.mxu0 0.0
    %3348 = vmatpush1.msra.mxu0 %v41
    %3349 = vmatprep.subr.mxu0 0.0
    %3350 = vmatpush1.msra.mxu0 %v40
    %3351 = vmatprep.subr.mxu0 0.0
    %3352 = vmatpush1.msra.mxu0 %v39
    %3353 = vmatprep.subr.mxu0 0.0
    %3354 = vmatpush2.msra.mxu0 0.0
    %3355 = vmatprep.subr.mxu0 0.0
    %3356 = vmatpush2.msra.mxu0 0.0
    %3357 = vmatprep.subr.mxu0 0.0
    %3358 = vmatpush2.msra.mxu0 0.0
    %3359 = vmatprep.subr.mxu0 0.0
    %3360 = vmatpush2.msra.mxu0 0.0
    %3361 = vmatprep.subr.mxu0 0.0
    %3362 = vmatpush2.msra.mxu0 0.0
    %3363 = vmatprep.subr.mxu0 0.0
    %3364 = vmatpush2.msra.mxu0 0.0
    %3365 = vmatprep.subr.mxu0 0.0
    %3366 = vmatpush2.msra.mxu0 0.0
    %3367 = vmatprep.subr.mxu0 0.0
    %3368 = vmatpush2.msra.mxu0 0.0
    %3369 = vmatprep.subr.mxu0 0.0
    %3370 = vmatpush2.msra.mxu0 0.0
    %3371 = vmatprep.subr.mxu0 0.0
    %3372 = vmatpush2.msra.mxu0 0.0
    %3373 = vmatprep.subr.mxu0 0.0
    %3374 = vmatpush2.msra.mxu0 0.0
    %3375 = vmatprep.subr.mxu0 0.0
    %3376 = vmatpush2.msra.mxu0 0.0
    %3377 = vmatprep.subr.mxu0 0.0
    %3378 = vmatpush2.msra.mxu0 0.0
    %3379 = vmatprep.subr.mxu0 0.0
    %3380 = vmatpush2.msra.mxu0 0.0
    %3381 = vmatprep.subr.mxu0 0.0
    %3382 = vmatpush2.msra.mxu0 0.0
    %3383 = vmatprep.subr.mxu0 0.0
    %3384 = vmatpush2.msra.mxu0 0.0
    %3385 = vmatprep.mubr.f32.mxu0 0.0
    %3386 = vmatmul.mubr.f32.gmra.mxu0 %v3316
    %v3387 = vpop.f32.mrf.mxu0
    %v3388 = vadd.f32 0.0, %v3387
    %v3389 = vpop.f32.mrf.mxu0
    %3390 = vmatprep.mubr.f32.mxu0 0.0
    %3391 = vmatmul.mubr.f32.gmra.mxu0 %v3319
    %v3392 = vpop.f32.mrf.mxu0
    %v3393 = vadd.f32 0.0, %v3392
    %v3394 = vpop.f32.mrf.mxu0
    %3395 = vdwg.mxu0
    %v3396 = vrcp.pop %v3388
    %v3397 = vrcp.pop %v3393
    %v3398 = vmul.f32 %v3312, %v3396
    %v3399 = vmul.f32 %v3314, %v3397
    %v3400 = vsel %vm592, %v3220, -inf
    %v3401 = vsel %vm592, %v3221, -inf
    %v3402 = vmax.f32 %v3400, %v3401
    %v3403 = vrot.slane %v3402, 4
    %v3404 = vmax.f32 %v3402, %v3403
    %v3405 = vrot.slane %v3404, 2
    %v3406 = vmax.f32 %v3404, %v3405
    %v3407 = vrot.slane %v3406, 1
    %v3408 = vmax.f32 %v3406, %v3407
    %v3409 = vsub.f32 %v3220, %v3408
    %v3410 = vsub.f32 %v3221, %v3408
    %v3411 = vmul.f32 %v3409, 1.442695
    %v3412 = vpow.pop %v3411
    %v3413 = vmul.f32 %v3410, 1.442695
    %v3414 = vpow.pop %v3413
    %v3415 = vsel %vm592, %v3412, 0.0
    %v3416 = vrot.slane %v3415, 4
    %v3417 = vadd.f32 %v3415, %v3416
    %v3418 = vrot.slane %v3417, 2
    %v3419 = vadd.f32 %v3417, %v3418
    %v3420 = vrot.slane %v3419, 1
    %v3421 = vadd.f32 %v3419, %v3420
    %v3422 = vrcp.pop %v3421
    %v3423 = vmul.f32 %v3412, %v3422
    %3424 = vxpose.xlu0.b32.start [1/16] %v3423, 128
    %3425 = vxpose.xlu0.b32.cont [2/16] 0.0, 128
    %3426 = vxpose.xlu0.b32.cont [3/16] 0.0, 128
    %3427 = vxpose.xlu0.b32.cont [4/16] 0.0, 128
    %3428 = vxpose.xlu0.b32.cont [5/16] 0.0, 128
    %3429 = vxpose.xlu0.b32.cont [6/16] 0.0, 128
    %3430 = vxpose.xlu0.b32.cont [7/16] 0.0, 128
    %3431 = vxpose.xlu0.b32.cont [8/16] 0.0, 128
    %3432 = vxpose.xlu0.b32.cont [9/16] 0.0, 128
    %3433 = vxpose.xlu0.b32.cont [10/16] 0.0, 128
    %3434 = vxpose.xlu0.b32.cont [11/16] 0.0, 128
    %3435 = vxpose.xlu0.b32.cont [12/16] 0.0, 128
    %3436 = vxpose.xlu0.b32.cont [13/16] 0.0, 128
    %3437 = vxpose.xlu0.b32.cont [14/16] 0.0, 128
    %3438 = vxpose.xlu0.b32.cont [15/16] 0.0, 128
    %3439 = vxpose.xlu0.b32.end [16/16] 0.0, 128
    %v3440 = vpop.trf.xlu0
    %v3441 = vpop.trf.xlu0
    %v3442 = vpop.trf.xlu0
    %v3443 = vpop.trf.xlu0
    %v3444 = vpop.trf.xlu0
    %v3445 = vpop.trf.xlu0
    %v3446 = vpop.trf.xlu0
    %v3447 = vpop.trf.xlu0
    %v3448 = vpop.trf.xlu0
    %v3449 = vpop.trf.xlu0
    %v3450 = vpop.trf.xlu0
    %v3451 = vpop.trf.xlu0
    %v3452 = vpop.trf.xlu0
    %v3453 = vpop.trf.xlu0
    %v3454 = vpop.trf.xlu0
    %v3455 = vpop.trf.xlu0
    %v3457 = vsel %vm1052, %v3440, 0
    %v3460 = vsel %vm1052, %v3441, 0
    %v3463 = vsel %vm1052, %v3442, 0
    %v3466 = vsel %vm1052, %v3443, 0
    %3468 = vmatprep.subr.mxu0 0.0
    %3469 = vmatpush1.msra.mxu0 0.0
    %3470 = vmatprep.subr.mxu0 0.0
    %3471 = vmatpush1.msra.mxu0 0.0
    %3472 = vmatprep.subr.mxu0 0.0
    %3473 = vmatpush1.msra.mxu0 0.0
    %3474 = vmatprep.subr.mxu0 0.0
    %3475 = vmatpush1.msra.mxu0 0.0
    %3476 = vmatprep.subr.mxu0 0.0
    %3477 = vmatpush1.msra.mxu0 0.0
    %3478 = vmatprep.subr.mxu0 0.0
    %3479 = vmatpush1.msra.mxu0 0.0
    %3480 = vmatprep.subr.mxu0 0.0
    %3481 = vmatpush1.msra.mxu0 0.0
    %3482 = vmatprep.subr.mxu0 0.0
    %3483 = vmatpush1.msra.mxu0 0.0
    %3484 = vmatprep.subr.mxu0 0.0
    %3485 = vmatpush1.msra.mxu0 0.0
    %3486 = vmatprep.subr.mxu0 0.0
    %3487 = vmatpush1.msra.mxu0 0.0
    %3488 = vmatprep.subr.mxu0 0.0
    %3489 = vmatpush1.msra.mxu0 0.0
    %3490 = vmatprep.subr.mxu0 0.0
    %3491 = vmatpush1.msra.mxu0 0.0
    %3492 = vmatprep.subr.mxu0 0.0
    %3493 = vmatpush1.msra.mxu0 0.0
    %3494 = vmatprep.subr.mxu0 0.0
    %3495 = vmatpush1.msra.mxu0 0.0
    %3496 = vmatprep.subr.mxu0 0.0
    %3497 = vmatpush1.msra.mxu0 0.0
    %3498 = vmatprep.subr.mxu0 0.0
    %3499 = vmatpush1.msra.mxu0 %v3301
    %3500 = vmatprep.subr.mxu0 0.0
    %3501 = vmatpush2.msra.mxu0 0.0
    %3502 = vmatprep.subr.mxu0 0.0
    %3503 = vmatpush2.msra.mxu0 0.0
    %3504 = vmatprep.subr.mxu0 0.0
    %3505 = vmatpush2.msra.mxu0 0.0
    %3506 = vmatprep.subr.mxu0 0.0
    %3507 = vmatpush2.msra.mxu0 0.0
    %3508 = vmatprep.subr.mxu0 0.0
    %3509 = vmatpush2.msra.mxu0 0.0
    %3510 = vmatprep.subr.mxu0 0.0
    %3511 = vmatpush2.msra.mxu0 0.0
    %3512 = vmatprep.subr.mxu0 0.0
    %3513 = vmatpush2.msra.mxu0 0.0
    %3514 = vmatprep.subr.mxu0 0.0
    %3515 = vmatpush2.msra.mxu0 0.0
    %3516 = vmatprep.subr.mxu0 0.0
    %3517 = vmatpush2.msra.mxu0 0.0
    %3518 = vmatprep.subr.mxu0 0.0
    %3519 = vmatpush2.msra.mxu0 0.0
    %3520 = vmatprep.subr.mxu0 0.0
    %3521 = vmatpush2.msra.mxu0 0.0
    %3522 = vmatprep.subr.mxu0 0.0
    %3523 = vmatpush2.msra.mxu0 0.0
    %3524 = vmatprep.subr.mxu0 0.0
    %3525 = vmatpush2.msra.mxu0 0.0
    %3526 = vmatprep.subr.mxu0 0.0
    %3527 = vmatpush2.msra.mxu0 0.0
    %3528 = vmatprep.subr.mxu0 0.0
    %3529 = vmatpush2.msra.mxu0 0.0
    %3530 = vmatprep.subr.mxu0 0.0
    %3531 = vmatpush2.msra.mxu0 0.0
    %3532 = vmatprep.mubr.f32.mxu0 0.0
    %3533 = vmatmul.mubr.f32.gmra.mxu0 %v3457
    %v3534 = vpop.f32.mrf.mxu0
    %v3535 = vadd.f32 0.0, %v3534
    %v3536 = vpop.f32.mrf.mxu0
    %3537 = vmatprep.mubr.f32.mxu0 0.0
    %3538 = vmatmul.mubr.f32.gmra.mxu0 %v3460
    %v3539 = vpop.f32.mrf.mxu0
    %v3540 = vadd.f32 0.0, %v3539
    %v3541 = vpop.f32.mrf.mxu0
    %3542 = vmatprep.mubr.f32.mxu0 0.0
    %3543 = vmatmul.mubr.f32.gmra.mxu0 %v3463
    %v3544 = vpop.f32.mrf.mxu0
    %v3545 = vadd.f32 0.0, %v3544
    %v3546 = vpop.f32.mrf.mxu0
    %3547 = vmatprep.mubr.f32.mxu0 0.0
    %3548 = vmatmul.mubr.f32.gmra.mxu0 %v3466
    %v3549 = vpop.f32.mrf.mxu0
    %v3550 = vadd.f32 0.0, %v3549
    %v3551 = vpop.f32.mrf.mxu0
    %3552 = vdwg.mxu0
    %v3553 = vmul.f32 %v3535, %v39
    %v3554 = vmul.f32 %v3540, %v40
    %v3555 = vmul.f32 %v3545, %v41
    %v3556 = vmul.f32 %v3550, %v42
    %v3558 = vsel %vm592, %v3398, 0
    %3560 = vmatprep.subr.mxu0 0.0
    %3561 = vmatpush1.msra.mxu0 0.0
    %3562 = vmatprep.subr.mxu0 0.0
    %3563 = vmatpush1.msra.mxu0 0.0
    %3564 = vmatprep.subr.mxu0 0.0
    %3565 = vmatpush1.msra.mxu0 0.0
    %3566 = vmatprep.subr.mxu0 0.0
    %3567 = vmatpush1.msra.mxu0 0.0
    %3568 = vmatprep.subr.mxu0 0.0
    %3569 = vmatpush1.msra.mxu0 0.0
    %3570 = vmatprep.subr.mxu0 0.0
    %3571 = vmatpush1.msra.mxu0 0.0
    %3572 = vmatprep.subr.mxu0 0.0
    %3573 = vmatpush1.msra.mxu0 0.0
    %3574 = vmatprep.subr.mxu0 0.0
    %3575 = vmatpush1.msra.mxu0 0.0
    %3576 = vmatprep.subr.mxu0 0.0
    %3577 = vmatpush1.msra.mxu0 0.0
    %3578 = vmatprep.subr.mxu0 0.0
    %3579 = vmatpush1.msra.mxu0 0.0
    %3580 = vmatprep.subr.mxu0 0.0
    %3581 = vmatpush1.msra.mxu0 0.0
    %3582 = vmatprep.subr.mxu0 0.0
    %3583 = vmatpush1.msra.mxu0 0.0
    %3584 = vmatprep.subr.mxu0 0.0
    %3585 = vmatpush1.msra.mxu0 %v3556
    %3586 = vmatprep.subr.mxu0 0.0
    %3587 = vmatpush1.msra.mxu0 %v3555
    %3588 = vmatprep.subr.mxu0 0.0
    %3589 = vmatpush1.msra.mxu0 %v3554
    %3590 = vmatprep.subr.mxu0 0.0
    %3591 = vmatpush1.msra.mxu0 %v3553
    %3592 = vmatprep.subr.mxu0 0.0
    %3593 = vmatpush2.msra.mxu0 0.0
    %3594 = vmatprep.subr.mxu0 0.0
    %3595 = vmatpush2.msra.mxu0 0.0
    %3596 = vmatprep.subr.mxu0 0.0
    %3597 = vmatpush2.msra.mxu0 0.0
    %3598 = vmatprep.subr.mxu0 0.0
    %3599 = vmatpush2.msra.mxu0 0.0
    %3600 = vmatprep.subr.mxu0 0.0
    %3601 = vmatpush2.msra.mxu0 0.0
    %3602 = vmatprep.subr.mxu0 0.0
    %3603 = vmatpush2.msra.mxu0 0.0
    %3604 = vmatprep.subr.mxu0 0.0
    %3605 = vmatpush2.msra.mxu0 0.0
    %3606 = vmatprep.subr.mxu0 0.0
    %3607 = vmatpush2.msra.mxu0 0.0
    %3608 = vmatprep.subr.mxu0 0.0
    %3609 = vmatpush2.msra.mxu0 0.0
    %3610 = vmatprep.subr.mxu0 0.0
    %3611 = vmatpush2.msra.mxu0 0.0
    %3612 = vmatprep.subr.mxu0 0.0
    %3613 = vmatpush2.msra.mxu0 0.0
    %3614 = vmatprep.subr.mxu0 0.0
    %3615 = vmatpush2.msra.mxu0 0.0
    %3616 = vmatprep.subr.mxu0 0.0
    %3617 = vmatpush2.msra.mxu0 0.0
    %3618 = vmatprep.subr.mxu0 0.0
    %3619 = vmatpush2.msra.mxu0 0.0
    %3620 = vmatprep.subr.mxu0 0.0
    %3621 = vmatpush2.msra.mxu0 0.0
    %3622 = vmatprep.subr.mxu0 0.0
    %3623 = vmatpush2.msra.mxu0 0.0
    %3624 = vmatprep.mubr.f32.mxu0 0.0
    %3625 = vmatmul.mubr.f32.gmra.mxu0 %v3558
    %v3626 = vpop.f32.mrf.mxu0
    %v3627 = vadd.f32 0.0, %v3626
    %v3628 = vpop.f32.mrf.mxu0
    %3629 = vdwg.mxu0
    %v3630 = vsel %vm592, %v3414, 0.0
    %v3631 = vrot.slane %v3630, 4
    %v3632 = vadd.f32 %v3630, %v3631
    %v3633 = vrot.slane %v3632, 2
    %v3634 = vadd.f32 %v3632, %v3633
    %v3635 = vrot.slane %v3634, 1
    %v3636 = vadd.f32 %v3634, %v3635
    %v3637 = vrcp.pop %v3636
    %v3638 = vmul.f32 %v3414, %v3637
    %3639 = vxpose.xlu0.b32.start [1/16] %v3638, 128
    %3640 = vxpose.xlu0.b32.cont [2/16] 0.0, 128
    %3641 = vxpose.xlu0.b32.cont [3/16] 0.0, 128
    %3642 = vxpose.xlu0.b32.cont [4/16] 0.0, 128
    %3643 = vxpose.xlu0.b32.cont [5/16] 0.0, 128
    %3644 = vxpose.xlu0.b32.cont [6/16] 0.0, 128
    %3645 = vxpose.xlu0.b32.cont [7/16] 0.0, 128
    %3646 = vxpose.xlu0.b32.cont [8/16] 0.0, 128
    %3647 = vxpose.xlu0.b32.cont [9/16] 0.0, 128
    %3648 = vxpose.xlu0.b32.cont [10/16] 0.0, 128
    %3649 = vxpose.xlu0.b32.cont [11/16] 0.0, 128
    %3650 = vxpose.xlu0.b32.cont [12/16] 0.0, 128
    %3651 = vxpose.xlu0.b32.cont [13/16] 0.0, 128
    %3652 = vxpose.xlu0.b32.cont [14/16] 0.0, 128
    %3653 = vxpose.xlu0.b32.cont [15/16] 0.0, 128
    %3654 = vxpose.xlu0.b32.end [16/16] 0.0, 128
    %v3655 = vpop.trf.xlu0
    %v3656 = vpop.trf.xlu0
    %v3657 = vpop.trf.xlu0
    %v3658 = vpop.trf.xlu0
    %v3659 = vpop.trf.xlu0
    %v3660 = vpop.trf.xlu0
    %v3661 = vpop.trf.xlu0
    %v3662 = vpop.trf.xlu0
    %v3663 = vpop.trf.xlu0
    %v3664 = vpop.trf.xlu0
    %v3665 = vpop.trf.xlu0
    %v3666 = vpop.trf.xlu0
    %v3667 = vpop.trf.xlu0
    %v3668 = vpop.trf.xlu0
    %v3669 = vpop.trf.xlu0
    %v3670 = vpop.trf.xlu0
    %v3672 = vsel %vm1052, %v3655, 0
    %v3675 = vsel %vm1052, %v3656, 0
    %v3678 = vsel %vm1052, %v3657, 0
    %v3681 = vsel %vm1052, %v3658, 0
    %3683 = vmatprep.subr.mxu0 0.0
    %3684 = vmatpush1.msra.mxu0 0.0
    %3685 = vmatprep.subr.mxu0 0.0
    %3686 = vmatpush1.msra.mxu0 0.0
    %3687 = vmatprep.subr.mxu0 0.0
    %3688 = vmatpush1.msra.mxu0 0.0
    %3689 = vmatprep.subr.mxu0 0.0
    %3690 = vmatpush1.msra.mxu0 0.0
    %3691 = vmatprep.subr.mxu0 0.0
    %3692 = vmatpush1.msra.mxu0 0.0
    %3693 = vmatprep.subr.mxu0 0.0
    %3694 = vmatpush1.msra.mxu0 0.0
    %3695 = vmatprep.subr.mxu0 0.0
    %3696 = vmatpush1.msra.mxu0 0.0
    %3697 = vmatprep.subr.mxu0 0.0
    %3698 = vmatpush1.msra.mxu0 0.0
    %3699 = vmatprep.subr.mxu0 0.0
    %3700 = vmatpush1.msra.mxu0 0.0
    %3701 = vmatprep.subr.mxu0 0.0
    %3702 = vmatpush1.msra.mxu0 0.0
    %3703 = vmatprep.subr.mxu0 0.0
    %3704 = vmatpush1.msra.mxu0 0.0
    %3705 = vmatprep.subr.mxu0 0.0
    %3706 = vmatpush1.msra.mxu0 0.0
    %3707 = vmatprep.subr.mxu0 0.0
    %3708 = vmatpush1.msra.mxu0 0.0
    %3709 = vmatprep.subr.mxu0 0.0
    %3710 = vmatpush1.msra.mxu0 0.0
    %3711 = vmatprep.subr.mxu0 0.0
    %3712 = vmatpush1.msra.mxu0 0.0
    %3713 = vmatprep.subr.mxu0 0.0
    %3714 = vmatpush1.msra.mxu0 %v3302
    %3715 = vmatprep.subr.mxu0 0.0
    %3716 = vmatpush2.msra.mxu0 0.0
    %3717 = vmatprep.subr.mxu0 0.0
    %3718 = vmatpush2.msra.mxu0 0.0
    %3719 = vmatprep.subr.mxu0 0.0
    %3720 = vmatpush2.msra.mxu0 0.0
    %3721 = vmatprep.subr.mxu0 0.0
    %3722 = vmatpush2.msra.mxu0 0.0
    %3723 = vmatprep.subr.mxu0 0.0
    %3724 = vmatpush2.msra.mxu0 0.0
    %3725 = vmatprep.subr.mxu0 0.0
    %3726 = vmatpush2.msra.mxu0 0.0
    %3727 = vmatprep.subr.mxu0 0.0
    %3728 = vmatpush2.msra.mxu0 0.0
    %3729 = vmatprep.subr.mxu0 0.0
    %3730 = vmatpush2.msra.mxu0 0.0
    %3731 = vmatprep.subr.mxu0 0.0
    %3732 = vmatpush2.msra.mxu0 0.0
    %3733 = vmatprep.subr.mxu0 0.0
    %3734 = vmatpush2.msra.mxu0 0.0
    %3735 = vmatprep.subr.mxu0 0.0
    %3736 = vmatpush2.msra.mxu0 0.0
    %3737 = vmatprep.subr.mxu0 0.0
    %3738 = vmatpush2.msra.mxu0 0.0
    %3739 = vmatprep.subr.mxu0 0.0
    %3740 = vmatpush2.msra.mxu0 0.0
    %3741 = vmatprep.subr.mxu0 0.0
    %3742 = vmatpush2.msra.mxu0 0.0
    %3743 = vmatprep.subr.mxu0 0.0
    %3744 = vmatpush2.msra.mxu0 0.0
    %3745 = vmatprep.subr.mxu0 0.0
    %3746 = vmatpush2.msra.mxu0 0.0
    %3747 = vmatprep.mubr.f32.mxu0 0.0
    %3748 = vmatmul.mubr.f32.gmra.mxu0 %v3672
    %v3749 = vpop.f32.mrf.mxu0
    %v3750 = vadd.f32 0.0, %v3749
    %v3751 = vpop.f32.mrf.mxu0
    %3752 = vmatprep.mubr.f32.mxu0 0.0
    %3753 = vmatmul.mubr.f32.gmra.mxu0 %v3675
    %v3754 = vpop.f32.mrf.mxu0
    %v3755 = vadd.f32 0.0, %v3754
    %v3756 = vpop.f32.mrf.mxu0
    %3757 = vmatprep.mubr.f32.mxu0 0.0
    %3758 = vmatmul.mubr.f32.gmra.mxu0 %v3678
    %v3759 = vpop.f32.mrf.mxu0
    %v3760 = vadd.f32 0.0, %v3759
    %v3761 = vpop.f32.mrf.mxu0
    %3762 = vmatprep.mubr.f32.mxu0 0.0
    %3763 = vmatmul.mubr.f32.gmra.mxu0 %v3681
    %v3764 = vpop.f32.mrf.mxu0
    %v3765 = vadd.f32 0.0, %v3764
    %v3766 = vpop.f32.mrf.mxu0
    %3767 = vdwg.mxu0
    %v3768 = vmul.f32 %v3750, %v39
    %v3769 = vmul.f32 %v3755, %v40
    %v3770 = vmul.f32 %v3760, %v41
    %v3771 = vmul.f32 %v3765, %v42
    %v3773 = vsel %vm592, %v3399, 0
    %3775 = vmatprep.subr.mxu0 0.0
    %3776 = vmatpush1.msra.mxu0 0.0
    %3777 = vmatprep.subr.mxu0 0.0
    %3778 = vmatpush1.msra.mxu0 0.0
    %3779 = vmatprep.subr.mxu0 0.0
    %3780 = vmatpush1.msra.mxu0 0.0
    %3781 = vmatprep.subr.mxu0 0.0
    %3782 = vmatpush1.msra.mxu0 0.0
    %3783 = vmatprep.subr.mxu0 0.0
    %3784 = vmatpush1.msra.mxu0 0.0
    %3785 = vmatprep.subr.mxu0 0.0
    %3786 = vmatpush1.msra.mxu0 0.0
    %3787 = vmatprep.subr.mxu0 0.0
    %3788 = vmatpush1.msra.mxu0 0.0
    %3789 = vmatprep.subr.mxu0 0.0
    %3790 = vmatpush1.msra.mxu0 0.0
    %3791 = vmatprep.subr.mxu0 0.0
    %3792 = vmatpush1.msra.mxu0 0.0
    %3793 = vmatprep.subr.mxu0 0.0
    %3794 = vmatpush1.msra.mxu0 0.0
    %3795 = vmatprep.subr.mxu0 0.0
    %3796 = vmatpush1.msra.mxu0 0.0
    %3797 = vmatprep.subr.mxu0 0.0
    %3798 = vmatpush1.msra.mxu0 0.0
    %3799 = vmatprep.subr.mxu0 0.0
    %3800 = vmatpush1.msra.mxu0 %v3771
    %3801 = vmatprep.subr.mxu0 0.0
    %3802 = vmatpush1.msra.mxu0 %v3770
    %3803 = vmatprep.subr.mxu0 0.0
    %3804 = vmatpush1.msra.mxu0 %v3769
    %3805 = vmatprep.subr.mxu0 0.0
    %3806 = vmatpush1.msra.mxu0 %v3768
    %3807 = vmatprep.subr.mxu0 0.0
    %3808 = vmatpush2.msra.mxu0 0.0
    %3809 = vmatprep.subr.mxu0 0.0
    %3810 = vmatpush2.msra.mxu0 0.0
    %3811 = vmatprep.subr.mxu0 0.0
    %3812 = vmatpush2.msra.mxu0 0.0
    %3813 = vmatprep.subr.mxu0 0.0
    %3814 = vmatpush2.msra.mxu0 0.0
    %3815 = vmatprep.subr.mxu0 0.0
    %3816 = vmatpush2.msra.mxu0 0.0
    %3817 = vmatprep.subr.mxu0 0.0
    %3818 = vmatpush2.msra.mxu0 0.0
    %3819 = vmatprep.subr.mxu0 0.0
    %3820 = vmatpush2.msra.mxu0 0.0
    %3821 = vmatprep.subr.mxu0 0.0
    %3822 = vmatpush2.msra.mxu0 0.0
    %3823 = vmatprep.subr.mxu0 0.0
    %3824 = vmatpush2.msra.mxu0 0.0
    %3825 = vmatprep.subr.mxu0 0.0
    %3826 = vmatpush2.msra.mxu0 0.0
    %3827 = vmatprep.subr.mxu0 0.0
    %3828 = vmatpush2.msra.mxu0 0.0
    %3829 = vmatprep.subr.mxu0 0.0
    %3830 = vmatpush2.msra.mxu0 0.0
    %3831 = vmatprep.subr.mxu0 0.0
    %3832 = vmatpush2.msra.mxu0 0.0
    %3833 = vmatprep.subr.mxu0 0.0
    %3834 = vmatpush2.msra.mxu0 0.0
    %3835 = vmatprep.subr.mxu0 0.0
    %3836 = vmatpush2.msra.mxu0 0.0
    %3837 = vmatprep.subr.mxu0 0.0
    %3838 = vmatpush2.msra.mxu0 0.0
    %3839 = vmatprep.mubr.f32.mxu0 0.0
    %3840 = vmatmul.mubr.f32.gmra.mxu0 %v3773
    %v3841 = vpop.f32.mrf.mxu0
    %v3842 = vadd.f32 0.0, %v3841
    %v3843 = vpop.f32.mrf.mxu0
    %3844 = vdwg.mxu0
    %v3845 = vsel %vm592, %v3627, 0.0
    %3846 = vadd.xlane.f32.xlu0 %v3845
    %v3847 = vpop.xlane.xlu0 %3846
    %v3848 = vsel %vm592, %v3842, 0.0
    %3849 = vadd.xlane.f32.xlu0 %v3848
    %v3850 = vpop.xlane.xlu0 %3849
    %v3851 = vmul.f32 %v3847, %v599
    %v3852 = vmul.f32 %v3850, %v599
    %v3853 = vsub.f32 %v3627, %v3851
    %v3854 = vsub.f32 %v3842, %v3852
    %v3855 = vmul.f32 %v3853, %v3853
    %v3856 = vmul.f32 %v3854, %v3854
    %v3857 = vsel %vm592, %v3855, 0.0
    %3858 = vadd.xlane.f32.xlu0 %v3857
    %v3859 = vpop.xlane.xlu0 %3858
    %v3860 = vsel %vm592, %v3856, 0.0
    %3861 = vadd.xlane.f32.xlu0 %v3860
    %v3862 = vpop.xlane.xlu0 %3861
    %v3863 = vmul.f32 %v3859, %v599
    %v3864 = vmul.f32 %v3862, %v599
    %v3865 = vadd.f32 %v3863, 1e-05
    %v3866 = vadd.f32 %v3864, 1e-05
    %v3867 = vrsqrt.pop %v3865
    %v3868 = vrsqrt.pop %v3866
    %v3869 = vmul.f32 %v3853, %v3867
    %v3870 = vmul.f32 %v3854, %v3868
    %v3871 = vlaneseq
    %v3872 = vshrl.u32 %v3871, 7
    %v3873 = vsub.s32 6, %v3872
    %v3874 = vrot.slane %v458, %v3873
    %v3875 = vmul.f32 %v3869, %v3874
    %v3876 = vmul.f32 %v3870, %v3874
    %v3877 = vlaneseq
    %v3878 = vshrl.u32 %v3877, 7
    %v3879 = vsub.s32 7, %v3878
    %v3880 = vrot.slane %v458, %v3879
    %v3881 = vadd.f32 %v3875, %v3880
    %v3882 = vadd.f32 %v3876, %v3880
    %3885 = vrot.lane.b32.xlu0 %v2889, 64
    %v3886 = vpop.permute.xlu0 %3885
    %3887 = vrot.lane.b32.xlu0 %v2890, 64
    %v3888 = vpop.permute.xlu0 %3887
    %v3891 = vmul.f32 %v3881, %v3886
    %v3892 = vmul.f32 %v3882, %v3888
    %3893 = vrot.lane.b32.xlu0 %v354, 32
    %v3894 = vpop.permute.xlu0 %3893
    %3895 = vrot.lane.b32.xlu0 %v359, 32
    %v3896 = vpop.permute.xlu0 %3895
    %v3899 = vadd.f32 %v3891, %v3894
    %v3900 = vadd.f32 %v3892, %v3896
    %v3901 = vxor.u32 %v3899, 2147483648
    %v3902 = vxor.u32 %v3900, 2147483648
    %v3903 = vmul.f32 %v3901, 1.442695
    %v3904 = vpow.pop %v3903
    %v3905 = vmul.f32 %v3902, 1.442695
    %v3906 = vpow.pop %v3905
    %v3907 = vadd.f32 %v3904, 1.0
    %v3908 = vadd.f32 %v3906, 1.0
    %v3909 = vrcp.pop %v3907
    %v3910 = vmul.f32 1.0, %v3909
    %v3911 = vrcp.pop %v3908
    %v3912 = vmul.f32 1.0, %v3911
    %v3913 = vmul.f32 %v3899, %v3910
    %v3914 = vmul.f32 %v3900, %v3912
    %v3915 = vlaneseq
    %v3916 = vshrl.u32 %v3915, 7
    %v3917 = vsub.s32 3, %v3916
    %v3918 = vrot.slane %v484, %v3917
    %v3920 = vsel %vm592, %v3913, 0
    %v3923 = vsel %vm592, %v3914, 0
    %3925 = vmatprep.subr.mxu0 0.0
    %3926 = vmatpush1.msra.mxu0 0.0
    %3927 = vmatprep.subr.mxu0 0.0
    %3928 = vmatpush1.msra.mxu0 0.0
    %3929 = vmatprep.subr.mxu0 0.0
    %3930 = vmatpush1.msra.mxu0 0.0
    %3931 = vmatprep.subr.mxu0 0.0
    %3932 = vmatpush1.msra.mxu0 0.0
    %3933 = vmatprep.subr.mxu0 0.0
    %3934 = vmatpush1.msra.mxu0 0.0
    %3935 = vmatprep.subr.mxu0 0.0
    %3936 = vmatpush1.msra.mxu0 0.0
    %3937 = vmatprep.subr.mxu0 0.0
    %3938 = vmatpush1.msra.mxu0 0.0
    %3939 = vmatprep.subr.mxu0 0.0
    %3940 = vmatpush1.msra.mxu0 0.0
    %3941 = vmatprep.subr.mxu0 0.0
    %3942 = vmatpush1.msra.mxu0 0.0
    %3943 = vmatprep.subr.mxu0 0.0
    %3944 = vmatpush1.msra.mxu0 0.0
    %3945 = vmatprep.subr.mxu0 0.0
    %3946 = vmatpush1.msra.mxu0 0.0
    %3947 = vmatprep.subr.mxu0 0.0
    %3948 = vmatpush1.msra.mxu0 0.0
    %3949 = vmatprep.subr.mxu0 0.0
    %3950 = vmatpush1.msra.mxu0 %v475
    %3951 = vmatprep.subr.mxu0 0.0
    %3952 = vmatpush1.msra.mxu0 %v474
    %3953 = vmatprep.subr.mxu0 0.0
    %3954 = vmatpush1.msra.mxu0 %v473
    %3955 = vmatprep.subr.mxu0 0.0
    %3956 = vmatpush1.msra.mxu0 %v472
    %3957 = vmatprep.subr.mxu0 0.0
    %3958 = vmatpush2.msra.mxu0 0.0
    %3959 = vmatprep.subr.mxu0 0.0
    %3960 = vmatpush2.msra.mxu0 0.0
    %3961 = vmatprep.subr.mxu0 0.0
    %3962 = vmatpush2.msra.mxu0 0.0
    %3963 = vmatprep.subr.mxu0 0.0
    %3964 = vmatpush2.msra.mxu0 0.0
    %3965 = vmatprep.subr.mxu0 0.0
    %3966 = vmatpush2.msra.mxu0 0.0
    %3967 = vmatprep.subr.mxu0 0.0
    %3968 = vmatpush2.msra.mxu0 0.0
    %3969 = vmatprep.subr.mxu0 0.0
    %3970 = vmatpush2.msra.mxu0 0.0
    %3971 = vmatprep.subr.mxu0 0.0
    %3972 = vmatpush2.msra.mxu0 0.0
    %3973 = vmatprep.subr.mxu0 0.0
    %3974 = vmatpush2.msra.mxu0 0.0
    %3975 = vmatprep.subr.mxu0 0.0
    %3976 = vmatpush2.msra.mxu0 0.0
    %3977 = vmatprep.subr.mxu0 0.0
    %3978 = vmatpush2.msra.mxu0 0.0
    %3979 = vmatprep.subr.mxu0 0.0
    %3980 = vmatpush2.msra.mxu0 0.0
    %3981 = vmatprep.subr.mxu0 0.0
    %3982 = vmatpush2.msra.mxu0 0.0
    %3983 = vmatprep.subr.mxu0 0.0
    %3984 = vmatpush2.msra.mxu0 0.0
    %3985 = vmatprep.subr.mxu0 0.0
    %3986 = vmatpush2.msra.mxu0 0.0
    %3987 = vmatprep.subr.mxu0 0.0
    %3988 = vmatpush2.msra.mxu0 0.0
    %3989 = vmatprep.mubr.f32.mxu0 0.0
    %3990 = vmatmul.mubr.f32.gmra.mxu0 %v3920
    %v3991 = vpop.f32.mrf.mxu0
    %v3992 = vadd.f32 %v3918, %v3991
    %v3993 = vpop.f32.mrf.mxu0
    %3994 = vmatprep.mubr.f32.mxu0 0.0
    %3995 = vmatmul.mubr.f32.gmra.mxu0 %v3923
    %v3996 = vpop.f32.mrf.mxu0
    %v3997 = vadd.f32 %v3918, %v3996
    %v3998 = vpop.f32.mrf.mxu0
    %3999 = vdwg.mxu0
    %v4000 = vadd.f32 %v3002, %v3992
    %v4001 = vadd.f32 %v3003, %v3997
    %v4002 = vld [vmem:[#allocation2 + $0x590] sm:$0x3]
    %v4003 = vld [vmem:[#allocation2 + $0x598] sm:$0x3]
    %v4004 = vld [vmem:[#allocation2 + $0x5c0] sm:$0xff]
    %v4005 = vld [vmem:[#allocation2 + $0x5c8] sm:$0xff]
    %v4006 = vld [vmem:[#allocation2 + $0x5d0] sm:$0xff]
    %v4007 = vld [vmem:[#allocation2 + $0x5d8] sm:$0xff]
    %v4008 = vld [vmem:[#allocation2 + $0x5e0] sm:$0xff]
    %v4009 = vld [vmem:[#allocation2 + $0x5e8] sm:$0xff]
    %v4010 = vld [vmem:[#allocation2 + $0x5f0] sm:$0xff]
    %v4011 = vld [vmem:[#allocation2 + $0x5f8] sm:$0xff]
    %v4012 = vld [vmem:[#allocation2 + $0x600] sm:$0xff]
    %v4013 = vld [vmem:[#allocation2 + $0x608] sm:$0xff]
    %v4014 = vld [vmem:[#allocation2 + $0x610] sm:$0xff]
    %v4015 = vld [vmem:[#allocation2 + $0x618] sm:$0xff]
    %v4016 = vld [vmem:[#allocation2 + $0x620] sm:$0xff]
    %v4017 = vld [vmem:[#allocation2 + $0x628] sm:$0xff]
    %v4018 = vld [vmem:[#allocation2 + $0x630] sm:$0xff]
    %v4019 = vld [vmem:[#allocation2 + $0x638] sm:$0xff]
    %v4020 = vld [vmem:[#allocation2 + $0x640] sm:$0xff]
    %v4021 = vld [vmem:[#allocation2 + $0x648] sm:$0xff]
    %v4022 = vld [vmem:[#allocation2 + $0x650] sm:$0xff]
    %v4023 = vld [vmem:[#allocation2 + $0x658] sm:$0xff]
    %v4024 = vld [vmem:[#allocation2 + $0x660] sm:$0xff]
    %v4025 = vld [vmem:[#allocation2 + $0x668] sm:$0xff]
    %v4026 = vld [vmem:[#allocation2 + $0x670] sm:$0xff]
    %v4027 = vld [vmem:[#allocation2 + $0x678] sm:$0xff]
    %v4028 = vld [vmem:[#allocation2 + $0x680] sm:$0xff]
    %v4029 = vld [vmem:[#allocation2 + $0x688] sm:$0xff]
    %v4030 = vld [vmem:[#allocation2 + $0x690] sm:$0xff]
    %v4031 = vld [vmem:[#allocation2 + $0x698] sm:$0xff]
    %v4032 = vld [vmem:[#allocation2 + $0x6a0] sm:$0xff]
    %v4033 = vld [vmem:[#allocation2 + $0x6a8] sm:$0xff]
    %v4034 = vld [vmem:[#allocation2 + $0x6b0] sm:$0xff]
    %v4035 = vld [vmem:[#allocation2 + $0x6b8] sm:$0xff]
    %v4036 = vld [vmem:[#allocation2 + $0x6c0] sm:$0x7]
    %v4037 = vsel %vm592, %v4000, 0.0
    %4038 = vadd.xlane.f32.xlu0 %v4037
    %v4039 = vpop.xlane.xlu0 %4038
    %v4040 = vsel %vm592, %v4001, 0.0
    %4041 = vadd.xlane.f32.xlu0 %v4040
    %v4042 = vpop.xlane.xlu0 %4041
    %v4043 = vmul.f32 %v4039, %v599
    %v4044 = vmul.f32 %v4042, %v599
    %v4045 = vsub.f32 %v4000, %v4043
    %v4046 = vsub.f32 %v4001, %v4044
    %v4047 = vmul.f32 %v4045, %v4045
    %v4048 = vmul.f32 %v4046, %v4046
    %v4049 = vsel %vm592, %v4047, 0.0
    %4050 = vadd.xlane.f32.xlu0 %v4049
    %v4051 = vpop.xlane.xlu0 %4050
    %v4052 = vsel %vm592, %v4048, 0.0
    %4053 = vadd.xlane.f32.xlu0 %v4052
    %v4054 = vpop.xlane.xlu0 %4053
    %v4055 = vmul.f32 %v4051, %v599
    %v4056 = vmul.f32 %v4054, %v599
    %v4057 = vadd.f32 %v4055, 1e-05
    %v4058 = vadd.f32 %v4056, 1e-05
    %v4059 = vrsqrt.pop %v4057
    %v4060 = vrsqrt.pop %v4058
    %v4061 = vmul.f32 %v4045, %v4059
    %v4062 = vmul.f32 %v4046, %v4060
    %v4063 = vlaneseq
    %v4064 = vshrl.u32 %v4063, 7
    %v4065 = vsub.s32 0, %v4064
    %v4066 = vrot.slane %v4002, %v4065
    %v4067 = vmul.f32 %v4061, %v4066
    %v4068 = vmul.f32 %v4062, %v4066
    %v4069 = vlaneseq
    %v4070 = vshrl.u32 %v4069, 7
    %v4071 = vsub.s32 1, %v4070
    %v4072 = vrot.slane %v4002, %v4071
    %v4073 = vadd.f32 %v4067, %v4072
    %v4074 = vadd.f32 %v4068, %v4072
    %v4075 = vlaneseq
    %v4076 = vshrl.u32 %v4075, 7
    %v4077 = vsub.s32 0, %v4076
    %v4078 = vrot.slane %v4003, %v4077
    %v4079 = vmul.f32 %v1689, %v4078
    %v4080 = vmul.f32 %v1690, %v4078
    %v4081 = vlaneseq
    %v4082 = vshrl.u32 %v4081, 7
    %v4083 = vsub.s32 1, %v4082
    %v4084 = vrot.slane %v4003, %v4083
    %v4085 = vadd.f32 %v4079, %v4084
    %v4086 = vadd.f32 %v4080, %v4084
    %v4087 = vld [vmem:[#allocation2 + $0x5a0] sm:$0xff]
    %v4088 = vld [vmem:[#allocation2 + $0x5a8] sm:$0xff]
    %v4089 = vld [vmem:[#allocation2 + $0x5b0] sm:$0xff]
    %v4090 = vld [vmem:[#allocation2 + $0x5b8] sm:$0xff]
    %v4091 = vlaneseq
    %v4092 = vshrl.u32 %v4091, 7
    %v4093 = vsub.s32 0, %v4092
    %v4094 = vrot.slane %v4036, %v4093
    %v4096 = vsel %vm592, %v4073, 0
    %v4099 = vsel %vm592, %v4074, 0
    %4101 = vmatprep.subr.mxu0 0.0
    %4102 = vmatpush1.msra.mxu0 0.0
    %4103 = vmatprep.subr.mxu0 0.0
    %4104 = vmatpush1.msra.mxu0 0.0
    %4105 = vmatprep.subr.mxu0 0.0
    %4106 = vmatpush1.msra.mxu0 0.0
    %4107 = vmatprep.subr.mxu0 0.0
    %4108 = vmatpush1.msra.mxu0 0.0
    %4109 = vmatprep.subr.mxu0 0.0
    %4110 = vmatpush1.msra.mxu0 0.0
    %4111 = vmatprep.subr.mxu0 0.0
    %4112 = vmatpush1.msra.mxu0 0.0
    %4113 = vmatprep.subr.mxu0 0.0
    %4114 = vmatpush1.msra.mxu0 0.0
    %4115 = vmatprep.subr.mxu0 0.0
    %4116 = vmatpush1.msra.mxu0 0.0
    %4117 = vmatprep.subr.mxu0 0.0
    %4118 = vmatpush1.msra.mxu0 0.0
    %4119 = vmatprep.subr.mxu0 0.0
    %4120 = vmatpush1.msra.mxu0 0.0
    %4121 = vmatprep.subr.mxu0 0.0
    %4122 = vmatpush1.msra.mxu0 0.0
    %4123 = vmatprep.subr.mxu0 0.0
    %4124 = vmatpush1.msra.mxu0 0.0
    %4125 = vmatprep.subr.mxu0 0.0
    %4126 = vmatpush1.msra.mxu0 %v4090
    %4127 = vmatprep.subr.mxu0 0.0
    %4128 = vmatpush1.msra.mxu0 %v4089
    %4129 = vmatprep.subr.mxu0 0.0
    %4130 = vmatpush1.msra.mxu0 %v4088
    %4131 = vmatprep.subr.mxu0 0.0
    %4132 = vmatpush1.msra.mxu0 %v4087
    %4133 = vmatprep.subr.mxu0 0.0
    %4134 = vmatpush2.msra.mxu0 0.0
    %4135 = vmatprep.subr.mxu0 0.0
    %4136 = vmatpush2.msra.mxu0 0.0
    %4137 = vmatprep.subr.mxu0 0.0
    %4138 = vmatpush2.msra.mxu0 0.0
    %4139 = vmatprep.subr.mxu0 0.0
    %4140 = vmatpush2.msra.mxu0 0.0
    %4141 = vmatprep.subr.mxu0 0.0
    %4142 = vmatpush2.msra.mxu0 0.0
    %4143 = vmatprep.subr.mxu0 0.0
    %4144 = vmatpush2.msra.mxu0 0.0
    %4145 = vmatprep.subr.mxu0 0.0
    %4146 = vmatpush2.msra.mxu0 0.0
    %4147 = vmatprep.subr.mxu0 0.0
    %4148 = vmatpush2.msra.mxu0 0.0
    %4149 = vmatprep.subr.mxu0 0.0
    %4150 = vmatpush2.msra.mxu0 0.0
    %4151 = vmatprep.subr.mxu0 0.0
    %4152 = vmatpush2.msra.mxu0 0.0
    %4153 = vmatprep.subr.mxu0 0.0
    %4154 = vmatpush2.msra.mxu0 0.0
    %4155 = vmatprep.subr.mxu0 0.0
    %4156 = vmatpush2.msra.mxu0 0.0
    %4157 = vmatprep.subr.mxu0 0.0
    %4158 = vmatpush2.msra.mxu0 0.0
    %4159 = vmatprep.subr.mxu0 0.0
    %4160 = vmatpush2.msra.mxu0 0.0
    %4161 = vmatprep.subr.mxu0 0.0
    %4162 = vmatpush2.msra.mxu0 0.0
    %4163 = vmatprep.subr.mxu0 0.0
    %4164 = vmatpush2.msra.mxu0 0.0
    %4165 = vmatprep.mubr.f32.mxu0 0.0
    %4166 = vmatmul.mubr.f32.gmra.mxu0 %v4096
    %v4167 = vpop.f32.mrf.mxu0
    %v4168 = vadd.f32 %v4094, %v4167
    %v4169 = vpop.f32.mrf.mxu0
    %4170 = vmatprep.mubr.f32.mxu0 0.0
    %4171 = vmatmul.mubr.f32.gmra.mxu0 %v4099
    %v4172 = vpop.f32.mrf.mxu0
    %v4173 = vadd.f32 %v4094, %v4172
    %v4174 = vpop.f32.mrf.mxu0
    %4175 = vdwg.mxu0
    %v4176 = vlaneseq
    %v4177 = vshrl.u32 %v4176, 7
    %v4178 = vsub.s32 1, %v4177
    %v4179 = vrot.slane %v4036, %v4178
    %4180 = vmatprep.subr.mxu0 0.0
    %4181 = vmatpush1.msra.mxu0 %v4019
    %4182 = vmatprep.subr.mxu0 0.0
    %4183 = vmatpush1.msra.mxu0 %v4018
    %4184 = vmatprep.subr.mxu0 0.0
    %4185 = vmatpush1.msra.mxu0 %v4017
    %4186 = vmatprep.subr.mxu0 0.0
    %4187 = vmatpush1.msra.mxu0 %v4016
    %4188 = vmatprep.subr.mxu0 0.0
    %4189 = vmatpush1.msra.mxu0 %v4015
    %4190 = vmatprep.subr.mxu0 0.0
    %4191 = vmatpush1.msra.mxu0 %v4014
    %4192 = vmatprep.subr.mxu0 0.0
    %4193 = vmatpush1.msra.mxu0 %v4013
    %4194 = vmatprep.subr.mxu0 0.0
    %4195 = vmatpush1.msra.mxu0 %v4012
    %4196 = vmatprep.subr.mxu0 0.0
    %4197 = vmatpush1.msra.mxu0 %v4011
    %4198 = vmatprep.subr.mxu0 0.0
    %4199 = vmatpush1.msra.mxu0 %v4010
    %4200 = vmatprep.subr.mxu0 0.0
    %4201 = vmatpush1.msra.mxu0 %v4009
    %4202 = vmatprep.subr.mxu0 0.0
    %4203 = vmatpush1.msra.mxu0 %v4008
    %4204 = vmatprep.subr.mxu0 0.0
    %4205 = vmatpush1.msra.mxu0 %v4007
    %4206 = vmatprep.subr.mxu0 0.0
    %4207 = vmatpush1.msra.mxu0 %v4006
    %4208 = vmatprep.subr.mxu0 0.0
    %4209 = vmatpush1.msra.mxu0 %v4005
    %4210 = vmatprep.subr.mxu0 0.0
    %4211 = vmatpush1.msra.mxu0 %v4004
    %4212 = vmatprep.subr.mxu0 0.0
    %4213 = vmatpush2.msra.mxu0 0.0
    %4214 = vmatprep.subr.mxu0 0.0
    %4215 = vmatpush2.msra.mxu0 0.0
    %4216 = vmatprep.subr.mxu0 0.0
    %4217 = vmatpush2.msra.mxu0 0.0
    %4218 = vmatprep.subr.mxu0 0.0
    %4219 = vmatpush2.msra.mxu0 0.0
    %4220 = vmatprep.subr.mxu0 0.0
    %4221 = vmatpush2.msra.mxu0 0.0
    %4222 = vmatprep.subr.mxu0 0.0
    %4223 = vmatpush2.msra.mxu0 0.0
    %4224 = vmatprep.subr.mxu0 0.0
    %4225 = vmatpush2.msra.mxu0 0.0
    %4226 = vmatprep.subr.mxu0 0.0
    %4227 = vmatpush2.msra.mxu0 0.0
    %4228 = vmatprep.subr.mxu0 0.0
    %4229 = vmatpush2.msra.mxu0 0.0
    %4230 = vmatprep.subr.mxu0 0.0
    %4231 = vmatpush2.msra.mxu0 0.0
    %4232 = vmatprep.subr.mxu0 0.0
    %4233 = vmatpush2.msra.mxu0 0.0
    %4234 = vmatprep.subr.mxu0 0.0
    %4235 = vmatpush2.msra.mxu0 0.0
    %4236 = vmatprep.subr.mxu0 0.0
    %4237 = vmatpush2.msra.mxu0 0.0
    %4238 = vmatprep.subr.mxu0 0.0
    %4239 = vmatpush2.msra.mxu0 0.0
    %4240 = vmatprep.subr.mxu0 0.0
    %4241 = vmatpush2.msra.mxu0 0.0
    %4242 = vmatprep.subr.mxu0 0.0
    %4243 = vmatpush2.msra.mxu0 0.0
    %4244 = vmatprep.mubr.f32.mxu0 0.0
    %4245 = vmatmul.mubr.f32.gmra.mxu0 %v4085
    %v4246 = vpop.f32.mrf.mxu0
    %v4247 = vadd.f32 %v4179, %v4246
    %v4248 = vpop.f32.mrf.mxu0
    %4249 = vmatprep.mubr.f32.mxu0 0.0
    %4250 = vmatmul.mubr.f32.gmra.mxu0 %v4086
    %v4251 = vpop.f32.mrf.mxu0
    %v4252 = vadd.f32 %v4179, %v4251
    %v4253 = vpop.f32.mrf.mxu0
    %4254 = vdwg.mxu0
    %v4255 = vlaneseq
    %v4256 = vshrl.u32 %v4255, 7
    %v4257 = vsub.s32 2, %v4256
    %v4258 = vrot.slane %v4036, %v4257
    %4259 = vmatprep.subr.mxu0 0.0
    %4260 = vmatpush1.msra.mxu0 %v4035
    %4261 = vmatprep.subr.mxu0 0.0
    %4262 = vmatpush1.msra.mxu0 %v4034
    %4263 = vmatprep.subr.mxu0 0.0
    %4264 = vmatpush1.msra.mxu0 %v4033
    %4265 = vmatprep.subr.mxu0 0.0
    %4266 = vmatpush1.msra.mxu0 %v4032
    %4267 = vmatprep.subr.mxu0 0.0
    %4268 = vmatpush1.msra.mxu0 %v4031
    %4269 = vmatprep.subr.mxu0 0.0
    %4270 = vmatpush1.msra.mxu0 %v4030
    %4271 = vmatprep.subr.mxu0 0.0
    %4272 = vmatpush1.msra.mxu0 %v4029
    %4273 = vmatprep.subr.mxu0 0.0
    %4274 = vmatpush1.msra.mxu0 %v4028
    %4275 = vmatprep.subr.mxu0 0.0
    %4276 = vmatpush1.msra.mxu0 %v4027
    %4277 = vmatprep.subr.mxu0 0.0
    %4278 = vmatpush1.msra.mxu0 %v4026
    %4279 = vmatprep.subr.mxu0 0.0
    %4280 = vmatpush1.msra.mxu0 %v4025
    %4281 = vmatprep.subr.mxu0 0.0
    %4282 = vmatpush1.msra.mxu0 %v4024
    %4283 = vmatprep.subr.mxu0 0.0
    %4284 = vmatpush1.msra.mxu0 %v4023
    %4285 = vmatprep.subr.mxu0 0.0
    %4286 = vmatpush1.msra.mxu0 %v4022
    %4287 = vmatprep.subr.mxu0 0.0
    %4288 = vmatpush1.msra.mxu0 %v4021
    %4289 = vmatprep.subr.mxu0 0.0
    %4290 = vmatpush1.msra.mxu0 %v4020
    %4291 = vmatprep.subr.mxu0 0.0
    %4292 = vmatpush2.msra.mxu0 0.0
    %4293 = vmatprep.subr.mxu0 0.0
    %4294 = vmatpush2.msra.mxu0 0.0
    %4295 = vmatprep.subr.mxu0 0.0
    %4296 = vmatpush2.msra.mxu0 0.0
    %4297 = vmatprep.subr.mxu0 0.0
    %4298 = vmatpush2.msra.mxu0 0.0
    %4299 = vmatprep.subr.mxu0 0.0
    %4300 = vmatpush2.msra.mxu0 0.0
    %4301 = vmatprep.subr.mxu0 0.0
    %4302 = vmatpush2.msra.mxu0 0.0
    %4303 = vmatprep.subr.mxu0 0.0
    %4304 = vmatpush2.msra.mxu0 0.0
    %4305 = vmatprep.subr.mxu0 0.0
    %4306 = vmatpush2.msra.mxu0 0.0
    %4307 = vmatprep.subr.mxu0 0.0
    %4308 = vmatpush2.msra.mxu0 0.0
    %4309 = vmatprep.subr.mxu0 0.0
    %4310 = vmatpush2.msra.mxu0 0.0
    %4311 = vmatprep.subr.mxu0 0.0
    %4312 = vmatpush2.msra.mxu0 0.0
    %4313 = vmatprep.subr.mxu0 0.0
    %4314 = vmatpush2.msra.mxu0 0.0
    %4315 = vmatprep.subr.mxu0 0.0
    %4316 = vmatpush2.msra.mxu0 0.0
    %4317 = vmatprep.subr.mxu0 0.0
    %4318 = vmatpush2.msra.mxu0 0.0
    %4319 = vmatprep.subr.mxu0 0.0
    %4320 = vmatpush2.msra.mxu0 0.0
    %4321 = vmatprep.subr.mxu0 0.0
    %4322 = vmatpush2.msra.mxu0 0.0
    %4323 = vmatprep.mubr.f32.mxu0 0.0
    %4324 = vmatmul.mubr.f32.gmra.mxu0 %v4085
    %v4325 = vpop.f32.mrf.mxu0
    %v4326 = vadd.f32 %v4258, %v4325
    %v4327 = vpop.f32.mrf.mxu0
    %4328 = vmatprep.mubr.f32.mxu0 0.0
    %4329 = vmatmul.mubr.f32.gmra.mxu0 %v4086
    %v4330 = vpop.f32.mrf.mxu0
    %v4331 = vadd.f32 %v4258, %v4330
    %v4332 = vpop.f32.mrf.mxu0
    %4333 = vdwg.mxu0
    %v4334 = vsel %vm592, %v4168, -inf
    %4335 = vmax.xlane.f32.xlu0 %v4334
    %v4336 = vpop.xlane.xlu0 %4335
    %v4337 = vsel %vm592, %v4173, -inf
    %4338 = vmax.xlane.f32.xlu0 %v4337
    %v4339 = vpop.xlane.xlu0 %4338
    %v4340 = vsub.f32 %v4168, %v4336
    %v4341 = vsub.f32 %v4173, %v4339
    %v4342 = vmul.f32 %v4340, 1.442695
    %v4343 = vpow.pop %v4342
    %v4344 = vmul.f32 %v4341, 1.442695
    %v4345 = vpow.pop %v4344
    %v4347 = vsel %vm592, %v4343, 0
    %v4350 = vsel %vm592, %v4345, 0
    %4352 = vmatprep.subr.mxu0 0.0
    %4353 = vmatpush1.msra.mxu0 0.0
    %4354 = vmatprep.subr.mxu0 0.0
    %4355 = vmatpush1.msra.mxu0 0.0
    %4356 = vmatprep.subr.mxu0 0.0
    %4357 = vmatpush1.msra.mxu0 0.0
    %4358 = vmatprep.subr.mxu0 0.0
    %4359 = vmatpush1.msra.mxu0 0.0
    %4360 = vmatprep.subr.mxu0 0.0
    %4361 = vmatpush1.msra.mxu0 0.0
    %4362 = vmatprep.subr.mxu0 0.0
    %4363 = vmatpush1.msra.mxu0 0.0
    %4364 = vmatprep.subr.mxu0 0.0
    %4365 = vmatpush1.msra.mxu0 0.0
    %4366 = vmatprep.subr.mxu0 0.0
    %4367 = vmatpush1.msra.mxu0 0.0
    %4368 = vmatprep.subr.mxu0 0.0
    %4369 = vmatpush1.msra.mxu0 0.0
    %4370 = vmatprep.subr.mxu0 0.0
    %4371 = vmatpush1.msra.mxu0 0.0
    %4372 = vmatprep.subr.mxu0 0.0
    %4373 = vmatpush1.msra.mxu0 0.0
    %4374 = vmatprep.subr.mxu0 0.0
    %4375 = vmatpush1.msra.mxu0 0.0
    %4376 = vmatprep.subr.mxu0 0.0
    %4377 = vmatpush1.msra.mxu0 %v42
    %4378 = vmatprep.subr.mxu0 0.0
    %4379 = vmatpush1.msra.mxu0 %v41
    %4380 = vmatprep.subr.mxu0 0.0
    %4381 = vmatpush1.msra.mxu0 %v40
    %4382 = vmatprep.subr.mxu0 0.0
    %4383 = vmatpush1.msra.mxu0 %v39
    %4384 = vmatprep.subr.mxu0 0.0
    %4385 = vmatpush2.msra.mxu0 0.0
    %4386 = vmatprep.subr.mxu0 0.0
    %4387 = vmatpush2.msra.mxu0 0.0
    %4388 = vmatprep.subr.mxu0 0.0
    %4389 = vmatpush2.msra.mxu0 0.0
    %4390 = vmatprep.subr.mxu0 0.0
    %4391 = vmatpush2.msra.mxu0 0.0
    %4392 = vmatprep.subr.mxu0 0.0
    %4393 = vmatpush2.msra.mxu0 0.0
    %4394 = vmatprep.subr.mxu0 0.0
    %4395 = vmatpush2.msra.mxu0 0.0
    %4396 = vmatprep.subr.mxu0 0.0
    %4397 = vmatpush2.msra.mxu0 0.0
    %4398 = vmatprep.subr.mxu0 0.0
    %4399 = vmatpush2.msra.mxu0 0.0
    %4400 = vmatprep.subr.mxu0 0.0
    %4401 = vmatpush2.msra.mxu0 0.0
    %4402 = vmatprep.subr.mxu0 0.0
    %4403 = vmatpush2.msra.mxu0 0.0
    %4404 = vmatprep.subr.mxu0 0.0
    %4405 = vmatpush2.msra.mxu0 0.0
    %4406 = vmatprep.subr.mxu0 0.0
    %4407 = vmatpush2.msra.mxu0 0.0
    %4408 = vmatprep.subr.mxu0 0.0
    %4409 = vmatpush2.msra.mxu0 0.0
    %4410 = vmatprep.subr.mxu0 0.0
    %4411 = vmatpush2.msra.mxu0 0.0
    %4412 = vmatprep.subr.mxu0 0.0
    %4413 = vmatpush2.msra.mxu0 0.0
    %4414 = vmatprep.subr.mxu0 0.0
    %4415 = vmatpush2.msra.mxu0 0.0
    %4416 = vmatprep.mubr.f32.mxu0 0.0
    %4417 = vmatmul.mubr.f32.gmra.mxu0 %v4347
    %v4418 = vpop.f32.mrf.mxu0
    %v4419 = vadd.f32 0.0, %v4418
    %v4420 = vpop.f32.mrf.mxu0
    %4421 = vmatprep.mubr.f32.mxu0 0.0
    %4422 = vmatmul.mubr.f32.gmra.mxu0 %v4350
    %v4423 = vpop.f32.mrf.mxu0
    %v4424 = vadd.f32 0.0, %v4423
    %v4425 = vpop.f32.mrf.mxu0
    %4426 = vdwg.mxu0
    %v4427 = vrcp.pop %v4419
    %v4428 = vrcp.pop %v4424
    %v4429 = vmul.f32 %v4343, %v4427
    %v4430 = vmul.f32 %v4345, %v4428
    %v4431 = vsel %vm592, %v4247, -inf
    %v4432 = vsel %vm592, %v4252, -inf
    %v4433 = vmax.f32 %v4431, %v4432
    %v4434 = vrot.slane %v4433, 4
    %v4435 = vmax.f32 %v4433, %v4434
    %v4436 = vrot.slane %v4435, 2
    %v4437 = vmax.f32 %v4435, %v4436
    %v4438 = vrot.slane %v4437, 1
    %v4439 = vmax.f32 %v4437, %v4438
    %v4440 = vsub.f32 %v4247, %v4439
    %v4441 = vsub.f32 %v4252, %v4439
    %v4442 = vmul.f32 %v4440, 1.442695
    %v4443 = vpow.pop %v4442
    %v4444 = vmul.f32 %v4441, 1.442695
    %v4445 = vpow.pop %v4444
    %v4446 = vsel %vm592, %v4443, 0.0
    %v4447 = vrot.slane %v4446, 4
    %v4448 = vadd.f32 %v4446, %v4447
    %v4449 = vrot.slane %v4448, 2
    %v4450 = vadd.f32 %v4448, %v4449
    %v4451 = vrot.slane %v4450, 1
    %v4452 = vadd.f32 %v4450, %v4451
    %v4453 = vrcp.pop %v4452
    %v4454 = vmul.f32 %v4443, %v4453
    %4455 = vxpose.xlu0.b32.start [1/16] %v4454, 128
    %4456 = vxpose.xlu0.b32.cont [2/16] 0.0, 128
    %4457 = vxpose.xlu0.b32.cont [3/16] 0.0, 128
    %4458 = vxpose.xlu0.b32.cont [4/16] 0.0, 128
    %4459 = vxpose.xlu0.b32.cont [5/16] 0.0, 128
    %4460 = vxpose.xlu0.b32.cont [6/16] 0.0, 128
    %4461 = vxpose.xlu0.b32.cont [7/16] 0.0, 128
    %4462 = vxpose.xlu0.b32.cont [8/16] 0.0, 128
    %4463 = vxpose.xlu0.b32.cont [9/16] 0.0, 128
    %4464 = vxpose.xlu0.b32.cont [10/16] 0.0, 128
    %4465 = vxpose.xlu0.b32.cont [11/16] 0.0, 128
    %4466 = vxpose.xlu0.b32.cont [12/16] 0.0, 128
    %4467 = vxpose.xlu0.b32.cont [13/16] 0.0, 128
    %4468 = vxpose.xlu0.b32.cont [14/16] 0.0, 128
    %4469 = vxpose.xlu0.b32.cont [15/16] 0.0, 128
    %4470 = vxpose.xlu0.b32.end [16/16] 0.0, 128
    %v4471 = vpop.trf.xlu0
    %v4472 = vpop.trf.xlu0
    %v4473 = vpop.trf.xlu0
    %v4474 = vpop.trf.xlu0
    %v4475 = vpop.trf.xlu0
    %v4476 = vpop.trf.xlu0
    %v4477 = vpop.trf.xlu0
    %v4478 = vpop.trf.xlu0
    %v4479 = vpop.trf.xlu0
    %v4480 = vpop.trf.xlu0
    %v4481 = vpop.trf.xlu0
    %v4482 = vpop.trf.xlu0
    %v4483 = vpop.trf.xlu0
    %v4484 = vpop.trf.xlu0
    %v4485 = vpop.trf.xlu0
    %v4486 = vpop.trf.xlu0
    %v4488 = vsel %vm1052, %v4471, 0
    %v4491 = vsel %vm1052, %v4472, 0
    %v4494 = vsel %vm1052, %v4473, 0
    %v4497 = vsel %vm1052, %v4474, 0
    %4499 = vmatprep.subr.mxu0 0.0
    %4500 = vmatpush1.msra.mxu0 0.0
    %4501 = vmatprep.subr.mxu0 0.0
    %4502 = vmatpush1.msra.mxu0 0.0
    %4503 = vmatprep.subr.mxu0 0.0
    %4504 = vmatpush1.msra.mxu0 0.0
    %4505 = vmatprep.subr.mxu0 0.0
    %4506 = vmatpush1.msra.mxu0 0.0
    %4507 = vmatprep.subr.mxu0 0.0
    %4508 = vmatpush1.msra.mxu0 0.0
    %4509 = vmatprep.subr.mxu0 0.0
    %4510 = vmatpush1.msra.mxu0 0.0
    %4511 = vmatprep.subr.mxu0 0.0
    %4512 = vmatpush1.msra.mxu0 0.0
    %4513 = vmatprep.subr.mxu0 0.0
    %4514 = vmatpush1.msra.mxu0 0.0
    %4515 = vmatprep.subr.mxu0 0.0
    %4516 = vmatpush1.msra.mxu0 0.0
    %4517 = vmatprep.subr.mxu0 0.0
    %4518 = vmatpush1.msra.mxu0 0.0
    %4519 = vmatprep.subr.mxu0 0.0
    %4520 = vmatpush1.msra.mxu0 0.0
    %4521 = vmatprep.subr.mxu0 0.0
    %4522 = vmatpush1.msra.mxu0 0.0
    %4523 = vmatprep.subr.mxu0 0.0
    %4524 = vmatpush1.msra.mxu0 0.0
    %4525 = vmatprep.subr.mxu0 0.0
    %4526 = vmatpush1.msra.mxu0 0.0
    %4527 = vmatprep.subr.mxu0 0.0
    %4528 = vmatpush1.msra.mxu0 0.0
    %4529 = vmatprep.subr.mxu0 0.0
    %4530 = vmatpush1.msra.mxu0 %v4326
    %4531 = vmatprep.subr.mxu0 0.0
    %4532 = vmatpush2.msra.mxu0 0.0
    %4533 = vmatprep.subr.mxu0 0.0
    %4534 = vmatpush2.msra.mxu0 0.0
    %4535 = vmatprep.subr.mxu0 0.0
    %4536 = vmatpush2.msra.mxu0 0.0
    %4537 = vmatprep.subr.mxu0 0.0
    %4538 = vmatpush2.msra.mxu0 0.0
    %4539 = vmatprep.subr.mxu0 0.0
    %4540 = vmatpush2.msra.mxu0 0.0
    %4541 = vmatprep.subr.mxu0 0.0
    %4542 = vmatpush2.msra.mxu0 0.0
    %4543 = vmatprep.subr.mxu0 0.0
    %4544 = vmatpush2.msra.mxu0 0.0
    %4545 = vmatprep.subr.mxu0 0.0
    %4546 = vmatpush2.msra.mxu0 0.0
    %4547 = vmatprep.subr.mxu0 0.0
    %4548 = vmatpush2.msra.mxu0 0.0
    %4549 = vmatprep.subr.mxu0 0.0
    %4550 = vmatpush2.msra.mxu0 0.0
    %4551 = vmatprep.subr.mxu0 0.0
    %4552 = vmatpush2.msra.mxu0 0.0
    %4553 = vmatprep.subr.mxu0 0.0
    %4554 = vmatpush2.msra.mxu0 0.0
    %4555 = vmatprep.subr.mxu0 0.0
    %4556 = vmatpush2.msra.mxu0 0.0
    %4557 = vmatprep.subr.mxu0 0.0
    %4558 = vmatpush2.msra.mxu0 0.0
    %4559 = vmatprep.subr.mxu0 0.0
    %4560 = vmatpush2.msra.mxu0 0.0
    %4561 = vmatprep.subr.mxu0 0.0
    %4562 = vmatpush2.msra.mxu0 0.0
    %4563 = vmatprep.mubr.f32.mxu0 0.0
    %4564 = vmatmul.mubr.f32.gmra.mxu0 %v4488
    %v4565 = vpop.f32.mrf.mxu0
    %v4566 = vadd.f32 0.0, %v4565
    %v4567 = vpop.f32.mrf.mxu0
    %4568 = vmatprep.mubr.f32.mxu0 0.0
    %4569 = vmatmul.mubr.f32.gmra.mxu0 %v4491
    %v4570 = vpop.f32.mrf.mxu0
    %v4571 = vadd.f32 0.0, %v4570
    %v4572 = vpop.f32.mrf.mxu0
    %4573 = vmatprep.mubr.f32.mxu0 0.0
    %4574 = vmatmul.mubr.f32.gmra.mxu0 %v4494
    %v4575 = vpop.f32.mrf.mxu0
    %v4576 = vadd.f32 0.0, %v4575
    %v4577 = vpop.f32.mrf.mxu0
    %4578 = vmatprep.mubr.f32.mxu0 0.0
    %4579 = vmatmul.mubr.f32.gmra.mxu0 %v4497
    %v4580 = vpop.f32.mrf.mxu0
    %v4581 = vadd.f32 0.0, %v4580
    %v4582 = vpop.f32.mrf.mxu0
    %4583 = vdwg.mxu0
    %v4584 = vmul.f32 %v4566, %v39
    %v4585 = vmul.f32 %v4571, %v40
    %v4586 = vmul.f32 %v4576, %v41
    %v4587 = vmul.f32 %v4581, %v42
    %v4589 = vsel %vm592, %v4429, 0
    %4591 = vmatprep.subr.mxu0 0.0
    %4592 = vmatpush1.msra.mxu0 0.0
    %4593 = vmatprep.subr.mxu0 0.0
    %4594 = vmatpush1.msra.mxu0 0.0
    %4595 = vmatprep.subr.mxu0 0.0
    %4596 = vmatpush1.msra.mxu0 0.0
    %4597 = vmatprep.subr.mxu0 0.0
    %4598 = vmatpush1.msra.mxu0 0.0
    %4599 = vmatprep.subr.mxu0 0.0
    %4600 = vmatpush1.msra.mxu0 0.0
    %4601 = vmatprep.subr.mxu0 0.0
    %4602 = vmatpush1.msra.mxu0 0.0
    %4603 = vmatprep.subr.mxu0 0.0
    %4604 = vmatpush1.msra.mxu0 0.0
    %4605 = vmatprep.subr.mxu0 0.0
    %4606 = vmatpush1.msra.mxu0 0.0
    %4607 = vmatprep.subr.mxu0 0.0
    %4608 = vmatpush1.msra.mxu0 0.0
    %4609 = vmatprep.subr.mxu0 0.0
    %4610 = vmatpush1.msra.mxu0 0.0
    %4611 = vmatprep.subr.mxu0 0.0
    %4612 = vmatpush1.msra.mxu0 0.0
    %4613 = vmatprep.subr.mxu0 0.0
    %4614 = vmatpush1.msra.mxu0 0.0
    %4615 = vmatprep.subr.mxu0 0.0
    %4616 = vmatpush1.msra.mxu0 %v4587
    %4617 = vmatprep.subr.mxu0 0.0
    %4618 = vmatpush1.msra.mxu0 %v4586
    %4619 = vmatprep.subr.mxu0 0.0
    %4620 = vmatpush1.msra.mxu0 %v4585
    %4621 = vmatprep.subr.mxu0 0.0
    %4622 = vmatpush1.msra.mxu0 %v4584
    %4623 = vmatprep.subr.mxu0 0.0
    %4624 = vmatpush2.msra.mxu0 0.0
    %4625 = vmatprep.subr.mxu0 0.0
    %4626 = vmatpush2.msra.mxu0 0.0
    %4627 = vmatprep.subr.mxu0 0.0
    %4628 = vmatpush2.msra.mxu0 0.0
    %4629 = vmatprep.subr.mxu0 0.0
    %4630 = vmatpush2.msra.mxu0 0.0
    %4631 = vmatprep.subr.mxu0 0.0
    %4632 = vmatpush2.msra.mxu0 0.0
    %4633 = vmatprep.subr.mxu0 0.0
    %4634 = vmatpush2.msra.mxu0 0.0
    %4635 = vmatprep.subr.mxu0 0.0
    %4636 = vmatpush2.msra.mxu0 0.0
    %4637 = vmatprep.subr.mxu0 0.0
    %4638 = vmatpush2.msra.mxu0 0.0
    %4639 = vmatprep.subr.mxu0 0.0
    %4640 = vmatpush2.msra.mxu0 0.0
    %4641 = vmatprep.subr.mxu0 0.0
    %4642 = vmatpush2.msra.mxu0 0.0
    %4643 = vmatprep.subr.mxu0 0.0
    %4644 = vmatpush2.msra.mxu0 0.0
    %4645 = vmatprep.subr.mxu0 0.0
    %4646 = vmatpush2.msra.mxu0 0.0
    %4647 = vmatprep.subr.mxu0 0.0
    %4648 = vmatpush2.msra.mxu0 0.0
    %4649 = vmatprep.subr.mxu0 0.0
    %4650 = vmatpush2.msra.mxu0 0.0
    %4651 = vmatprep.subr.mxu0 0.0
    %4652 = vmatpush2.msra.mxu0 0.0
    %4653 = vmatprep.subr.mxu0 0.0
    %4654 = vmatpush2.msra.mxu0 0.0
    %4655 = vmatprep.mubr.f32.mxu0 0.0
    %4656 = vmatmul.mubr.f32.gmra.mxu0 %v4589
    %v4657 = vpop.f32.mrf.mxu0
    %v4658 = vadd.f32 0.0, %v4657
    %v4659 = vpop.f32.mrf.mxu0
    %4660 = vdwg.mxu0
    %v4661 = vsel %vm592, %v4445, 0.0
    %v4662 = vrot.slane %v4661, 4
    %v4663 = vadd.f32 %v4661, %v4662
    %v4664 = vrot.slane %v4663, 2
    %v4665 = vadd.f32 %v4663, %v4664
    %v4666 = vrot.slane %v4665, 1
    %v4667 = vadd.f32 %v4665, %v4666
    %v4668 = vrcp.pop %v4667
    %v4669 = vmul.f32 %v4445, %v4668
    %4670 = vxpose.xlu0.b32.start [1/16] %v4669, 128
    %4671 = vxpose.xlu0.b32.cont [2/16] 0.0, 128
    %4672 = vxpose.xlu0.b32.cont [3/16] 0.0, 128
    %4673 = vxpose.xlu0.b32.cont [4/16] 0.0, 128
    %4674 = vxpose.xlu0.b32.cont [5/16] 0.0, 128
    %4675 = vxpose.xlu0.b32.cont [6/16] 0.0, 128
    %4676 = vxpose.xlu0.b32.cont [7/16] 0.0, 128
    %4677 = vxpose.xlu0.b32.cont [8/16] 0.0, 128
    %4678 = vxpose.xlu0.b32.cont [9/16] 0.0, 128
    %4679 = vxpose.xlu0.b32.cont [10/16] 0.0, 128
    %4680 = vxpose.xlu0.b32.cont [11/16] 0.0, 128
    %4681 = vxpose.xlu0.b32.cont [12/16] 0.0, 128
    %4682 = vxpose.xlu0.b32.cont [13/16] 0.0, 128
    %4683 = vxpose.xlu0.b32.cont [14/16] 0.0, 128
    %4684 = vxpose.xlu0.b32.cont [15/16] 0.0, 128
    %4685 = vxpose.xlu0.b32.end [16/16] 0.0, 128
    %v4686 = vpop.trf.xlu0
    %v4687 = vpop.trf.xlu0
    %v4688 = vpop.trf.xlu0
    %v4689 = vpop.trf.xlu0
    %v4690 = vpop.trf.xlu0
    %v4691 = vpop.trf.xlu0
    %v4692 = vpop.trf.xlu0
    %v4693 = vpop.trf.xlu0
    %v4694 = vpop.trf.xlu0
    %v4695 = vpop.trf.xlu0
    %v4696 = vpop.trf.xlu0
    %v4697 = vpop.trf.xlu0
    %v4698 = vpop.trf.xlu0
    %v4699 = vpop.trf.xlu0
    %v4700 = vpop.trf.xlu0
    %v4701 = vpop.trf.xlu0
    %v4703 = vsel %vm1052, %v4686, 0
    %v4706 = vsel %vm1052, %v4687, 0
    %v4709 = vsel %vm1052, %v4688, 0
    %v4712 = vsel %vm1052, %v4689, 0
    %4714 = vmatprep.subr.mxu0 0.0
    %4715 = vmatpush1.msra.mxu0 0.0
    %4716 = vmatprep.subr.mxu0 0.0
    %4717 = vmatpush1.msra.mxu0 0.0
    %4718 = vmatprep.subr.mxu0 0.0
    %4719 = vmatpush1.msra.mxu0 0.0
    %4720 = vmatprep.subr.mxu0 0.0
    %4721 = vmatpush1.msra.mxu0 0.0
    %4722 = vmatprep.subr.mxu0 0.0
    %4723 = vmatpush1.msra.mxu0 0.0
    %4724 = vmatprep.subr.mxu0 0.0
    %4725 = vmatpush1.msra.mxu0 0.0
    %4726 = vmatprep.subr.mxu0 0.0
    %4727 = vmatpush1.msra.mxu0 0.0
    %4728 = vmatprep.subr.mxu0 0.0
    %4729 = vmatpush1.msra.mxu0 0.0
    %4730 = vmatprep.subr.mxu0 0.0
    %4731 = vmatpush1.msra.mxu0 0.0
    %4732 = vmatprep.subr.mxu0 0.0
    %4733 = vmatpush1.msra.mxu0 0.0
    %4734 = vmatprep.subr.mxu0 0.0
    %4735 = vmatpush1.msra.mxu0 0.0
    %4736 = vmatprep.subr.mxu0 0.0
    %4737 = vmatpush1.msra.mxu0 0.0
    %4738 = vmatprep.subr.mxu0 0.0
    %4739 = vmatpush1.msra.mxu0 0.0
    %4740 = vmatprep.subr.mxu0 0.0
    %4741 = vmatpush1.msra.mxu0 0.0
    %4742 = vmatprep.subr.mxu0 0.0
    %4743 = vmatpush1.msra.mxu0 0.0
    %4744 = vmatprep.subr.mxu0 0.0
    %4745 = vmatpush1.msra.mxu0 %v4331
    %4746 = vmatprep.subr.mxu0 0.0
    %4747 = vmatpush2.msra.mxu0 0.0
    %4748 = vmatprep.subr.mxu0 0.0
    %4749 = vmatpush2.msra.mxu0 0.0
    %4750 = vmatprep.subr.mxu0 0.0
    %4751 = vmatpush2.msra.mxu0 0.0
    %4752 = vmatprep.subr.mxu0 0.0
    %4753 = vmatpush2.msra.mxu0 0.0
    %4754 = vmatprep.subr.mxu0 0.0
    %4755 = vmatpush2.msra.mxu0 0.0
    %4756 = vmatprep.subr.mxu0 0.0
    %4757 = vmatpush2.msra.mxu0 0.0
    %4758 = vmatprep.subr.mxu0 0.0
    %4759 = vmatpush2.msra.mxu0 0.0
    %4760 = vmatprep.subr.mxu0 0.0
    %4761 = vmatpush2.msra.mxu0 0.0
    %4762 = vmatprep.subr.mxu0 0.0
    %4763 = vmatpush2.msra.mxu0 0.0
    %4764 = vmatprep.subr.mxu0 0.0
    %4765 = vmatpush2.msra.mxu0 0.0
    %4766 = vmatprep.subr.mxu0 0.0
    %4767 = vmatpush2.msra.mxu0 0.0
    %4768 = vmatprep.subr.mxu0 0.0
    %4769 = vmatpush2.msra.mxu0 0.0
    %4770 = vmatprep.subr.mxu0 0.0
    %4771 = vmatpush2.msra.mxu0 0.0
    %4772 = vmatprep.subr.mxu0 0.0
    %4773 = vmatpush2.msra.mxu0 0.0
    %4774 = vmatprep.subr.mxu0 0.0
    %4775 = vmatpush2.msra.mxu0 0.0
    %4776 = vmatprep.subr.mxu0 0.0
    %4777 = vmatpush2.msra.mxu0 0.0
    %4778 = vmatprep.mubr.f32.mxu0 0.0
    %4779 = vmatmul.mubr.f32.gmra.mxu0 %v4703
    %v4780 = vpop.f32.mrf.mxu0
    %v4781 = vadd.f32 0.0, %v4780
    %v4782 = vpop.f32.mrf.mxu0
    %4783 = vmatprep.mubr.f32.mxu0 0.0
    %4784 = vmatmul.mubr.f32.gmra.mxu0 %v4706
    %v4785 = vpop.f32.mrf.mxu0
    %v4786 = vadd.f32 0.0, %v4785
    %v4787 = vpop.f32.mrf.mxu0
    %4788 = vmatprep.mubr.f32.mxu0 0.0
    %4789 = vmatmul.mubr.f32.gmra.mxu0 %v4709
    %v4790 = vpop.f32.mrf.mxu0
    %v4791 = vadd.f32 0.0, %v4790
    %v4792 = vpop.f32.mrf.mxu0
    %4793 = vmatprep.mubr.f32.mxu0 0.0
    %4794 = vmatmul.mubr.f32.gmra.mxu0 %v4712
    %v4795 = vpop.f32.mrf.mxu0
    %v4796 = vadd.f32 0.0, %v4795
    %v4797 = vpop.f32.mrf.mxu0
    %4798 = vdwg.mxu0
    %v4799 = vmul.f32 %v4781, %v39
    %v4800 = vmul.f32 %v4786, %v40
    %v4801 = vmul.f32 %v4791, %v41
    %v4802 = vmul.f32 %v4796, %v42
    %v4804 = vsel %vm592, %v4430, 0
    %4806 = vmatprep.subr.mxu0 0.0
    %4807 = vmatpush1.msra.mxu0 0.0
    %4808 = vmatprep.subr.mxu0 0.0
    %4809 = vmatpush1.msra.mxu0 0.0
    %4810 = vmatprep.subr.mxu0 0.0
    %4811 = vmatpush1.msra.mxu0 0.0
    %4812 = vmatprep.subr.mxu0 0.0
    %4813 = vmatpush1.msra.mxu0 0.0
    %4814 = vmatprep.subr.mxu0 0.0
    %4815 = vmatpush1.msra.mxu0 0.0
    %4816 = vmatprep.subr.mxu0 0.0
    %4817 = vmatpush1.msra.mxu0 0.0
    %4818 = vmatprep.subr.mxu0 0.0
    %4819 = vmatpush1.msra.mxu0 0.0
    %4820 = vmatprep.subr.mxu0 0.0
    %4821 = vmatpush1.msra.mxu0 0.0
    %4822 = vmatprep.subr.mxu0 0.0
    %4823 = vmatpush1.msra.mxu0 0.0
    %4824 = vmatprep.subr.mxu0 0.0
    %4825 = vmatpush1.msra.mxu0 0.0
    %4826 = vmatprep.subr.mxu0 0.0
    %4827 = vmatpush1.msra.mxu0 0.0
    %4828 = vmatprep.subr.mxu0 0.0
    %4829 = vmatpush1.msra.mxu0 0.0
    %4830 = vmatprep.subr.mxu0 0.0
    %4831 = vmatpush1.msra.mxu0 %v4802
    %4832 = vmatprep.subr.mxu0 0.0
    %4833 = vmatpush1.msra.mxu0 %v4801
    %4834 = vmatprep.subr.mxu0 0.0
    %4835 = vmatpush1.msra.mxu0 %v4800
    %4836 = vmatprep.subr.mxu0 0.0
    %4837 = vmatpush1.msra.mxu0 %v4799
    %4838 = vmatprep.subr.mxu0 0.0
    %4839 = vmatpush2.msra.mxu0 0.0
    %4840 = vmatprep.subr.mxu0 0.0
    %4841 = vmatpush2.msra.mxu0 0.0
    %4842 = vmatprep.subr.mxu0 0.0
    %4843 = vmatpush2.msra.mxu0 0.0
    %4844 = vmatprep.subr.mxu0 0.0
    %4845 = vmatpush2.msra.mxu0 0.0
    %4846 = vmatprep.subr.mxu0 0.0
    %4847 = vmatpush2.msra.mxu0 0.0
    %4848 = vmatprep.subr.mxu0 0.0
    %4849 = vmatpush2.msra.mxu0 0.0
    %4850 = vmatprep.subr.mxu0 0.0
    %4851 = vmatpush2.msra.mxu0 0.0
    %4852 = vmatprep.subr.mxu0 0.0
    %4853 = vmatpush2.msra.mxu0 0.0
    %4854 = vmatprep.subr.mxu0 0.0
    %4855 = vmatpush2.msra.mxu0 0.0
    %4856 = vmatprep.subr.mxu0 0.0
    %4857 = vmatpush2.msra.mxu0 0.0
    %4858 = vmatprep.subr.mxu0 0.0
    %4859 = vmatpush2.msra.mxu0 0.0
    %4860 = vmatprep.subr.mxu0 0.0
    %4861 = vmatpush2.msra.mxu0 0.0
    %4862 = vmatprep.subr.mxu0 0.0
    %4863 = vmatpush2.msra.mxu0 0.0
    %4864 = vmatprep.subr.mxu0 0.0
    %4865 = vmatpush2.msra.mxu0 0.0
    %4866 = vmatprep.subr.mxu0 0.0
    %4867 = vmatpush2.msra.mxu0 0.0
    %4868 = vmatprep.subr.mxu0 0.0
    %4869 = vmatpush2.msra.mxu0 0.0
    %4870 = vmatprep.mubr.f32.mxu0 0.0
    %4871 = vmatmul.mubr.f32.gmra.mxu0 %v4804
    %v4872 = vpop.f32.mrf.mxu0
    %v4873 = vadd.f32 0.0, %v4872
    %v4874 = vpop.f32.mrf.mxu0
    %4875 = vdwg.mxu0
    %v4876 = vsel %vm592, %v4658, 0.0
    %4877 = vadd.xlane.f32.xlu0 %v4876
    %v4878 = vpop.xlane.xlu0 %4877
    %v4879 = vsel %vm592, %v4873, 0.0
    %4880 = vadd.xlane.f32.xlu0 %v4879
    %v4881 = vpop.xlane.xlu0 %4880
    %v4882 = vmul.f32 %v4878, %v599
    %v4883 = vmul.f32 %v4881, %v599
    %v4884 = vsub.f32 %v4658, %v4882
    %v4885 = vsub.f32 %v4873, %v4883
    %v4886 = vmul.f32 %v4884, %v4884
    %v4887 = vmul.f32 %v4885, %v4885
    %v4888 = vsel %vm592, %v4886, 0.0
    %4889 = vadd.xlane.f32.xlu0 %v4888
    %v4890 = vpop.xlane.xlu0 %4889
    %v4891 = vsel %vm592, %v4887, 0.0
    %4892 = vadd.xlane.f32.xlu0 %v4891
    %v4893 = vpop.xlane.xlu0 %4892
    %v4894 = vmul.f32 %v4890, %v599
    %v4895 = vmul.f32 %v4893, %v599
    %v4896 = vadd.f32 %v4894, 1e-05
    %v4897 = vadd.f32 %v4895, 1e-05
    %v4898 = vrsqrt.pop %v4896
    %v4899 = vrsqrt.pop %v4897
    %v4900 = vmul.f32 %v4884, %v4898
    %v4901 = vmul.f32 %v4885, %v4899
    %v4902 = vlaneseq
    %v4903 = vshrl.u32 %v4902, 7
    %v4904 = vsub.s32 0, %v4903
    %v4905 = vrot.slane %v459, %v4904
    %v4906 = vmul.f32 %v4900, %v4905
    %v4907 = vmul.f32 %v4901, %v4905
    %v4908 = vlaneseq
    %v4909 = vshrl.u32 %v4908, 7
    %v4910 = vsub.s32 1, %v4909
    %v4911 = vrot.slane %v459, %v4910
    %v4912 = vadd.f32 %v4906, %v4911
    %v4913 = vadd.f32 %v4907, %v4911
    %v4914 = vadd.f32 %v450, 1.0
    %v4915 = vadd.f32 %v455, 1.0
    %v4916 = vmul.f32 %v4912, %v4914
    %v4917 = vmul.f32 %v4913, %v4915
    %4920 = vrot.lane.b32.xlu0 %v450, 96
    %v4921 = vpop.permute.xlu0 %4920
    %4922 = vrot.lane.b32.xlu0 %v455, 96
    %v4923 = vpop.permute.xlu0 %4922
    %v4926 = vadd.f32 %v4916, %v4921
    %v4927 = vadd.f32 %v4917, %v4923
    %v4928 = vxor.u32 %v4926, 2147483648
    %v4929 = vxor.u32 %v4927, 2147483648
    %v4930 = vmul.f32 %v4928, 1.442695
    %v4931 = vpow.pop %v4930
    %v4932 = vmul.f32 %v4929, 1.442695
    %v4933 = vpow.pop %v4932
    %v4934 = vadd.f32 %v4931, 1.0
    %v4935 = vadd.f32 %v4933, 1.0
    %v4936 = vrcp.pop %v4934
    %v4937 = vmul.f32 1.0, %v4936
    %v4938 = vrcp.pop %v4935
    %v4939 = vmul.f32 1.0, %v4938
    %v4940 = vmul.f32 %v4926, %v4937
    %v4941 = vmul.f32 %v4927, %v4939
    %v4942 = vlaneseq
    %v4943 = vshrl.u32 %v4942, 7
    %v4944 = vsub.s32 4, %v4943
    %v4945 = vrot.slane %v484, %v4944
    %v4947 = vsel %vm592, %v4940, 0
    %v4950 = vsel %vm592, %v4941, 0
    %4952 = vmatprep.subr.mxu0 0.0
    %4953 = vmatpush1.msra.mxu0 0.0
    %4954 = vmatprep.subr.mxu0 0.0
    %4955 = vmatpush1.msra.mxu0 0.0
    %4956 = vmatprep.subr.mxu0 0.0
    %4957 = vmatpush1.msra.mxu0 0.0
    %4958 = vmatprep.subr.mxu0 0.0
    %4959 = vmatpush1.msra.mxu0 0.0
    %4960 = vmatprep.subr.mxu0 0.0
    %4961 = vmatpush1.msra.mxu0 0.0
    %4962 = vmatprep.subr.mxu0 0.0
    %4963 = vmatpush1.msra.mxu0 0.0
    %4964 = vmatprep.subr.mxu0 0.0
    %4965 = vmatpush1.msra.mxu0 0.0
    %4966 = vmatprep.subr.mxu0 0.0
    %4967 = vmatpush1.msra.mxu0 0.0
    %4968 = vmatprep.subr.mxu0 0.0
    %4969 = vmatpush1.msra.mxu0 0.0
    %4970 = vmatprep.subr.mxu0 0.0
    %4971 = vmatpush1.msra.mxu0 0.0
    %4972 = vmatprep.subr.mxu0 0.0
    %4973 = vmatpush1.msra.mxu0 0.0
    %4974 = vmatprep.subr.mxu0 0.0
    %4975 = vmatpush1.msra.mxu0 0.0
    %4976 = vmatprep.subr.mxu0 0.0
    %4977 = vmatpush1.msra.mxu0 %v479
    %4978 = vmatprep.subr.mxu0 0.0
    %4979 = vmatpush1.msra.mxu0 %v478
    %4980 = vmatprep.subr.mxu0 0.0
    %4981 = vmatpush1.msra.mxu0 %v477
    %4982 = vmatprep.subr.mxu0 0.0
    %4983 = vmatpush1.msra.mxu0 %v476
    %4984 = vmatprep.subr.mxu0 0.0
    %4985 = vmatpush2.msra.mxu0 0.0
    %4986 = vmatprep.subr.mxu0 0.0
    %4987 = vmatpush2.msra.mxu0 0.0
    %4988 = vmatprep.subr.mxu0 0.0
    %4989 = vmatpush2.msra.mxu0 0.0
    %4990 = vmatprep.subr.mxu0 0.0
    %4991 = vmatpush2.msra.mxu0 0.0
    %4992 = vmatprep.subr.mxu0 0.0
    %4993 = vmatpush2.msra.mxu0 0.0
    %4994 = vmatprep.subr.mxu0 0.0
    %4995 = vmatpush2.msra.mxu0 0.0
    %4996 = vmatprep.subr.mxu0 0.0
    %4997 = vmatpush2.msra.mxu0 0.0
    %4998 = vmatprep.subr.mxu0 0.0
    %4999 = vmatpush2.msra.mxu0 0.0
    %5000 = vmatprep.subr.mxu0 0.0
    %5001 = vmatpush2.msra.mxu0 0.0
    %5002 = vmatprep.subr.mxu0 0.0
    %5003 = vmatpush2.msra.mxu0 0.0
    %5004 = vmatprep.subr.mxu0 0.0
    %5005 = vmatpush2.msra.mxu0 0.0
    %5006 = vmatprep.subr.mxu0 0.0
    %5007 = vmatpush2.msra.mxu0 0.0
    %5008 = vmatprep.subr.mxu0 0.0
    %5009 = vmatpush2.msra.mxu0 0.0
    %5010 = vmatprep.subr.mxu0 0.0
    %5011 = vmatpush2.msra.mxu0 0.0
    %5012 = vmatprep.subr.mxu0 0.0
    %5013 = vmatpush2.msra.mxu0 0.0
    %5014 = vmatprep.subr.mxu0 0.0
    %5015 = vmatpush2.msra.mxu0 0.0
    %5016 = vmatprep.mubr.f32.mxu0 0.0
    %5017 = vmatmul.mubr.f32.gmra.mxu0 %v4947
    %v5018 = vpop.f32.mrf.mxu0
    %v5019 = vadd.f32 %v4945, %v5018
    %v5020 = vpop.f32.mrf.mxu0
    %5021 = vmatprep.mubr.f32.mxu0 0.0
    %5022 = vmatmul.mubr.f32.gmra.mxu0 %v4950
    %v5023 = vpop.f32.mrf.mxu0
    %v5024 = vadd.f32 %v4945, %v5023
    %v5025 = vpop.f32.mrf.mxu0
    %5026 = vdwg.mxu0
    %v5027 = vadd.f32 %v4000, %v5019
    %v5028 = vadd.f32 %v4001, %v5024
    %v5029 = vld [vmem:[#allocation2 + $0x6c8] sm:$0xff]
    %v5030 = vld [vmem:[#allocation2 + $0x6d0] sm:$0xff]
    %v5031 = vld [vmem:[#allocation2 + $0x6d8] sm:$0xff]
    %v5032 = vld [vmem:[#allocation2 + $0x6e0] sm:$0xff]
    %v5033 = vld [vmem:[#allocation2 + $0x6e8] sm:$0x1]
    %v5034 = vlaneseq
    %v5035 = vshrl.u32 %v5034, 7
    %v5036 = vsub.s32 0, %v5035
    %v5037 = vrot.slane %v5033, %v5036
    %v5039 = vsel %vm592, %v5027, 0
    %v5042 = vsel %vm592, %v5028, 0
    %5044 = vmatprep.subr.mxu0 0.0
    %5045 = vmatpush1.msra.mxu0 0.0
    %5046 = vmatprep.subr.mxu0 0.0
    %5047 = vmatpush1.msra.mxu0 0.0
    %5048 = vmatprep.subr.mxu0 0.0
    %5049 = vmatpush1.msra.mxu0 0.0
    %5050 = vmatprep.subr.mxu0 0.0
    %5051 = vmatpush1.msra.mxu0 0.0
    %5052 = vmatprep.subr.mxu0 0.0
    %5053 = vmatpush1.msra.mxu0 0.0
    %5054 = vmatprep.subr.mxu0 0.0
    %5055 = vmatpush1.msra.mxu0 0.0
    %5056 = vmatprep.subr.mxu0 0.0
    %5057 = vmatpush1.msra.mxu0 0.0
    %5058 = vmatprep.subr.mxu0 0.0
    %5059 = vmatpush1.msra.mxu0 0.0
    %5060 = vmatprep.subr.mxu0 0.0
    %5061 = vmatpush1.msra.mxu0 0.0
    %5062 = vmatprep.subr.mxu0 0.0
    %5063 = vmatpush1.msra.mxu0 0.0
    %5064 = vmatprep.subr.mxu0 0.0
    %5065 = vmatpush1.msra.mxu0 0.0
    %5066 = vmatprep.subr.mxu0 0.0
    %5067 = vmatpush1.msra.mxu0 0.0
    %5068 = vmatprep.subr.mxu0 0.0
    %5069 = vmatpush1.msra.mxu0 %v5032
    %5070 = vmatprep.subr.mxu0 0.0
    %5071 = vmatpush1.msra.mxu0 %v5031
    %5072 = vmatprep.subr.mxu0 0.0
    %5073 = vmatpush1.msra.mxu0 %v5030
    %5074 = vmatprep.subr.mxu0 0.0
    %5075 = vmatpush1.msra.mxu0 %v5029
    %5076 = vmatprep.subr.mxu0 0.0
    %5077 = vmatpush2.msra.mxu0 0.0
    %5078 = vmatprep.subr.mxu0 0.0
    %5079 = vmatpush2.msra.mxu0 0.0
    %5080 = vmatprep.subr.mxu0 0.0
    %5081 = vmatpush2.msra.mxu0 0.0
    %5082 = vmatprep.subr.mxu0 0.0
    %5083 = vmatpush2.msra.mxu0 0.0
    %5084 = vmatprep.subr.mxu0 0.0
    %5085 = vmatpush2.msra.mxu0 0.0
    %5086 = vmatprep.subr.mxu0 0.0
    %5087 = vmatpush2.msra.mxu0 0.0
    %5088 = vmatprep.subr.mxu0 0.0
    %5089 = vmatpush2.msra.mxu0 0.0
    %5090 = vmatprep.subr.mxu0 0.0
    %5091 = vmatpush2.msra.mxu0 0.0
    %5092 = vmatprep.subr.mxu0 0.0
    %5093 = vmatpush2.msra.mxu0 0.0
    %5094 = vmatprep.subr.mxu0 0.0
    %5095 = vmatpush2.msra.mxu0 0.0
    %5096 = vmatprep.subr.mxu0 0.0
    %5097 = vmatpush2.msra.mxu0 0.0
    %5098 = vmatprep.subr.mxu0 0.0
    %5099 = vmatpush2.msra.mxu0 0.0
    %5100 = vmatprep.subr.mxu0 0.0
    %5101 = vmatpush2.msra.mxu0 0.0
    %5102 = vmatprep.subr.mxu0 0.0
    %5103 = vmatpush2.msra.mxu0 0.0
    %5104 = vmatprep.subr.mxu0 0.0
    %5105 = vmatpush2.msra.mxu0 0.0
    %5106 = vmatprep.subr.mxu0 0.0
    %5107 = vmatpush2.msra.mxu0 0.0
    %5108 = vmatprep.mubr.f32.mxu0 0.0
    %5109 = vmatmul.mubr.f32.gmra.mxu0 %v5039
    %v5110 = vpop.f32.mrf.mxu0
    %v5111 = vadd.f32 %v5037, %v5110
    %v5112 = vpop.f32.mrf.mxu0
    %5113 = vmatprep.mubr.f32.mxu0 0.0
    %5114 = vmatmul.mubr.f32.gmra.mxu0 %v5042
    %v5115 = vpop.f32.mrf.mxu0
    %v5116 = vadd.f32 %v5037, %v5115
    %v5117 = vpop.f32.mrf.mxu0
    %5118 = vdwg.mxu0
    %v5119 = vmul.f32 %v5111, 0.5
    %v5120 = vmul.f32 %v5116, 0.5
    %v5121 = vmul.f32 %v5111, 0.044715
    %v5122 = vmul.f32 %v5116, 0.044715
    %v5123 = vmul.f32 %v5121, %v5111
    %v5124 = vmul.f32 %v5122, %v5116
    %v5125 = vmul.f32 %v5123, %v5111
    %v5126 = vmul.f32 %v5124, %v5116
    %v5127 = vadd.f32 %v5111, %v5125
    %v5128 = vadd.f32 %v5116, %v5126
    %v5129 = vmul.f32 %v5127, 0.7978846
    %v5130 = vmul.f32 %v5128, 0.7978846
    %v5131 = vtanh.pop %v5129
    %v5132 = vtanh.pop %v5130
    %v5133 = vadd.f32 %v5131, 1.0
    %v5134 = vadd.f32 %v5132, 1.0
    %v5135 = vmul.f32 %v5119, %v5133
    %v5136 = vmul.f32 %v5120, %v5134
    %v5137 = vld [vmem:[#allocation2 + $0x6f0] sm:$0xff]
    %v5138 = vld [vmem:[#allocation2 + $0x6f8] sm:$0xff]
    %v5139 = vld [vmem:[#allocation2 + $0x700] sm:$0xff]
    %v5140 = vld [vmem:[#allocation2 + $0x708] sm:$0xff]
    %v5141 = vld [vmem:[#allocation2 + $0x710] sm:$0xff]
    %v5142 = vld [vmem:[#allocation2 + $0x718] sm:$0xff]
    %v5143 = vld [vmem:[#allocation2 + $0x720] sm:$0xff]
    %v5144 = vld [vmem:[#allocation2 + $0x728] sm:$0xff]
    %v5145 = vld [vmem:[#allocation2 + $0x730] sm:$0x1]
    %v5146 = vlaneseq
    %v5147 = vshrl.u32 %v5146, 7
    %v5148 = vsub.s32 0, %v5147
    %v5149 = vrot.slane %v5145, %v5148
    %v5151 = vsel %vm56, %v5135, 0
    %v5154 = vsel %vm56, %v5136, 0
    %5156 = vmatprep.subr.mxu0 0.0
    %5157 = vmatpush1.msra.mxu0 0.0
    %5158 = vmatprep.subr.mxu0 0.0
    %5159 = vmatpush1.msra.mxu0 0.0
    %5160 = vmatprep.subr.mxu0 0.0
    %5161 = vmatpush1.msra.mxu0 0.0
    %5162 = vmatprep.subr.mxu0 0.0
    %5163 = vmatpush1.msra.mxu0 0.0
    %5164 = vmatprep.subr.mxu0 0.0
    %5165 = vmatpush1.msra.mxu0 0.0
    %5166 = vmatprep.subr.mxu0 0.0
    %5167 = vmatpush1.msra.mxu0 0.0
    %5168 = vmatprep.subr.mxu0 0.0
    %5169 = vmatpush1.msra.mxu0 0.0
    %5170 = vmatprep.subr.mxu0 0.0
    %5171 = vmatpush1.msra.mxu0 0.0
    %5172 = vmatprep.subr.mxu0 0.0
    %5173 = vmatpush1.msra.mxu0 %v5144
    %5174 = vmatprep.subr.mxu0 0.0
    %5175 = vmatpush1.msra.mxu0 %v5143
    %5176 = vmatprep.subr.mxu0 0.0
    %5177 = vmatpush1.msra.mxu0 %v5142
    %5178 = vmatprep.subr.mxu0 0.0
    %5179 = vmatpush1.msra.mxu0 %v5141
    %5180 = vmatprep.subr.mxu0 0.0
    %5181 = vmatpush1.msra.mxu0 %v5140
    %5182 = vmatprep.subr.mxu0 0.0
    %5183 = vmatpush1.msra.mxu0 %v5139
    %5184 = vmatprep.subr.mxu0 0.0
    %5185 = vmatpush1.msra.mxu0 %v5138
    %5186 = vmatprep.subr.mxu0 0.0
    %5187 = vmatpush1.msra.mxu0 %v5137
    %5188 = vmatprep.subr.mxu0 0.0
    %5189 = vmatpush2.msra.mxu0 0.0
    %5190 = vmatprep.subr.mxu0 0.0
    %5191 = vmatpush2.msra.mxu0 0.0
    %5192 = vmatprep.subr.mxu0 0.0
    %5193 = vmatpush2.msra.mxu0 0.0
    %5194 = vmatprep.subr.mxu0 0.0
    %5195 = vmatpush2.msra.mxu0 0.0
    %5196 = vmatprep.subr.mxu0 0.0
    %5197 = vmatpush2.msra.mxu0 0.0
    %5198 = vmatprep.subr.mxu0 0.0
    %5199 = vmatpush2.msra.mxu0 0.0
    %5200 = vmatprep.subr.mxu0 0.0
    %5201 = vmatpush2.msra.mxu0 0.0
    %5202 = vmatprep.subr.mxu0 0.0
    %5203 = vmatpush2.msra.mxu0 0.0
    %5204 = vmatprep.subr.mxu0 0.0
    %5205 = vmatpush2.msra.mxu0 0.0
    %5206 = vmatprep.subr.mxu0 0.0
    %5207 = vmatpush2.msra.mxu0 0.0
    %5208 = vmatprep.subr.mxu0 0.0
    %5209 = vmatpush2.msra.mxu0 0.0
    %5210 = vmatprep.subr.mxu0 0.0
    %5211 = vmatpush2.msra.mxu0 0.0
    %5212 = vmatprep.subr.mxu0 0.0
    %5213 = vmatpush2.msra.mxu0 0.0
    %5214 = vmatprep.subr.mxu0 0.0
    %5215 = vmatpush2.msra.mxu0 0.0
    %5216 = vmatprep.subr.mxu0 0.0
    %5217 = vmatpush2.msra.mxu0 0.0
    %5218 = vmatprep.subr.mxu0 0.0
    %5219 = vmatpush2.msra.mxu0 0.0
    %5220 = vmatprep.mubr.f32.mxu0 0.0
    %5221 = vmatmul.mubr.f32.gmra.mxu0 %v5151
    %v5222 = vpop.f32.mrf.mxu0
    %v5223 = vadd.f32 %v5149, %v5222
    %v5224 = vpop.f32.mrf.mxu0
    %5225 = vmatprep.mubr.f32.mxu0 0.0
    %5226 = vmatmul.mubr.f32.gmra.mxu0 %v5154
    %v5227 = vpop.f32.mrf.mxu0
    %v5228 = vadd.f32 %v5149, %v5227
    %v5229 = vpop.f32.mrf.mxu0
    %5230 = vdwg.mxu0
    %v5231 = vsel %vm592, %v5223, 0.0
    %5232 = vadd.xlane.f32.xlu0 %v5231
    %v5233 = vpop.xlane.xlu0 %5232
    %v5234 = vsel %vm592, %v5228, 0.0
    %5235 = vadd.xlane.f32.xlu0 %v5234
    %v5236 = vpop.xlane.xlu0 %5235
    %v5237 = vmul.f32 %v5233, %v599
    %v5238 = vmul.f32 %v5236, %v599
    %v5239 = vsub.f32 %v5223, %v5237
    %v5240 = vsub.f32 %v5228, %v5238
    %v5241 = vmul.f32 %v5239, %v5239
    %v5242 = vmul.f32 %v5240, %v5240
    %v5243 = vsel %vm592, %v5241, 0.0
    %5244 = vadd.xlane.f32.xlu0 %v5243
    %v5245 = vpop.xlane.xlu0 %5244
    %v5246 = vsel %vm592, %v5242, 0.0
    %5247 = vadd.xlane.f32.xlu0 %v5246
    %v5248 = vpop.xlane.xlu0 %5247
    %v5249 = vmul.f32 %v5245, %v599
    %v5250 = vmul.f32 %v5248, %v599
    %v5251 = vadd.f32 %v5249, 1e-05
    %v5252 = vadd.f32 %v5250, 1e-05
    %v5253 = vrsqrt.pop %v5251
    %v5254 = vrsqrt.pop %v5252
    %v5255 = vmul.f32 %v5239, %v5253
    %v5256 = vmul.f32 %v5240, %v5254
    %v5257 = vlaneseq
    %v5258 = vshrl.u32 %v5257, 7
    %v5259 = vsub.s32 2, %v5258
    %v5260 = vrot.slane %v459, %v5259
    %v5261 = vmul.f32 %v5255, %v5260
    %v5262 = vmul.f32 %v5256, %v5260
    %v5263 = vlaneseq
    %v5264 = vshrl.u32 %v5263, 7
    %v5265 = vsub.s32 3, %v5264
    %v5266 = vrot.slane %v459, %v5265
    %v5267 = vadd.f32 %v5261, %v5266
    %v5268 = vadd.f32 %v5262, %v5266
    %5271 = vrot.lane.b32.xlu0 %v4914, 64
    %v5272 = vpop.permute.xlu0 %5271
    %5273 = vrot.lane.b32.xlu0 %v4915, 64
    %v5274 = vpop.permute.xlu0 %5273
    %v5277 = vmul.f32 %v5267, %v5272
    %v5278 = vmul.f32 %v5268, %v5274
    %5279 = vrot.lane.b32.xlu0 %v450, 32
    %v5280 = vpop.permute.xlu0 %5279
    %5281 = vrot.lane.b32.xlu0 %v455, 32
    %v5282 = vpop.permute.xlu0 %5281
    %v5285 = vadd.f32 %v5277, %v5280
    %v5286 = vadd.f32 %v5278, %v5282
    %v5287 = vxor.u32 %v5285, 2147483648
    %v5288 = vxor.u32 %v5286, 2147483648
    %v5289 = vmul.f32 %v5287, 1.442695
    %v5290 = vpow.pop %v5289
    %v5291 = vmul.f32 %v5288, 1.442695
    %v5292 = vpow.pop %v5291
    %v5293 = vadd.f32 %v5290, 1.0
    %v5294 = vadd.f32 %v5292, 1.0
    %v5295 = vrcp.pop %v5293
    %v5296 = vmul.f32 1.0, %v5295
    %v5297 = vrcp.pop %v5294
    %v5298 = vmul.f32 1.0, %v5297
    %v5299 = vmul.f32 %v5285, %v5296
    %v5300 = vmul.f32 %v5286, %v5298
    %v5301 = vlaneseq
    %v5302 = vshrl.u32 %v5301, 7
    %v5303 = vsub.s32 5, %v5302
    %v5304 = vrot.slane %v484, %v5303
    %v5306 = vsel %vm592, %v5299, 0
    %v5309 = vsel %vm592, %v5300, 0
    %5311 = vmatprep.subr.mxu0 0.0
    %5312 = vmatpush1.msra.mxu0 0.0
    %5313 = vmatprep.subr.mxu0 0.0
    %5314 = vmatpush1.msra.mxu0 0.0
    %5315 = vmatprep.subr.mxu0 0.0
    %5316 = vmatpush1.msra.mxu0 0.0
    %5317 = vmatprep.subr.mxu0 0.0
    %5318 = vmatpush1.msra.mxu0 0.0
    %5319 = vmatprep.subr.mxu0 0.0
    %5320 = vmatpush1.msra.mxu0 0.0
    %5321 = vmatprep.subr.mxu0 0.0
    %5322 = vmatpush1.msra.mxu0 0.0
    %5323 = vmatprep.subr.mxu0 0.0
    %5324 = vmatpush1.msra.mxu0 0.0
    %5325 = vmatprep.subr.mxu0 0.0
    %5326 = vmatpush1.msra.mxu0 0.0
    %5327 = vmatprep.subr.mxu0 0.0
    %5328 = vmatpush1.msra.mxu0 0.0
    %5329 = vmatprep.subr.mxu0 0.0
    %5330 = vmatpush1.msra.mxu0 0.0
    %5331 = vmatprep.subr.mxu0 0.0
    %5332 = vmatpush1.msra.mxu0 0.0
    %5333 = vmatprep.subr.mxu0 0.0
    %5334 = vmatpush1.msra.mxu0 0.0
    %5335 = vmatprep.subr.mxu0 0.0
    %5336 = vmatpush1.msra.mxu0 %v483
    %5337 = vmatprep.subr.mxu0 0.0
    %5338 = vmatpush1.msra.mxu0 %v482
    %5339 = vmatprep.subr.mxu0 0.0
    %5340 = vmatpush1.msra.mxu0 %v481
    %5341 = vmatprep.subr.mxu0 0.0
    %5342 = vmatpush1.msra.mxu0 %v480
    %5343 = vmatprep.subr.mxu0 0.0
    %5344 = vmatpush2.msra.mxu0 0.0
    %5345 = vmatprep.subr.mxu0 0.0
    %5346 = vmatpush2.msra.mxu0 0.0
    %5347 = vmatprep.subr.mxu0 0.0
    %5348 = vmatpush2.msra.mxu0 0.0
    %5349 = vmatprep.subr.mxu0 0.0
    %5350 = vmatpush2.msra.mxu0 0.0
    %5351 = vmatprep.subr.mxu0 0.0
    %5352 = vmatpush2.msra.mxu0 0.0
    %5353 = vmatprep.subr.mxu0 0.0
    %5354 = vmatpush2.msra.mxu0 0.0
    %5355 = vmatprep.subr.mxu0 0.0
    %5356 = vmatpush2.msra.mxu0 0.0
    %5357 = vmatprep.subr.mxu0 0.0
    %5358 = vmatpush2.msra.mxu0 0.0
    %5359 = vmatprep.subr.mxu0 0.0
    %5360 = vmatpush2.msra.mxu0 0.0
    %5361 = vmatprep.subr.mxu0 0.0
    %5362 = vmatpush2.msra.mxu0 0.0
    %5363 = vmatprep.subr.mxu0 0.0
    %5364 = vmatpush2.msra.mxu0 0.0
    %5365 = vmatprep.subr.mxu0 0.0
    %5366 = vmatpush2.msra.mxu0 0.0
    %5367 = vmatprep.subr.mxu0 0.0
    %5368 = vmatpush2.msra.mxu0 0.0
    %5369 = vmatprep.subr.mxu0 0.0
    %5370 = vmatpush2.msra.mxu0 0.0
    %5371 = vmatprep.subr.mxu0 0.0
    %5372 = vmatpush2.msra.mxu0 0.0
    %5373 = vmatprep.subr.mxu0 0.0
    %5374 = vmatpush2.msra.mxu0 0.0
    %5375 = vmatprep.mubr.f32.mxu0 0.0
    %5376 = vmatmul.mubr.f32.gmra.mxu0 %v5306
    %v5377 = vpop.f32.mrf.mxu0
    %v5378 = vadd.f32 %v5304, %v5377
    %v5379 = vpop.f32.mrf.mxu0
    %5380 = vmatprep.mubr.f32.mxu0 0.0
    %5381 = vmatmul.mubr.f32.gmra.mxu0 %v5309
    %v5382 = vpop.f32.mrf.mxu0
    %v5383 = vadd.f32 %v5304, %v5382
    %v5384 = vpop.f32.mrf.mxu0
    %5385 = vdwg.mxu0
    %v5386 = vadd.f32 %v5027, %v5378
    %v5387 = vadd.f32 %v5028, %v5383
    %v5388 = vld [vmem:[#allocation2 + $0x738] sm:$0xff]
    %v5389 = vld [vmem:[#allocation2 + $0x740] sm:$0xff]
    %v5390 = vld [vmem:[#allocation2 + $0x748] sm:$0xff]
    %v5391 = vld [vmem:[#allocation2 + $0x750] sm:$0xff]
    %v5392 = vld [vmem:[#allocation2 + $0x758] sm:$0x1]
    %v5393 = vlaneseq
    %v5394 = vshrl.u32 %v5393, 7
    %v5395 = vsub.s32 0, %v5394
    %v5396 = vrot.slane %v5392, %v5395
    %v5398 = vsel %vm592, %v5386, 0
    %v5401 = vsel %vm592, %v5387, 0
    %5403 = vmatprep.subr.mxu0 0.0
    %5404 = vmatpush1.msra.mxu0 0.0
    %5405 = vmatprep.subr.mxu0 0.0
    %5406 = vmatpush1.msra.mxu0 0.0
    %5407 = vmatprep.subr.mxu0 0.0
    %5408 = vmatpush1.msra.mxu0 0.0
    %5409 = vmatprep.subr.mxu0 0.0
    %5410 = vmatpush1.msra.mxu0 0.0
    %5411 = vmatprep.subr.mxu0 0.0
    %5412 = vmatpush1.msra.mxu0 0.0
    %5413 = vmatprep.subr.mxu0 0.0
    %5414 = vmatpush1.msra.mxu0 0.0
    %5415 = vmatprep.subr.mxu0 0.0
    %5416 = vmatpush1.msra.mxu0 0.0
    %5417 = vmatprep.subr.mxu0 0.0
    %5418 = vmatpush1.msra.mxu0 0.0
    %5419 = vmatprep.subr.mxu0 0.0
    %5420 = vmatpush1.msra.mxu0 0.0
    %5421 = vmatprep.subr.mxu0 0.0
    %5422 = vmatpush1.msra.mxu0 0.0
    %5423 = vmatprep.subr.mxu0 0.0
    %5424 = vmatpush1.msra.mxu0 0.0
    %5425 = vmatprep.subr.mxu0 0.0
    %5426 = vmatpush1.msra.mxu0 0.0
    %5427 = vmatprep.subr.mxu0 0.0
    %5428 = vmatpush1.msra.mxu0 %v5391
    %5429 = vmatprep.subr.mxu0 0.0
    %5430 = vmatpush1.msra.mxu0 %v5390
    %5431 = vmatprep.subr.mxu0 0.0
    %5432 = vmatpush1.msra.mxu0 %v5389
    %5433 = vmatprep.subr.mxu0 0.0
    %5434 = vmatpush1.msra.mxu0 %v5388
    %5435 = vmatprep.subr.mxu0 0.0
    %5436 = vmatpush2.msra.mxu0 0.0
    %5437 = vmatprep.subr.mxu0 0.0
    %5438 = vmatpush2.msra.mxu0 0.0
    %5439 = vmatprep.subr.mxu0 0.0
    %5440 = vmatpush2.msra.mxu0 0.0
    %5441 = vmatprep.subr.mxu0 0.0
    %5442 = vmatpush2.msra.mxu0 0.0
    %5443 = vmatprep.subr.mxu0 0.0
    %5444 = vmatpush2.msra.mxu0 0.0
    %5445 = vmatprep.subr.mxu0 0.0
    %5446 = vmatpush2.msra.mxu0 0.0
    %5447 = vmatprep.subr.mxu0 0.0
    %5448 = vmatpush2.msra.mxu0 0.0
    %5449 = vmatprep.subr.mxu0 0.0
    %5450 = vmatpush2.msra.mxu0 0.0
    %5451 = vmatprep.subr.mxu0 0.0
    %5452 = vmatpush2.msra.mxu0 0.0
    %5453 = vmatprep.subr.mxu0 0.0
    %5454 = vmatpush2.msra.mxu0 0.0
    %5455 = vmatprep.subr.mxu0 0.0
    %5456 = vmatpush2.msra.mxu0 0.0
    %5457 = vmatprep.subr.mxu0 0.0
    %5458 = vmatpush2.msra.mxu0 0.0
    %5459 = vmatprep.subr.mxu0 0.0
    %5460 = vmatpush2.msra.mxu0 0.0
    %5461 = vmatprep.subr.mxu0 0.0
    %5462 = vmatpush2.msra.mxu0 0.0
    %5463 = vmatprep.subr.mxu0 0.0
    %5464 = vmatpush2.msra.mxu0 0.0
    %5465 = vmatprep.subr.mxu0 0.0
    %5466 = vmatpush2.msra.mxu0 0.0
    %5467 = vmatprep.mubr.f32.mxu0 0.0
    %5468 = vmatmul.mubr.f32.gmra.mxu0 %v5398
    %v5469 = vpop.f32.mrf.mxu0
    %v5470 = vadd.f32 %v5396, %v5469
    %v5471 = vpop.f32.mrf.mxu0
    %5472 = vmatprep.mubr.f32.mxu0 0.0
    %5473 = vmatmul.mubr.f32.gmra.mxu0 %v5401
    %v5474 = vpop.f32.mrf.mxu0
    %v5475 = vadd.f32 %v5396, %v5474
    %v5476 = vpop.f32.mrf.mxu0
    %5477 = vdwg.mxu0
    %5478 = vst [vmem:[%s2] sm:$0xff] %v5470
    %5479 = vst [vmem:[%s2 + $0x8] sm:$0xff] %v5475
    // Predicated region
    $region14: #{pallas_forward.1} parent=1 // pred_check
      _
    $region15: #{pallas_forward.1} parent=1 // pred_check_branch
      %5481 = sbr.rel (0) target = $region17
    $region16: #{pallas_forward.1} parent=1 // pred_region
      _
    $region17: #{pallas_forward.1} parent=1 // pred_fallthru
      _
    // Predicated region
    $region18: #{pallas_forward.1} parent=1 // pred_check
      _
    $region19: #{pallas_forward.1} parent=1 // pred_check_branch
      %5483 = sbr.rel (0) target = $region21
    $region20: #{pallas_forward.1} parent=1 // pred_region
      _
    $region21: #{pallas_forward.1} parent=1 // pred_fallthru
      _
    %5484 = vsyncpa [#allocation3], 1

</llo_original>
